<compile_context>
chip_gen: v7x
topology: tpu7x:2x2x1
jax: 0.10.0
libtpu: 0.0.40
codegen_flags: <defaults>
</compile_context>

<pallas_src>
import jax
import jax.numpy as jnp
from jax.experimental import pallas as pl
from jax.experimental.pallas import tpu as pltpu


def _round_up(x, m):
    return ((x + m - 1) // m) * m


def _weightnet_kernel(s_ref, p_ref, o_ref,
                      w_obj_ref, w_pred_ref, b_obj_ref, b_pred_ref,
                      w1_ref, b1_ref, w2_ref, b2_ref,
                      out_ref):
    f32 = jnp.float32
    bf16 = jnp.bfloat16

    # In-kernel cast (VPU has idle slots here); inputs may already be bf16.
    s_b = s_ref[...].astype(bf16)
    p_b = p_ref[...].astype(bf16)
    o_b = o_ref[...].astype(bf16)

    # --- shared down-sample projections (bf16 MXU, f32 accumulate) ---
    w_obj = w_obj_ref[...]
    s_d = jnp.dot(s_b, w_obj, preferred_element_type=f32) + b_obj_ref[...]
    o_d = jnp.dot(o_b, w_obj, preferred_element_type=f32) + b_obj_ref[...]
    p_d = jnp.dot(p_b, w_pred_ref[...], preferred_element_type=f32) + b_pred_ref[...]

    # --- single fused hidden contraction: [s_d | o_d | p_d] @ W1 -> (tile_n, 2*hidden)
    x1 = jnp.concatenate([s_d, o_d, p_d], axis=1).astype(bf16)
    h = jnp.dot(x1, w1_ref[...], preferred_element_type=f32) + b1_ref[...]
    h = jnp.maximum(h, 0.0)  # ReLU

    # --- fused block-diagonal heads: (2*hidden, 2) -> logits (tile_n, 2) ---
    logits = jnp.dot(h.astype(bf16), w2_ref[...], preferred_element_type=f32) + b2_ref[...]
    out_ref[...] = jax.nn.sigmoid(logits).astype(out_ref.dtype)


def weightnet_gcn_forward(s, p, o, params, *, tile_n=2048,
                          vmem_budget_bytes=38 * 2**20):
    """WeightNetGCN forward as a single Pallas TPU kernel.

    s, o: [N, feat_dim_in1], p: [N, feat_dim_in2]  (float32 or bfloat16)
    params: dict of weights stored as [in, out] and biases as [1, out] (f32).
    Returns (w_s, w_o), each float32 of shape [N, 1].
    """
    N, din1 = s.shape
    _, din2 = p.shape
    feat = params["w_obj"].shape[1]
    hidden = params["ws1"].shape[1]

    bf16 = jnp.bfloat16
    f32 = jnp.float32

    # ---- fuse Net_s / Net_o weights into wide MXU operands (exact math) ----
    zpad = jnp.zeros((feat, hidden), f32)
    zcol = jnp.zeros((hidden, 1), f32)
    w_obj = params["w_obj"].astype(bf16)
    w_pred = params["w_pred"].astype(bf16)
    b_obj = params["b_obj"].astype(f32)
    b_pred = params["b_pred"].astype(f32)
    # Row order must match the in-kernel concat [s_d | o_d | p_d].
    w1 = jnp.concatenate(
        [jnp.concatenate([params["ws1"][:feat], zpad], axis=1),                       # s_d rows
         jnp.concatenate([zpad, params["wo1"][:feat]], axis=1),                       # o_d rows
         jnp.concatenate([params["ws1"][feat:], params["wo1"][feat:]], axis=1)],      # p_d rows
        axis=0).astype(bf16)                                                          # (3F, 2*hidden)
    b1 = jnp.concatenate([params["bs1"], params["bo1"]], axis=1).astype(f32)
    w2 = jnp.concatenate(
        [jnp.concatenate([params["ws2"], zcol], axis=1),
         jnp.concatenate([zcol, params["wo2"]], axis=1)], axis=0).astype(bf16)        # (2*hidden, 2)
    b2 = jnp.concatenate([params["bs2"], params["bo2"]], axis=1).astype(f32)

    weights = [w_obj, w_pred, b_obj, b_pred, w1, b1, w2, b2]
    weight_bytes = sum(int(w.size) * w.dtype.itemsize for w in weights)
    act_bytes = s.dtype.itemsize  # activations are DMA'd in their HBM dtype

    # ---- tile selection (ragged grid, no padding, no divisibility req) ----
    def _vmem_bytes(t):
        in_blk = 2 * t * (2 * din1 + din2) * act_bytes        # double-buffered inputs
        out_blk = 2 * t * 2 * 4                                # double-buffered output
        interm = t * ((2 * din1 + din2) * 2                    # in-kernel bf16 casts
                      + 3 * feat * (4 + 2)                     # s_d/o_d/p_d f32 + bf16 concat
                      + 2 * hidden * (4 + 2) + 2 * 4)          # h f32/bf16 + logits
        return in_blk + out_blk + interm + 2 * weight_bytes

    tile_n = max(16, _round_up(min(int(tile_n), _round_up(N, 16)), 16))
    # v7x has 2 TensorCores: when there is enough work, keep grid_n >= 2 so the
    # "parallel" axis actually shards across both cores (harmless on v5e/v6e).
    if N >= 4096:
        tile_n = min(tile_n, _round_up(-(-N // 2), 16))
    # Clamp tile so the VMEM footprint stays within budget (v7x: 64 MiB phys).
    while tile_n > 16 and _vmem_bytes(tile_n) > vmem_budget_bytes:
        tile_n = _round_up(tile_n // 2, 16)
    grid_n = pl.cdiv(N, tile_n)

    vmem_limit = int(min(64 * 2**20, max(32 * 2**20, 1.5 * _vmem_bytes(tile_n))))

    # BlockSpec helpers: row-tiled activations, fully-resident weights.
    def row_spec(cols):
        return pl.BlockSpec((tile_n, cols), lambda i: (i, 0))

    def full_spec(arr):
        return pl.BlockSpec(arr.shape, lambda i: (0, 0))

    # NOTE: the 8 weight/bias inputs have constant index_maps so they are only
    # DMA'd once; their second pipeline buffer wastes ~0.4 MiB. pl.Buffered(1)
    # would reclaim it on v7x but is skipped here to keep lowering robust.
    in_specs = ([row_spec(din1), row_spec(din2), row_spec(din1)]
                + [full_spec(w) for w in weights])
    out_specs = pl.BlockSpec((tile_n, 2), lambda i: (i, 0))
    out_shape = jax.ShapeDtypeStruct((N, 2), f32)

    # ---- advisory cost estimate for the XLA scheduler ----
    macs_per_row = ((2 * din1 + din2) * feat
                    + (3 * feat) * (2 * hidden)
                    + (2 * hidden) * 2)
    cost = pl.CostEstimate(
        flops=2 * N * macs_per_row,
        transcendentals=2 * N,
        bytes_accessed=N * (2 * din1 + din2) * act_bytes + N * 2 * 4 + weight_bytes,
    )

    out = pl.pallas_call(
        _weightnet_kernel,
        out_shape=out_shape,
        grid_spec=pltpu.PrefetchScalarGridSpec(
            num_scalar_prefetch=0,
            grid=(grid_n,),
            in_specs=in_specs,
            out_specs=out_specs,
        ),
        compiler_params=pltpu.CompilerParams(
            dimension_semantics=("parallel",),
            vmem_limit_bytes=vmem_limit,
        ),
        cost_estimate=cost,
    )(s, p, o, *weights)

    return out[:, 0:1], out[:, 1:2]


def init_params(key, feat_dim_in1=256, feat_dim_in2=256, feat_dim=128, hidden=64):
    """Deterministic synthetic parameters (weights stored as [in, out])."""
    ks = jax.random.split(key, 12)

    def lin(kw, kb, din, dout):
        w = jax.random.normal(kw, (din, dout), jnp.float32) * (1.0 / jnp.sqrt(din))
        b = jax.random.normal(kb, (1, dout), jnp.float32) * 0.01
        return w, b

    w_obj, b_obj = lin(ks[0], ks[1], feat_dim_in1, feat_dim)    # down_sample_obj
    w_pred, b_pred = lin(ks[2], ks[3], feat_dim_in2, feat_dim)  # down_sample_pred
    ws1, bs1 = lin(ks[4], ks[5], 2 * feat_dim, hidden)          # Net_s Linear(2F, 64)
    ws2, bs2 = lin(ks[6], ks[7], hidden, 1)                     # Net_s Linear(64, 1)
    wo1, bo1 = lin(ks[8], ks[9], 2 * feat_dim, hidden)          # Net_o Linear(2F, 64)
    wo2, bo2 = lin(ks[10], ks[11], hidden, 1)                   # Net_o Linear(64, 1)
    return dict(w_obj=w_obj, b_obj=b_obj, w_pred=w_pred, b_pred=b_pred,
                ws1=ws1, bs1=bs1, ws2=ws2, bs2=bs2,
                wo1=wo1, bo1=bo1, wo2=wo2, bo2=bo2)


def reference_forward(s, p, o, params):
    """Plain-JAX f32 reference mirroring the PyTorch forward exactly."""
    s_d = s @ params["w_obj"] + params["b_obj"]
    p_d = p @ params["w_pred"] + params["b_pred"]
    o_d = o @ params["w_obj"] + params["b_obj"]
    feat1 = jnp.concatenate([s_d, p_d], axis=1)
    feat2 = jnp.concatenate([o_d, p_d], axis=1)
    h_s = jnp.maximum(feat1 @ params["ws1"] + params["bs1"], 0.0)
    w_s = jax.nn.sigmoid(h_s @ params["ws2"] + params["bs2"])
    h_o = jnp.maximum(feat2 @ params["wo1"] + params["bo1"], 0.0)
    w_o = jax.nn.sigmoid(h_o @ params["wo2"] + params["bo2"])
    return w_s, w_o


if __name__ == "__main__":
    # Module defaults: feat_dim_in1 = feat_dim_in2 = 256, feat_dim = 128, hidden = 64.
    # N deliberately NOT a multiple of any tile to exercise the ragged-grid path.
    N = 1000
    FEAT_IN1 = 256
    FEAT_IN2 = 256
    FEAT = 128
    HIDDEN = 64

    key = jax.random.PRNGKey(0)
    k_s, k_p, k_o, k_params = jax.random.split(key, 4)

    s = jax.random.normal(k_s, (N, FEAT_IN1), jnp.float32)
    p = jax.random.normal(k_p, (N, FEAT_IN2), jnp.float32)
    o = jax.random.normal(k_o, (N, FEAT_IN1), jnp.float32)

    params = init_params(k_params, FEAT_IN1, FEAT_IN2, FEAT, HIDDEN)

    # 1) Production defaults (tile clamped to N -> single ragged tile here).
    w_s, w_o = weightnet_gcn_forward(s, p, o, params)
    # 2) Multi-tile path: grid_n = 2 with a ragged last block (488 valid rows).
    w_s2, w_o2 = weightnet_gcn_forward(s, p, o, params, tile_n=512)
    jax.block_until_ready((w_s, w_o, w_s2, w_o2))

    # Correctness vs. plain-JAX f32 reference. Outputs are sigmoids in [0, 1],
    # bf16 MXU operands -> absolute tolerance.
    ref_w_s, ref_w_o = reference_forward(s, p, o, params)
    for got, ref in ((w_s, ref_w_s), (w_o, ref_w_o), (w_s2, ref_w_s), (w_o2, ref_w_o)):
        assert got.shape == (N, 1)
        err = float(jnp.max(jnp.abs(got - ref)))
        assert err < 3e-2, f"max abs err {err}"
    print("KERNEL_OK")
</pallas_src>

<mosaic_0001>
module attributes {stable_mosaic.version = 11 : i64} {
  func.func @_weightnet_kernel(%arg0: i32, %arg1: memref<1008x256xf32, #tpu.memory_space<vmem>>, %arg2: memref<1008x256xf32, #tpu.memory_space<vmem>>, %arg3: memref<1008x256xf32, #tpu.memory_space<vmem>>, %arg4: memref<256x128xbf16, #tpu.memory_space<vmem>>, %arg5: memref<256x128xbf16, #tpu.memory_space<vmem>>, %arg6: memref<1x128xf32, #tpu.memory_space<vmem>>, %arg7: memref<1x128xf32, #tpu.memory_space<vmem>>, %arg8: memref<384x128xbf16, #tpu.memory_space<vmem>>, %arg9: memref<1x128xf32, #tpu.memory_space<vmem>>, %arg10: memref<128x2xbf16, #tpu.memory_space<vmem>>, %arg11: memref<1x2xf32, #tpu.memory_space<vmem>>, %arg12: memref<1008x2xf32, #tpu.memory_space<vmem>>) attributes {dimension_semantics = [#tpu.dimension_semantics<parallel>], iteration_bounds = array<i64: 1>, scalar_prefetch = 0 : i64, scratch_operands = 0 : i64, tpu.core_type = #tpu.core_type<tc>, window_params = [{transform_indices = @transform_0, window_bounds = array<i64: 1008, 256>}, {transform_indices = @transform_1, window_bounds = array<i64: 1008, 256>}, {transform_indices = @transform_2, window_bounds = array<i64: 1008, 256>}, {pipeline_mode = #tpu.pipeline_mode<synchronous>, transform_indices = @transform_3, window_bounds = array<i64: 256, 128>}, {pipeline_mode = #tpu.pipeline_mode<synchronous>, transform_indices = @transform_4, window_bounds = array<i64: 256, 128>}, {pipeline_mode = #tpu.pipeline_mode<synchronous>, transform_indices = @transform_5, window_bounds = array<i64: 1, 128>}, {pipeline_mode = #tpu.pipeline_mode<synchronous>, transform_indices = @transform_6, window_bounds = array<i64: 1, 128>}, {pipeline_mode = #tpu.pipeline_mode<synchronous>, transform_indices = @transform_7, window_bounds = array<i64: 384, 128>}, {pipeline_mode = #tpu.pipeline_mode<synchronous>, transform_indices = @transform_8, window_bounds = array<i64: 1, 128>}, {pipeline_mode = #tpu.pipeline_mode<synchronous>, transform_indices = @transform_9, window_bounds = array<i64: 128, 2>}, {pipeline_mode = #tpu.pipeline_mode<synchronous>, transform_indices = @transform_10, window_bounds = array<i64: 1, 2>}, {transform_indices = @transform_11, window_bounds = array<i64: 1008, 2>}]} {
    %c0 = arith.constant 0 : index
    %c0_0 = arith.constant 0 : index
    %0 = vector.load %arg1[%c0, %c0_0] : memref<1008x256xf32, #tpu.memory_space<vmem>>, vector<1008x256xf32>
    %1 = arith.truncf %0 : vector<1008x256xf32> to vector<1008x256xbf16>
    %c0_1 = arith.constant 0 : index
    %c0_2 = arith.constant 0 : index
    %2 = vector.load %arg2[%c0_1, %c0_2] : memref<1008x256xf32, #tpu.memory_space<vmem>>, vector<1008x256xf32>
    %3 = arith.truncf %2 : vector<1008x256xf32> to vector<1008x256xbf16>
    %c0_3 = arith.constant 0 : index
    %c0_4 = arith.constant 0 : index
    %4 = vector.load %arg3[%c0_3, %c0_4] : memref<1008x256xf32, #tpu.memory_space<vmem>>, vector<1008x256xf32>
    %5 = arith.truncf %4 : vector<1008x256xf32> to vector<1008x256xbf16>
    %c0_5 = arith.constant 0 : index
    %c0_6 = arith.constant 0 : index
    %6 = vector.load %arg4[%c0_5, %c0_6] : memref<256x128xbf16, #tpu.memory_space<vmem>>, vector<256x128xbf16>
    %cst = arith.constant dense<0.000000e+00> : vector<1008x128xf32>
    %7 = tpu.matmul %1, %6, %cst {dimension_numbers = #tpu.dot_dimension_numbers<[1], [0], [0], [1], [0, 0, 1, 1], [], []>} : vector<1008x256xbf16>, vector<256x128xbf16>, vector<1008x128xf32> -> vector<1008x128xf32>
    %c0_7 = arith.constant 0 : index
    %c0_8 = arith.constant 0 : index
    %8 = vector.load %arg6[%c0_7, %c0_8] : memref<1x128xf32, #tpu.memory_space<vmem>>, vector<1x128xf32>
    %9 = vector.broadcast %8 : vector<1x128xf32> to vector<1008x128xf32>
    %10 = arith.addf %7, %9 : vector<1008x128xf32>
    %cst_9 = arith.constant dense<0.000000e+00> : vector<1008x128xf32>
    %11 = tpu.matmul %5, %6, %cst_9 {dimension_numbers = #tpu.dot_dimension_numbers<[1], [0], [0], [1], [0, 0, 1, 1], [], []>} : vector<1008x256xbf16>, vector<256x128xbf16>, vector<1008x128xf32> -> vector<1008x128xf32>
    %c0_10 = arith.constant 0 : index
    %c0_11 = arith.constant 0 : index
    %12 = vector.load %arg6[%c0_10, %c0_11] : memref<1x128xf32, #tpu.memory_space<vmem>>, vector<1x128xf32>
    %13 = vector.broadcast %12 : vector<1x128xf32> to vector<1008x128xf32>
    %14 = arith.addf %11, %13 : vector<1008x128xf32>
    %c0_12 = arith.constant 0 : index
    %c0_13 = arith.constant 0 : index
    %15 = vector.load %arg5[%c0_12, %c0_13] : memref<256x128xbf16, #tpu.memory_space<vmem>>, vector<256x128xbf16>
    %cst_14 = arith.constant dense<0.000000e+00> : vector<1008x128xf32>
    %16 = tpu.matmul %3, %15, %cst_14 {dimension_numbers = #tpu.dot_dimension_numbers<[1], [0], [0], [1], [0, 0, 1, 1], [], []>} : vector<1008x256xbf16>, vector<256x128xbf16>, vector<1008x128xf32> -> vector<1008x128xf32>
    %c0_15 = arith.constant 0 : index
    %c0_16 = arith.constant 0 : index
    %17 = vector.load %arg7[%c0_15, %c0_16] : memref<1x128xf32, #tpu.memory_space<vmem>>, vector<1x128xf32>
    %18 = vector.broadcast %17 : vector<1x128xf32> to vector<1008x128xf32>
    %19 = arith.addf %16, %18 : vector<1008x128xf32>
    %20 = tpu.concatenate %10, %14, %19 in 1 : vector<1008x128xf32>, vector<1008x128xf32>, vector<1008x128xf32> -> vector<1008x384xf32>
    %21 = arith.truncf %20 : vector<1008x384xf32> to vector<1008x384xbf16>
    %c0_17 = arith.constant 0 : index
    %c0_18 = arith.constant 0 : index
    %22 = vector.load %arg8[%c0_17, %c0_18] : memref<384x128xbf16, #tpu.memory_space<vmem>>, vector<384x128xbf16>
    %cst_19 = arith.constant dense<0.000000e+00> : vector<1008x128xf32>
    %23 = tpu.matmul %21, %22, %cst_19 {dimension_numbers = #tpu.dot_dimension_numbers<[1], [0], [0], [1], [0, 0, 1, 1], [], []>} : vector<1008x384xbf16>, vector<384x128xbf16>, vector<1008x128xf32> -> vector<1008x128xf32>
    %c0_20 = arith.constant 0 : index
    %c0_21 = arith.constant 0 : index
    %24 = vector.load %arg9[%c0_20, %c0_21] : memref<1x128xf32, #tpu.memory_space<vmem>>, vector<1x128xf32>
    %25 = vector.broadcast %24 : vector<1x128xf32> to vector<1008x128xf32>
    %26 = arith.addf %23, %25 : vector<1008x128xf32>
    %cst_22 = arith.constant 0.000000e+00 : f32
    %27 = vector.broadcast %cst_22 : f32 to vector<1008x128xf32>
    %28 = arith.maximumf %26, %27 : vector<1008x128xf32>
    %29 = arith.truncf %28 : vector<1008x128xf32> to vector<1008x128xbf16>
    %c0_23 = arith.constant 0 : index
    %c0_24 = arith.constant 0 : index
    %30 = vector.load %arg10[%c0_23, %c0_24] : memref<128x2xbf16, #tpu.memory_space<vmem>>, vector<128x2xbf16>
    %cst_25 = arith.constant dense<0.000000e+00> : vector<1008x2xf32>
    %31 = tpu.matmul %29, %30, %cst_25 {dimension_numbers = #tpu.dot_dimension_numbers<[1], [0], [0], [1], [0, 0, 1, 1], [], []>} : vector<1008x128xbf16>, vector<128x2xbf16>, vector<1008x2xf32> -> vector<1008x2xf32>
    %c0_26 = arith.constant 0 : index
    %c0_27 = arith.constant 0 : index
    %32 = vector.load %arg11[%c0_26, %c0_27] : memref<1x2xf32, #tpu.memory_space<vmem>>, vector<1x2xf32>
    %33 = vector.broadcast %32 : vector<1x2xf32> to vector<1008x2xf32>
    %34 = arith.addf %31, %33 : vector<1008x2xf32>
    %35 = arith.negf %34 : vector<1008x2xf32>
    %36 = math.exp %35 : vector<1008x2xf32>
    %cst_28 = arith.constant 1.000000e+00 : f32
    %37 = vector.broadcast %cst_28 : f32 to vector<1008x2xf32>
    %38 = arith.addf %37, %36 : vector<1008x2xf32>
    %39 = arith.divf %37, %38 : vector<1008x2xf32>
    %c0_29 = arith.constant 0 : index
    %c0_30 = arith.constant 0 : index
    %40 = vector.load %arg12[%c0_29, %c0_30] : memref<1008x2xf32, #tpu.memory_space<vmem>>, vector<1008x2xf32>
    tpu.vector_store %arg12[%c0_29, %c0_30], %39 {strides = array<i32>} : memref<1008x2xf32, #tpu.memory_space<vmem>>, vector<1008x2xf32>,
    return
  }
  func.func @transform_0(%arg0: i32) -> (i32, i32) {
    %c0_i32 = arith.constant 0 : i32
    %c0_i32_0 = arith.constant 0 : i32
    return %arg0, %c0_i32 : i32, i32
  }
  func.func @transform_1(%arg0: i32) -> (i32, i32) {
    %c0_i32 = arith.constant 0 : i32
    %c0_i32_0 = arith.constant 0 : i32
    return %arg0, %c0_i32 : i32, i32
  }
  func.func @transform_2(%arg0: i32) -> (i32, i32) {
    %c0_i32 = arith.constant 0 : i32
    %c0_i32_0 = arith.constant 0 : i32
    return %arg0, %c0_i32 : i32, i32
  }
  func.func @transform_3(%arg0: i32) -> (i32, i32) {
    %c0_i32 = arith.constant 0 : i32
    %c0_i32_0 = arith.constant 0 : i32
    %c0_i32_1 = arith.constant 0 : i32
    return %c0_i32, %c0_i32_0 : i32, i32
  }
  func.func @transform_4(%arg0: i32) -> (i32, i32) {
    %c0_i32 = arith.constant 0 : i32
    %c0_i32_0 = arith.constant 0 : i32
    %c0_i32_1 = arith.constant 0 : i32
    return %c0_i32, %c0_i32_0 : i32, i32
  }
  func.func @transform_5(%arg0: i32) -> (i32, i32) {
    %c0_i32 = arith.constant 0 : i32
    %c0_i32_0 = arith.constant 0 : i32
    %c0_i32_1 = arith.constant 0 : i32
    return %c0_i32, %c0_i32_0 : i32, i32
  }
  func.func @transform_6(%arg0: i32) -> (i32, i32) {
    %c0_i32 = arith.constant 0 : i32
    %c0_i32_0 = arith.constant 0 : i32
    %c0_i32_1 = arith.constant 0 : i32
    return %c0_i32, %c0_i32_0 : i32, i32
  }
  func.func @transform_7(%arg0: i32) -> (i32, i32) {
    %c0_i32 = arith.constant 0 : i32
    %c0_i32_0 = arith.constant 0 : i32
    %c0_i32_1 = arith.constant 0 : i32
    return %c0_i32, %c0_i32_0 : i32, i32
  }
  func.func @transform_8(%arg0: i32) -> (i32, i32) {
    %c0_i32 = arith.constant 0 : i32
    %c0_i32_0 = arith.constant 0 : i32
    %c0_i32_1 = arith.constant 0 : i32
    return %c0_i32, %c0_i32_0 : i32, i32
  }
  func.func @transform_9(%arg0: i32) -> (i32, i32) {
    %c0_i32 = arith.constant 0 : i32
    %c0_i32_0 = arith.constant 0 : i32
    %c0_i32_1 = arith.constant 0 : i32
    return %c0_i32, %c0_i32_0 : i32, i32
  }
  func.func @transform_10(%arg0: i32) -> (i32, i32) {
    %c0_i32 = arith.constant 0 : i32
    %c0_i32_0 = arith.constant 0 : i32
    %c0_i32_1 = arith.constant 0 : i32
    return %c0_i32, %c0_i32_0 : i32, i32
  }
  func.func @transform_11(%arg0: i32) -> (i32, i32) {
    %c0_i32 = arith.constant 0 : i32
    %c0_i32_0 = arith.constant 0 : i32
    return %arg0, %c0_i32 : i32, i32
  }
}

</mosaic_0001>

<llo_original>
// kernel: tpu_custom_call.1
$region0: #{tpu_custom_call.1}
  #allocation0 [shape = 'u32[]', space=smem, size = 0x4, offset = 0x4, fixed_abs, tag = 'smem constant byte address 0x4 - core index']
  #allocation1 [shape = 'u32[144,128]{1,0:T(1,128)}', space=vmem, size = 0x12000, scoped, tag = 'internal scratch']
  %s0 = inlined_call_operand.hbm [shape: f32[1000,256], index: 0, kind: input, shape index: {}]
  %s1 = inlined_call_operand.hbm [shape: f32[1000,256], index: 1, kind: input, shape index: {}]
  %s2 = inlined_call_operand.hbm [shape: f32[1000,256], index: 2, kind: input, shape index: {}]
  %s3 = inlined_call_operand.hbm [shape: bf16[256,128], index: 3, kind: input, shape index: {}]
  %s4 = inlined_call_operand.hbm [shape: bf16[256,128], index: 4, kind: input, shape index: {}]
  %s5 = inlined_call_operand.vmem [shape: f32[1,128], index: 5, kind: input, shape index: {}]
  %s6 = inlined_call_operand.vmem [shape: f32[1,128], index: 6, kind: input, shape index: {}]
  %s7 = inlined_call_operand.hbm [shape: bf16[384,128], index: 7, kind: input, shape index: {}]
  %s8 = inlined_call_operand.vmem [shape: f32[1,128], index: 8, kind: input, shape index: {}]
  %s9 = inlined_call_operand.vmem [shape: bf16[128,2], index: 9, kind: input, shape index: {}]
  %s10 = inlined_call_operand.vmem [shape: f32[1,2], index: 10, kind: input, shape index: {}]
  %s11 = inlined_call_operand.vmem [shape: f32[1000,2], index: 11, kind: output, shape index: {}]
  %s12 = sld [smem:[#allocation0]]
  $region112: #{tpu_custom_call.1} parent=0
    _
  %s14 = ssub.s32 1, %s12
  %s15 = scalar_select 0, %s14, %s12
  $region1: #{tpu_custom_call.1} parent=0
    #allocation2 [shape = 'u8[1032192]{0}', space=vmem, size = 0xfc000, scoped, tag = 'input window, operand 0, single buffered']
    #allocation3 [shape = 's32[1]{0}', space=sflag, size = 0x4, scoped, tag = 'scoped memory for tpu_custom_call.1']
    #allocation4 [shape = 'u8[1032192]{0}', space=vmem, size = 0xfc000, scoped, tag = 'input window, operand 1, single buffered']
    #allocation5 [shape = 's32[1]{0}', space=sflag, size = 0x4, scoped, tag = 'scoped memory for tpu_custom_call.1']
    #allocation6 [shape = 'u8[1032192]{0}', space=vmem, size = 0xfc000, scoped, tag = 'input window, operand 2, single buffered']
    #allocation7 [shape = 'u8[65536]{0}', space=vmem, size = 0x10000, scoped, tag = 'input window, operand 3, single buffered']
    #allocation8 [shape = 's32[1]{0}', space=sflag, size = 0x4, scoped, tag = 'scoped memory for tpu_custom_call.1']
    #allocation9 [shape = 'u8[65536]{0}', space=vmem, size = 0x10000, scoped, tag = 'input window, operand 4, single buffered']
    #allocation10 [shape = 'u8[98304]{0}', space=vmem, size = 0x18000, scoped, tag = 'input window, operand 7, single buffered']
    #allocation11 [shape = 's32[1]{0}', space=sflag, size = 0x4, scoped, tag = 'scoped memory for tpu_custom_call.1']
    #allocation12 [shape = 'u8[516096]{0}', space=vmem, size = 0x7e000, scoped, tag = 'output window, operand 0, single buffered']
    %16 = vsyncpa [#allocation3], 0
    %17 = vsyncpa [#allocation5], 0
    %18 = vsyncpa [#allocation8], 0
    %19 = vsyncpa [#allocation11], 0
    // Predicated region
    $region2: #{tpu_custom_call.1} parent=1 // pred_check
      _
    $region3: #{tpu_custom_call.1} parent=1 // pred_check_branch
      %21 = sbr.rel (0) target = $region5
    $region4: #{tpu_custom_call.1} parent=1 // pred_region
      %s23 = ssub.s32 32256, 32000
      %24 = vsyncadd [#allocation3], %s23
      %s25 = sshll.u32 [#allocation2], 4
      %s26 = int_to_ptr.vmem [resolvable:$true] %s25
      %31 = dma.hbm_to_vmem [thread:$0]  %s0, 32000, %s26, [#allocation3], 256, 256, 16
    $region5: #{tpu_custom_call.1} parent=1 // pred_fallthru
      _
    // Predicated region
    $region6: #{tpu_custom_call.1} parent=1 // pred_check
      _
    $region7: #{tpu_custom_call.1} parent=1 // pred_check_branch
      %33 = sbr.rel (0) target = $region9
    $region8: #{tpu_custom_call.1} parent=1 // pred_region
      %s35 = ssub.s32 32256, 32000
      %36 = vsyncadd [#allocation5], %s35
      %s37 = sshll.u32 [#allocation4], 4
      %s38 = int_to_ptr.vmem [resolvable:$true] %s37
      %43 = dma.hbm_to_vmem [thread:$0]  %s1, 32000, %s38, [#allocation5], 256, 256, 16
    $region9: #{tpu_custom_call.1} parent=1 // pred_fallthru
      _
    // Predicated region
    $region10: #{tpu_custom_call.1} parent=1 // pred_check
      _
    $region11: #{tpu_custom_call.1} parent=1 // pred_check_branch
      %45 = sbr.rel (0) target = $region13
    $region12: #{tpu_custom_call.1} parent=1 // pred_region
      %s47 = ssub.s32 32256, 32000
      %48 = vsyncadd [#allocation5], %s47
      %s49 = sshll.u32 [#allocation6], 4
      %s50 = int_to_ptr.vmem [resolvable:$true] %s49
      %55 = dma.hbm_to_vmem [thread:$0]  %s2, 32000, %s50, [#allocation5], 256, 256, 16
    $region13: #{tpu_custom_call.1} parent=1 // pred_fallthru
      _
    // Predicated region
    $region14: #{tpu_custom_call.1} parent=1 // pred_check
      _
    $region15: #{tpu_custom_call.1} parent=1 // pred_check_branch
      %57 = sbr.rel (0) target = $region17
    $region16: #{tpu_custom_call.1} parent=1 // pred_region
      %s59 = ssub.s32 2048, 2048
      %60 = vsyncadd [#allocation8], %s59
      %s61 = sshll.u32 [#allocation7], 4
      %s62 = int_to_ptr.vmem [resolvable:$true] %s61
      %67 = dma.hbm_to_vmem [thread:$0]  %s3, 2048, %s62, [#allocation8], 64, 64, 4
    $region17: #{tpu_custom_call.1} parent=1 // pred_fallthru
      _
    // Predicated region
    $region18: #{tpu_custom_call.1} parent=1 // pred_check
      _
    $region19: #{tpu_custom_call.1} parent=1 // pred_check_branch
      %69 = sbr.rel (0) target = $region21
    $region20: #{tpu_custom_call.1} parent=1 // pred_region
      %s71 = ssub.s32 2048, 2048
      %72 = vsyncadd [#allocation8], %s71
      %s73 = sshll.u32 [#allocation9], 4
      %s74 = int_to_ptr.vmem [resolvable:$true] %s73
      %79 = dma.hbm_to_vmem [thread:$0]  %s4, 2048, %s74, [#allocation8], 64, 64, 4
    $region21: #{tpu_custom_call.1} parent=1 // pred_fallthru
      _
    // Predicated region
    $region22: #{tpu_custom_call.1} parent=1 // pred_check
      _
    $region23: #{tpu_custom_call.1} parent=1 // pred_check_branch
      %81 = sbr.rel (0) target = $region25
    $region24: #{tpu_custom_call.1} parent=1 // pred_region
      _
    $region25: #{tpu_custom_call.1} parent=1 // pred_fallthru
      _
    // Predicated region
    $region26: #{tpu_custom_call.1} parent=1 // pred_check
      _
    $region27: #{tpu_custom_call.1} parent=1 // pred_check_branch
      %83 = sbr.rel (0) target = $region29
    $region28: #{tpu_custom_call.1} parent=1 // pred_region
      _
    $region29: #{tpu_custom_call.1} parent=1 // pred_fallthru
      _
    // Predicated region
    $region30: #{tpu_custom_call.1} parent=1 // pred_check
      _
    $region31: #{tpu_custom_call.1} parent=1 // pred_check_branch
      %85 = sbr.rel (0) target = $region33
    $region32: #{tpu_custom_call.1} parent=1 // pred_region
      %s87 = ssub.s32 3072, 3072
      %88 = vsyncadd [#allocation11], %s87
      %s89 = sshll.u32 [#allocation10], 4
      %s90 = int_to_ptr.vmem [resolvable:$true] %s89
      %95 = dma.hbm_to_vmem [thread:$0]  %s7, 3072, %s90, [#allocation11], 64, 64, 4
    $region33: #{tpu_custom_call.1} parent=1 // pred_fallthru
      _
    // Predicated region
    $region34: #{tpu_custom_call.1} parent=1 // pred_check
      _
    $region35: #{tpu_custom_call.1} parent=1 // pred_check_branch
      %97 = sbr.rel (0) target = $region37
    $region36: #{tpu_custom_call.1} parent=1 // pred_region
      _
    $region37: #{tpu_custom_call.1} parent=1 // pred_fallthru
      _
    // Predicated region
    $region38: #{tpu_custom_call.1} parent=1 // pred_check
      _
    $region39: #{tpu_custom_call.1} parent=1 // pred_check_branch
      %99 = sbr.rel (0) target = $region41
    $region40: #{tpu_custom_call.1} parent=1 // pred_region
      _
    $region41: #{tpu_custom_call.1} parent=1 // pred_fallthru
      _
    // Predicated region
    $region42: #{tpu_custom_call.1} parent=1 // pred_check
      _
    $region43: #{tpu_custom_call.1} parent=1 // pred_check_branch
      %101 = sbr.rel (0) target = $region45
    $region44: #{tpu_custom_call.1} parent=1 // pred_region
      _
    $region45: #{tpu_custom_call.1} parent=1 // pred_fallthru
      _
    // Predicated region
    $region46: #{tpu_custom_call.1} parent=1 // pred_check
      _
    $region47: #{tpu_custom_call.1} parent=1 // pred_check_branch
      %103 = sbr.rel (0) target = $region49
    $region48: #{tpu_custom_call.1} parent=1 // pred_region
      %104 = dma.done [#allocation3], 32256
    $region49: #{tpu_custom_call.1} parent=1 // pred_fallthru
      _
    // Predicated region
    $region50: #{tpu_custom_call.1} parent=1 // pred_check
      _
    $region51: #{tpu_custom_call.1} parent=1 // pred_check_branch
      %106 = sbr.rel (0) target = $region53
    $region52: #{tpu_custom_call.1} parent=1 // pred_region
      %107 = dma.done [#allocation5], 32256
    $region53: #{tpu_custom_call.1} parent=1 // pred_fallthru
      _
    // Predicated region
    $region54: #{tpu_custom_call.1} parent=1 // pred_check
      _
    $region55: #{tpu_custom_call.1} parent=1 // pred_check_branch
      %109 = sbr.rel (0) target = $region57
    $region56: #{tpu_custom_call.1} parent=1 // pred_region
      %110 = dma.done [#allocation5], 32256
    $region57: #{tpu_custom_call.1} parent=1 // pred_fallthru
      _
    // Predicated region
    $region58: #{tpu_custom_call.1} parent=1 // pred_check
      _
    $region59: #{tpu_custom_call.1} parent=1 // pred_check_branch
      %112 = sbr.rel (0) target = $region61
    $region60: #{tpu_custom_call.1} parent=1 // pred_region
      %113 = dma.done [#allocation8], 2048
    $region61: #{tpu_custom_call.1} parent=1 // pred_fallthru
      _
    // Predicated region
    $region62: #{tpu_custom_call.1} parent=1 // pred_check
      _
    $region63: #{tpu_custom_call.1} parent=1 // pred_check_branch
      %115 = sbr.rel (0) target = $region65
    $region64: #{tpu_custom_call.1} parent=1 // pred_region
      %116 = dma.done [#allocation8], 2048
    $region65: #{tpu_custom_call.1} parent=1 // pred_fallthru
      _
    // Predicated region
    $region66: #{tpu_custom_call.1} parent=1 // pred_check
      _
    $region67: #{tpu_custom_call.1} parent=1 // pred_check_branch
      %118 = sbr.rel (0) target = $region69
    $region68: #{tpu_custom_call.1} parent=1 // pred_region
      %119 = dma.done [#allocation11], 3072
    $region69: #{tpu_custom_call.1} parent=1 // pred_fallthru
      _
    %v121 = vld [vmem:[#allocation2] sm:$0xff]
    %v122 = vld [vmem:[#allocation2 + $0x8] sm:$0xff]
    %v123 = vld [vmem:[#allocation2 + $0x10] sm:$0xff]
    %v124 = vld [vmem:[#allocation2 + $0x18] sm:$0xff]
    %v125 = vld [vmem:[#allocation2 + $0x20] sm:$0xff]
    %v126 = vld [vmem:[#allocation2 + $0x28] sm:$0xff]
    %v127 = vld [vmem:[#allocation2 + $0x30] sm:$0xff]
    %v128 = vld [vmem:[#allocation2 + $0x38] sm:$0xff]
    %v129 = vld [vmem:[#allocation2 + $0x40] sm:$0xff]
    %v130 = vld [vmem:[#allocation2 + $0x48] sm:$0xff]
    %v131 = vld [vmem:[#allocation2 + $0x50] sm:$0xff]
    %v132 = vld [vmem:[#allocation2 + $0x58] sm:$0xff]
    %v133 = vld [vmem:[#allocation2 + $0x60] sm:$0xff]
    %v134 = vld [vmem:[#allocation2 + $0x68] sm:$0xff]
    %v135 = vld [vmem:[#allocation2 + $0x70] sm:$0xff]
    %v136 = vld [vmem:[#allocation2 + $0x78] sm:$0xff]
    %v137 = vld [vmem:[#allocation2 + $0x80] sm:$0xff]
    %v138 = vld [vmem:[#allocation2 + $0x88] sm:$0xff]
    %v139 = vld [vmem:[#allocation2 + $0x90] sm:$0xff]
    %v140 = vld [vmem:[#allocation2 + $0x98] sm:$0xff]
    %v141 = vld [vmem:[#allocation2 + $0xa0] sm:$0xff]
    %v142 = vld [vmem:[#allocation2 + $0xa8] sm:$0xff]
    %v143 = vld [vmem:[#allocation2 + $0xb0] sm:$0xff]
    %v144 = vld [vmem:[#allocation2 + $0xb8] sm:$0xff]
    %v145 = vld [vmem:[#allocation2 + $0xc0] sm:$0xff]
    %v146 = vld [vmem:[#allocation2 + $0xc8] sm:$0xff]
    %v147 = vld [vmem:[#allocation2 + $0xd0] sm:$0xff]
    %v148 = vld [vmem:[#allocation2 + $0xd8] sm:$0xff]
    %v149 = vld [vmem:[#allocation2 + $0xe0] sm:$0xff]
    %v150 = vld [vmem:[#allocation2 + $0xe8] sm:$0xff]
    %v151 = vld [vmem:[#allocation2 + $0xf0] sm:$0xff]
    %v152 = vld [vmem:[#allocation2 + $0xf8] sm:$0xff]
    %v153 = vld [vmem:[#allocation2 + $0x100] sm:$0xff]
    %v154 = vld [vmem:[#allocation2 + $0x108] sm:$0xff]
    %v155 = vld [vmem:[#allocation2 + $0x110] sm:$0xff]
    %v156 = vld [vmem:[#allocation2 + $0x118] sm:$0xff]
    %v157 = vld [vmem:[#allocation2 + $0x120] sm:$0xff]
    %v158 = vld [vmem:[#allocation2 + $0x128] sm:$0xff]
    %v159 = vld [vmem:[#allocation2 + $0x130] sm:$0xff]
    %v160 = vld [vmem:[#allocation2 + $0x138] sm:$0xff]
    %v161 = vld [vmem:[#allocation2 + $0x140] sm:$0xff]
    %v162 = vld [vmem:[#allocation2 + $0x148] sm:$0xff]
    %v163 = vld [vmem:[#allocation2 + $0x150] sm:$0xff]
    %v164 = vld [vmem:[#allocation2 + $0x158] sm:$0xff]
    %v165 = vld [vmem:[#allocation2 + $0x160] sm:$0xff]
    %v166 = vld [vmem:[#allocation2 + $0x168] sm:$0xff]
    %v167 = vld [vmem:[#allocation2 + $0x170] sm:$0xff]
    %v168 = vld [vmem:[#allocation2 + $0x178] sm:$0xff]
    %v169 = vld [vmem:[#allocation2 + $0x180] sm:$0xff]
    %v170 = vld [vmem:[#allocation2 + $0x188] sm:$0xff]
    %v171 = vld [vmem:[#allocation2 + $0x190] sm:$0xff]
    %v172 = vld [vmem:[#allocation2 + $0x198] sm:$0xff]
    %v173 = vld [vmem:[#allocation2 + $0x1a0] sm:$0xff]
    %v174 = vld [vmem:[#allocation2 + $0x1a8] sm:$0xff]
    %v175 = vld [vmem:[#allocation2 + $0x1b0] sm:$0xff]
    %v176 = vld [vmem:[#allocation2 + $0x1b8] sm:$0xff]
    %v177 = vld [vmem:[#allocation2 + $0x1c0] sm:$0xff]
    %v178 = vld [vmem:[#allocation2 + $0x1c8] sm:$0xff]
    %v179 = vld [vmem:[#allocation2 + $0x1d0] sm:$0xff]
    %v180 = vld [vmem:[#allocation2 + $0x1d8] sm:$0xff]
    %v181 = vld [vmem:[#allocation2 + $0x1e0] sm:$0xff]
    %v182 = vld [vmem:[#allocation2 + $0x1e8] sm:$0xff]
    %v183 = vld [vmem:[#allocation2 + $0x1f0] sm:$0xff]
    %v184 = vld [vmem:[#allocation2 + $0x1f8] sm:$0xff]
    %v185 = vld [vmem:[#allocation2 + $0x200] sm:$0xff]
    %v186 = vld [vmem:[#allocation2 + $0x208] sm:$0xff]
    %v187 = vld [vmem:[#allocation2 + $0x210] sm:$0xff]
    %v188 = vld [vmem:[#allocation2 + $0x218] sm:$0xff]
    %v189 = vld [vmem:[#allocation2 + $0x220] sm:$0xff]
    %v190 = vld [vmem:[#allocation2 + $0x228] sm:$0xff]
    %v191 = vld [vmem:[#allocation2 + $0x230] sm:$0xff]
    %v192 = vld [vmem:[#allocation2 + $0x238] sm:$0xff]
    %v193 = vld [vmem:[#allocation2 + $0x240] sm:$0xff]
    %v194 = vld [vmem:[#allocation2 + $0x248] sm:$0xff]
    %v195 = vld [vmem:[#allocation2 + $0x250] sm:$0xff]
    %v196 = vld [vmem:[#allocation2 + $0x258] sm:$0xff]
    %v197 = vld [vmem:[#allocation2 + $0x260] sm:$0xff]
    %v198 = vld [vmem:[#allocation2 + $0x268] sm:$0xff]
    %v199 = vld [vmem:[#allocation2 + $0x270] sm:$0xff]
    %v200 = vld [vmem:[#allocation2 + $0x278] sm:$0xff]
    %v201 = vld [vmem:[#allocation2 + $0x280] sm:$0xff]
    %v202 = vld [vmem:[#allocation2 + $0x288] sm:$0xff]
    %v203 = vld [vmem:[#allocation2 + $0x290] sm:$0xff]
    %v204 = vld [vmem:[#allocation2 + $0x298] sm:$0xff]
    %v205 = vld [vmem:[#allocation2 + $0x2a0] sm:$0xff]
    %v206 = vld [vmem:[#allocation2 + $0x2a8] sm:$0xff]
    %v207 = vld [vmem:[#allocation2 + $0x2b0] sm:$0xff]
    %v208 = vld [vmem:[#allocation2 + $0x2b8] sm:$0xff]
    %v209 = vld [vmem:[#allocation2 + $0x2c0] sm:$0xff]
    %v210 = vld [vmem:[#allocation2 + $0x2c8] sm:$0xff]
    %v211 = vld [vmem:[#allocation2 + $0x2d0] sm:$0xff]
    %v212 = vld [vmem:[#allocation2 + $0x2d8] sm:$0xff]
    %v213 = vld [vmem:[#allocation2 + $0x2e0] sm:$0xff]
    %v214 = vld [vmem:[#allocation2 + $0x2e8] sm:$0xff]
    %v215 = vld [vmem:[#allocation2 + $0x2f0] sm:$0xff]
    %v216 = vld [vmem:[#allocation2 + $0x2f8] sm:$0xff]
    %v217 = vld [vmem:[#allocation2 + $0x300] sm:$0xff]
    %v218 = vld [vmem:[#allocation2 + $0x308] sm:$0xff]
    %v219 = vld [vmem:[#allocation2 + $0x310] sm:$0xff]
    %v220 = vld [vmem:[#allocation2 + $0x318] sm:$0xff]
    %v221 = vld [vmem:[#allocation2 + $0x320] sm:$0xff]
    %v222 = vld [vmem:[#allocation2 + $0x328] sm:$0xff]
    %v223 = vld [vmem:[#allocation2 + $0x330] sm:$0xff]
    %v224 = vld [vmem:[#allocation2 + $0x338] sm:$0xff]
    %v225 = vld [vmem:[#allocation2 + $0x340] sm:$0xff]
    %v226 = vld [vmem:[#allocation2 + $0x348] sm:$0xff]
    %v227 = vld [vmem:[#allocation2 + $0x350] sm:$0xff]
    %v228 = vld [vmem:[#allocation2 + $0x358] sm:$0xff]
    %v229 = vld [vmem:[#allocation2 + $0x360] sm:$0xff]
    %v230 = vld [vmem:[#allocation2 + $0x368] sm:$0xff]
    %v231 = vld [vmem:[#allocation2 + $0x370] sm:$0xff]
    %v232 = vld [vmem:[#allocation2 + $0x378] sm:$0xff]
    %v233 = vld [vmem:[#allocation2 + $0x380] sm:$0xff]
    %v234 = vld [vmem:[#allocation2 + $0x388] sm:$0xff]
    %v235 = vld [vmem:[#allocation2 + $0x390] sm:$0xff]
    %v236 = vld [vmem:[#allocation2 + $0x398] sm:$0xff]
    %v237 = vld [vmem:[#allocation2 + $0x3a0] sm:$0xff]
    %v238 = vld [vmem:[#allocation2 + $0x3a8] sm:$0xff]
    %v239 = vld [vmem:[#allocation2 + $0x3b0] sm:$0xff]
    %v240 = vld [vmem:[#allocation2 + $0x3b8] sm:$0xff]
    %v241 = vld [vmem:[#allocation2 + $0x3c0] sm:$0xff]
    %v242 = vld [vmem:[#allocation2 + $0x3c8] sm:$0xff]
    %v243 = vld [vmem:[#allocation2 + $0x3d0] sm:$0xff]
    %v244 = vld [vmem:[#allocation2 + $0x3d8] sm:$0xff]
    %v245 = vld [vmem:[#allocation2 + $0x3e0] sm:$0xff]
    %v246 = vld [vmem:[#allocation2 + $0x3e8] sm:$0xff]
    %v247 = vld [vmem:[#allocation2 + $0x3f0] sm:$0xff]
    %v248 = vld [vmem:[#allocation2 + $0x3f8] sm:$0xff]
    %v249 = vld [vmem:[#allocation2 + $0x400] sm:$0xff]
    %v250 = vld [vmem:[#allocation2 + $0x408] sm:$0xff]
    %v251 = vld [vmem:[#allocation2 + $0x410] sm:$0xff]
    %v252 = vld [vmem:[#allocation2 + $0x418] sm:$0xff]
    %v253 = vld [vmem:[#allocation2 + $0x420] sm:$0xff]
    %v254 = vld [vmem:[#allocation2 + $0x428] sm:$0xff]
    %v255 = vld [vmem:[#allocation2 + $0x430] sm:$0xff]
    %v256 = vld [vmem:[#allocation2 + $0x438] sm:$0xff]
    %v257 = vld [vmem:[#allocation2 + $0x440] sm:$0xff]
    %v258 = vld [vmem:[#allocation2 + $0x448] sm:$0xff]
    %v259 = vld [vmem:[#allocation2 + $0x450] sm:$0xff]
    %v260 = vld [vmem:[#allocation2 + $0x458] sm:$0xff]
    %v261 = vld [vmem:[#allocation2 + $0x460] sm:$0xff]
    %v262 = vld [vmem:[#allocation2 + $0x468] sm:$0xff]
    %v263 = vld [vmem:[#allocation2 + $0x470] sm:$0xff]
    %v264 = vld [vmem:[#allocation2 + $0x478] sm:$0xff]
    %v265 = vld [vmem:[#allocation2 + $0x480] sm:$0xff]
    %v266 = vld [vmem:[#allocation2 + $0x488] sm:$0xff]
    %v267 = vld [vmem:[#allocation2 + $0x490] sm:$0xff]
    %v268 = vld [vmem:[#allocation2 + $0x498] sm:$0xff]
    %v269 = vld [vmem:[#allocation2 + $0x4a0] sm:$0xff]
    %v270 = vld [vmem:[#allocation2 + $0x4a8] sm:$0xff]
    %v271 = vld [vmem:[#allocation2 + $0x4b0] sm:$0xff]
    %v272 = vld [vmem:[#allocation2 + $0x4b8] sm:$0xff]
    %v273 = vld [vmem:[#allocation2 + $0x4c0] sm:$0xff]
    %v274 = vld [vmem:[#allocation2 + $0x4c8] sm:$0xff]
    %v275 = vld [vmem:[#allocation2 + $0x4d0] sm:$0xff]
    %v276 = vld [vmem:[#allocation2 + $0x4d8] sm:$0xff]
    %v277 = vld [vmem:[#allocation2 + $0x4e0] sm:$0xff]
    %v278 = vld [vmem:[#allocation2 + $0x4e8] sm:$0xff]
    %v279 = vld [vmem:[#allocation2 + $0x4f0] sm:$0xff]
    %v280 = vld [vmem:[#allocation2 + $0x4f8] sm:$0xff]
    %v281 = vld [vmem:[#allocation2 + $0x500] sm:$0xff]
    %v282 = vld [vmem:[#allocation2 + $0x508] sm:$0xff]
    %v283 = vld [vmem:[#allocation2 + $0x510] sm:$0xff]
    %v284 = vld [vmem:[#allocation2 + $0x518] sm:$0xff]
    %v285 = vld [vmem:[#allocation2 + $0x520] sm:$0xff]
    %v286 = vld [vmem:[#allocation2 + $0x528] sm:$0xff]
    %v287 = vld [vmem:[#allocation2 + $0x530] sm:$0xff]
    %v288 = vld [vmem:[#allocation2 + $0x538] sm:$0xff]
    %v289 = vld [vmem:[#allocation2 + $0x540] sm:$0xff]
    %v290 = vld [vmem:[#allocation2 + $0x548] sm:$0xff]
    %v291 = vld [vmem:[#allocation2 + $0x550] sm:$0xff]
    %v292 = vld [vmem:[#allocation2 + $0x558] sm:$0xff]
    %v293 = vld [vmem:[#allocation2 + $0x560] sm:$0xff]
    %v294 = vld [vmem:[#allocation2 + $0x568] sm:$0xff]
    %v295 = vld [vmem:[#allocation2 + $0x570] sm:$0xff]
    %v296 = vld [vmem:[#allocation2 + $0x578] sm:$0xff]
    %v297 = vld [vmem:[#allocation2 + $0x580] sm:$0xff]
    %v298 = vld [vmem:[#allocation2 + $0x588] sm:$0xff]
    %v299 = vld [vmem:[#allocation2 + $0x590] sm:$0xff]
    %v300 = vld [vmem:[#allocation2 + $0x598] sm:$0xff]
    %v301 = vld [vmem:[#allocation2 + $0x5a0] sm:$0xff]
    %v302 = vld [vmem:[#allocation2 + $0x5a8] sm:$0xff]
    %v303 = vld [vmem:[#allocation2 + $0x5b0] sm:$0xff]
    %v304 = vld [vmem:[#allocation2 + $0x5b8] sm:$0xff]
    %v305 = vld [vmem:[#allocation2 + $0x5c0] sm:$0xff]
    %v306 = vld [vmem:[#allocation2 + $0x5c8] sm:$0xff]
    %v307 = vld [vmem:[#allocation2 + $0x5d0] sm:$0xff]
    %v308 = vld [vmem:[#allocation2 + $0x5d8] sm:$0xff]
    %v309 = vld [vmem:[#allocation2 + $0x5e0] sm:$0xff]
    %v310 = vld [vmem:[#allocation2 + $0x5e8] sm:$0xff]
    %v311 = vld [vmem:[#allocation2 + $0x5f0] sm:$0xff]
    %v312 = vld [vmem:[#allocation2 + $0x5f8] sm:$0xff]
    %v313 = vld [vmem:[#allocation2 + $0x600] sm:$0xff]
    %v314 = vld [vmem:[#allocation2 + $0x608] sm:$0xff]
    %v315 = vld [vmem:[#allocation2 + $0x610] sm:$0xff]
    %v316 = vld [vmem:[#allocation2 + $0x618] sm:$0xff]
    %v317 = vld [vmem:[#allocation2 + $0x620] sm:$0xff]
    %v318 = vld [vmem:[#allocation2 + $0x628] sm:$0xff]
    %v319 = vld [vmem:[#allocation2 + $0x630] sm:$0xff]
    %v320 = vld [vmem:[#allocation2 + $0x638] sm:$0xff]
    %v321 = vld [vmem:[#allocation2 + $0x640] sm:$0xff]
    %v322 = vld [vmem:[#allocation2 + $0x648] sm:$0xff]
    %v323 = vld [vmem:[#allocation2 + $0x650] sm:$0xff]
    %v324 = vld [vmem:[#allocation2 + $0x658] sm:$0xff]
    %v325 = vld [vmem:[#allocation2 + $0x660] sm:$0xff]
    %v326 = vld [vmem:[#allocation2 + $0x668] sm:$0xff]
    %v327 = vld [vmem:[#allocation2 + $0x670] sm:$0xff]
    %v328 = vld [vmem:[#allocation2 + $0x678] sm:$0xff]
    %v329 = vld [vmem:[#allocation2 + $0x680] sm:$0xff]
    %v330 = vld [vmem:[#allocation2 + $0x688] sm:$0xff]
    %v331 = vld [vmem:[#allocation2 + $0x690] sm:$0xff]
    %v332 = vld [vmem:[#allocation2 + $0x698] sm:$0xff]
    %v333 = vld [vmem:[#allocation2 + $0x6a0] sm:$0xff]
    %v334 = vld [vmem:[#allocation2 + $0x6a8] sm:$0xff]
    %v335 = vld [vmem:[#allocation2 + $0x6b0] sm:$0xff]
    %v336 = vld [vmem:[#allocation2 + $0x6b8] sm:$0xff]
    %v337 = vld [vmem:[#allocation2 + $0x6c0] sm:$0xff]
    %v338 = vld [vmem:[#allocation2 + $0x6c8] sm:$0xff]
    %v339 = vld [vmem:[#allocation2 + $0x6d0] sm:$0xff]
    %v340 = vld [vmem:[#allocation2 + $0x6d8] sm:$0xff]
    %v341 = vld [vmem:[#allocation2 + $0x6e0] sm:$0xff]
    %v342 = vld [vmem:[#allocation2 + $0x6e8] sm:$0xff]
    %v343 = vld [vmem:[#allocation2 + $0x6f0] sm:$0xff]
    %v344 = vld [vmem:[#allocation2 + $0x6f8] sm:$0xff]
    %v345 = vld [vmem:[#allocation2 + $0x700] sm:$0xff]
    %v346 = vld [vmem:[#allocation2 + $0x708] sm:$0xff]
    %v347 = vld [vmem:[#allocation2 + $0x710] sm:$0xff]
    %v348 = vld [vmem:[#allocation2 + $0x718] sm:$0xff]
    %v349 = vld [vmem:[#allocation2 + $0x720] sm:$0xff]
    %v350 = vld [vmem:[#allocation2 + $0x728] sm:$0xff]
    %v351 = vld [vmem:[#allocation2 + $0x730] sm:$0xff]
    %v352 = vld [vmem:[#allocation2 + $0x738] sm:$0xff]
    %v353 = vld [vmem:[#allocation2 + $0x740] sm:$0xff]
    %v354 = vld [vmem:[#allocation2 + $0x748] sm:$0xff]
    %v355 = vld [vmem:[#allocation2 + $0x750] sm:$0xff]
    %v356 = vld [vmem:[#allocation2 + $0x758] sm:$0xff]
    %v357 = vld [vmem:[#allocation2 + $0x760] sm:$0xff]
    %v358 = vld [vmem:[#allocation2 + $0x768] sm:$0xff]
    %v359 = vld [vmem:[#allocation2 + $0x770] sm:$0xff]
    %v360 = vld [vmem:[#allocation2 + $0x778] sm:$0xff]
    %v361 = vld [vmem:[#allocation2 + $0x780] sm:$0xff]
    %v362 = vld [vmem:[#allocation2 + $0x788] sm:$0xff]
    %v363 = vld [vmem:[#allocation2 + $0x790] sm:$0xff]
    %v364 = vld [vmem:[#allocation2 + $0x798] sm:$0xff]
    %v365 = vld [vmem:[#allocation2 + $0x7a0] sm:$0xff]
    %v366 = vld [vmem:[#allocation2 + $0x7a8] sm:$0xff]
    %v367 = vld [vmem:[#allocation2 + $0x7b0] sm:$0xff]
    %v368 = vld [vmem:[#allocation2 + $0x7b8] sm:$0xff]
    %v369 = vld [vmem:[#allocation2 + $0x7c0] sm:$0xff]
    %v370 = vld [vmem:[#allocation2 + $0x7c8] sm:$0xff]
    %v371 = vld [vmem:[#allocation2 + $0x7d0] sm:$0xff]
    %v372 = vld [vmem:[#allocation2 + $0x7d8] sm:$0xff]
    %v373 = vpack.c.bf16 %v123, %v121
    %v374 = vpack.c.bf16 %v124, %v122
    %v375 = vpack.c.bf16 %v127, %v125
    %v376 = vpack.c.bf16 %v128, %v126
    %v377 = vpack.c.bf16 %v131, %v129
    %v378 = vpack.c.bf16 %v132, %v130
    %v379 = vpack.c.bf16 %v135, %v133
    %v380 = vpack.c.bf16 %v136, %v134
    %v381 = vpack.c.bf16 %v139, %v137
    %v382 = vpack.c.bf16 %v140, %v138
    %v383 = vpack.c.bf16 %v143, %v141
    %v384 = vpack.c.bf16 %v144, %v142
    %v385 = vpack.c.bf16 %v147, %v145
    %v386 = vpack.c.bf16 %v148, %v146
    %v387 = vpack.c.bf16 %v151, %v149
    %v388 = vpack.c.bf16 %v152, %v150
    %v389 = vpack.c.bf16 %v155, %v153
    %v390 = vpack.c.bf16 %v156, %v154
    %v391 = vpack.c.bf16 %v159, %v157
    %v392 = vpack.c.bf16 %v160, %v158
    %v393 = vpack.c.bf16 %v163, %v161
    %v394 = vpack.c.bf16 %v164, %v162
    %v395 = vpack.c.bf16 %v167, %v165
    %v396 = vpack.c.bf16 %v168, %v166
    %v397 = vpack.c.bf16 %v171, %v169
    %v398 = vpack.c.bf16 %v172, %v170
    %v399 = vpack.c.bf16 %v175, %v173
    %v400 = vpack.c.bf16 %v176, %v174
    %v401 = vpack.c.bf16 %v179, %v177
    %v402 = vpack.c.bf16 %v180, %v178
    %v403 = vpack.c.bf16 %v183, %v181
    %v404 = vpack.c.bf16 %v184, %v182
    %v405 = vpack.c.bf16 %v187, %v185
    %v406 = vpack.c.bf16 %v188, %v186
    %v407 = vpack.c.bf16 %v191, %v189
    %v408 = vpack.c.bf16 %v192, %v190
    %v409 = vpack.c.bf16 %v195, %v193
    %v410 = vpack.c.bf16 %v196, %v194
    %v411 = vpack.c.bf16 %v199, %v197
    %v412 = vpack.c.bf16 %v200, %v198
    %v413 = vpack.c.bf16 %v203, %v201
    %v414 = vpack.c.bf16 %v204, %v202
    %v415 = vpack.c.bf16 %v207, %v205
    %v416 = vpack.c.bf16 %v208, %v206
    %v417 = vpack.c.bf16 %v211, %v209
    %v418 = vpack.c.bf16 %v212, %v210
    %v419 = vpack.c.bf16 %v215, %v213
    %v420 = vpack.c.bf16 %v216, %v214
    %v421 = vpack.c.bf16 %v219, %v217
    %v422 = vpack.c.bf16 %v220, %v218
    %v423 = vpack.c.bf16 %v223, %v221
    %v424 = vpack.c.bf16 %v224, %v222
    %v425 = vpack.c.bf16 %v227, %v225
    %v426 = vpack.c.bf16 %v228, %v226
    %v427 = vpack.c.bf16 %v231, %v229
    %v428 = vpack.c.bf16 %v232, %v230
    %v429 = vpack.c.bf16 %v235, %v233
    %v430 = vpack.c.bf16 %v236, %v234
    %v431 = vpack.c.bf16 %v239, %v237
    %v432 = vpack.c.bf16 %v240, %v238
    %v433 = vpack.c.bf16 %v243, %v241
    %v434 = vpack.c.bf16 %v244, %v242
    %v435 = vpack.c.bf16 %v247, %v245
    %v436 = vpack.c.bf16 %v248, %v246
    %v437 = vpack.c.bf16 %v251, %v249
    %v438 = vpack.c.bf16 %v252, %v250
    %v439 = vpack.c.bf16 %v255, %v253
    %v440 = vpack.c.bf16 %v256, %v254
    %v441 = vpack.c.bf16 %v259, %v257
    %v442 = vpack.c.bf16 %v260, %v258
    %v443 = vpack.c.bf16 %v263, %v261
    %v444 = vpack.c.bf16 %v264, %v262
    %v445 = vpack.c.bf16 %v267, %v265
    %v446 = vpack.c.bf16 %v268, %v266
    %v447 = vpack.c.bf16 %v271, %v269
    %v448 = vpack.c.bf16 %v272, %v270
    %v449 = vpack.c.bf16 %v275, %v273
    %v450 = vpack.c.bf16 %v276, %v274
    %v451 = vpack.c.bf16 %v279, %v277
    %v452 = vpack.c.bf16 %v280, %v278
    %v453 = vpack.c.bf16 %v283, %v281
    %v454 = vpack.c.bf16 %v284, %v282
    %v455 = vpack.c.bf16 %v287, %v285
    %v456 = vpack.c.bf16 %v288, %v286
    %v457 = vpack.c.bf16 %v291, %v289
    %v458 = vpack.c.bf16 %v292, %v290
    %v459 = vpack.c.bf16 %v295, %v293
    %v460 = vpack.c.bf16 %v296, %v294
    %v461 = vpack.c.bf16 %v299, %v297
    %v462 = vpack.c.bf16 %v300, %v298
    %v463 = vpack.c.bf16 %v303, %v301
    %v464 = vpack.c.bf16 %v304, %v302
    %v465 = vpack.c.bf16 %v307, %v305
    %v466 = vpack.c.bf16 %v308, %v306
    %v467 = vpack.c.bf16 %v311, %v309
    %v468 = vpack.c.bf16 %v312, %v310
    %v469 = vpack.c.bf16 %v315, %v313
    %v470 = vpack.c.bf16 %v316, %v314
    %v471 = vpack.c.bf16 %v319, %v317
    %v472 = vpack.c.bf16 %v320, %v318
    %v473 = vpack.c.bf16 %v323, %v321
    %v474 = vpack.c.bf16 %v324, %v322
    %v475 = vpack.c.bf16 %v327, %v325
    %v476 = vpack.c.bf16 %v328, %v326
    %v477 = vpack.c.bf16 %v331, %v329
    %v478 = vpack.c.bf16 %v332, %v330
    %v479 = vpack.c.bf16 %v335, %v333
    %v480 = vpack.c.bf16 %v336, %v334
    %v481 = vpack.c.bf16 %v339, %v337
    %v482 = vpack.c.bf16 %v340, %v338
    %v483 = vpack.c.bf16 %v343, %v341
    %v484 = vpack.c.bf16 %v344, %v342
    %v485 = vpack.c.bf16 %v347, %v345
    %v486 = vpack.c.bf16 %v348, %v346
    %v487 = vpack.c.bf16 %v351, %v349
    %v488 = vpack.c.bf16 %v352, %v350
    %v489 = vpack.c.bf16 %v355, %v353
    %v490 = vpack.c.bf16 %v356, %v354
    %v491 = vpack.c.bf16 %v359, %v357
    %v492 = vpack.c.bf16 %v360, %v358
    %v493 = vpack.c.bf16 %v363, %v361
    %v494 = vpack.c.bf16 %v364, %v362
    %v495 = vpack.c.bf16 %v367, %v365
    %v496 = vpack.c.bf16 %v368, %v366
    %v497 = vpack.c.bf16 %v371, %v369
    %v498 = vpack.c.bf16 %v372, %v370
    %v499 = vld [vmem:[#allocation4] sm:$0xff]
    %v500 = vld [vmem:[#allocation4 + $0x8] sm:$0xff]
    %v501 = vld [vmem:[#allocation4 + $0x10] sm:$0xff]
    %v502 = vld [vmem:[#allocation4 + $0x18] sm:$0xff]
    %v503 = vld [vmem:[#allocation4 + $0x20] sm:$0xff]
    %v504 = vld [vmem:[#allocation4 + $0x28] sm:$0xff]
    %v505 = vld [vmem:[#allocation4 + $0x30] sm:$0xff]
    %v506 = vld [vmem:[#allocation4 + $0x38] sm:$0xff]
    %v507 = vld [vmem:[#allocation4 + $0x40] sm:$0xff]
    %v508 = vld [vmem:[#allocation4 + $0x48] sm:$0xff]
    %v509 = vld [vmem:[#allocation4 + $0x50] sm:$0xff]
    %v510 = vld [vmem:[#allocation4 + $0x58] sm:$0xff]
    %v511 = vld [vmem:[#allocation4 + $0x60] sm:$0xff]
    %v512 = vld [vmem:[#allocation4 + $0x68] sm:$0xff]
    %v513 = vld [vmem:[#allocation4 + $0x70] sm:$0xff]
    %v514 = vld [vmem:[#allocation4 + $0x78] sm:$0xff]
    %v515 = vld [vmem:[#allocation4 + $0x80] sm:$0xff]
    %v516 = vld [vmem:[#allocation4 + $0x88] sm:$0xff]
    %v517 = vld [vmem:[#allocation4 + $0x90] sm:$0xff]
    %v518 = vld [vmem:[#allocation4 + $0x98] sm:$0xff]
    %v519 = vld [vmem:[#allocation4 + $0xa0] sm:$0xff]
    %v520 = vld [vmem:[#allocation4 + $0xa8] sm:$0xff]
    %v521 = vld [vmem:[#allocation4 + $0xb0] sm:$0xff]
    %v522 = vld [vmem:[#allocation4 + $0xb8] sm:$0xff]
    %v523 = vld [vmem:[#allocation4 + $0xc0] sm:$0xff]
    %v524 = vld [vmem:[#allocation4 + $0xc8] sm:$0xff]
    %v525 = vld [vmem:[#allocation4 + $0xd0] sm:$0xff]
    %v526 = vld [vmem:[#allocation4 + $0xd8] sm:$0xff]
    %v527 = vld [vmem:[#allocation4 + $0xe0] sm:$0xff]
    %v528 = vld [vmem:[#allocation4 + $0xe8] sm:$0xff]
    %v529 = vld [vmem:[#allocation4 + $0xf0] sm:$0xff]
    %v530 = vld [vmem:[#allocation4 + $0xf8] sm:$0xff]
    %v531 = vld [vmem:[#allocation4 + $0x100] sm:$0xff]
    %v532 = vld [vmem:[#allocation4 + $0x108] sm:$0xff]
    %v533 = vld [vmem:[#allocation4 + $0x110] sm:$0xff]
    %v534 = vld [vmem:[#allocation4 + $0x118] sm:$0xff]
    %v535 = vld [vmem:[#allocation4 + $0x120] sm:$0xff]
    %v536 = vld [vmem:[#allocation4 + $0x128] sm:$0xff]
    %v537 = vld [vmem:[#allocation4 + $0x130] sm:$0xff]
    %v538 = vld [vmem:[#allocation4 + $0x138] sm:$0xff]
    %v539 = vld [vmem:[#allocation4 + $0x140] sm:$0xff]
    %v540 = vld [vmem:[#allocation4 + $0x148] sm:$0xff]
    %v541 = vld [vmem:[#allocation4 + $0x150] sm:$0xff]
    %v542 = vld [vmem:[#allocation4 + $0x158] sm:$0xff]
    %v543 = vld [vmem:[#allocation4 + $0x160] sm:$0xff]
    %v544 = vld [vmem:[#allocation4 + $0x168] sm:$0xff]
    %v545 = vld [vmem:[#allocation4 + $0x170] sm:$0xff]
    %v546 = vld [vmem:[#allocation4 + $0x178] sm:$0xff]
    %v547 = vld [vmem:[#allocation4 + $0x180] sm:$0xff]
    %v548 = vld [vmem:[#allocation4 + $0x188] sm:$0xff]
    %v549 = vld [vmem:[#allocation4 + $0x190] sm:$0xff]
    %v550 = vld [vmem:[#allocation4 + $0x198] sm:$0xff]
    %v551 = vld [vmem:[#allocation4 + $0x1a0] sm:$0xff]
    %v552 = vld [vmem:[#allocation4 + $0x1a8] sm:$0xff]
    %v553 = vld [vmem:[#allocation4 + $0x1b0] sm:$0xff]
    %v554 = vld [vmem:[#allocation4 + $0x1b8] sm:$0xff]
    %v555 = vld [vmem:[#allocation4 + $0x1c0] sm:$0xff]
    %v556 = vld [vmem:[#allocation4 + $0x1c8] sm:$0xff]
    %v557 = vld [vmem:[#allocation4 + $0x1d0] sm:$0xff]
    %v558 = vld [vmem:[#allocation4 + $0x1d8] sm:$0xff]
    %v559 = vld [vmem:[#allocation4 + $0x1e0] sm:$0xff]
    %v560 = vld [vmem:[#allocation4 + $0x1e8] sm:$0xff]
    %v561 = vld [vmem:[#allocation4 + $0x1f0] sm:$0xff]
    %v562 = vld [vmem:[#allocation4 + $0x1f8] sm:$0xff]
    %v563 = vld [vmem:[#allocation4 + $0x200] sm:$0xff]
    %v564 = vld [vmem:[#allocation4 + $0x208] sm:$0xff]
    %v565 = vld [vmem:[#allocation4 + $0x210] sm:$0xff]
    %v566 = vld [vmem:[#allocation4 + $0x218] sm:$0xff]
    %v567 = vld [vmem:[#allocation4 + $0x220] sm:$0xff]
    %v568 = vld [vmem:[#allocation4 + $0x228] sm:$0xff]
    %v569 = vld [vmem:[#allocation4 + $0x230] sm:$0xff]
    %v570 = vld [vmem:[#allocation4 + $0x238] sm:$0xff]
    %v571 = vld [vmem:[#allocation4 + $0x240] sm:$0xff]
    %v572 = vld [vmem:[#allocation4 + $0x248] sm:$0xff]
    %v573 = vld [vmem:[#allocation4 + $0x250] sm:$0xff]
    %v574 = vld [vmem:[#allocation4 + $0x258] sm:$0xff]
    %v575 = vld [vmem:[#allocation4 + $0x260] sm:$0xff]
    %v576 = vld [vmem:[#allocation4 + $0x268] sm:$0xff]
    %v577 = vld [vmem:[#allocation4 + $0x270] sm:$0xff]
    %v578 = vld [vmem:[#allocation4 + $0x278] sm:$0xff]
    %v579 = vld [vmem:[#allocation4 + $0x280] sm:$0xff]
    %v580 = vld [vmem:[#allocation4 + $0x288] sm:$0xff]
    %v581 = vld [vmem:[#allocation4 + $0x290] sm:$0xff]
    %v582 = vld [vmem:[#allocation4 + $0x298] sm:$0xff]
    %v583 = vld [vmem:[#allocation4 + $0x2a0] sm:$0xff]
    %v584 = vld [vmem:[#allocation4 + $0x2a8] sm:$0xff]
    %v585 = vld [vmem:[#allocation4 + $0x2b0] sm:$0xff]
    %v586 = vld [vmem:[#allocation4 + $0x2b8] sm:$0xff]
    %v587 = vld [vmem:[#allocation4 + $0x2c0] sm:$0xff]
    %v588 = vld [vmem:[#allocation4 + $0x2c8] sm:$0xff]
    %v589 = vld [vmem:[#allocation4 + $0x2d0] sm:$0xff]
    %v590 = vld [vmem:[#allocation4 + $0x2d8] sm:$0xff]
    %v591 = vld [vmem:[#allocation4 + $0x2e0] sm:$0xff]
    %v592 = vld [vmem:[#allocation4 + $0x2e8] sm:$0xff]
    %v593 = vld [vmem:[#allocation4 + $0x2f0] sm:$0xff]
    %v594 = vld [vmem:[#allocation4 + $0x2f8] sm:$0xff]
    %v595 = vld [vmem:[#allocation4 + $0x300] sm:$0xff]
    %v596 = vld [vmem:[#allocation4 + $0x308] sm:$0xff]
    %v597 = vld [vmem:[#allocation4 + $0x310] sm:$0xff]
    %v598 = vld [vmem:[#allocation4 + $0x318] sm:$0xff]
    %v599 = vld [vmem:[#allocation4 + $0x320] sm:$0xff]
    %v600 = vld [vmem:[#allocation4 + $0x328] sm:$0xff]
    %v601 = vld [vmem:[#allocation4 + $0x330] sm:$0xff]
    %v602 = vld [vmem:[#allocation4 + $0x338] sm:$0xff]
    %v603 = vld [vmem:[#allocation4 + $0x340] sm:$0xff]
    %v604 = vld [vmem:[#allocation4 + $0x348] sm:$0xff]
    %v605 = vld [vmem:[#allocation4 + $0x350] sm:$0xff]
    %v606 = vld [vmem:[#allocation4 + $0x358] sm:$0xff]
    %v607 = vld [vmem:[#allocation4 + $0x360] sm:$0xff]
    %v608 = vld [vmem:[#allocation4 + $0x368] sm:$0xff]
    %v609 = vld [vmem:[#allocation4 + $0x370] sm:$0xff]
    %v610 = vld [vmem:[#allocation4 + $0x378] sm:$0xff]
    %v611 = vld [vmem:[#allocation4 + $0x380] sm:$0xff]
    %v612 = vld [vmem:[#allocation4 + $0x388] sm:$0xff]
    %v613 = vld [vmem:[#allocation4 + $0x390] sm:$0xff]
    %v614 = vld [vmem:[#allocation4 + $0x398] sm:$0xff]
    %v615 = vld [vmem:[#allocation4 + $0x3a0] sm:$0xff]
    %v616 = vld [vmem:[#allocation4 + $0x3a8] sm:$0xff]
    %v617 = vld [vmem:[#allocation4 + $0x3b0] sm:$0xff]
    %v618 = vld [vmem:[#allocation4 + $0x3b8] sm:$0xff]
    %v619 = vld [vmem:[#allocation4 + $0x3c0] sm:$0xff]
    %v620 = vld [vmem:[#allocation4 + $0x3c8] sm:$0xff]
    %v621 = vld [vmem:[#allocation4 + $0x3d0] sm:$0xff]
    %v622 = vld [vmem:[#allocation4 + $0x3d8] sm:$0xff]
    %v623 = vld [vmem:[#allocation4 + $0x3e0] sm:$0xff]
    %v624 = vld [vmem:[#allocation4 + $0x3e8] sm:$0xff]
    %v625 = vld [vmem:[#allocation4 + $0x3f0] sm:$0xff]
    %v626 = vld [vmem:[#allocation4 + $0x3f8] sm:$0xff]
    %v627 = vld [vmem:[#allocation4 + $0x400] sm:$0xff]
    %v628 = vld [vmem:[#allocation4 + $0x408] sm:$0xff]
    %v629 = vld [vmem:[#allocation4 + $0x410] sm:$0xff]
    %v630 = vld [vmem:[#allocation4 + $0x418] sm:$0xff]
    %v631 = vld [vmem:[#allocation4 + $0x420] sm:$0xff]
    %v632 = vld [vmem:[#allocation4 + $0x428] sm:$0xff]
    %v633 = vld [vmem:[#allocation4 + $0x430] sm:$0xff]
    %v634 = vld [vmem:[#allocation4 + $0x438] sm:$0xff]
    %v635 = vld [vmem:[#allocation4 + $0x440] sm:$0xff]
    %v636 = vld [vmem:[#allocation4 + $0x448] sm:$0xff]
    %v637 = vld [vmem:[#allocation4 + $0x450] sm:$0xff]
    %v638 = vld [vmem:[#allocation4 + $0x458] sm:$0xff]
    %v639 = vld [vmem:[#allocation4 + $0x460] sm:$0xff]
    %v640 = vld [vmem:[#allocation4 + $0x468] sm:$0xff]
    %v641 = vld [vmem:[#allocation4 + $0x470] sm:$0xff]
    %v642 = vld [vmem:[#allocation4 + $0x478] sm:$0xff]
    %v643 = vld [vmem:[#allocation4 + $0x480] sm:$0xff]
    %v644 = vld [vmem:[#allocation4 + $0x488] sm:$0xff]
    %v645 = vld [vmem:[#allocation4 + $0x490] sm:$0xff]
    %v646 = vld [vmem:[#allocation4 + $0x498] sm:$0xff]
    %v647 = vld [vmem:[#allocation4 + $0x4a0] sm:$0xff]
    %v648 = vld [vmem:[#allocation4 + $0x4a8] sm:$0xff]
    %v649 = vld [vmem:[#allocation4 + $0x4b0] sm:$0xff]
    %v650 = vld [vmem:[#allocation4 + $0x4b8] sm:$0xff]
    %v651 = vld [vmem:[#allocation4 + $0x4c0] sm:$0xff]
    %v652 = vld [vmem:[#allocation4 + $0x4c8] sm:$0xff]
    %v653 = vld [vmem:[#allocation4 + $0x4d0] sm:$0xff]
    %v654 = vld [vmem:[#allocation4 + $0x4d8] sm:$0xff]
    %v655 = vld [vmem:[#allocation4 + $0x4e0] sm:$0xff]
    %v656 = vld [vmem:[#allocation4 + $0x4e8] sm:$0xff]
    %v657 = vld [vmem:[#allocation4 + $0x4f0] sm:$0xff]
    %v658 = vld [vmem:[#allocation4 + $0x4f8] sm:$0xff]
    %v659 = vld [vmem:[#allocation4 + $0x500] sm:$0xff]
    %v660 = vld [vmem:[#allocation4 + $0x508] sm:$0xff]
    %v661 = vld [vmem:[#allocation4 + $0x510] sm:$0xff]
    %v662 = vld [vmem:[#allocation4 + $0x518] sm:$0xff]
    %v663 = vld [vmem:[#allocation4 + $0x520] sm:$0xff]
    %v664 = vld [vmem:[#allocation4 + $0x528] sm:$0xff]
    %v665 = vld [vmem:[#allocation4 + $0x530] sm:$0xff]
    %v666 = vld [vmem:[#allocation4 + $0x538] sm:$0xff]
    %v667 = vld [vmem:[#allocation4 + $0x540] sm:$0xff]
    %v668 = vld [vmem:[#allocation4 + $0x548] sm:$0xff]
    %v669 = vld [vmem:[#allocation4 + $0x550] sm:$0xff]
    %v670 = vld [vmem:[#allocation4 + $0x558] sm:$0xff]
    %v671 = vld [vmem:[#allocation4 + $0x560] sm:$0xff]
    %v672 = vld [vmem:[#allocation4 + $0x568] sm:$0xff]
    %v673 = vld [vmem:[#allocation4 + $0x570] sm:$0xff]
    %v674 = vld [vmem:[#allocation4 + $0x578] sm:$0xff]
    %v675 = vld [vmem:[#allocation4 + $0x580] sm:$0xff]
    %v676 = vld [vmem:[#allocation4 + $0x588] sm:$0xff]
    %v677 = vld [vmem:[#allocation4 + $0x590] sm:$0xff]
    %v678 = vld [vmem:[#allocation4 + $0x598] sm:$0xff]
    %v679 = vld [vmem:[#allocation4 + $0x5a0] sm:$0xff]
    %v680 = vld [vmem:[#allocation4 + $0x5a8] sm:$0xff]
    %v681 = vld [vmem:[#allocation4 + $0x5b0] sm:$0xff]
    %v682 = vld [vmem:[#allocation4 + $0x5b8] sm:$0xff]
    %v683 = vld [vmem:[#allocation4 + $0x5c0] sm:$0xff]
    %v684 = vld [vmem:[#allocation4 + $0x5c8] sm:$0xff]
    %v685 = vld [vmem:[#allocation4 + $0x5d0] sm:$0xff]
    %v686 = vld [vmem:[#allocation4 + $0x5d8] sm:$0xff]
    %v687 = vld [vmem:[#allocation4 + $0x5e0] sm:$0xff]
    %v688 = vld [vmem:[#allocation4 + $0x5e8] sm:$0xff]
    %v689 = vld [vmem:[#allocation4 + $0x5f0] sm:$0xff]
    %v690 = vld [vmem:[#allocation4 + $0x5f8] sm:$0xff]
    %v691 = vld [vmem:[#allocation4 + $0x600] sm:$0xff]
    %v692 = vld [vmem:[#allocation4 + $0x608] sm:$0xff]
    %v693 = vld [vmem:[#allocation4 + $0x610] sm:$0xff]
    %v694 = vld [vmem:[#allocation4 + $0x618] sm:$0xff]
    %v695 = vld [vmem:[#allocation4 + $0x620] sm:$0xff]
    %v696 = vld [vmem:[#allocation4 + $0x628] sm:$0xff]
    %v697 = vld [vmem:[#allocation4 + $0x630] sm:$0xff]
    %v698 = vld [vmem:[#allocation4 + $0x638] sm:$0xff]
    %v699 = vld [vmem:[#allocation4 + $0x640] sm:$0xff]
    %v700 = vld [vmem:[#allocation4 + $0x648] sm:$0xff]
    %v701 = vld [vmem:[#allocation4 + $0x650] sm:$0xff]
    %v702 = vld [vmem:[#allocation4 + $0x658] sm:$0xff]
    %v703 = vld [vmem:[#allocation4 + $0x660] sm:$0xff]
    %v704 = vld [vmem:[#allocation4 + $0x668] sm:$0xff]
    %v705 = vld [vmem:[#allocation4 + $0x670] sm:$0xff]
    %v706 = vld [vmem:[#allocation4 + $0x678] sm:$0xff]
    %v707 = vld [vmem:[#allocation4 + $0x680] sm:$0xff]
    %v708 = vld [vmem:[#allocation4 + $0x688] sm:$0xff]
    %v709 = vld [vmem:[#allocation4 + $0x690] sm:$0xff]
    %v710 = vld [vmem:[#allocation4 + $0x698] sm:$0xff]
    %v711 = vld [vmem:[#allocation4 + $0x6a0] sm:$0xff]
    %v712 = vld [vmem:[#allocation4 + $0x6a8] sm:$0xff]
    %v713 = vld [vmem:[#allocation4 + $0x6b0] sm:$0xff]
    %v714 = vld [vmem:[#allocation4 + $0x6b8] sm:$0xff]
    %v715 = vld [vmem:[#allocation4 + $0x6c0] sm:$0xff]
    %v716 = vld [vmem:[#allocation4 + $0x6c8] sm:$0xff]
    %v717 = vld [vmem:[#allocation4 + $0x6d0] sm:$0xff]
    %v718 = vld [vmem:[#allocation4 + $0x6d8] sm:$0xff]
    %v719 = vld [vmem:[#allocation4 + $0x6e0] sm:$0xff]
    %v720 = vld [vmem:[#allocation4 + $0x6e8] sm:$0xff]
    %v721 = vld [vmem:[#allocation4 + $0x6f0] sm:$0xff]
    %v722 = vld [vmem:[#allocation4 + $0x6f8] sm:$0xff]
    %v723 = vld [vmem:[#allocation4 + $0x700] sm:$0xff]
    %v724 = vld [vmem:[#allocation4 + $0x708] sm:$0xff]
    %v725 = vld [vmem:[#allocation4 + $0x710] sm:$0xff]
    %v726 = vld [vmem:[#allocation4 + $0x718] sm:$0xff]
    %v727 = vld [vmem:[#allocation4 + $0x720] sm:$0xff]
    %v728 = vld [vmem:[#allocation4 + $0x728] sm:$0xff]
    %v729 = vld [vmem:[#allocation4 + $0x730] sm:$0xff]
    %v730 = vld [vmem:[#allocation4 + $0x738] sm:$0xff]
    %v731 = vld [vmem:[#allocation4 + $0x740] sm:$0xff]
    %v732 = vld [vmem:[#allocation4 + $0x748] sm:$0xff]
    %v733 = vld [vmem:[#allocation4 + $0x750] sm:$0xff]
    %v734 = vld [vmem:[#allocation4 + $0x758] sm:$0xff]
    %v735 = vld [vmem:[#allocation4 + $0x760] sm:$0xff]
    %v736 = vld [vmem:[#allocation4 + $0x768] sm:$0xff]
    %v737 = vld [vmem:[#allocation4 + $0x770] sm:$0xff]
    %v738 = vld [vmem:[#allocation4 + $0x778] sm:$0xff]
    %v739 = vld [vmem:[#allocation4 + $0x780] sm:$0xff]
    %v740 = vld [vmem:[#allocation4 + $0x788] sm:$0xff]
    %v741 = vld [vmem:[#allocation4 + $0x790] sm:$0xff]
    %v742 = vld [vmem:[#allocation4 + $0x798] sm:$0xff]
    %v743 = vld [vmem:[#allocation4 + $0x7a0] sm:$0xff]
    %v744 = vld [vmem:[#allocation4 + $0x7a8] sm:$0xff]
    %v745 = vld [vmem:[#allocation4 + $0x7b0] sm:$0xff]
    %v746 = vld [vmem:[#allocation4 + $0x7b8] sm:$0xff]
    %v747 = vld [vmem:[#allocation4 + $0x7c0] sm:$0xff]
    %v748 = vld [vmem:[#allocation4 + $0x7c8] sm:$0xff]
    %v749 = vld [vmem:[#allocation4 + $0x7d0] sm:$0xff]
    %v750 = vld [vmem:[#allocation4 + $0x7d8] sm:$0xff]
    %v751 = vpack.c.bf16 %v501, %v499
    %v752 = vpack.c.bf16 %v502, %v500
    %v753 = vpack.c.bf16 %v505, %v503
    %v754 = vpack.c.bf16 %v506, %v504
    %v755 = vpack.c.bf16 %v509, %v507
    %v756 = vpack.c.bf16 %v510, %v508
    %v757 = vpack.c.bf16 %v513, %v511
    %v758 = vpack.c.bf16 %v514, %v512
    %v759 = vpack.c.bf16 %v517, %v515
    %v760 = vpack.c.bf16 %v518, %v516
    %v761 = vpack.c.bf16 %v521, %v519
    %v762 = vpack.c.bf16 %v522, %v520
    %v763 = vpack.c.bf16 %v525, %v523
    %v764 = vpack.c.bf16 %v526, %v524
    %v765 = vpack.c.bf16 %v529, %v527
    %v766 = vpack.c.bf16 %v530, %v528
    %v767 = vpack.c.bf16 %v533, %v531
    %v768 = vpack.c.bf16 %v534, %v532
    %v769 = vpack.c.bf16 %v537, %v535
    %v770 = vpack.c.bf16 %v538, %v536
    %v771 = vpack.c.bf16 %v541, %v539
    %v772 = vpack.c.bf16 %v542, %v540
    %v773 = vpack.c.bf16 %v545, %v543
    %v774 = vpack.c.bf16 %v546, %v544
    %v775 = vpack.c.bf16 %v549, %v547
    %v776 = vpack.c.bf16 %v550, %v548
    %v777 = vpack.c.bf16 %v553, %v551
    %v778 = vpack.c.bf16 %v554, %v552
    %v779 = vpack.c.bf16 %v557, %v555
    %v780 = vpack.c.bf16 %v558, %v556
    %v781 = vpack.c.bf16 %v561, %v559
    %v782 = vpack.c.bf16 %v562, %v560
    %v783 = vpack.c.bf16 %v565, %v563
    %v784 = vpack.c.bf16 %v566, %v564
    %v785 = vpack.c.bf16 %v569, %v567
    %v786 = vpack.c.bf16 %v570, %v568
    %v787 = vpack.c.bf16 %v573, %v571
    %v788 = vpack.c.bf16 %v574, %v572
    %v789 = vpack.c.bf16 %v577, %v575
    %v790 = vpack.c.bf16 %v578, %v576
    %v791 = vpack.c.bf16 %v581, %v579
    %v792 = vpack.c.bf16 %v582, %v580
    %v793 = vpack.c.bf16 %v585, %v583
    %v794 = vpack.c.bf16 %v586, %v584
    %v795 = vpack.c.bf16 %v589, %v587
    %v796 = vpack.c.bf16 %v590, %v588
    %v797 = vpack.c.bf16 %v593, %v591
    %v798 = vpack.c.bf16 %v594, %v592
    %v799 = vpack.c.bf16 %v597, %v595
    %v800 = vpack.c.bf16 %v598, %v596
    %v801 = vpack.c.bf16 %v601, %v599
    %v802 = vpack.c.bf16 %v602, %v600
    %v803 = vpack.c.bf16 %v605, %v603
    %v804 = vpack.c.bf16 %v606, %v604
    %v805 = vpack.c.bf16 %v609, %v607
    %v806 = vpack.c.bf16 %v610, %v608
    %v807 = vpack.c.bf16 %v613, %v611
    %v808 = vpack.c.bf16 %v614, %v612
    %v809 = vpack.c.bf16 %v617, %v615
    %v810 = vpack.c.bf16 %v618, %v616
    %v811 = vpack.c.bf16 %v621, %v619
    %v812 = vpack.c.bf16 %v622, %v620
    %v813 = vpack.c.bf16 %v625, %v623
    %v814 = vpack.c.bf16 %v626, %v624
    %v815 = vpack.c.bf16 %v629, %v627
    %v816 = vpack.c.bf16 %v630, %v628
    %v817 = vpack.c.bf16 %v633, %v631
    %v818 = vpack.c.bf16 %v634, %v632
    %v819 = vpack.c.bf16 %v637, %v635
    %v820 = vpack.c.bf16 %v638, %v636
    %v821 = vpack.c.bf16 %v641, %v639
    %v822 = vpack.c.bf16 %v642, %v640
    %v823 = vpack.c.bf16 %v645, %v643
    %v824 = vpack.c.bf16 %v646, %v644
    %v825 = vpack.c.bf16 %v649, %v647
    %v826 = vpack.c.bf16 %v650, %v648
    %v827 = vpack.c.bf16 %v653, %v651
    %v828 = vpack.c.bf16 %v654, %v652
    %v829 = vpack.c.bf16 %v657, %v655
    %v830 = vpack.c.bf16 %v658, %v656
    %v831 = vpack.c.bf16 %v661, %v659
    %v832 = vpack.c.bf16 %v662, %v660
    %v833 = vpack.c.bf16 %v665, %v663
    %v834 = vpack.c.bf16 %v666, %v664
    %v835 = vpack.c.bf16 %v669, %v667
    %v836 = vpack.c.bf16 %v670, %v668
    %v837 = vpack.c.bf16 %v673, %v671
    %v838 = vpack.c.bf16 %v674, %v672
    %v839 = vpack.c.bf16 %v677, %v675
    %v840 = vpack.c.bf16 %v678, %v676
    %v841 = vpack.c.bf16 %v681, %v679
    %v842 = vpack.c.bf16 %v682, %v680
    %v843 = vpack.c.bf16 %v685, %v683
    %v844 = vpack.c.bf16 %v686, %v684
    %v845 = vpack.c.bf16 %v689, %v687
    %v846 = vpack.c.bf16 %v690, %v688
    %v847 = vpack.c.bf16 %v693, %v691
    %v848 = vpack.c.bf16 %v694, %v692
    %v849 = vpack.c.bf16 %v697, %v695
    %v850 = vpack.c.bf16 %v698, %v696
    %v851 = vpack.c.bf16 %v701, %v699
    %v852 = vpack.c.bf16 %v702, %v700
    %v853 = vpack.c.bf16 %v705, %v703
    %v854 = vpack.c.bf16 %v706, %v704
    %v855 = vpack.c.bf16 %v709, %v707
    %v856 = vpack.c.bf16 %v710, %v708
    %v857 = vpack.c.bf16 %v713, %v711
    %v858 = vpack.c.bf16 %v714, %v712
    %v859 = vpack.c.bf16 %v717, %v715
    %v860 = vpack.c.bf16 %v718, %v716
    %v861 = vpack.c.bf16 %v721, %v719
    %v862 = vpack.c.bf16 %v722, %v720
    %v863 = vpack.c.bf16 %v725, %v723
    %v864 = vpack.c.bf16 %v726, %v724
    %v865 = vpack.c.bf16 %v729, %v727
    %v866 = vpack.c.bf16 %v730, %v728
    %v867 = vpack.c.bf16 %v733, %v731
    %v868 = vpack.c.bf16 %v734, %v732
    %v869 = vpack.c.bf16 %v737, %v735
    %v870 = vpack.c.bf16 %v738, %v736
    %v871 = vpack.c.bf16 %v741, %v739
    %v872 = vpack.c.bf16 %v742, %v740
    %v873 = vpack.c.bf16 %v745, %v743
    %v874 = vpack.c.bf16 %v746, %v744
    %v875 = vpack.c.bf16 %v749, %v747
    %v876 = vpack.c.bf16 %v750, %v748
    %v877 = vld [vmem:[#allocation6] sm:$0xff]
    %v878 = vld [vmem:[#allocation6 + $0x8] sm:$0xff]
    %v879 = vld [vmem:[#allocation6 + $0x10] sm:$0xff]
    %v880 = vld [vmem:[#allocation6 + $0x18] sm:$0xff]
    %v881 = vld [vmem:[#allocation6 + $0x20] sm:$0xff]
    %v882 = vld [vmem:[#allocation6 + $0x28] sm:$0xff]
    %v883 = vld [vmem:[#allocation6 + $0x30] sm:$0xff]
    %v884 = vld [vmem:[#allocation6 + $0x38] sm:$0xff]
    %v885 = vld [vmem:[#allocation6 + $0x40] sm:$0xff]
    %v886 = vld [vmem:[#allocation6 + $0x48] sm:$0xff]
    %v887 = vld [vmem:[#allocation6 + $0x50] sm:$0xff]
    %v888 = vld [vmem:[#allocation6 + $0x58] sm:$0xff]
    %v889 = vld [vmem:[#allocation6 + $0x60] sm:$0xff]
    %v890 = vld [vmem:[#allocation6 + $0x68] sm:$0xff]
    %v891 = vld [vmem:[#allocation6 + $0x70] sm:$0xff]
    %v892 = vld [vmem:[#allocation6 + $0x78] sm:$0xff]
    %v893 = vld [vmem:[#allocation6 + $0x80] sm:$0xff]
    %v894 = vld [vmem:[#allocation6 + $0x88] sm:$0xff]
    %v895 = vld [vmem:[#allocation6 + $0x90] sm:$0xff]
    %v896 = vld [vmem:[#allocation6 + $0x98] sm:$0xff]
    %v897 = vld [vmem:[#allocation6 + $0xa0] sm:$0xff]
    %v898 = vld [vmem:[#allocation6 + $0xa8] sm:$0xff]
    %v899 = vld [vmem:[#allocation6 + $0xb0] sm:$0xff]
    %v900 = vld [vmem:[#allocation6 + $0xb8] sm:$0xff]
    %v901 = vld [vmem:[#allocation6 + $0xc0] sm:$0xff]
    %v902 = vld [vmem:[#allocation6 + $0xc8] sm:$0xff]
    %v903 = vld [vmem:[#allocation6 + $0xd0] sm:$0xff]
    %v904 = vld [vmem:[#allocation6 + $0xd8] sm:$0xff]
    %v905 = vld [vmem:[#allocation6 + $0xe0] sm:$0xff]
    %v906 = vld [vmem:[#allocation6 + $0xe8] sm:$0xff]
    %v907 = vld [vmem:[#allocation6 + $0xf0] sm:$0xff]
    %v908 = vld [vmem:[#allocation6 + $0xf8] sm:$0xff]
    %v909 = vld [vmem:[#allocation6 + $0x100] sm:$0xff]
    %v910 = vld [vmem:[#allocation6 + $0x108] sm:$0xff]
    %v911 = vld [vmem:[#allocation6 + $0x110] sm:$0xff]
    %v912 = vld [vmem:[#allocation6 + $0x118] sm:$0xff]
    %v913 = vld [vmem:[#allocation6 + $0x120] sm:$0xff]
    %v914 = vld [vmem:[#allocation6 + $0x128] sm:$0xff]
    %v915 = vld [vmem:[#allocation6 + $0x130] sm:$0xff]
    %v916 = vld [vmem:[#allocation6 + $0x138] sm:$0xff]
    %v917 = vld [vmem:[#allocation6 + $0x140] sm:$0xff]
    %v918 = vld [vmem:[#allocation6 + $0x148] sm:$0xff]
    %v919 = vld [vmem:[#allocation6 + $0x150] sm:$0xff]
    %v920 = vld [vmem:[#allocation6 + $0x158] sm:$0xff]
    %v921 = vld [vmem:[#allocation6 + $0x160] sm:$0xff]
    %v922 = vld [vmem:[#allocation6 + $0x168] sm:$0xff]
    %v923 = vld [vmem:[#allocation6 + $0x170] sm:$0xff]
    %v924 = vld [vmem:[#allocation6 + $0x178] sm:$0xff]
    %v925 = vld [vmem:[#allocation6 + $0x180] sm:$0xff]
    %v926 = vld [vmem:[#allocation6 + $0x188] sm:$0xff]
    %v927 = vld [vmem:[#allocation6 + $0x190] sm:$0xff]
    %v928 = vld [vmem:[#allocation6 + $0x198] sm:$0xff]
    %v929 = vld [vmem:[#allocation6 + $0x1a0] sm:$0xff]
    %v930 = vld [vmem:[#allocation6 + $0x1a8] sm:$0xff]
    %v931 = vld [vmem:[#allocation6 + $0x1b0] sm:$0xff]
    %v932 = vld [vmem:[#allocation6 + $0x1b8] sm:$0xff]
    %v933 = vld [vmem:[#allocation6 + $0x1c0] sm:$0xff]
    %v934 = vld [vmem:[#allocation6 + $0x1c8] sm:$0xff]
    %v935 = vld [vmem:[#allocation6 + $0x1d0] sm:$0xff]
    %v936 = vld [vmem:[#allocation6 + $0x1d8] sm:$0xff]
    %v937 = vld [vmem:[#allocation6 + $0x1e0] sm:$0xff]
    %v938 = vld [vmem:[#allocation6 + $0x1e8] sm:$0xff]
    %v939 = vld [vmem:[#allocation6 + $0x1f0] sm:$0xff]
    %v940 = vld [vmem:[#allocation6 + $0x1f8] sm:$0xff]
    %v941 = vld [vmem:[#allocation6 + $0x200] sm:$0xff]
    %v942 = vld [vmem:[#allocation6 + $0x208] sm:$0xff]
    %v943 = vld [vmem:[#allocation6 + $0x210] sm:$0xff]
    %v944 = vld [vmem:[#allocation6 + $0x218] sm:$0xff]
    %v945 = vld [vmem:[#allocation6 + $0x220] sm:$0xff]
    %v946 = vld [vmem:[#allocation6 + $0x228] sm:$0xff]
    %v947 = vld [vmem:[#allocation6 + $0x230] sm:$0xff]
    %v948 = vld [vmem:[#allocation6 + $0x238] sm:$0xff]
    %v949 = vld [vmem:[#allocation6 + $0x240] sm:$0xff]
    %v950 = vld [vmem:[#allocation6 + $0x248] sm:$0xff]
    %v951 = vld [vmem:[#allocation6 + $0x250] sm:$0xff]
    %v952 = vld [vmem:[#allocation6 + $0x258] sm:$0xff]
    %v953 = vld [vmem:[#allocation6 + $0x260] sm:$0xff]
    %v954 = vld [vmem:[#allocation6 + $0x268] sm:$0xff]
    %v955 = vld [vmem:[#allocation6 + $0x270] sm:$0xff]
    %v956 = vld [vmem:[#allocation6 + $0x278] sm:$0xff]
    %v957 = vld [vmem:[#allocation6 + $0x280] sm:$0xff]
    %v958 = vld [vmem:[#allocation6 + $0x288] sm:$0xff]
    %v959 = vld [vmem:[#allocation6 + $0x290] sm:$0xff]
    %v960 = vld [vmem:[#allocation6 + $0x298] sm:$0xff]
    %v961 = vld [vmem:[#allocation6 + $0x2a0] sm:$0xff]
    %v962 = vld [vmem:[#allocation6 + $0x2a8] sm:$0xff]
    %v963 = vld [vmem:[#allocation6 + $0x2b0] sm:$0xff]
    %v964 = vld [vmem:[#allocation6 + $0x2b8] sm:$0xff]
    %v965 = vld [vmem:[#allocation6 + $0x2c0] sm:$0xff]
    %v966 = vld [vmem:[#allocation6 + $0x2c8] sm:$0xff]
    %v967 = vld [vmem:[#allocation6 + $0x2d0] sm:$0xff]
    %v968 = vld [vmem:[#allocation6 + $0x2d8] sm:$0xff]
    %v969 = vld [vmem:[#allocation6 + $0x2e0] sm:$0xff]
    %v970 = vld [vmem:[#allocation6 + $0x2e8] sm:$0xff]
    %v971 = vld [vmem:[#allocation6 + $0x2f0] sm:$0xff]
    %v972 = vld [vmem:[#allocation6 + $0x2f8] sm:$0xff]
    %v973 = vld [vmem:[#allocation6 + $0x300] sm:$0xff]
    %v974 = vld [vmem:[#allocation6 + $0x308] sm:$0xff]
    %v975 = vld [vmem:[#allocation6 + $0x310] sm:$0xff]
    %v976 = vld [vmem:[#allocation6 + $0x318] sm:$0xff]
    %v977 = vld [vmem:[#allocation6 + $0x320] sm:$0xff]
    %v978 = vld [vmem:[#allocation6 + $0x328] sm:$0xff]
    %v979 = vld [vmem:[#allocation6 + $0x330] sm:$0xff]
    %v980 = vld [vmem:[#allocation6 + $0x338] sm:$0xff]
    %v981 = vld [vmem:[#allocation6 + $0x340] sm:$0xff]
    %v982 = vld [vmem:[#allocation6 + $0x348] sm:$0xff]
    %v983 = vld [vmem:[#allocation6 + $0x350] sm:$0xff]
    %v984 = vld [vmem:[#allocation6 + $0x358] sm:$0xff]
    %v985 = vld [vmem:[#allocation6 + $0x360] sm:$0xff]
    %v986 = vld [vmem:[#allocation6 + $0x368] sm:$0xff]
    %v987 = vld [vmem:[#allocation6 + $0x370] sm:$0xff]
    %v988 = vld [vmem:[#allocation6 + $0x378] sm:$0xff]
    %v989 = vld [vmem:[#allocation6 + $0x380] sm:$0xff]
    %v990 = vld [vmem:[#allocation6 + $0x388] sm:$0xff]
    %v991 = vld [vmem:[#allocation6 + $0x390] sm:$0xff]
    %v992 = vld [vmem:[#allocation6 + $0x398] sm:$0xff]
    %v993 = vld [vmem:[#allocation6 + $0x3a0] sm:$0xff]
    %v994 = vld [vmem:[#allocation6 + $0x3a8] sm:$0xff]
    %v995 = vld [vmem:[#allocation6 + $0x3b0] sm:$0xff]
    %v996 = vld [vmem:[#allocation6 + $0x3b8] sm:$0xff]
    %v997 = vld [vmem:[#allocation6 + $0x3c0] sm:$0xff]
    %v998 = vld [vmem:[#allocation6 + $0x3c8] sm:$0xff]
    %v999 = vld [vmem:[#allocation6 + $0x3d0] sm:$0xff]
    %v1000 = vld [vmem:[#allocation6 + $0x3d8] sm:$0xff]
    %v1001 = vld [vmem:[#allocation6 + $0x3e0] sm:$0xff]
    %v1002 = vld [vmem:[#allocation6 + $0x3e8] sm:$0xff]
    %v1003 = vld [vmem:[#allocation6 + $0x3f0] sm:$0xff]
    %v1004 = vld [vmem:[#allocation6 + $0x3f8] sm:$0xff]
    %v1005 = vld [vmem:[#allocation6 + $0x400] sm:$0xff]
    %v1006 = vld [vmem:[#allocation6 + $0x408] sm:$0xff]
    %v1007 = vld [vmem:[#allocation6 + $0x410] sm:$0xff]
    %v1008 = vld [vmem:[#allocation6 + $0x418] sm:$0xff]
    %v1009 = vld [vmem:[#allocation6 + $0x420] sm:$0xff]
    %v1010 = vld [vmem:[#allocation6 + $0x428] sm:$0xff]
    %v1011 = vld [vmem:[#allocation6 + $0x430] sm:$0xff]
    %v1012 = vld [vmem:[#allocation6 + $0x438] sm:$0xff]
    %v1013 = vld [vmem:[#allocation6 + $0x440] sm:$0xff]
    %v1014 = vld [vmem:[#allocation6 + $0x448] sm:$0xff]
    %v1015 = vld [vmem:[#allocation6 + $0x450] sm:$0xff]
    %v1016 = vld [vmem:[#allocation6 + $0x458] sm:$0xff]
    %v1017 = vld [vmem:[#allocation6 + $0x460] sm:$0xff]
    %v1018 = vld [vmem:[#allocation6 + $0x468] sm:$0xff]
    %v1019 = vld [vmem:[#allocation6 + $0x470] sm:$0xff]
    %v1020 = vld [vmem:[#allocation6 + $0x478] sm:$0xff]
    %v1021 = vld [vmem:[#allocation6 + $0x480] sm:$0xff]
    %v1022 = vld [vmem:[#allocation6 + $0x488] sm:$0xff]
    %v1023 = vld [vmem:[#allocation6 + $0x490] sm:$0xff]
    %v1024 = vld [vmem:[#allocation6 + $0x498] sm:$0xff]
    %v1025 = vld [vmem:[#allocation6 + $0x4a0] sm:$0xff]
    %v1026 = vld [vmem:[#allocation6 + $0x4a8] sm:$0xff]
    %v1027 = vld [vmem:[#allocation6 + $0x4b0] sm:$0xff]
    %v1028 = vld [vmem:[#allocation6 + $0x4b8] sm:$0xff]
    %v1029 = vld [vmem:[#allocation6 + $0x4c0] sm:$0xff]
    %v1030 = vld [vmem:[#allocation6 + $0x4c8] sm:$0xff]
    %v1031 = vld [vmem:[#allocation6 + $0x4d0] sm:$0xff]
    %v1032 = vld [vmem:[#allocation6 + $0x4d8] sm:$0xff]
    %v1033 = vld [vmem:[#allocation6 + $0x4e0] sm:$0xff]
    %v1034 = vld [vmem:[#allocation6 + $0x4e8] sm:$0xff]
    %v1035 = vld [vmem:[#allocation6 + $0x4f0] sm:$0xff]
    %v1036 = vld [vmem:[#allocation6 + $0x4f8] sm:$0xff]
    %v1037 = vld [vmem:[#allocation6 + $0x500] sm:$0xff]
    %v1038 = vld [vmem:[#allocation6 + $0x508] sm:$0xff]
    %v1039 = vld [vmem:[#allocation6 + $0x510] sm:$0xff]
    %v1040 = vld [vmem:[#allocation6 + $0x518] sm:$0xff]
    %v1041 = vld [vmem:[#allocation6 + $0x520] sm:$0xff]
    %v1042 = vld [vmem:[#allocation6 + $0x528] sm:$0xff]
    %v1043 = vld [vmem:[#allocation6 + $0x530] sm:$0xff]
    %v1044 = vld [vmem:[#allocation6 + $0x538] sm:$0xff]
    %v1045 = vld [vmem:[#allocation6 + $0x540] sm:$0xff]
    %v1046 = vld [vmem:[#allocation6 + $0x548] sm:$0xff]
    %v1047 = vld [vmem:[#allocation6 + $0x550] sm:$0xff]
    %v1048 = vld [vmem:[#allocation6 + $0x558] sm:$0xff]
    %v1049 = vld [vmem:[#allocation6 + $0x560] sm:$0xff]
    %v1050 = vld [vmem:[#allocation6 + $0x568] sm:$0xff]
    %v1051 = vld [vmem:[#allocation6 + $0x570] sm:$0xff]
    %v1052 = vld [vmem:[#allocation6 + $0x578] sm:$0xff]
    %v1053 = vld [vmem:[#allocation6 + $0x580] sm:$0xff]
    %v1054 = vld [vmem:[#allocation6 + $0x588] sm:$0xff]
    %v1055 = vld [vmem:[#allocation6 + $0x590] sm:$0xff]
    %v1056 = vld [vmem:[#allocation6 + $0x598] sm:$0xff]
    %v1057 = vld [vmem:[#allocation6 + $0x5a0] sm:$0xff]
    %v1058 = vld [vmem:[#allocation6 + $0x5a8] sm:$0xff]
    %v1059 = vld [vmem:[#allocation6 + $0x5b0] sm:$0xff]
    %v1060 = vld [vmem:[#allocation6 + $0x5b8] sm:$0xff]
    %v1061 = vld [vmem:[#allocation6 + $0x5c0] sm:$0xff]
    %v1062 = vld [vmem:[#allocation6 + $0x5c8] sm:$0xff]
    %v1063 = vld [vmem:[#allocation6 + $0x5d0] sm:$0xff]
    %v1064 = vld [vmem:[#allocation6 + $0x5d8] sm:$0xff]
    %v1065 = vld [vmem:[#allocation6 + $0x5e0] sm:$0xff]
    %v1066 = vld [vmem:[#allocation6 + $0x5e8] sm:$0xff]
    %v1067 = vld [vmem:[#allocation6 + $0x5f0] sm:$0xff]
    %v1068 = vld [vmem:[#allocation6 + $0x5f8] sm:$0xff]
    %v1069 = vld [vmem:[#allocation6 + $0x600] sm:$0xff]
    %v1070 = vld [vmem:[#allocation6 + $0x608] sm:$0xff]
    %v1071 = vld [vmem:[#allocation6 + $0x610] sm:$0xff]
    %v1072 = vld [vmem:[#allocation6 + $0x618] sm:$0xff]
    %v1073 = vld [vmem:[#allocation6 + $0x620] sm:$0xff]
    %v1074 = vld [vmem:[#allocation6 + $0x628] sm:$0xff]
    %v1075 = vld [vmem:[#allocation6 + $0x630] sm:$0xff]
    %v1076 = vld [vmem:[#allocation6 + $0x638] sm:$0xff]
    %v1077 = vld [vmem:[#allocation6 + $0x640] sm:$0xff]
    %v1078 = vld [vmem:[#allocation6 + $0x648] sm:$0xff]
    %v1079 = vld [vmem:[#allocation6 + $0x650] sm:$0xff]
    %v1080 = vld [vmem:[#allocation6 + $0x658] sm:$0xff]
    %v1081 = vld [vmem:[#allocation6 + $0x660] sm:$0xff]
    %v1082 = vld [vmem:[#allocation6 + $0x668] sm:$0xff]
    %v1083 = vld [vmem:[#allocation6 + $0x670] sm:$0xff]
    %v1084 = vld [vmem:[#allocation6 + $0x678] sm:$0xff]
    %v1085 = vld [vmem:[#allocation6 + $0x680] sm:$0xff]
    %v1086 = vld [vmem:[#allocation6 + $0x688] sm:$0xff]
    %v1087 = vld [vmem:[#allocation6 + $0x690] sm:$0xff]
    %v1088 = vld [vmem:[#allocation6 + $0x698] sm:$0xff]
    %v1089 = vld [vmem:[#allocation6 + $0x6a0] sm:$0xff]
    %v1090 = vld [vmem:[#allocation6 + $0x6a8] sm:$0xff]
    %v1091 = vld [vmem:[#allocation6 + $0x6b0] sm:$0xff]
    %v1092 = vld [vmem:[#allocation6 + $0x6b8] sm:$0xff]
    %v1093 = vld [vmem:[#allocation6 + $0x6c0] sm:$0xff]
    %v1094 = vld [vmem:[#allocation6 + $0x6c8] sm:$0xff]
    %v1095 = vld [vmem:[#allocation6 + $0x6d0] sm:$0xff]
    %v1096 = vld [vmem:[#allocation6 + $0x6d8] sm:$0xff]
    %v1097 = vld [vmem:[#allocation6 + $0x6e0] sm:$0xff]
    %v1098 = vld [vmem:[#allocation6 + $0x6e8] sm:$0xff]
    %v1099 = vld [vmem:[#allocation6 + $0x6f0] sm:$0xff]
    %v1100 = vld [vmem:[#allocation6 + $0x6f8] sm:$0xff]
    %v1101 = vld [vmem:[#allocation6 + $0x700] sm:$0xff]
    %v1102 = vld [vmem:[#allocation6 + $0x708] sm:$0xff]
    %v1103 = vld [vmem:[#allocation6 + $0x710] sm:$0xff]
    %v1104 = vld [vmem:[#allocation6 + $0x718] sm:$0xff]
    %v1105 = vld [vmem:[#allocation6 + $0x720] sm:$0xff]
    %v1106 = vld [vmem:[#allocation6 + $0x728] sm:$0xff]
    %v1107 = vld [vmem:[#allocation6 + $0x730] sm:$0xff]
    %v1108 = vld [vmem:[#allocation6 + $0x738] sm:$0xff]
    %v1109 = vld [vmem:[#allocation6 + $0x740] sm:$0xff]
    %v1110 = vld [vmem:[#allocation6 + $0x748] sm:$0xff]
    %v1111 = vld [vmem:[#allocation6 + $0x750] sm:$0xff]
    %v1112 = vld [vmem:[#allocation6 + $0x758] sm:$0xff]
    %v1113 = vld [vmem:[#allocation6 + $0x760] sm:$0xff]
    %v1114 = vld [vmem:[#allocation6 + $0x768] sm:$0xff]
    %v1115 = vld [vmem:[#allocation6 + $0x770] sm:$0xff]
    %v1116 = vld [vmem:[#allocation6 + $0x778] sm:$0xff]
    %v1117 = vld [vmem:[#allocation6 + $0x780] sm:$0xff]
    %v1118 = vld [vmem:[#allocation6 + $0x788] sm:$0xff]
    %v1119 = vld [vmem:[#allocation6 + $0x790] sm:$0xff]
    %v1120 = vld [vmem:[#allocation6 + $0x798] sm:$0xff]
    %v1121 = vld [vmem:[#allocation6 + $0x7a0] sm:$0xff]
    %v1122 = vld [vmem:[#allocation6 + $0x7a8] sm:$0xff]
    %v1123 = vld [vmem:[#allocation6 + $0x7b0] sm:$0xff]
    %v1124 = vld [vmem:[#allocation6 + $0x7b8] sm:$0xff]
    %v1125 = vld [vmem:[#allocation6 + $0x7c0] sm:$0xff]
    %v1126 = vld [vmem:[#allocation6 + $0x7c8] sm:$0xff]
    %v1127 = vld [vmem:[#allocation6 + $0x7d0] sm:$0xff]
    %v1128 = vld [vmem:[#allocation6 + $0x7d8] sm:$0xff]
    %v1129 = vpack.c.bf16 %v879, %v877
    %v1130 = vpack.c.bf16 %v880, %v878
    %v1131 = vpack.c.bf16 %v883, %v881
    %v1132 = vpack.c.bf16 %v884, %v882
    %v1133 = vpack.c.bf16 %v887, %v885
    %v1134 = vpack.c.bf16 %v888, %v886
    %v1135 = vpack.c.bf16 %v891, %v889
    %v1136 = vpack.c.bf16 %v892, %v890
    %v1137 = vpack.c.bf16 %v895, %v893
    %v1138 = vpack.c.bf16 %v896, %v894
    %v1139 = vpack.c.bf16 %v899, %v897
    %v1140 = vpack.c.bf16 %v900, %v898
    %v1141 = vpack.c.bf16 %v903, %v901
    %v1142 = vpack.c.bf16 %v904, %v902
    %v1143 = vpack.c.bf16 %v907, %v905
    %v1144 = vpack.c.bf16 %v908, %v906
    %v1145 = vpack.c.bf16 %v911, %v909
    %v1146 = vpack.c.bf16 %v912, %v910
    %v1147 = vpack.c.bf16 %v915, %v913
    %v1148 = vpack.c.bf16 %v916, %v914
    %v1149 = vpack.c.bf16 %v919, %v917
    %v1150 = vpack.c.bf16 %v920, %v918
    %v1151 = vpack.c.bf16 %v923, %v921
    %v1152 = vpack.c.bf16 %v924, %v922
    %v1153 = vpack.c.bf16 %v927, %v925
    %v1154 = vpack.c.bf16 %v928, %v926
    %v1155 = vpack.c.bf16 %v931, %v929
    %v1156 = vpack.c.bf16 %v932, %v930
    %v1157 = vpack.c.bf16 %v935, %v933
    %v1158 = vpack.c.bf16 %v936, %v934
    %v1159 = vpack.c.bf16 %v939, %v937
    %v1160 = vpack.c.bf16 %v940, %v938
    %v1161 = vpack.c.bf16 %v943, %v941
    %v1162 = vpack.c.bf16 %v944, %v942
    %v1163 = vpack.c.bf16 %v947, %v945
    %v1164 = vpack.c.bf16 %v948, %v946
    %v1165 = vpack.c.bf16 %v951, %v949
    %v1166 = vpack.c.bf16 %v952, %v950
    %v1167 = vpack.c.bf16 %v955, %v953
    %v1168 = vpack.c.bf16 %v956, %v954
    %v1169 = vpack.c.bf16 %v959, %v957
    %v1170 = vpack.c.bf16 %v960, %v958
    %v1171 = vpack.c.bf16 %v963, %v961
    %v1172 = vpack.c.bf16 %v964, %v962
    %v1173 = vpack.c.bf16 %v967, %v965
    %v1174 = vpack.c.bf16 %v968, %v966
    %v1175 = vpack.c.bf16 %v971, %v969
    %v1176 = vpack.c.bf16 %v972, %v970
    %v1177 = vpack.c.bf16 %v975, %v973
    %v1178 = vpack.c.bf16 %v976, %v974
    %v1179 = vpack.c.bf16 %v979, %v977
    %v1180 = vpack.c.bf16 %v980, %v978
    %v1181 = vpack.c.bf16 %v983, %v981
    %v1182 = vpack.c.bf16 %v984, %v982
    %v1183 = vpack.c.bf16 %v987, %v985
    %v1184 = vpack.c.bf16 %v988, %v986
    %v1185 = vpack.c.bf16 %v991, %v989
    %v1186 = vpack.c.bf16 %v992, %v990
    %v1187 = vpack.c.bf16 %v995, %v993
    %v1188 = vpack.c.bf16 %v996, %v994
    %v1189 = vpack.c.bf16 %v999, %v997
    %v1190 = vpack.c.bf16 %v1000, %v998
    %v1191 = vpack.c.bf16 %v1003, %v1001
    %v1192 = vpack.c.bf16 %v1004, %v1002
    %v1193 = vpack.c.bf16 %v1007, %v1005
    %v1194 = vpack.c.bf16 %v1008, %v1006
    %v1195 = vpack.c.bf16 %v1011, %v1009
    %v1196 = vpack.c.bf16 %v1012, %v1010
    %v1197 = vpack.c.bf16 %v1015, %v1013
    %v1198 = vpack.c.bf16 %v1016, %v1014
    %v1199 = vpack.c.bf16 %v1019, %v1017
    %v1200 = vpack.c.bf16 %v1020, %v1018
    %v1201 = vpack.c.bf16 %v1023, %v1021
    %v1202 = vpack.c.bf16 %v1024, %v1022
    %v1203 = vpack.c.bf16 %v1027, %v1025
    %v1204 = vpack.c.bf16 %v1028, %v1026
    %v1205 = vpack.c.bf16 %v1031, %v1029
    %v1206 = vpack.c.bf16 %v1032, %v1030
    %v1207 = vpack.c.bf16 %v1035, %v1033
    %v1208 = vpack.c.bf16 %v1036, %v1034
    %v1209 = vpack.c.bf16 %v1039, %v1037
    %v1210 = vpack.c.bf16 %v1040, %v1038
    %v1211 = vpack.c.bf16 %v1043, %v1041
    %v1212 = vpack.c.bf16 %v1044, %v1042
    %v1213 = vpack.c.bf16 %v1047, %v1045
    %v1214 = vpack.c.bf16 %v1048, %v1046
    %v1215 = vpack.c.bf16 %v1051, %v1049
    %v1216 = vpack.c.bf16 %v1052, %v1050
    %v1217 = vpack.c.bf16 %v1055, %v1053
    %v1218 = vpack.c.bf16 %v1056, %v1054
    %v1219 = vpack.c.bf16 %v1059, %v1057
    %v1220 = vpack.c.bf16 %v1060, %v1058
    %v1221 = vpack.c.bf16 %v1063, %v1061
    %v1222 = vpack.c.bf16 %v1064, %v1062
    %v1223 = vpack.c.bf16 %v1067, %v1065
    %v1224 = vpack.c.bf16 %v1068, %v1066
    %v1225 = vpack.c.bf16 %v1071, %v1069
    %v1226 = vpack.c.bf16 %v1072, %v1070
    %v1227 = vpack.c.bf16 %v1075, %v1073
    %v1228 = vpack.c.bf16 %v1076, %v1074
    %v1229 = vpack.c.bf16 %v1079, %v1077
    %v1230 = vpack.c.bf16 %v1080, %v1078
    %v1231 = vpack.c.bf16 %v1083, %v1081
    %v1232 = vpack.c.bf16 %v1084, %v1082
    %v1233 = vpack.c.bf16 %v1087, %v1085
    %v1234 = vpack.c.bf16 %v1088, %v1086
    %v1235 = vpack.c.bf16 %v1091, %v1089
    %v1236 = vpack.c.bf16 %v1092, %v1090
    %v1237 = vpack.c.bf16 %v1095, %v1093
    %v1238 = vpack.c.bf16 %v1096, %v1094
    %v1239 = vpack.c.bf16 %v1099, %v1097
    %v1240 = vpack.c.bf16 %v1100, %v1098
    %v1241 = vpack.c.bf16 %v1103, %v1101
    %v1242 = vpack.c.bf16 %v1104, %v1102
    %v1243 = vpack.c.bf16 %v1107, %v1105
    %v1244 = vpack.c.bf16 %v1108, %v1106
    %v1245 = vpack.c.bf16 %v1111, %v1109
    %v1246 = vpack.c.bf16 %v1112, %v1110
    %v1247 = vpack.c.bf16 %v1115, %v1113
    %v1248 = vpack.c.bf16 %v1116, %v1114
    %v1249 = vpack.c.bf16 %v1119, %v1117
    %v1250 = vpack.c.bf16 %v1120, %v1118
    %v1251 = vpack.c.bf16 %v1123, %v1121
    %v1252 = vpack.c.bf16 %v1124, %v1122
    %v1253 = vpack.c.bf16 %v1127, %v1125
    %v1254 = vpack.c.bf16 %v1128, %v1126
    %v1255 = vld [vmem:[#allocation7] sm:$0xf]
    %v1256 = vld [vmem:[#allocation7 + $0x4] sm:$0xf]
    %v1257 = vld [vmem:[#allocation7 + $0x8] sm:$0xf]
    %v1258 = vld [vmem:[#allocation7 + $0xc] sm:$0xf]
    %v1259 = vld [vmem:[#allocation7 + $0x10] sm:$0xf]
    %v1260 = vld [vmem:[#allocation7 + $0x14] sm:$0xf]
    %v1261 = vld [vmem:[#allocation7 + $0x18] sm:$0xf]
    %v1262 = vld [vmem:[#allocation7 + $0x1c] sm:$0xf]
    %v1263 = vld [vmem:[#allocation7 + $0x20] sm:$0xf]
    %v1264 = vld [vmem:[#allocation7 + $0x24] sm:$0xf]
    %v1265 = vld [vmem:[#allocation7 + $0x28] sm:$0xf]
    %v1266 = vld [vmem:[#allocation7 + $0x2c] sm:$0xf]
    %v1267 = vld [vmem:[#allocation7 + $0x30] sm:$0xf]
    %v1268 = vld [vmem:[#allocation7 + $0x34] sm:$0xf]
    %v1269 = vld [vmem:[#allocation7 + $0x38] sm:$0xf]
    %v1270 = vld [vmem:[#allocation7 + $0x3c] sm:$0xf]
    %v1271 = vld [vmem:[#allocation7 + $0x40] sm:$0xf]
    %v1272 = vld [vmem:[#allocation7 + $0x44] sm:$0xf]
    %v1273 = vld [vmem:[#allocation7 + $0x48] sm:$0xf]
    %v1274 = vld [vmem:[#allocation7 + $0x4c] sm:$0xf]
    %v1275 = vld [vmem:[#allocation7 + $0x50] sm:$0xf]
    %v1276 = vld [vmem:[#allocation7 + $0x54] sm:$0xf]
    %v1277 = vld [vmem:[#allocation7 + $0x58] sm:$0xf]
    %v1278 = vld [vmem:[#allocation7 + $0x5c] sm:$0xf]
    %v1279 = vld [vmem:[#allocation7 + $0x60] sm:$0xf]
    %v1280 = vld [vmem:[#allocation7 + $0x64] sm:$0xf]
    %v1281 = vld [vmem:[#allocation7 + $0x68] sm:$0xf]
    %v1282 = vld [vmem:[#allocation7 + $0x6c] sm:$0xf]
    %v1283 = vld [vmem:[#allocation7 + $0x70] sm:$0xf]
    %v1284 = vld [vmem:[#allocation7 + $0x74] sm:$0xf]
    %v1285 = vld [vmem:[#allocation7 + $0x78] sm:$0xf]
    %v1286 = vld [vmem:[#allocation7 + $0x7c] sm:$0xf]
    %v1287 = vld [vmem:[%s5] sm:$0x1]
    %v1289 = vlaneseq
    %v1290 = vshrl.u32 %v1289, 7
    %v1291 = vsub.s32 0, %v1290
    %v1292 = vrot.slane %v1287, %v1291
    %v1326 = vunpack.c.l.b16 %v1255
    %v1327 = vunpack.c.l.b16 %v1256
    %v1328 = vunpack.c.l.b16 %v1257
    %v1329 = vunpack.c.l.b16 %v1258
    %v1330 = vunpack.c.l.b16 %v1259
    %v1331 = vunpack.c.l.b16 %v1260
    %v1332 = vunpack.c.l.b16 %v1261
    %v1333 = vunpack.c.l.b16 %v1262
    %v1334 = vunpack.c.l.b16 %v1263
    %v1335 = vunpack.c.l.b16 %v1264
    %v1336 = vunpack.c.l.b16 %v1265
    %v1337 = vunpack.c.l.b16 %v1266
    %v1338 = vunpack.c.l.b16 %v1267
    %v1339 = vunpack.c.l.b16 %v1268
    %v1340 = vunpack.c.l.b16 %v1269
    %v1341 = vunpack.c.l.b16 %v1270
    %v1342 = vunpack.c.l.b16 %v1271
    %v1343 = vunpack.c.l.b16 %v1272
    %v1344 = vunpack.c.l.b16 %v1273
    %v1345 = vunpack.c.l.b16 %v1274
    %v1346 = vunpack.c.l.b16 %v1275
    %v1347 = vunpack.c.l.b16 %v1276
    %v1348 = vunpack.c.l.b16 %v1277
    %v1349 = vunpack.c.l.b16 %v1278
    %v1350 = vunpack.c.l.b16 %v1279
    %v1351 = vunpack.c.l.b16 %v1280
    %v1352 = vunpack.c.l.b16 %v1281
    %v1353 = vunpack.c.l.b16 %v1282
    %v1354 = vunpack.c.l.b16 %v1283
    %v1355 = vunpack.c.l.b16 %v1284
    %v1356 = vunpack.c.l.b16 %v1285
    %v1357 = vunpack.c.l.b16 %v1286
    %v1358 = vpack.c.b16 %v1327, %v1326
    %v1359 = vpack.c.b16 %v1329, %v1328
    %v1360 = vpack.c.b16 %v1331, %v1330
    %v1361 = vpack.c.b16 %v1333, %v1332
    %v1362 = vpack.c.b16 %v1335, %v1334
    %v1363 = vpack.c.b16 %v1337, %v1336
    %v1364 = vpack.c.b16 %v1339, %v1338
    %v1365 = vpack.c.b16 %v1341, %v1340
    %v1366 = vpack.c.b16 %v1343, %v1342
    %v1367 = vpack.c.b16 %v1345, %v1344
    %v1368 = vpack.c.b16 %v1347, %v1346
    %v1369 = vpack.c.b16 %v1349, %v1348
    %v1370 = vpack.c.b16 %v1351, %v1350
    %v1371 = vpack.c.b16 %v1353, %v1352
    %v1372 = vpack.c.b16 %v1355, %v1354
    %v1373 = vpack.c.b16 %v1357, %v1356
    %1390 = vmatprep.subr.bf16.mxu0 0
    %1391 = vmatpush1.bf16.msra.mxu0 %v1358
    %1392 = vmatprep.subr.bf16.mxu0 0
    %1393 = vmatpush1.bf16.msra.mxu0 %v1359
    %1394 = vmatprep.subr.bf16.mxu0 0
    %1395 = vmatpush1.bf16.msra.mxu0 %v1360
    %1396 = vmatprep.subr.bf16.mxu0 0
    %1397 = vmatpush1.bf16.msra.mxu0 %v1361
    %1398 = vmatprep.subr.bf16.mxu0 0
    %1399 = vmatpush1.bf16.msra.mxu0 %v1362
    %1400 = vmatprep.subr.bf16.mxu0 0
    %1401 = vmatpush1.bf16.msra.mxu0 %v1363
    %1402 = vmatprep.subr.bf16.mxu0 0
    %1403 = vmatpush1.bf16.msra.mxu0 %v1364
    %1404 = vmatprep.subr.bf16.mxu0 0
    %1405 = vmatpush1.bf16.msra.mxu0 %v1365
    %1406 = vmatprep.subr.bf16.mxu0 0
    %1407 = vmatpush1.bf16.msra.mxu0 %v1366
    %1408 = vmatprep.subr.bf16.mxu0 0
    %1409 = vmatpush1.bf16.msra.mxu0 %v1367
    %1410 = vmatprep.subr.bf16.mxu0 0
    %1411 = vmatpush1.bf16.msra.mxu0 %v1368
    %1412 = vmatprep.subr.bf16.mxu0 0
    %1413 = vmatpush1.bf16.msra.mxu0 %v1369
    %1414 = vmatprep.subr.bf16.mxu0 0
    %1415 = vmatpush1.bf16.msra.mxu0 %v1370
    %1416 = vmatprep.subr.bf16.mxu0 0
    %1417 = vmatpush1.bf16.msra.mxu0 %v1371
    %1418 = vmatprep.subr.bf16.mxu0 0
    %1419 = vmatpush1.bf16.msra.mxu0 %v1372
    %1420 = vmatprep.subr.bf16.mxu0 0
    %1421 = vmatpush1.bf16.msra.mxu0 %v1373
    %1422 = vmatprep.mubr.bf16.mxu0 %v374
    %1423 = vmatmul.mubr.bf16.gmra.mrb[0].mxu0 %v373
    %v1424 = vpop.f32.mrb[0].mxu0
    %v1425 = vadd.f32 %v1292, %v1424
    %v1426 = vpop.f32.mrb[0].mxu0
    %v1427 = vpop.f32.mrb[0].mxu0
    %v1428 = vadd.f32 %v1292, %v1427
    %v1429 = vpop.f32.mrb[0].mxu0
    %1430 = vmatprep.mubr.bf16.mxu0 %v376
    %1431 = vmatmul.mubr.bf16.gmra.mrb[0].mxu0 %v375
    %v1432 = vpop.f32.mrb[0].mxu0
    %v1433 = vadd.f32 %v1292, %v1432
    %v1434 = vpop.f32.mrb[0].mxu0
    %v1435 = vpop.f32.mrb[0].mxu0
    %v1436 = vadd.f32 %v1292, %v1435
    %v1437 = vpop.f32.mrb[0].mxu0
    %1438 = vmatprep.mubr.bf16.mxu0 %v378
    %1439 = vmatmul.mubr.bf16.gmra.mrb[0].mxu0 %v377
    %v1440 = vpop.f32.mrb[0].mxu0
    %v1441 = vadd.f32 %v1292, %v1440
    %v1442 = vpop.f32.mrb[0].mxu0
    %v1443 = vpop.f32.mrb[0].mxu0
    %v1444 = vadd.f32 %v1292, %v1443
    %v1445 = vpop.f32.mrb[0].mxu0
    %1446 = vmatprep.mubr.bf16.mxu0 %v380
    %1447 = vmatmul.mubr.bf16.gmra.mrb[0].mxu0 %v379
    %v1448 = vpop.f32.mrb[0].mxu0
    %v1449 = vadd.f32 %v1292, %v1448
    %v1450 = vpop.f32.mrb[0].mxu0
    %v1451 = vpop.f32.mrb[0].mxu0
    %v1452 = vadd.f32 %v1292, %v1451
    %v1453 = vpop.f32.mrb[0].mxu0
    %1454 = vmatprep.mubr.bf16.mxu0 %v382
    %1455 = vmatmul.mubr.bf16.gmra.mrb[0].mxu0 %v381
    %v1456 = vpop.f32.mrb[0].mxu0
    %v1457 = vadd.f32 %v1292, %v1456
    %v1458 = vpop.f32.mrb[0].mxu0
    %v1459 = vpop.f32.mrb[0].mxu0
    %v1460 = vadd.f32 %v1292, %v1459
    %v1461 = vpop.f32.mrb[0].mxu0
    %1462 = vmatprep.mubr.bf16.mxu0 %v384
    %1463 = vmatmul.mubr.bf16.gmra.mrb[0].mxu0 %v383
    %v1464 = vpop.f32.mrb[0].mxu0
    %v1465 = vadd.f32 %v1292, %v1464
    %v1466 = vpop.f32.mrb[0].mxu0
    %v1467 = vpop.f32.mrb[0].mxu0
    %v1468 = vadd.f32 %v1292, %v1467
    %v1469 = vpop.f32.mrb[0].mxu0
    %1470 = vmatprep.mubr.bf16.mxu0 %v386
    %1471 = vmatmul.mubr.bf16.gmra.mrb[0].mxu0 %v385
    %v1472 = vpop.f32.mrb[0].mxu0
    %v1473 = vadd.f32 %v1292, %v1472
    %v1474 = vpop.f32.mrb[0].mxu0
    %v1475 = vpop.f32.mrb[0].mxu0
    %v1476 = vadd.f32 %v1292, %v1475
    %v1477 = vpop.f32.mrb[0].mxu0
    %1478 = vmatprep.mubr.bf16.mxu0 %v388
    %1479 = vmatmul.mubr.bf16.gmra.mrb[0].mxu0 %v387
    %v1480 = vpop.f32.mrb[0].mxu0
    %v1481 = vadd.f32 %v1292, %v1480
    %v1482 = vpop.f32.mrb[0].mxu0
    %v1483 = vpop.f32.mrb[0].mxu0
    %v1484 = vadd.f32 %v1292, %v1483
    %v1485 = vpop.f32.mrb[0].mxu0
    %1486 = vmatprep.mubr.bf16.mxu0 %v390
    %1487 = vmatmul.mubr.bf16.gmra.mrb[0].mxu0 %v389
    %v1488 = vpop.f32.mrb[0].mxu0
    %v1489 = vadd.f32 %v1292, %v1488
    %v1490 = vpop.f32.mrb[0].mxu0
    %v1491 = vpop.f32.mrb[0].mxu0
    %v1492 = vadd.f32 %v1292, %v1491
    %v1493 = vpop.f32.mrb[0].mxu0
    %1494 = vmatprep.mubr.bf16.mxu0 %v392
    %1495 = vmatmul.mubr.bf16.gmra.mrb[0].mxu0 %v391
    %v1496 = vpop.f32.mrb[0].mxu0
    %v1497 = vadd.f32 %v1292, %v1496
    %v1498 = vpop.f32.mrb[0].mxu0
    %v1499 = vpop.f32.mrb[0].mxu0
    %v1500 = vadd.f32 %v1292, %v1499
    %v1501 = vpop.f32.mrb[0].mxu0
    %1502 = vmatprep.mubr.bf16.mxu0 %v394
    %1503 = vmatmul.mubr.bf16.gmra.mrb[0].mxu0 %v393
    %v1504 = vpop.f32.mrb[0].mxu0
    %v1505 = vadd.f32 %v1292, %v1504
    %v1506 = vpop.f32.mrb[0].mxu0
    %v1507 = vpop.f32.mrb[0].mxu0
    %v1508 = vadd.f32 %v1292, %v1507
    %v1509 = vpop.f32.mrb[0].mxu0
    %1510 = vmatprep.mubr.bf16.mxu0 %v396
    %1511 = vmatmul.mubr.bf16.gmra.mrb[0].mxu0 %v395
    %v1512 = vpop.f32.mrb[0].mxu0
    %v1513 = vadd.f32 %v1292, %v1512
    %v1514 = vpop.f32.mrb[0].mxu0
    %v1515 = vpop.f32.mrb[0].mxu0
    %v1516 = vadd.f32 %v1292, %v1515
    %v1517 = vpop.f32.mrb[0].mxu0
    %1518 = vmatprep.mubr.bf16.mxu0 %v398
    %1519 = vmatmul.mubr.bf16.gmra.mrb[0].mxu0 %v397
    %v1520 = vpop.f32.mrb[0].mxu0
    %v1521 = vadd.f32 %v1292, %v1520
    %v1522 = vpop.f32.mrb[0].mxu0
    %v1523 = vpop.f32.mrb[0].mxu0
    %v1524 = vadd.f32 %v1292, %v1523
    %v1525 = vpop.f32.mrb[0].mxu0
    %1526 = vmatprep.mubr.bf16.mxu0 %v400
    %1527 = vmatmul.mubr.bf16.gmra.mrb[0].mxu0 %v399
    %v1528 = vpop.f32.mrb[0].mxu0
    %v1529 = vadd.f32 %v1292, %v1528
    %v1530 = vpop.f32.mrb[0].mxu0
    %v1531 = vpop.f32.mrb[0].mxu0
    %v1532 = vadd.f32 %v1292, %v1531
    %v1533 = vpop.f32.mrb[0].mxu0
    %1534 = vmatprep.mubr.bf16.mxu0 %v402
    %1535 = vmatmul.mubr.bf16.gmra.mrb[0].mxu0 %v401
    %v1536 = vpop.f32.mrb[0].mxu0
    %v1537 = vadd.f32 %v1292, %v1536
    %v1538 = vpop.f32.mrb[0].mxu0
    %v1539 = vpop.f32.mrb[0].mxu0
    %v1540 = vadd.f32 %v1292, %v1539
    %v1541 = vpop.f32.mrb[0].mxu0
    %1542 = vmatprep.mubr.bf16.mxu0 %v404
    %1543 = vmatmul.mubr.bf16.gmra.mrb[0].mxu0 %v403
    %v1544 = vpop.f32.mrb[0].mxu0
    %v1545 = vadd.f32 %v1292, %v1544
    %v1546 = vpop.f32.mrb[0].mxu0
    %v1547 = vpop.f32.mrb[0].mxu0
    %v1548 = vadd.f32 %v1292, %v1547
    %v1549 = vpop.f32.mrb[0].mxu0
    %1550 = vmatprep.mubr.bf16.mxu0 %v406
    %1551 = vmatmul.mubr.bf16.gmra.mrb[0].mxu0 %v405
    %v1552 = vpop.f32.mrb[0].mxu0
    %v1553 = vadd.f32 %v1292, %v1552
    %v1554 = vpop.f32.mrb[0].mxu0
    %v1555 = vpop.f32.mrb[0].mxu0
    %v1556 = vadd.f32 %v1292, %v1555
    %v1557 = vpop.f32.mrb[0].mxu0
    %1558 = vmatprep.mubr.bf16.mxu0 %v408
    %1559 = vmatmul.mubr.bf16.gmra.mrb[0].mxu0 %v407
    %v1560 = vpop.f32.mrb[0].mxu0
    %v1561 = vadd.f32 %v1292, %v1560
    %v1562 = vpop.f32.mrb[0].mxu0
    %v1563 = vpop.f32.mrb[0].mxu0
    %v1564 = vadd.f32 %v1292, %v1563
    %v1565 = vpop.f32.mrb[0].mxu0
    %1566 = vmatprep.mubr.bf16.mxu0 %v410
    %1567 = vmatmul.mubr.bf16.gmra.mrb[0].mxu0 %v409
    %v1568 = vpop.f32.mrb[0].mxu0
    %v1569 = vadd.f32 %v1292, %v1568
    %v1570 = vpop.f32.mrb[0].mxu0
    %v1571 = vpop.f32.mrb[0].mxu0
    %v1572 = vadd.f32 %v1292, %v1571
    %v1573 = vpop.f32.mrb[0].mxu0
    %1574 = vmatprep.mubr.bf16.mxu0 %v412
    %1575 = vmatmul.mubr.bf16.gmra.mrb[0].mxu0 %v411
    %v1576 = vpop.f32.mrb[0].mxu0
    %v1577 = vadd.f32 %v1292, %v1576
    %v1578 = vpop.f32.mrb[0].mxu0
    %v1579 = vpop.f32.mrb[0].mxu0
    %v1580 = vadd.f32 %v1292, %v1579
    %v1581 = vpop.f32.mrb[0].mxu0
    %1582 = vmatprep.mubr.bf16.mxu0 %v414
    %1583 = vmatmul.mubr.bf16.gmra.mrb[0].mxu0 %v413
    %v1584 = vpop.f32.mrb[0].mxu0
    %v1585 = vadd.f32 %v1292, %v1584
    %v1586 = vpop.f32.mrb[0].mxu0
    %v1587 = vpop.f32.mrb[0].mxu0
    %v1588 = vadd.f32 %v1292, %v1587
    %v1589 = vpop.f32.mrb[0].mxu0
    %1590 = vmatprep.mubr.bf16.mxu0 %v416
    %1591 = vmatmul.mubr.bf16.gmra.mrb[0].mxu0 %v415
    %v1592 = vpop.f32.mrb[0].mxu0
    %v1593 = vadd.f32 %v1292, %v1592
    %v1594 = vpop.f32.mrb[0].mxu0
    %v1595 = vpop.f32.mrb[0].mxu0
    %v1596 = vadd.f32 %v1292, %v1595
    %v1597 = vpop.f32.mrb[0].mxu0
    %1598 = vmatprep.mubr.bf16.mxu0 %v418
    %1599 = vmatmul.mubr.bf16.gmra.mrb[0].mxu0 %v417
    %v1600 = vpop.f32.mrb[0].mxu0
    %v1601 = vadd.f32 %v1292, %v1600
    %v1602 = vpop.f32.mrb[0].mxu0
    %v1603 = vpop.f32.mrb[0].mxu0
    %v1604 = vadd.f32 %v1292, %v1603
    %v1605 = vpop.f32.mrb[0].mxu0
    %1606 = vmatprep.mubr.bf16.mxu0 %v420
    %1607 = vmatmul.mubr.bf16.gmra.mrb[0].mxu0 %v419
    %v1608 = vpop.f32.mrb[0].mxu0
    %v1609 = vadd.f32 %v1292, %v1608
    %v1610 = vpop.f32.mrb[0].mxu0
    %v1611 = vpop.f32.mrb[0].mxu0
    %v1612 = vadd.f32 %v1292, %v1611
    %v1613 = vpop.f32.mrb[0].mxu0
    %1614 = vmatprep.mubr.bf16.mxu0 %v422
    %1615 = vmatmul.mubr.bf16.gmra.mrb[0].mxu0 %v421
    %v1616 = vpop.f32.mrb[0].mxu0
    %v1617 = vadd.f32 %v1292, %v1616
    %v1618 = vpop.f32.mrb[0].mxu0
    %v1619 = vpop.f32.mrb[0].mxu0
    %v1620 = vadd.f32 %v1292, %v1619
    %v1621 = vpop.f32.mrb[0].mxu0
    %1622 = vmatprep.mubr.bf16.mxu0 %v424
    %1623 = vmatmul.mubr.bf16.gmra.mrb[0].mxu0 %v423
    %v1624 = vpop.f32.mrb[0].mxu0
    %v1625 = vadd.f32 %v1292, %v1624
    %v1626 = vpop.f32.mrb[0].mxu0
    %v1627 = vpop.f32.mrb[0].mxu0
    %v1628 = vadd.f32 %v1292, %v1627
    %v1629 = vpop.f32.mrb[0].mxu0
    %1630 = vmatprep.mubr.bf16.mxu0 %v426
    %1631 = vmatmul.mubr.bf16.gmra.mrb[0].mxu0 %v425
    %v1632 = vpop.f32.mrb[0].mxu0
    %v1633 = vadd.f32 %v1292, %v1632
    %v1634 = vpop.f32.mrb[0].mxu0
    %v1635 = vpop.f32.mrb[0].mxu0
    %v1636 = vadd.f32 %v1292, %v1635
    %v1637 = vpop.f32.mrb[0].mxu0
    %1638 = vmatprep.mubr.bf16.mxu0 %v428
    %1639 = vmatmul.mubr.bf16.gmra.mrb[0].mxu0 %v427
    %v1640 = vpop.f32.mrb[0].mxu0
    %v1641 = vadd.f32 %v1292, %v1640
    %v1642 = vpop.f32.mrb[0].mxu0
    %v1643 = vpop.f32.mrb[0].mxu0
    %v1644 = vadd.f32 %v1292, %v1643
    %v1645 = vpop.f32.mrb[0].mxu0
    %1646 = vmatprep.mubr.bf16.mxu0 %v430
    %1647 = vmatmul.mubr.bf16.gmra.mrb[0].mxu0 %v429
    %v1648 = vpop.f32.mrb[0].mxu0
    %v1649 = vadd.f32 %v1292, %v1648
    %v1650 = vpop.f32.mrb[0].mxu0
    %v1651 = vpop.f32.mrb[0].mxu0
    %v1652 = vadd.f32 %v1292, %v1651
    %v1653 = vpop.f32.mrb[0].mxu0
    %1654 = vmatprep.mubr.bf16.mxu0 %v432
    %1655 = vmatmul.mubr.bf16.gmra.mrb[0].mxu0 %v431
    %v1656 = vpop.f32.mrb[0].mxu0
    %v1657 = vadd.f32 %v1292, %v1656
    %v1658 = vpop.f32.mrb[0].mxu0
    %v1659 = vpop.f32.mrb[0].mxu0
    %v1660 = vadd.f32 %v1292, %v1659
    %v1661 = vpop.f32.mrb[0].mxu0
    %1662 = vmatprep.mubr.bf16.mxu0 %v434
    %1663 = vmatmul.mubr.bf16.gmra.mrb[0].mxu0 %v433
    %v1664 = vpop.f32.mrb[0].mxu0
    %v1665 = vadd.f32 %v1292, %v1664
    %v1666 = vpop.f32.mrb[0].mxu0
    %v1667 = vpop.f32.mrb[0].mxu0
    %v1668 = vadd.f32 %v1292, %v1667
    %v1669 = vpop.f32.mrb[0].mxu0
    %1670 = vmatprep.mubr.bf16.mxu0 %v436
    %1671 = vmatmul.mubr.bf16.gmra.mrb[0].mxu0 %v435
    %v1672 = vpop.f32.mrb[0].mxu0
    %v1673 = vadd.f32 %v1292, %v1672
    %v1674 = vpop.f32.mrb[0].mxu0
    %v1675 = vpop.f32.mrb[0].mxu0
    %v1676 = vadd.f32 %v1292, %v1675
    %v1677 = vpop.f32.mrb[0].mxu0
    %1678 = vmatprep.mubr.bf16.mxu0 %v438
    %1679 = vmatmul.mubr.bf16.gmra.mrb[0].mxu0 %v437
    %v1680 = vpop.f32.mrb[0].mxu0
    %v1681 = vadd.f32 %v1292, %v1680
    %v1682 = vpop.f32.mrb[0].mxu0
    %v1683 = vpop.f32.mrb[0].mxu0
    %v1684 = vadd.f32 %v1292, %v1683
    %v1685 = vpop.f32.mrb[0].mxu0
    %1686 = vmatprep.mubr.bf16.mxu0 %v440
    %1687 = vmatmul.mubr.bf16.gmra.mrb[0].mxu0 %v439
    %v1688 = vpop.f32.mrb[0].mxu0
    %v1689 = vadd.f32 %v1292, %v1688
    %v1690 = vpop.f32.mrb[0].mxu0
    %v1691 = vpop.f32.mrb[0].mxu0
    %v1692 = vadd.f32 %v1292, %v1691
    %v1693 = vpop.f32.mrb[0].mxu0
    %1694 = vmatprep.mubr.bf16.mxu0 %v442
    %1695 = vmatmul.mubr.bf16.gmra.mrb[0].mxu0 %v441
    %v1696 = vpop.f32.mrb[0].mxu0
    %v1697 = vadd.f32 %v1292, %v1696
    %v1698 = vpop.f32.mrb[0].mxu0
    %v1699 = vpop.f32.mrb[0].mxu0
    %v1700 = vadd.f32 %v1292, %v1699
    %v1701 = vpop.f32.mrb[0].mxu0
    %1702 = vmatprep.mubr.bf16.mxu0 %v444
    %1703 = vmatmul.mubr.bf16.gmra.mrb[0].mxu0 %v443
    %v1704 = vpop.f32.mrb[0].mxu0
    %v1705 = vadd.f32 %v1292, %v1704
    %v1706 = vpop.f32.mrb[0].mxu0
    %v1707 = vpop.f32.mrb[0].mxu0
    %v1708 = vadd.f32 %v1292, %v1707
    %v1709 = vpop.f32.mrb[0].mxu0
    %1710 = vmatprep.mubr.bf16.mxu0 %v446
    %1711 = vmatmul.mubr.bf16.gmra.mrb[0].mxu0 %v445
    %v1712 = vpop.f32.mrb[0].mxu0
    %v1713 = vadd.f32 %v1292, %v1712
    %v1714 = vpop.f32.mrb[0].mxu0
    %v1715 = vpop.f32.mrb[0].mxu0
    %v1716 = vadd.f32 %v1292, %v1715
    %v1717 = vpop.f32.mrb[0].mxu0
    %1718 = vmatprep.mubr.bf16.mxu0 %v448
    %1719 = vmatmul.mubr.bf16.gmra.mrb[0].mxu0 %v447
    %v1720 = vpop.f32.mrb[0].mxu0
    %v1721 = vadd.f32 %v1292, %v1720
    %v1722 = vpop.f32.mrb[0].mxu0
    %v1723 = vpop.f32.mrb[0].mxu0
    %v1724 = vadd.f32 %v1292, %v1723
    %v1725 = vpop.f32.mrb[0].mxu0
    %1726 = vmatprep.mubr.bf16.mxu0 %v450
    %1727 = vmatmul.mubr.bf16.gmra.mrb[0].mxu0 %v449
    %v1728 = vpop.f32.mrb[0].mxu0
    %v1729 = vadd.f32 %v1292, %v1728
    %v1730 = vpop.f32.mrb[0].mxu0
    %v1731 = vpop.f32.mrb[0].mxu0
    %v1732 = vadd.f32 %v1292, %v1731
    %v1733 = vpop.f32.mrb[0].mxu0
    %1734 = vmatprep.mubr.bf16.mxu0 %v452
    %1735 = vmatmul.mubr.bf16.gmra.mrb[0].mxu0 %v451
    %v1736 = vpop.f32.mrb[0].mxu0
    %v1737 = vadd.f32 %v1292, %v1736
    %v1738 = vpop.f32.mrb[0].mxu0
    %v1739 = vpop.f32.mrb[0].mxu0
    %v1740 = vadd.f32 %v1292, %v1739
    %v1741 = vpop.f32.mrb[0].mxu0
    %1742 = vmatprep.mubr.bf16.mxu0 %v454
    %1743 = vmatmul.mubr.bf16.gmra.mrb[0].mxu0 %v453
    %v1744 = vpop.f32.mrb[0].mxu0
    %v1745 = vadd.f32 %v1292, %v1744
    %v1746 = vpop.f32.mrb[0].mxu0
    %v1747 = vpop.f32.mrb[0].mxu0
    %v1748 = vadd.f32 %v1292, %v1747
    %v1749 = vpop.f32.mrb[0].mxu0
    %1750 = vmatprep.mubr.bf16.mxu0 %v456
    %1751 = vmatmul.mubr.bf16.gmra.mrb[0].mxu0 %v455
    %v1752 = vpop.f32.mrb[0].mxu0
    %v1753 = vadd.f32 %v1292, %v1752
    %v1754 = vpop.f32.mrb[0].mxu0
    %v1755 = vpop.f32.mrb[0].mxu0
    %v1756 = vadd.f32 %v1292, %v1755
    %v1757 = vpop.f32.mrb[0].mxu0
    %1758 = vmatprep.mubr.bf16.mxu0 %v458
    %1759 = vmatmul.mubr.bf16.gmra.mrb[0].mxu0 %v457
    %v1760 = vpop.f32.mrb[0].mxu0
    %v1761 = vadd.f32 %v1292, %v1760
    %v1762 = vpop.f32.mrb[0].mxu0
    %v1763 = vpop.f32.mrb[0].mxu0
    %v1764 = vadd.f32 %v1292, %v1763
    %v1765 = vpop.f32.mrb[0].mxu0
    %1766 = vmatprep.mubr.bf16.mxu0 %v460
    %1767 = vmatmul.mubr.bf16.gmra.mrb[0].mxu0 %v459
    %v1768 = vpop.f32.mrb[0].mxu0
    %v1769 = vadd.f32 %v1292, %v1768
    %v1770 = vpop.f32.mrb[0].mxu0
    %v1771 = vpop.f32.mrb[0].mxu0
    %v1772 = vadd.f32 %v1292, %v1771
    %v1773 = vpop.f32.mrb[0].mxu0
    %1774 = vmatprep.mubr.bf16.mxu0 %v462
    %1775 = vmatmul.mubr.bf16.gmra.mrb[0].mxu0 %v461
    %v1776 = vpop.f32.mrb[0].mxu0
    %v1777 = vadd.f32 %v1292, %v1776
    %v1778 = vpop.f32.mrb[0].mxu0
    %v1779 = vpop.f32.mrb[0].mxu0
    %v1780 = vadd.f32 %v1292, %v1779
    %v1781 = vpop.f32.mrb[0].mxu0
    %1782 = vmatprep.mubr.bf16.mxu0 %v464
    %1783 = vmatmul.mubr.bf16.gmra.mrb[0].mxu0 %v463
    %v1784 = vpop.f32.mrb[0].mxu0
    %v1785 = vadd.f32 %v1292, %v1784
    %v1786 = vpop.f32.mrb[0].mxu0
    %v1787 = vpop.f32.mrb[0].mxu0
    %v1788 = vadd.f32 %v1292, %v1787
    %v1789 = vpop.f32.mrb[0].mxu0
    %1790 = vmatprep.mubr.bf16.mxu0 %v466
    %1791 = vmatmul.mubr.bf16.gmra.mrb[0].mxu0 %v465
    %v1792 = vpop.f32.mrb[0].mxu0
    %v1793 = vadd.f32 %v1292, %v1792
    %v1794 = vpop.f32.mrb[0].mxu0
    %v1795 = vpop.f32.mrb[0].mxu0
    %v1796 = vadd.f32 %v1292, %v1795
    %v1797 = vpop.f32.mrb[0].mxu0
    %1798 = vmatprep.mubr.bf16.mxu0 %v468
    %1799 = vmatmul.mubr.bf16.gmra.mrb[0].mxu0 %v467
    %v1800 = vpop.f32.mrb[0].mxu0
    %v1801 = vadd.f32 %v1292, %v1800
    %v1802 = vpop.f32.mrb[0].mxu0
    %v1803 = vpop.f32.mrb[0].mxu0
    %v1804 = vadd.f32 %v1292, %v1803
    %v1805 = vpop.f32.mrb[0].mxu0
    %1806 = vmatprep.mubr.bf16.mxu0 %v470
    %1807 = vmatmul.mubr.bf16.gmra.mrb[0].mxu0 %v469
    %v1808 = vpop.f32.mrb[0].mxu0
    %v1809 = vadd.f32 %v1292, %v1808
    %v1810 = vpop.f32.mrb[0].mxu0
    %v1811 = vpop.f32.mrb[0].mxu0
    %v1812 = vadd.f32 %v1292, %v1811
    %v1813 = vpop.f32.mrb[0].mxu0
    %1814 = vmatprep.mubr.bf16.mxu0 %v472
    %1815 = vmatmul.mubr.bf16.gmra.mrb[0].mxu0 %v471
    %v1816 = vpop.f32.mrb[0].mxu0
    %v1817 = vadd.f32 %v1292, %v1816
    %v1818 = vpop.f32.mrb[0].mxu0
    %v1819 = vpop.f32.mrb[0].mxu0
    %v1820 = vadd.f32 %v1292, %v1819
    %v1821 = vpop.f32.mrb[0].mxu0
    %1822 = vmatprep.mubr.bf16.mxu0 %v474
    %1823 = vmatmul.mubr.bf16.gmra.mrb[0].mxu0 %v473
    %v1824 = vpop.f32.mrb[0].mxu0
    %v1825 = vadd.f32 %v1292, %v1824
    %v1826 = vpop.f32.mrb[0].mxu0
    %v1827 = vpop.f32.mrb[0].mxu0
    %v1828 = vadd.f32 %v1292, %v1827
    %v1829 = vpop.f32.mrb[0].mxu0
    %1830 = vmatprep.mubr.bf16.mxu0 %v476
    %1831 = vmatmul.mubr.bf16.gmra.mrb[0].mxu0 %v475
    %v1832 = vpop.f32.mrb[0].mxu0
    %v1833 = vadd.f32 %v1292, %v1832
    %v1834 = vpop.f32.mrb[0].mxu0
    %v1835 = vpop.f32.mrb[0].mxu0
    %v1836 = vadd.f32 %v1292, %v1835
    %v1837 = vpop.f32.mrb[0].mxu0
    %1838 = vmatprep.mubr.bf16.mxu0 %v478
    %1839 = vmatmul.mubr.bf16.gmra.mrb[0].mxu0 %v477
    %v1840 = vpop.f32.mrb[0].mxu0
    %v1841 = vadd.f32 %v1292, %v1840
    %v1842 = vpop.f32.mrb[0].mxu0
    %v1843 = vpop.f32.mrb[0].mxu0
    %v1844 = vadd.f32 %v1292, %v1843
    %v1845 = vpop.f32.mrb[0].mxu0
    %1846 = vmatprep.mubr.bf16.mxu0 %v480
    %1847 = vmatmul.mubr.bf16.gmra.mrb[0].mxu0 %v479
    %v1848 = vpop.f32.mrb[0].mxu0
    %v1849 = vadd.f32 %v1292, %v1848
    %v1850 = vpop.f32.mrb[0].mxu0
    %v1851 = vpop.f32.mrb[0].mxu0
    %v1852 = vadd.f32 %v1292, %v1851
    %v1853 = vpop.f32.mrb[0].mxu0
    %1854 = vmatprep.mubr.bf16.mxu0 %v482
    %1855 = vmatmul.mubr.bf16.gmra.mrb[0].mxu0 %v481
    %v1856 = vpop.f32.mrb[0].mxu0
    %v1857 = vadd.f32 %v1292, %v1856
    %v1858 = vpop.f32.mrb[0].mxu0
    %v1859 = vpop.f32.mrb[0].mxu0
    %v1860 = vadd.f32 %v1292, %v1859
    %v1861 = vpop.f32.mrb[0].mxu0
    %1862 = vmatprep.mubr.bf16.mxu0 %v484
    %1863 = vmatmul.mubr.bf16.gmra.mrb[0].mxu0 %v483
    %v1864 = vpop.f32.mrb[0].mxu0
    %v1865 = vadd.f32 %v1292, %v1864
    %v1866 = vpop.f32.mrb[0].mxu0
    %v1867 = vpop.f32.mrb[0].mxu0
    %v1868 = vadd.f32 %v1292, %v1867
    %v1869 = vpop.f32.mrb[0].mxu0
    %1870 = vmatprep.mubr.bf16.mxu0 %v486
    %1871 = vmatmul.mubr.bf16.gmra.mrb[0].mxu0 %v485
    %v1872 = vpop.f32.mrb[0].mxu0
    %v1873 = vadd.f32 %v1292, %v1872
    %v1874 = vpop.f32.mrb[0].mxu0
    %v1875 = vpop.f32.mrb[0].mxu0
    %v1876 = vadd.f32 %v1292, %v1875
    %v1877 = vpop.f32.mrb[0].mxu0
    %1878 = vmatprep.mubr.bf16.mxu0 %v488
    %1879 = vmatmul.mubr.bf16.gmra.mrb[0].mxu0 %v487
    %v1880 = vpop.f32.mrb[0].mxu0
    %v1881 = vadd.f32 %v1292, %v1880
    %v1882 = vpop.f32.mrb[0].mxu0
    %v1883 = vpop.f32.mrb[0].mxu0
    %v1884 = vadd.f32 %v1292, %v1883
    %v1885 = vpop.f32.mrb[0].mxu0
    %1886 = vmatprep.mubr.bf16.mxu0 %v490
    %1887 = vmatmul.mubr.bf16.gmra.mrb[0].mxu0 %v489
    %v1888 = vpop.f32.mrb[0].mxu0
    %v1889 = vadd.f32 %v1292, %v1888
    %v1890 = vpop.f32.mrb[0].mxu0
    %v1891 = vpop.f32.mrb[0].mxu0
    %v1892 = vadd.f32 %v1292, %v1891
    %v1893 = vpop.f32.mrb[0].mxu0
    %1894 = vmatprep.mubr.bf16.mxu0 %v492
    %1895 = vmatmul.mubr.bf16.gmra.mrb[0].mxu0 %v491
    %v1896 = vpop.f32.mrb[0].mxu0
    %v1897 = vadd.f32 %v1292, %v1896
    %v1898 = vpop.f32.mrb[0].mxu0
    %v1899 = vpop.f32.mrb[0].mxu0
    %v1900 = vadd.f32 %v1292, %v1899
    %v1901 = vpop.f32.mrb[0].mxu0
    %1902 = vmatprep.mubr.bf16.mxu0 %v494
    %1903 = vmatmul.mubr.bf16.gmra.mrb[0].mxu0 %v493
    %v1904 = vpop.f32.mrb[0].mxu0
    %v1905 = vadd.f32 %v1292, %v1904
    %v1906 = vpop.f32.mrb[0].mxu0
    %v1907 = vpop.f32.mrb[0].mxu0
    %v1908 = vadd.f32 %v1292, %v1907
    %v1909 = vpop.f32.mrb[0].mxu0
    %1910 = vmatprep.mubr.bf16.mxu0 %v496
    %1911 = vmatmul.mubr.bf16.gmra.mrb[0].mxu0 %v495
    %v1912 = vpop.f32.mrb[0].mxu0
    %v1913 = vadd.f32 %v1292, %v1912
    %v1914 = vpop.f32.mrb[0].mxu0
    %v1915 = vpop.f32.mrb[0].mxu0
    %v1916 = vadd.f32 %v1292, %v1915
    %v1917 = vpop.f32.mrb[0].mxu0
    %1918 = vmatprep.mubr.bf16.mxu0 %v498
    %1919 = vmatmul.mubr.bf16.gmra.mrb[0].mxu0 %v497
    %v1920 = vpop.f32.mrb[0].mxu0
    %v1921 = vadd.f32 %v1292, %v1920
    %v1922 = vpop.f32.mrb[0].mxu0
    %v1923 = vpop.f32.mrb[0].mxu0
    %v1924 = vadd.f32 %v1292, %v1923
    %v1925 = vpop.f32.mrb[0].mxu0
    %1926 = vdwg.mxu0
    %1927 = vmatprep.subr.bf16.mxu0 0
    %1928 = vmatpush1.bf16.msra.mxu0 %v1358
    %1929 = vmatprep.subr.bf16.mxu0 0
    %1930 = vmatpush1.bf16.msra.mxu0 %v1359
    %1931 = vmatprep.subr.bf16.mxu0 0
    %1932 = vmatpush1.bf16.msra.mxu0 %v1360
    %1933 = vmatprep.subr.bf16.mxu0 0
    %1934 = vmatpush1.bf16.msra.mxu0 %v1361
    %1935 = vmatprep.subr.bf16.mxu0 0
    %1936 = vmatpush1.bf16.msra.mxu0 %v1362
    %1937 = vmatprep.subr.bf16.mxu0 0
    %1938 = vmatpush1.bf16.msra.mxu0 %v1363
    %1939 = vmatprep.subr.bf16.mxu0 0
    %1940 = vmatpush1.bf16.msra.mxu0 %v1364
    %1941 = vmatprep.subr.bf16.mxu0 0
    %1942 = vmatpush1.bf16.msra.mxu0 %v1365
    %1943 = vmatprep.subr.bf16.mxu0 0
    %1944 = vmatpush1.bf16.msra.mxu0 %v1366
    %1945 = vmatprep.subr.bf16.mxu0 0
    %1946 = vmatpush1.bf16.msra.mxu0 %v1367
    %1947 = vmatprep.subr.bf16.mxu0 0
    %1948 = vmatpush1.bf16.msra.mxu0 %v1368
    %1949 = vmatprep.subr.bf16.mxu0 0
    %1950 = vmatpush1.bf16.msra.mxu0 %v1369
    %1951 = vmatprep.subr.bf16.mxu0 0
    %1952 = vmatpush1.bf16.msra.mxu0 %v1370
    %1953 = vmatprep.subr.bf16.mxu0 0
    %1954 = vmatpush1.bf16.msra.mxu0 %v1371
    %1955 = vmatprep.subr.bf16.mxu0 0
    %1956 = vmatpush1.bf16.msra.mxu0 %v1372
    %1957 = vmatprep.subr.bf16.mxu0 0
    %1958 = vmatpush1.bf16.msra.mxu0 %v1373
    %1959 = vmatprep.mubr.bf16.mxu0 %v1130
    %1960 = vmatmul.mubr.bf16.gmra.mrb[0].mxu0 %v1129
    %v1961 = vpop.f32.mrb[0].mxu0
    %v1962 = vadd.f32 %v1292, %v1961
    %v1963 = vpop.f32.mrb[0].mxu0
    %v1964 = vpop.f32.mrb[0].mxu0
    %v1965 = vadd.f32 %v1292, %v1964
    %v1966 = vpop.f32.mrb[0].mxu0
    %1967 = vmatprep.mubr.bf16.mxu0 %v1132
    %1968 = vmatmul.mubr.bf16.gmra.mrb[0].mxu0 %v1131
    %v1969 = vpop.f32.mrb[0].mxu0
    %v1970 = vadd.f32 %v1292, %v1969
    %v1971 = vpop.f32.mrb[0].mxu0
    %v1972 = vpop.f32.mrb[0].mxu0
    %v1973 = vadd.f32 %v1292, %v1972
    %v1974 = vpop.f32.mrb[0].mxu0
    %1975 = vmatprep.mubr.bf16.mxu0 %v1134
    %1976 = vmatmul.mubr.bf16.gmra.mrb[0].mxu0 %v1133
    %v1977 = vpop.f32.mrb[0].mxu0
    %v1978 = vadd.f32 %v1292, %v1977
    %v1979 = vpop.f32.mrb[0].mxu0
    %v1980 = vpop.f32.mrb[0].mxu0
    %v1981 = vadd.f32 %v1292, %v1980
    %v1982 = vpop.f32.mrb[0].mxu0
    %1983 = vmatprep.mubr.bf16.mxu0 %v1136
    %1984 = vmatmul.mubr.bf16.gmra.mrb[0].mxu0 %v1135
    %v1985 = vpop.f32.mrb[0].mxu0
    %v1986 = vadd.f32 %v1292, %v1985
    %v1987 = vpop.f32.mrb[0].mxu0
    %v1988 = vpop.f32.mrb[0].mxu0
    %v1989 = vadd.f32 %v1292, %v1988
    %v1990 = vpop.f32.mrb[0].mxu0
    %1991 = vmatprep.mubr.bf16.mxu0 %v1138
    %1992 = vmatmul.mubr.bf16.gmra.mrb[0].mxu0 %v1137
    %v1993 = vpop.f32.mrb[0].mxu0
    %v1994 = vadd.f32 %v1292, %v1993
    %v1995 = vpop.f32.mrb[0].mxu0
    %v1996 = vpop.f32.mrb[0].mxu0
    %v1997 = vadd.f32 %v1292, %v1996
    %v1998 = vpop.f32.mrb[0].mxu0
    %1999 = vmatprep.mubr.bf16.mxu0 %v1140
    %2000 = vmatmul.mubr.bf16.gmra.mrb[0].mxu0 %v1139
    %v2001 = vpop.f32.mrb[0].mxu0
    %v2002 = vadd.f32 %v1292, %v2001
    %v2003 = vpop.f32.mrb[0].mxu0
    %v2004 = vpop.f32.mrb[0].mxu0
    %v2005 = vadd.f32 %v1292, %v2004
    %v2006 = vpop.f32.mrb[0].mxu0
    %2007 = vmatprep.mubr.bf16.mxu0 %v1142
    %2008 = vmatmul.mubr.bf16.gmra.mrb[0].mxu0 %v1141
    %v2009 = vpop.f32.mrb[0].mxu0
    %v2010 = vadd.f32 %v1292, %v2009
    %v2011 = vpop.f32.mrb[0].mxu0
    %v2012 = vpop.f32.mrb[0].mxu0
    %v2013 = vadd.f32 %v1292, %v2012
    %v2014 = vpop.f32.mrb[0].mxu0
    %2015 = vmatprep.mubr.bf16.mxu0 %v1144
    %2016 = vmatmul.mubr.bf16.gmra.mrb[0].mxu0 %v1143
    %v2017 = vpop.f32.mrb[0].mxu0
    %v2018 = vadd.f32 %v1292, %v2017
    %v2019 = vpop.f32.mrb[0].mxu0
    %v2020 = vpop.f32.mrb[0].mxu0
    %v2021 = vadd.f32 %v1292, %v2020
    %v2022 = vpop.f32.mrb[0].mxu0
    %2023 = vmatprep.mubr.bf16.mxu0 %v1146
    %2024 = vmatmul.mubr.bf16.gmra.mrb[0].mxu0 %v1145
    %v2025 = vpop.f32.mrb[0].mxu0
    %v2026 = vadd.f32 %v1292, %v2025
    %v2027 = vpop.f32.mrb[0].mxu0
    %v2028 = vpop.f32.mrb[0].mxu0
    %v2029 = vadd.f32 %v1292, %v2028
    %v2030 = vpop.f32.mrb[0].mxu0
    %2031 = vmatprep.mubr.bf16.mxu0 %v1148
    %2032 = vmatmul.mubr.bf16.gmra.mrb[0].mxu0 %v1147
    %v2033 = vpop.f32.mrb[0].mxu0
    %v2034 = vadd.f32 %v1292, %v2033
    %v2035 = vpop.f32.mrb[0].mxu0
    %v2036 = vpop.f32.mrb[0].mxu0
    %v2037 = vadd.f32 %v1292, %v2036
    %v2038 = vpop.f32.mrb[0].mxu0
    %2039 = vmatprep.mubr.bf16.mxu0 %v1150
    %2040 = vmatmul.mubr.bf16.gmra.mrb[0].mxu0 %v1149
    %v2041 = vpop.f32.mrb[0].mxu0
    %v2042 = vadd.f32 %v1292, %v2041
    %v2043 = vpop.f32.mrb[0].mxu0
    %v2044 = vpop.f32.mrb[0].mxu0
    %v2045 = vadd.f32 %v1292, %v2044
    %v2046 = vpop.f32.mrb[0].mxu0
    %2047 = vmatprep.mubr.bf16.mxu0 %v1152
    %2048 = vmatmul.mubr.bf16.gmra.mrb[0].mxu0 %v1151
    %v2049 = vpop.f32.mrb[0].mxu0
    %v2050 = vadd.f32 %v1292, %v2049
    %v2051 = vpop.f32.mrb[0].mxu0
    %v2052 = vpop.f32.mrb[0].mxu0
    %v2053 = vadd.f32 %v1292, %v2052
    %v2054 = vpop.f32.mrb[0].mxu0
    %2055 = vmatprep.mubr.bf16.mxu0 %v1154
    %2056 = vmatmul.mubr.bf16.gmra.mrb[0].mxu0 %v1153
    %v2057 = vpop.f32.mrb[0].mxu0
    %v2058 = vadd.f32 %v1292, %v2057
    %v2059 = vpop.f32.mrb[0].mxu0
    %v2060 = vpop.f32.mrb[0].mxu0
    %v2061 = vadd.f32 %v1292, %v2060
    %v2062 = vpop.f32.mrb[0].mxu0
    %2063 = vmatprep.mubr.bf16.mxu0 %v1156
    %2064 = vmatmul.mubr.bf16.gmra.mrb[0].mxu0 %v1155
    %v2065 = vpop.f32.mrb[0].mxu0
    %v2066 = vadd.f32 %v1292, %v2065
    %v2067 = vpop.f32.mrb[0].mxu0
    %v2068 = vpop.f32.mrb[0].mxu0
    %v2069 = vadd.f32 %v1292, %v2068
    %v2070 = vpop.f32.mrb[0].mxu0
    %2071 = vmatprep.mubr.bf16.mxu0 %v1158
    %2072 = vmatmul.mubr.bf16.gmra.mrb[0].mxu0 %v1157
    %v2073 = vpop.f32.mrb[0].mxu0
    %v2074 = vadd.f32 %v1292, %v2073
    %v2075 = vpop.f32.mrb[0].mxu0
    %v2076 = vpop.f32.mrb[0].mxu0
    %v2077 = vadd.f32 %v1292, %v2076
    %v2078 = vpop.f32.mrb[0].mxu0
    %2079 = vmatprep.mubr.bf16.mxu0 %v1160
    %2080 = vmatmul.mubr.bf16.gmra.mrb[0].mxu0 %v1159
    %v2081 = vpop.f32.mrb[0].mxu0
    %v2082 = vadd.f32 %v1292, %v2081
    %v2083 = vpop.f32.mrb[0].mxu0
    %v2084 = vpop.f32.mrb[0].mxu0
    %v2085 = vadd.f32 %v1292, %v2084
    %v2086 = vpop.f32.mrb[0].mxu0
    %2087 = vmatprep.mubr.bf16.mxu0 %v1162
    %2088 = vmatmul.mubr.bf16.gmra.mrb[0].mxu0 %v1161
    %v2089 = vpop.f32.mrb[0].mxu0
    %v2090 = vadd.f32 %v1292, %v2089
    %v2091 = vpop.f32.mrb[0].mxu0
    %v2092 = vpop.f32.mrb[0].mxu0
    %v2093 = vadd.f32 %v1292, %v2092
    %v2094 = vpop.f32.mrb[0].mxu0
    %2095 = vmatprep.mubr.bf16.mxu0 %v1164
    %2096 = vmatmul.mubr.bf16.gmra.mrb[0].mxu0 %v1163
    %v2097 = vpop.f32.mrb[0].mxu0
    %v2098 = vadd.f32 %v1292, %v2097
    %v2099 = vpop.f32.mrb[0].mxu0
    %v2100 = vpop.f32.mrb[0].mxu0
    %v2101 = vadd.f32 %v1292, %v2100
    %v2102 = vpop.f32.mrb[0].mxu0
    %2103 = vmatprep.mubr.bf16.mxu0 %v1166
    %2104 = vmatmul.mubr.bf16.gmra.mrb[0].mxu0 %v1165
    %v2105 = vpop.f32.mrb[0].mxu0
    %v2106 = vadd.f32 %v1292, %v2105
    %v2107 = vpop.f32.mrb[0].mxu0
    %v2108 = vpop.f32.mrb[0].mxu0
    %v2109 = vadd.f32 %v1292, %v2108
    %v2110 = vpop.f32.mrb[0].mxu0
    %2111 = vmatprep.mubr.bf16.mxu0 %v1168
    %2112 = vmatmul.mubr.bf16.gmra.mrb[0].mxu0 %v1167
    %v2113 = vpop.f32.mrb[0].mxu0
    %v2114 = vadd.f32 %v1292, %v2113
    %v2115 = vpop.f32.mrb[0].mxu0
    %v2116 = vpop.f32.mrb[0].mxu0
    %v2117 = vadd.f32 %v1292, %v2116
    %v2118 = vpop.f32.mrb[0].mxu0
    %2119 = vmatprep.mubr.bf16.mxu0 %v1170
    %2120 = vmatmul.mubr.bf16.gmra.mrb[0].mxu0 %v1169
    %v2121 = vpop.f32.mrb[0].mxu0
    %v2122 = vadd.f32 %v1292, %v2121
    %v2123 = vpop.f32.mrb[0].mxu0
    %v2124 = vpop.f32.mrb[0].mxu0
    %v2125 = vadd.f32 %v1292, %v2124
    %v2126 = vpop.f32.mrb[0].mxu0
    %2127 = vmatprep.mubr.bf16.mxu0 %v1172
    %2128 = vmatmul.mubr.bf16.gmra.mrb[0].mxu0 %v1171
    %v2129 = vpop.f32.mrb[0].mxu0
    %v2130 = vadd.f32 %v1292, %v2129
    %v2131 = vpop.f32.mrb[0].mxu0
    %v2132 = vpop.f32.mrb[0].mxu0
    %v2133 = vadd.f32 %v1292, %v2132
    %v2134 = vpop.f32.mrb[0].mxu0
    %2135 = vmatprep.mubr.bf16.mxu0 %v1174
    %2136 = vmatmul.mubr.bf16.gmra.mrb[0].mxu0 %v1173
    %v2137 = vpop.f32.mrb[0].mxu0
    %v2138 = vadd.f32 %v1292, %v2137
    %v2139 = vpop.f32.mrb[0].mxu0
    %v2140 = vpop.f32.mrb[0].mxu0
    %v2141 = vadd.f32 %v1292, %v2140
    %v2142 = vpop.f32.mrb[0].mxu0
    %2143 = vmatprep.mubr.bf16.mxu0 %v1176
    %2144 = vmatmul.mubr.bf16.gmra.mrb[0].mxu0 %v1175
    %v2145 = vpop.f32.mrb[0].mxu0
    %v2146 = vadd.f32 %v1292, %v2145
    %v2147 = vpop.f32.mrb[0].mxu0
    %v2148 = vpop.f32.mrb[0].mxu0
    %v2149 = vadd.f32 %v1292, %v2148
    %v2150 = vpop.f32.mrb[0].mxu0
    %2151 = vmatprep.mubr.bf16.mxu0 %v1178
    %2152 = vmatmul.mubr.bf16.gmra.mrb[0].mxu0 %v1177
    %v2153 = vpop.f32.mrb[0].mxu0
    %v2154 = vadd.f32 %v1292, %v2153
    %v2155 = vpop.f32.mrb[0].mxu0
    %v2156 = vpop.f32.mrb[0].mxu0
    %v2157 = vadd.f32 %v1292, %v2156
    %v2158 = vpop.f32.mrb[0].mxu0
    %2159 = vmatprep.mubr.bf16.mxu0 %v1180
    %2160 = vmatmul.mubr.bf16.gmra.mrb[0].mxu0 %v1179
    %v2161 = vpop.f32.mrb[0].mxu0
    %v2162 = vadd.f32 %v1292, %v2161
    %v2163 = vpop.f32.mrb[0].mxu0
    %v2164 = vpop.f32.mrb[0].mxu0
    %v2165 = vadd.f32 %v1292, %v2164
    %v2166 = vpop.f32.mrb[0].mxu0
    %2167 = vmatprep.mubr.bf16.mxu0 %v1182
    %2168 = vmatmul.mubr.bf16.gmra.mrb[0].mxu0 %v1181
    %v2169 = vpop.f32.mrb[0].mxu0
    %v2170 = vadd.f32 %v1292, %v2169
    %v2171 = vpop.f32.mrb[0].mxu0
    %v2172 = vpop.f32.mrb[0].mxu0
    %v2173 = vadd.f32 %v1292, %v2172
    %v2174 = vpop.f32.mrb[0].mxu0
    %2175 = vmatprep.mubr.bf16.mxu0 %v1184
    %2176 = vmatmul.mubr.bf16.gmra.mrb[0].mxu0 %v1183
    %v2177 = vpop.f32.mrb[0].mxu0
    %v2178 = vadd.f32 %v1292, %v2177
    %v2179 = vpop.f32.mrb[0].mxu0
    %v2180 = vpop.f32.mrb[0].mxu0
    %v2181 = vadd.f32 %v1292, %v2180
    %v2182 = vpop.f32.mrb[0].mxu0
    %2183 = vmatprep.mubr.bf16.mxu0 %v1186
    %2184 = vmatmul.mubr.bf16.gmra.mrb[0].mxu0 %v1185
    %v2185 = vpop.f32.mrb[0].mxu0
    %v2186 = vadd.f32 %v1292, %v2185
    %v2187 = vpop.f32.mrb[0].mxu0
    %v2188 = vpop.f32.mrb[0].mxu0
    %v2189 = vadd.f32 %v1292, %v2188
    %v2190 = vpop.f32.mrb[0].mxu0
    %2191 = vmatprep.mubr.bf16.mxu0 %v1188
    %2192 = vmatmul.mubr.bf16.gmra.mrb[0].mxu0 %v1187
    %v2193 = vpop.f32.mrb[0].mxu0
    %v2194 = vadd.f32 %v1292, %v2193
    %v2195 = vpop.f32.mrb[0].mxu0
    %v2196 = vpop.f32.mrb[0].mxu0
    %v2197 = vadd.f32 %v1292, %v2196
    %v2198 = vpop.f32.mrb[0].mxu0
    %2199 = vmatprep.mubr.bf16.mxu0 %v1190
    %2200 = vmatmul.mubr.bf16.gmra.mrb[0].mxu0 %v1189
    %v2201 = vpop.f32.mrb[0].mxu0
    %v2202 = vadd.f32 %v1292, %v2201
    %v2203 = vpop.f32.mrb[0].mxu0
    %v2204 = vpop.f32.mrb[0].mxu0
    %v2205 = vadd.f32 %v1292, %v2204
    %v2206 = vpop.f32.mrb[0].mxu0
    %2207 = vmatprep.mubr.bf16.mxu0 %v1192
    %2208 = vmatmul.mubr.bf16.gmra.mrb[0].mxu0 %v1191
    %v2209 = vpop.f32.mrb[0].mxu0
    %v2210 = vadd.f32 %v1292, %v2209
    %v2211 = vpop.f32.mrb[0].mxu0
    %v2212 = vpop.f32.mrb[0].mxu0
    %v2213 = vadd.f32 %v1292, %v2212
    %v2214 = vpop.f32.mrb[0].mxu0
    %2215 = vmatprep.mubr.bf16.mxu0 %v1194
    %2216 = vmatmul.mubr.bf16.gmra.mrb[0].mxu0 %v1193
    %v2217 = vpop.f32.mrb[0].mxu0
    %v2218 = vadd.f32 %v1292, %v2217
    %v2219 = vpop.f32.mrb[0].mxu0
    %v2220 = vpop.f32.mrb[0].mxu0
    %v2221 = vadd.f32 %v1292, %v2220
    %v2222 = vpop.f32.mrb[0].mxu0
    %2223 = vmatprep.mubr.bf16.mxu0 %v1196
    %2224 = vmatmul.mubr.bf16.gmra.mrb[0].mxu0 %v1195
    %v2225 = vpop.f32.mrb[0].mxu0
    %v2226 = vadd.f32 %v1292, %v2225
    %v2227 = vpop.f32.mrb[0].mxu0
    %v2228 = vpop.f32.mrb[0].mxu0
    %v2229 = vadd.f32 %v1292, %v2228
    %v2230 = vpop.f32.mrb[0].mxu0
    %2231 = vmatprep.mubr.bf16.mxu0 %v1198
    %2232 = vmatmul.mubr.bf16.gmra.mrb[0].mxu0 %v1197
    %v2233 = vpop.f32.mrb[0].mxu0
    %v2234 = vadd.f32 %v1292, %v2233
    %v2235 = vpop.f32.mrb[0].mxu0
    %v2236 = vpop.f32.mrb[0].mxu0
    %v2237 = vadd.f32 %v1292, %v2236
    %v2238 = vpop.f32.mrb[0].mxu0
    %2239 = vmatprep.mubr.bf16.mxu0 %v1200
    %2240 = vmatmul.mubr.bf16.gmra.mrb[0].mxu0 %v1199
    %v2241 = vpop.f32.mrb[0].mxu0
    %v2242 = vadd.f32 %v1292, %v2241
    %v2243 = vpop.f32.mrb[0].mxu0
    %v2244 = vpop.f32.mrb[0].mxu0
    %v2245 = vadd.f32 %v1292, %v2244
    %v2246 = vpop.f32.mrb[0].mxu0
    %2247 = vmatprep.mubr.bf16.mxu0 %v1202
    %2248 = vmatmul.mubr.bf16.gmra.mrb[0].mxu0 %v1201
    %v2249 = vpop.f32.mrb[0].mxu0
    %v2250 = vadd.f32 %v1292, %v2249
    %v2251 = vpop.f32.mrb[0].mxu0
    %v2252 = vpop.f32.mrb[0].mxu0
    %v2253 = vadd.f32 %v1292, %v2252
    %v2254 = vpop.f32.mrb[0].mxu0
    %2255 = vmatprep.mubr.bf16.mxu0 %v1204
    %2256 = vmatmul.mubr.bf16.gmra.mrb[0].mxu0 %v1203
    %v2257 = vpop.f32.mrb[0].mxu0
    %v2258 = vadd.f32 %v1292, %v2257
    %v2259 = vpop.f32.mrb[0].mxu0
    %v2260 = vpop.f32.mrb[0].mxu0
    %v2261 = vadd.f32 %v1292, %v2260
    %v2262 = vpop.f32.mrb[0].mxu0
    %2263 = vmatprep.mubr.bf16.mxu0 %v1206
    %2264 = vmatmul.mubr.bf16.gmra.mrb[0].mxu0 %v1205
    %v2265 = vpop.f32.mrb[0].mxu0
    %v2266 = vadd.f32 %v1292, %v2265
    %v2267 = vpop.f32.mrb[0].mxu0
    %v2268 = vpop.f32.mrb[0].mxu0
    %v2269 = vadd.f32 %v1292, %v2268
    %v2270 = vpop.f32.mrb[0].mxu0
    %2271 = vmatprep.mubr.bf16.mxu0 %v1208
    %2272 = vmatmul.mubr.bf16.gmra.mrb[0].mxu0 %v1207
    %v2273 = vpop.f32.mrb[0].mxu0
    %v2274 = vadd.f32 %v1292, %v2273
    %v2275 = vpop.f32.mrb[0].mxu0
    %v2276 = vpop.f32.mrb[0].mxu0
    %v2277 = vadd.f32 %v1292, %v2276
    %v2278 = vpop.f32.mrb[0].mxu0
    %2279 = vmatprep.mubr.bf16.mxu0 %v1210
    %2280 = vmatmul.mubr.bf16.gmra.mrb[0].mxu0 %v1209
    %v2281 = vpop.f32.mrb[0].mxu0
    %v2282 = vadd.f32 %v1292, %v2281
    %v2283 = vpop.f32.mrb[0].mxu0
    %v2284 = vpop.f32.mrb[0].mxu0
    %v2285 = vadd.f32 %v1292, %v2284
    %v2286 = vpop.f32.mrb[0].mxu0
    %2287 = vmatprep.mubr.bf16.mxu0 %v1212
    %2288 = vmatmul.mubr.bf16.gmra.mrb[0].mxu0 %v1211
    %v2289 = vpop.f32.mrb[0].mxu0
    %v2290 = vadd.f32 %v1292, %v2289
    %v2291 = vpop.f32.mrb[0].mxu0
    %v2292 = vpop.f32.mrb[0].mxu0
    %v2293 = vadd.f32 %v1292, %v2292
    %v2294 = vpop.f32.mrb[0].mxu0
    %2295 = vmatprep.mubr.bf16.mxu0 %v1214
    %2296 = vmatmul.mubr.bf16.gmra.mrb[0].mxu0 %v1213
    %v2297 = vpop.f32.mrb[0].mxu0
    %v2298 = vadd.f32 %v1292, %v2297
    %v2299 = vpop.f32.mrb[0].mxu0
    %v2300 = vpop.f32.mrb[0].mxu0
    %v2301 = vadd.f32 %v1292, %v2300
    %v2302 = vpop.f32.mrb[0].mxu0
    %2303 = vmatprep.mubr.bf16.mxu0 %v1216
    %2304 = vmatmul.mubr.bf16.gmra.mrb[0].mxu0 %v1215
    %v2305 = vpop.f32.mrb[0].mxu0
    %v2306 = vadd.f32 %v1292, %v2305
    %v2307 = vpop.f32.mrb[0].mxu0
    %v2308 = vpop.f32.mrb[0].mxu0
    %v2309 = vadd.f32 %v1292, %v2308
    %v2310 = vpop.f32.mrb[0].mxu0
    %2311 = vmatprep.mubr.bf16.mxu0 %v1218
    %2312 = vmatmul.mubr.bf16.gmra.mrb[0].mxu0 %v1217
    %v2313 = vpop.f32.mrb[0].mxu0
    %v2314 = vadd.f32 %v1292, %v2313
    %v2315 = vpop.f32.mrb[0].mxu0
    %v2316 = vpop.f32.mrb[0].mxu0
    %v2317 = vadd.f32 %v1292, %v2316
    %v2318 = vpop.f32.mrb[0].mxu0
    %2319 = vmatprep.mubr.bf16.mxu0 %v1220
    %2320 = vmatmul.mubr.bf16.gmra.mrb[0].mxu0 %v1219
    %v2321 = vpop.f32.mrb[0].mxu0
    %v2322 = vadd.f32 %v1292, %v2321
    %v2323 = vpop.f32.mrb[0].mxu0
    %v2324 = vpop.f32.mrb[0].mxu0
    %v2325 = vadd.f32 %v1292, %v2324
    %v2326 = vpop.f32.mrb[0].mxu0
    %2327 = vmatprep.mubr.bf16.mxu0 %v1222
    %2328 = vmatmul.mubr.bf16.gmra.mrb[0].mxu0 %v1221
    %v2329 = vpop.f32.mrb[0].mxu0
    %v2330 = vadd.f32 %v1292, %v2329
    %v2331 = vpop.f32.mrb[0].mxu0
    %v2332 = vpop.f32.mrb[0].mxu0
    %v2333 = vadd.f32 %v1292, %v2332
    %v2334 = vpop.f32.mrb[0].mxu0
    %2335 = vmatprep.mubr.bf16.mxu0 %v1224
    %2336 = vmatmul.mubr.bf16.gmra.mrb[0].mxu0 %v1223
    %v2337 = vpop.f32.mrb[0].mxu0
    %v2338 = vadd.f32 %v1292, %v2337
    %v2339 = vpop.f32.mrb[0].mxu0
    %v2340 = vpop.f32.mrb[0].mxu0
    %v2341 = vadd.f32 %v1292, %v2340
    %v2342 = vpop.f32.mrb[0].mxu0
    %2343 = vmatprep.mubr.bf16.mxu0 %v1226
    %2344 = vmatmul.mubr.bf16.gmra.mrb[0].mxu0 %v1225
    %v2345 = vpop.f32.mrb[0].mxu0
    %v2346 = vadd.f32 %v1292, %v2345
    %v2347 = vpop.f32.mrb[0].mxu0
    %v2348 = vpop.f32.mrb[0].mxu0
    %v2349 = vadd.f32 %v1292, %v2348
    %v2350 = vpop.f32.mrb[0].mxu0
    %2351 = vmatprep.mubr.bf16.mxu0 %v1228
    %2352 = vmatmul.mubr.bf16.gmra.mrb[0].mxu0 %v1227
    %v2353 = vpop.f32.mrb[0].mxu0
    %v2354 = vadd.f32 %v1292, %v2353
    %v2355 = vpop.f32.mrb[0].mxu0
    %v2356 = vpop.f32.mrb[0].mxu0
    %v2357 = vadd.f32 %v1292, %v2356
    %v2358 = vpop.f32.mrb[0].mxu0
    %2359 = vmatprep.mubr.bf16.mxu0 %v1230
    %2360 = vmatmul.mubr.bf16.gmra.mrb[0].mxu0 %v1229
    %v2361 = vpop.f32.mrb[0].mxu0
    %v2362 = vadd.f32 %v1292, %v2361
    %v2363 = vpop.f32.mrb[0].mxu0
    %v2364 = vpop.f32.mrb[0].mxu0
    %v2365 = vadd.f32 %v1292, %v2364
    %v2366 = vpop.f32.mrb[0].mxu0
    %2367 = vmatprep.mubr.bf16.mxu0 %v1232
    %2368 = vmatmul.mubr.bf16.gmra.mrb[0].mxu0 %v1231
    %v2369 = vpop.f32.mrb[0].mxu0
    %v2370 = vadd.f32 %v1292, %v2369
    %v2371 = vpop.f32.mrb[0].mxu0
    %v2372 = vpop.f32.mrb[0].mxu0
    %v2373 = vadd.f32 %v1292, %v2372
    %v2374 = vpop.f32.mrb[0].mxu0
    %2375 = vmatprep.mubr.bf16.mxu0 %v1234
    %2376 = vmatmul.mubr.bf16.gmra.mrb[0].mxu0 %v1233
    %v2377 = vpop.f32.mrb[0].mxu0
    %v2378 = vadd.f32 %v1292, %v2377
    %v2379 = vpop.f32.mrb[0].mxu0
    %v2380 = vpop.f32.mrb[0].mxu0
    %v2381 = vadd.f32 %v1292, %v2380
    %v2382 = vpop.f32.mrb[0].mxu0
    %2383 = vmatprep.mubr.bf16.mxu0 %v1236
    %2384 = vmatmul.mubr.bf16.gmra.mrb[0].mxu0 %v1235
    %v2385 = vpop.f32.mrb[0].mxu0
    %v2386 = vadd.f32 %v1292, %v2385
    %v2387 = vpop.f32.mrb[0].mxu0
    %v2388 = vpop.f32.mrb[0].mxu0
    %v2389 = vadd.f32 %v1292, %v2388
    %v2390 = vpop.f32.mrb[0].mxu0
    %2391 = vmatprep.mubr.bf16.mxu0 %v1238
    %2392 = vmatmul.mubr.bf16.gmra.mrb[0].mxu0 %v1237
    %v2393 = vpop.f32.mrb[0].mxu0
    %v2394 = vadd.f32 %v1292, %v2393
    %v2395 = vpop.f32.mrb[0].mxu0
    %v2396 = vpop.f32.mrb[0].mxu0
    %v2397 = vadd.f32 %v1292, %v2396
    %v2398 = vpop.f32.mrb[0].mxu0
    %2399 = vmatprep.mubr.bf16.mxu0 %v1240
    %2400 = vmatmul.mubr.bf16.gmra.mrb[0].mxu0 %v1239
    %v2401 = vpop.f32.mrb[0].mxu0
    %v2402 = vadd.f32 %v1292, %v2401
    %v2403 = vpop.f32.mrb[0].mxu0
    %v2404 = vpop.f32.mrb[0].mxu0
    %v2405 = vadd.f32 %v1292, %v2404
    %v2406 = vpop.f32.mrb[0].mxu0
    %2407 = vmatprep.mubr.bf16.mxu0 %v1242
    %2408 = vmatmul.mubr.bf16.gmra.mrb[0].mxu0 %v1241
    %v2409 = vpop.f32.mrb[0].mxu0
    %v2410 = vadd.f32 %v1292, %v2409
    %v2411 = vpop.f32.mrb[0].mxu0
    %v2412 = vpop.f32.mrb[0].mxu0
    %v2413 = vadd.f32 %v1292, %v2412
    %v2414 = vpop.f32.mrb[0].mxu0
    %2415 = vmatprep.mubr.bf16.mxu0 %v1244
    %2416 = vmatmul.mubr.bf16.gmra.mrb[0].mxu0 %v1243
    %v2417 = vpop.f32.mrb[0].mxu0
    %v2418 = vadd.f32 %v1292, %v2417
    %v2419 = vpop.f32.mrb[0].mxu0
    %v2420 = vpop.f32.mrb[0].mxu0
    %v2421 = vadd.f32 %v1292, %v2420
    %v2422 = vpop.f32.mrb[0].mxu0
    %2423 = vmatprep.mubr.bf16.mxu0 %v1246
    %2424 = vmatmul.mubr.bf16.gmra.mrb[0].mxu0 %v1245
    %v2425 = vpop.f32.mrb[0].mxu0
    %v2426 = vadd.f32 %v1292, %v2425
    %v2427 = vpop.f32.mrb[0].mxu0
    %v2428 = vpop.f32.mrb[0].mxu0
    %v2429 = vadd.f32 %v1292, %v2428
    %v2430 = vpop.f32.mrb[0].mxu0
    %2431 = vmatprep.mubr.bf16.mxu0 %v1248
    %2432 = vmatmul.mubr.bf16.gmra.mrb[0].mxu0 %v1247
    %v2433 = vpop.f32.mrb[0].mxu0
    %v2434 = vadd.f32 %v1292, %v2433
    %v2435 = vpop.f32.mrb[0].mxu0
    %v2436 = vpop.f32.mrb[0].mxu0
    %v2437 = vadd.f32 %v1292, %v2436
    %v2438 = vpop.f32.mrb[0].mxu0
    %2439 = vmatprep.mubr.bf16.mxu0 %v1250
    %2440 = vmatmul.mubr.bf16.gmra.mrb[0].mxu0 %v1249
    %v2441 = vpop.f32.mrb[0].mxu0
    %v2442 = vadd.f32 %v1292, %v2441
    %v2443 = vpop.f32.mrb[0].mxu0
    %v2444 = vpop.f32.mrb[0].mxu0
    %v2445 = vadd.f32 %v1292, %v2444
    %v2446 = vpop.f32.mrb[0].mxu0
    %2447 = vmatprep.mubr.bf16.mxu0 %v1252
    %2448 = vmatmul.mubr.bf16.gmra.mrb[0].mxu0 %v1251
    %v2449 = vpop.f32.mrb[0].mxu0
    %v2450 = vadd.f32 %v1292, %v2449
    %v2451 = vpop.f32.mrb[0].mxu0
    %v2452 = vpop.f32.mrb[0].mxu0
    %v2453 = vadd.f32 %v1292, %v2452
    %v2454 = vpop.f32.mrb[0].mxu0
    %2455 = vmatprep.mubr.bf16.mxu0 %v1254
    %2456 = vmatmul.mubr.bf16.gmra.mrb[0].mxu0 %v1253
    %v2457 = vpop.f32.mrb[0].mxu0
    %v2458 = vadd.f32 %v1292, %v2457
    %v2459 = vpop.f32.mrb[0].mxu0
    %v2460 = vpop.f32.mrb[0].mxu0
    %v2461 = vadd.f32 %v1292, %v2460
    %v2462 = vpop.f32.mrb[0].mxu0
    %2463 = vdwg.mxu0
    %v2464 = vld [vmem:[#allocation9] sm:$0xf]
    %v2465 = vld [vmem:[#allocation9 + $0x4] sm:$0xf]
    %v2466 = vld [vmem:[#allocation9 + $0x8] sm:$0xf]
    %v2467 = vld [vmem:[#allocation9 + $0xc] sm:$0xf]
    %v2468 = vld [vmem:[#allocation9 + $0x10] sm:$0xf]
    %v2469 = vld [vmem:[#allocation9 + $0x14] sm:$0xf]
    %v2470 = vld [vmem:[#allocation9 + $0x18] sm:$0xf]
    %v2471 = vld [vmem:[#allocation9 + $0x1c] sm:$0xf]
    %v2472 = vld [vmem:[#allocation9 + $0x20] sm:$0xf]
    %v2473 = vld [vmem:[#allocation9 + $0x24] sm:$0xf]
    %v2474 = vld [vmem:[#allocation9 + $0x28] sm:$0xf]
    %v2475 = vld [vmem:[#allocation9 + $0x2c] sm:$0xf]
    %v2476 = vld [vmem:[#allocation9 + $0x30] sm:$0xf]
    %v2477 = vld [vmem:[#allocation9 + $0x34] sm:$0xf]
    %v2478 = vld [vmem:[#allocation9 + $0x38] sm:$0xf]
    %v2479 = vld [vmem:[#allocation9 + $0x3c] sm:$0xf]
    %v2480 = vld [vmem:[#allocation9 + $0x40] sm:$0xf]
    %v2481 = vld [vmem:[#allocation9 + $0x44] sm:$0xf]
    %v2482 = vld [vmem:[#allocation9 + $0x48] sm:$0xf]
    %v2483 = vld [vmem:[#allocation9 + $0x4c] sm:$0xf]
    %v2484 = vld [vmem:[#allocation9 + $0x50] sm:$0xf]
    %v2485 = vld [vmem:[#allocation9 + $0x54] sm:$0xf]
    %v2486 = vld [vmem:[#allocation9 + $0x58] sm:$0xf]
    %v2487 = vld [vmem:[#allocation9 + $0x5c] sm:$0xf]
    %v2488 = vld [vmem:[#allocation9 + $0x60] sm:$0xf]
    %v2489 = vld [vmem:[#allocation9 + $0x64] sm:$0xf]
    %v2490 = vld [vmem:[#allocation9 + $0x68] sm:$0xf]
    %v2491 = vld [vmem:[#allocation9 + $0x6c] sm:$0xf]
    %v2492 = vld [vmem:[#allocation9 + $0x70] sm:$0xf]
    %v2493 = vld [vmem:[#allocation9 + $0x74] sm:$0xf]
    %v2494 = vld [vmem:[#allocation9 + $0x78] sm:$0xf]
    %v2495 = vld [vmem:[#allocation9 + $0x7c] sm:$0xf]
    %v2496 = vld [vmem:[%s6] sm:$0x1]
    %v2498 = vlaneseq
    %v2499 = vshrl.u32 %v2498, 7
    %v2500 = vsub.s32 0, %v2499
    %v2501 = vrot.slane %v2496, %v2500
    %v2535 = vunpack.c.l.b16 %v2464
    %v2536 = vunpack.c.l.b16 %v2465
    %v2537 = vunpack.c.l.b16 %v2466
    %v2538 = vunpack.c.l.b16 %v2467
    %v2539 = vunpack.c.l.b16 %v2468
    %v2540 = vunpack.c.l.b16 %v2469
    %v2541 = vunpack.c.l.b16 %v2470
    %v2542 = vunpack.c.l.b16 %v2471
    %v2543 = vunpack.c.l.b16 %v2472
    %v2544 = vunpack.c.l.b16 %v2473
    %v2545 = vunpack.c.l.b16 %v2474
    %v2546 = vunpack.c.l.b16 %v2475
    %v2547 = vunpack.c.l.b16 %v2476
    %v2548 = vunpack.c.l.b16 %v2477
    %v2549 = vunpack.c.l.b16 %v2478
    %v2550 = vunpack.c.l.b16 %v2479
    %v2551 = vunpack.c.l.b16 %v2480
    %v2552 = vunpack.c.l.b16 %v2481
    %v2553 = vunpack.c.l.b16 %v2482
    %v2554 = vunpack.c.l.b16 %v2483
    %v2555 = vunpack.c.l.b16 %v2484
    %v2556 = vunpack.c.l.b16 %v2485
    %v2557 = vunpack.c.l.b16 %v2486
    %v2558 = vunpack.c.l.b16 %v2487
    %v2559 = vunpack.c.l.b16 %v2488
    %v2560 = vunpack.c.l.b16 %v2489
    %v2561 = vunpack.c.l.b16 %v2490
    %v2562 = vunpack.c.l.b16 %v2491
    %v2563 = vunpack.c.l.b16 %v2492
    %v2564 = vunpack.c.l.b16 %v2493
    %v2565 = vunpack.c.l.b16 %v2494
    %v2566 = vunpack.c.l.b16 %v2495
    %v2567 = vpack.c.b16 %v2536, %v2535
    %v2568 = vpack.c.b16 %v2538, %v2537
    %v2569 = vpack.c.b16 %v2540, %v2539
    %v2570 = vpack.c.b16 %v2542, %v2541
    %v2571 = vpack.c.b16 %v2544, %v2543
    %v2572 = vpack.c.b16 %v2546, %v2545
    %v2573 = vpack.c.b16 %v2548, %v2547
    %v2574 = vpack.c.b16 %v2550, %v2549
    %v2575 = vpack.c.b16 %v2552, %v2551
    %v2576 = vpack.c.b16 %v2554, %v2553
    %v2577 = vpack.c.b16 %v2556, %v2555
    %v2578 = vpack.c.b16 %v2558, %v2557
    %v2579 = vpack.c.b16 %v2560, %v2559
    %v2580 = vpack.c.b16 %v2562, %v2561
    %v2581 = vpack.c.b16 %v2564, %v2563
    %v2582 = vpack.c.b16 %v2566, %v2565
    %2599 = vmatprep.subr.bf16.mxu0 0
    %2600 = vmatpush1.bf16.msra.mxu0 %v2567
    %2601 = vmatprep.subr.bf16.mxu0 0
    %2602 = vmatpush1.bf16.msra.mxu0 %v2568
    %2603 = vmatprep.subr.bf16.mxu0 0
    %2604 = vmatpush1.bf16.msra.mxu0 %v2569
    %2605 = vmatprep.subr.bf16.mxu0 0
    %2606 = vmatpush1.bf16.msra.mxu0 %v2570
    %2607 = vmatprep.subr.bf16.mxu0 0
    %2608 = vmatpush1.bf16.msra.mxu0 %v2571
    %2609 = vmatprep.subr.bf16.mxu0 0
    %2610 = vmatpush1.bf16.msra.mxu0 %v2572
    %2611 = vmatprep.subr.bf16.mxu0 0
    %2612 = vmatpush1.bf16.msra.mxu0 %v2573
    %2613 = vmatprep.subr.bf16.mxu0 0
    %2614 = vmatpush1.bf16.msra.mxu0 %v2574
    %2615 = vmatprep.subr.bf16.mxu0 0
    %2616 = vmatpush1.bf16.msra.mxu0 %v2575
    %2617 = vmatprep.subr.bf16.mxu0 0
    %2618 = vmatpush1.bf16.msra.mxu0 %v2576
    %2619 = vmatprep.subr.bf16.mxu0 0
    %2620 = vmatpush1.bf16.msra.mxu0 %v2577
    %2621 = vmatprep.subr.bf16.mxu0 0
    %2622 = vmatpush1.bf16.msra.mxu0 %v2578
    %2623 = vmatprep.subr.bf16.mxu0 0
    %2624 = vmatpush1.bf16.msra.mxu0 %v2579
    %2625 = vmatprep.subr.bf16.mxu0 0
    %2626 = vmatpush1.bf16.msra.mxu0 %v2580
    %2627 = vmatprep.subr.bf16.mxu0 0
    %2628 = vmatpush1.bf16.msra.mxu0 %v2581
    %2629 = vmatprep.subr.bf16.mxu0 0
    %2630 = vmatpush1.bf16.msra.mxu0 %v2582
    %2631 = vmatprep.mubr.bf16.mxu0 %v752
    %2632 = vmatmul.mubr.bf16.gmra.mrb[0].mxu0 %v751
    %v2633 = vpop.f32.mrb[0].mxu0
    %v2634 = vadd.f32 %v2501, %v2633
    %v2635 = vpop.f32.mrb[0].mxu0
    %v2636 = vpop.f32.mrb[0].mxu0
    %v2637 = vadd.f32 %v2501, %v2636
    %v2638 = vpop.f32.mrb[0].mxu0
    %2639 = vmatprep.mubr.bf16.mxu0 %v754
    %2640 = vmatmul.mubr.bf16.gmra.mrb[0].mxu0 %v753
    %v2641 = vpop.f32.mrb[0].mxu0
    %v2642 = vadd.f32 %v2501, %v2641
    %v2643 = vpop.f32.mrb[0].mxu0
    %v2644 = vpop.f32.mrb[0].mxu0
    %v2645 = vadd.f32 %v2501, %v2644
    %v2646 = vpop.f32.mrb[0].mxu0
    %2647 = vmatprep.mubr.bf16.mxu0 %v756
    %2648 = vmatmul.mubr.bf16.gmra.mrb[0].mxu0 %v755
    %v2649 = vpop.f32.mrb[0].mxu0
    %v2650 = vadd.f32 %v2501, %v2649
    %v2651 = vpop.f32.mrb[0].mxu0
    %v2652 = vpop.f32.mrb[0].mxu0
    %v2653 = vadd.f32 %v2501, %v2652
    %v2654 = vpop.f32.mrb[0].mxu0
    %2655 = vmatprep.mubr.bf16.mxu0 %v758
    %2656 = vmatmul.mubr.bf16.gmra.mrb[0].mxu0 %v757
    %v2657 = vpop.f32.mrb[0].mxu0
    %v2658 = vadd.f32 %v2501, %v2657
    %v2659 = vpop.f32.mrb[0].mxu0
    %v2660 = vpop.f32.mrb[0].mxu0
    %v2661 = vadd.f32 %v2501, %v2660
    %v2662 = vpop.f32.mrb[0].mxu0
    %2663 = vmatprep.mubr.bf16.mxu0 %v760
    %2664 = vmatmul.mubr.bf16.gmra.mrb[0].mxu0 %v759
    %v2665 = vpop.f32.mrb[0].mxu0
    %v2666 = vadd.f32 %v2501, %v2665
    %v2667 = vpop.f32.mrb[0].mxu0
    %v2668 = vpop.f32.mrb[0].mxu0
    %v2669 = vadd.f32 %v2501, %v2668
    %v2670 = vpop.f32.mrb[0].mxu0
    %2671 = vmatprep.mubr.bf16.mxu0 %v762
    %2672 = vmatmul.mubr.bf16.gmra.mrb[0].mxu0 %v761
    %v2673 = vpop.f32.mrb[0].mxu0
    %v2674 = vadd.f32 %v2501, %v2673
    %v2675 = vpop.f32.mrb[0].mxu0
    %v2676 = vpop.f32.mrb[0].mxu0
    %v2677 = vadd.f32 %v2501, %v2676
    %v2678 = vpop.f32.mrb[0].mxu0
    %2679 = vmatprep.mubr.bf16.mxu0 %v764
    %2680 = vmatmul.mubr.bf16.gmra.mrb[0].mxu0 %v763
    %v2681 = vpop.f32.mrb[0].mxu0
    %v2682 = vadd.f32 %v2501, %v2681
    %v2683 = vpop.f32.mrb[0].mxu0
    %v2684 = vpop.f32.mrb[0].mxu0
    %v2685 = vadd.f32 %v2501, %v2684
    %v2686 = vpop.f32.mrb[0].mxu0
    %2687 = vmatprep.mubr.bf16.mxu0 %v766
    %2688 = vmatmul.mubr.bf16.gmra.mrb[0].mxu0 %v765
    %v2689 = vpop.f32.mrb[0].mxu0
    %v2690 = vadd.f32 %v2501, %v2689
    %v2691 = vpop.f32.mrb[0].mxu0
    %v2692 = vpop.f32.mrb[0].mxu0
    %v2693 = vadd.f32 %v2501, %v2692
    %v2694 = vpop.f32.mrb[0].mxu0
    %2695 = vmatprep.mubr.bf16.mxu0 %v768
    %2696 = vmatmul.mubr.bf16.gmra.mrb[0].mxu0 %v767
    %v2697 = vpop.f32.mrb[0].mxu0
    %v2698 = vadd.f32 %v2501, %v2697
    %v2699 = vpop.f32.mrb[0].mxu0
    %v2700 = vpop.f32.mrb[0].mxu0
    %v2701 = vadd.f32 %v2501, %v2700
    %v2702 = vpop.f32.mrb[0].mxu0
    %2703 = vmatprep.mubr.bf16.mxu0 %v770
    %2704 = vmatmul.mubr.bf16.gmra.mrb[0].mxu0 %v769
    %v2705 = vpop.f32.mrb[0].mxu0
    %v2706 = vadd.f32 %v2501, %v2705
    %v2707 = vpop.f32.mrb[0].mxu0
    %v2708 = vpop.f32.mrb[0].mxu0
    %v2709 = vadd.f32 %v2501, %v2708
    %v2710 = vpop.f32.mrb[0].mxu0
    %2711 = vmatprep.mubr.bf16.mxu0 %v772
    %2712 = vmatmul.mubr.bf16.gmra.mrb[0].mxu0 %v771
    %v2713 = vpop.f32.mrb[0].mxu0
    %v2714 = vadd.f32 %v2501, %v2713
    %v2715 = vpop.f32.mrb[0].mxu0
    %v2716 = vpop.f32.mrb[0].mxu0
    %v2717 = vadd.f32 %v2501, %v2716
    %v2718 = vpop.f32.mrb[0].mxu0
    %2719 = vmatprep.mubr.bf16.mxu0 %v774
    %2720 = vmatmul.mubr.bf16.gmra.mrb[0].mxu0 %v773
    %v2721 = vpop.f32.mrb[0].mxu0
    %v2722 = vadd.f32 %v2501, %v2721
    %v2723 = vpop.f32.mrb[0].mxu0
    %v2724 = vpop.f32.mrb[0].mxu0
    %v2725 = vadd.f32 %v2501, %v2724
    %v2726 = vpop.f32.mrb[0].mxu0
    %2727 = vmatprep.mubr.bf16.mxu0 %v776
    %2728 = vmatmul.mubr.bf16.gmra.mrb[0].mxu0 %v775
    %v2729 = vpop.f32.mrb[0].mxu0
    %v2730 = vadd.f32 %v2501, %v2729
    %v2731 = vpop.f32.mrb[0].mxu0
    %v2732 = vpop.f32.mrb[0].mxu0
    %v2733 = vadd.f32 %v2501, %v2732
    %v2734 = vpop.f32.mrb[0].mxu0
    %2735 = vmatprep.mubr.bf16.mxu0 %v778
    %2736 = vmatmul.mubr.bf16.gmra.mrb[0].mxu0 %v777
    %v2737 = vpop.f32.mrb[0].mxu0
    %v2738 = vadd.f32 %v2501, %v2737
    %v2739 = vpop.f32.mrb[0].mxu0
    %v2740 = vpop.f32.mrb[0].mxu0
    %v2741 = vadd.f32 %v2501, %v2740
    %v2742 = vpop.f32.mrb[0].mxu0
    %2743 = vmatprep.mubr.bf16.mxu0 %v780
    %2744 = vmatmul.mubr.bf16.gmra.mrb[0].mxu0 %v779
    %v2745 = vpop.f32.mrb[0].mxu0
    %v2746 = vadd.f32 %v2501, %v2745
    %v2747 = vpop.f32.mrb[0].mxu0
    %v2748 = vpop.f32.mrb[0].mxu0
    %v2749 = vadd.f32 %v2501, %v2748
    %v2750 = vpop.f32.mrb[0].mxu0
    %2751 = vmatprep.mubr.bf16.mxu0 %v782
    %2752 = vmatmul.mubr.bf16.gmra.mrb[0].mxu0 %v781
    %v2753 = vpop.f32.mrb[0].mxu0
    %v2754 = vadd.f32 %v2501, %v2753
    %v2755 = vpop.f32.mrb[0].mxu0
    %v2756 = vpop.f32.mrb[0].mxu0
    %v2757 = vadd.f32 %v2501, %v2756
    %v2758 = vpop.f32.mrb[0].mxu0
    %2759 = vmatprep.mubr.bf16.mxu0 %v784
    %2760 = vmatmul.mubr.bf16.gmra.mrb[0].mxu0 %v783
    %v2761 = vpop.f32.mrb[0].mxu0
    %v2762 = vadd.f32 %v2501, %v2761
    %v2763 = vpop.f32.mrb[0].mxu0
    %v2764 = vpop.f32.mrb[0].mxu0
    %v2765 = vadd.f32 %v2501, %v2764
    %v2766 = vpop.f32.mrb[0].mxu0
    %2767 = vmatprep.mubr.bf16.mxu0 %v786
    %2768 = vmatmul.mubr.bf16.gmra.mrb[0].mxu0 %v785
    %v2769 = vpop.f32.mrb[0].mxu0
    %v2770 = vadd.f32 %v2501, %v2769
    %v2771 = vpop.f32.mrb[0].mxu0
    %v2772 = vpop.f32.mrb[0].mxu0
    %v2773 = vadd.f32 %v2501, %v2772
    %v2774 = vpop.f32.mrb[0].mxu0
    %2775 = vmatprep.mubr.bf16.mxu0 %v788
    %2776 = vmatmul.mubr.bf16.gmra.mrb[0].mxu0 %v787
    %v2777 = vpop.f32.mrb[0].mxu0
    %v2778 = vadd.f32 %v2501, %v2777
    %v2779 = vpop.f32.mrb[0].mxu0
    %v2780 = vpop.f32.mrb[0].mxu0
    %v2781 = vadd.f32 %v2501, %v2780
    %v2782 = vpop.f32.mrb[0].mxu0
    %2783 = vmatprep.mubr.bf16.mxu0 %v790
    %2784 = vmatmul.mubr.bf16.gmra.mrb[0].mxu0 %v789
    %v2785 = vpop.f32.mrb[0].mxu0
    %v2786 = vadd.f32 %v2501, %v2785
    %v2787 = vpop.f32.mrb[0].mxu0
    %v2788 = vpop.f32.mrb[0].mxu0
    %v2789 = vadd.f32 %v2501, %v2788
    %v2790 = vpop.f32.mrb[0].mxu0
    %2791 = vmatprep.mubr.bf16.mxu0 %v792
    %2792 = vmatmul.mubr.bf16.gmra.mrb[0].mxu0 %v791
    %v2793 = vpop.f32.mrb[0].mxu0
    %v2794 = vadd.f32 %v2501, %v2793
    %v2795 = vpop.f32.mrb[0].mxu0
    %v2796 = vpop.f32.mrb[0].mxu0
    %v2797 = vadd.f32 %v2501, %v2796
    %v2798 = vpop.f32.mrb[0].mxu0
    %2799 = vmatprep.mubr.bf16.mxu0 %v794
    %2800 = vmatmul.mubr.bf16.gmra.mrb[0].mxu0 %v793
    %v2801 = vpop.f32.mrb[0].mxu0
    %v2802 = vadd.f32 %v2501, %v2801
    %v2803 = vpop.f32.mrb[0].mxu0
    %v2804 = vpop.f32.mrb[0].mxu0
    %v2805 = vadd.f32 %v2501, %v2804
    %v2806 = vpop.f32.mrb[0].mxu0
    %2807 = vmatprep.mubr.bf16.mxu0 %v796
    %2808 = vmatmul.mubr.bf16.gmra.mrb[0].mxu0 %v795
    %v2809 = vpop.f32.mrb[0].mxu0
    %v2810 = vadd.f32 %v2501, %v2809
    %v2811 = vpop.f32.mrb[0].mxu0
    %v2812 = vpop.f32.mrb[0].mxu0
    %v2813 = vadd.f32 %v2501, %v2812
    %v2814 = vpop.f32.mrb[0].mxu0
    %2815 = vmatprep.mubr.bf16.mxu0 %v798
    %2816 = vmatmul.mubr.bf16.gmra.mrb[0].mxu0 %v797
    %v2817 = vpop.f32.mrb[0].mxu0
    %v2818 = vadd.f32 %v2501, %v2817
    %v2819 = vpop.f32.mrb[0].mxu0
    %v2820 = vpop.f32.mrb[0].mxu0
    %v2821 = vadd.f32 %v2501, %v2820
    %v2822 = vpop.f32.mrb[0].mxu0
    %2823 = vmatprep.mubr.bf16.mxu0 %v800
    %2824 = vmatmul.mubr.bf16.gmra.mrb[0].mxu0 %v799
    %v2825 = vpop.f32.mrb[0].mxu0
    %v2826 = vadd.f32 %v2501, %v2825
    %v2827 = vpop.f32.mrb[0].mxu0
    %v2828 = vpop.f32.mrb[0].mxu0
    %v2829 = vadd.f32 %v2501, %v2828
    %v2830 = vpop.f32.mrb[0].mxu0
    %2831 = vmatprep.mubr.bf16.mxu0 %v802
    %2832 = vmatmul.mubr.bf16.gmra.mrb[0].mxu0 %v801
    %v2833 = vpop.f32.mrb[0].mxu0
    %v2834 = vadd.f32 %v2501, %v2833
    %v2835 = vpop.f32.mrb[0].mxu0
    %v2836 = vpop.f32.mrb[0].mxu0
    %v2837 = vadd.f32 %v2501, %v2836
    %v2838 = vpop.f32.mrb[0].mxu0
    %2839 = vmatprep.mubr.bf16.mxu0 %v804
    %2840 = vmatmul.mubr.bf16.gmra.mrb[0].mxu0 %v803
    %v2841 = vpop.f32.mrb[0].mxu0
    %v2842 = vadd.f32 %v2501, %v2841
    %v2843 = vpop.f32.mrb[0].mxu0
    %v2844 = vpop.f32.mrb[0].mxu0
    %v2845 = vadd.f32 %v2501, %v2844
    %v2846 = vpop.f32.mrb[0].mxu0
    %2847 = vmatprep.mubr.bf16.mxu0 %v806
    %2848 = vmatmul.mubr.bf16.gmra.mrb[0].mxu0 %v805
    %v2849 = vpop.f32.mrb[0].mxu0
    %v2850 = vadd.f32 %v2501, %v2849
    %v2851 = vpop.f32.mrb[0].mxu0
    %v2852 = vpop.f32.mrb[0].mxu0
    %v2853 = vadd.f32 %v2501, %v2852
    %v2854 = vpop.f32.mrb[0].mxu0
    %2855 = vmatprep.mubr.bf16.mxu0 %v808
    %2856 = vmatmul.mubr.bf16.gmra.mrb[0].mxu0 %v807
    %v2857 = vpop.f32.mrb[0].mxu0
    %v2858 = vadd.f32 %v2501, %v2857
    %v2859 = vpop.f32.mrb[0].mxu0
    %v2860 = vpop.f32.mrb[0].mxu0
    %v2861 = vadd.f32 %v2501, %v2860
    %v2862 = vpop.f32.mrb[0].mxu0
    %2863 = vmatprep.mubr.bf16.mxu0 %v810
    %2864 = vmatmul.mubr.bf16.gmra.mrb[0].mxu0 %v809
    %v2865 = vpop.f32.mrb[0].mxu0
    %v2866 = vadd.f32 %v2501, %v2865
    %v2867 = vpop.f32.mrb[0].mxu0
    %v2868 = vpop.f32.mrb[0].mxu0
    %v2869 = vadd.f32 %v2501, %v2868
    %v2870 = vpop.f32.mrb[0].mxu0
    %2871 = vmatprep.mubr.bf16.mxu0 %v812
    %2872 = vmatmul.mubr.bf16.gmra.mrb[0].mxu0 %v811
    %v2873 = vpop.f32.mrb[0].mxu0
    %v2874 = vadd.f32 %v2501, %v2873
    %v2875 = vpop.f32.mrb[0].mxu0
    %v2876 = vpop.f32.mrb[0].mxu0
    %v2877 = vadd.f32 %v2501, %v2876
    %v2878 = vpop.f32.mrb[0].mxu0
    %2879 = vmatprep.mubr.bf16.mxu0 %v814
    %2880 = vmatmul.mubr.bf16.gmra.mrb[0].mxu0 %v813
    %v2881 = vpop.f32.mrb[0].mxu0
    %v2882 = vadd.f32 %v2501, %v2881
    %v2883 = vpop.f32.mrb[0].mxu0
    %v2884 = vpop.f32.mrb[0].mxu0
    %v2885 = vadd.f32 %v2501, %v2884
    %v2886 = vpop.f32.mrb[0].mxu0
    %2887 = vmatprep.mubr.bf16.mxu0 %v816
    %2888 = vmatmul.mubr.bf16.gmra.mrb[0].mxu0 %v815
    %v2889 = vpop.f32.mrb[0].mxu0
    %v2890 = vadd.f32 %v2501, %v2889
    %v2891 = vpop.f32.mrb[0].mxu0
    %v2892 = vpop.f32.mrb[0].mxu0
    %v2893 = vadd.f32 %v2501, %v2892
    %v2894 = vpop.f32.mrb[0].mxu0
    %2895 = vmatprep.mubr.bf16.mxu0 %v818
    %2896 = vmatmul.mubr.bf16.gmra.mrb[0].mxu0 %v817
    %v2897 = vpop.f32.mrb[0].mxu0
    %v2898 = vadd.f32 %v2501, %v2897
    %v2899 = vpop.f32.mrb[0].mxu0
    %v2900 = vpop.f32.mrb[0].mxu0
    %v2901 = vadd.f32 %v2501, %v2900
    %v2902 = vpop.f32.mrb[0].mxu0
    %2903 = vmatprep.mubr.bf16.mxu0 %v820
    %2904 = vmatmul.mubr.bf16.gmra.mrb[0].mxu0 %v819
    %v2905 = vpop.f32.mrb[0].mxu0
    %v2906 = vadd.f32 %v2501, %v2905
    %v2907 = vpop.f32.mrb[0].mxu0
    %v2908 = vpop.f32.mrb[0].mxu0
    %v2909 = vadd.f32 %v2501, %v2908
    %v2910 = vpop.f32.mrb[0].mxu0
    %2911 = vmatprep.mubr.bf16.mxu0 %v822
    %2912 = vmatmul.mubr.bf16.gmra.mrb[0].mxu0 %v821
    %v2913 = vpop.f32.mrb[0].mxu0
    %v2914 = vadd.f32 %v2501, %v2913
    %v2915 = vpop.f32.mrb[0].mxu0
    %v2916 = vpop.f32.mrb[0].mxu0
    %v2917 = vadd.f32 %v2501, %v2916
    %v2918 = vpop.f32.mrb[0].mxu0
    %2919 = vmatprep.mubr.bf16.mxu0 %v824
    %2920 = vmatmul.mubr.bf16.gmra.mrb[0].mxu0 %v823
    %v2921 = vpop.f32.mrb[0].mxu0
    %v2922 = vadd.f32 %v2501, %v2921
    %v2923 = vpop.f32.mrb[0].mxu0
    %v2924 = vpop.f32.mrb[0].mxu0
    %v2925 = vadd.f32 %v2501, %v2924
    %v2926 = vpop.f32.mrb[0].mxu0
    %2927 = vmatprep.mubr.bf16.mxu0 %v826
    %2928 = vmatmul.mubr.bf16.gmra.mrb[0].mxu0 %v825
    %v2929 = vpop.f32.mrb[0].mxu0
    %v2930 = vadd.f32 %v2501, %v2929
    %v2931 = vpop.f32.mrb[0].mxu0
    %v2932 = vpop.f32.mrb[0].mxu0
    %v2933 = vadd.f32 %v2501, %v2932
    %v2934 = vpop.f32.mrb[0].mxu0
    %2935 = vmatprep.mubr.bf16.mxu0 %v828
    %2936 = vmatmul.mubr.bf16.gmra.mrb[0].mxu0 %v827
    %v2937 = vpop.f32.mrb[0].mxu0
    %v2938 = vadd.f32 %v2501, %v2937
    %v2939 = vpop.f32.mrb[0].mxu0
    %v2940 = vpop.f32.mrb[0].mxu0
    %v2941 = vadd.f32 %v2501, %v2940
    %v2942 = vpop.f32.mrb[0].mxu0
    %2943 = vmatprep.mubr.bf16.mxu0 %v830
    %2944 = vmatmul.mubr.bf16.gmra.mrb[0].mxu0 %v829
    %v2945 = vpop.f32.mrb[0].mxu0
    %v2946 = vadd.f32 %v2501, %v2945
    %v2947 = vpop.f32.mrb[0].mxu0
    %v2948 = vpop.f32.mrb[0].mxu0
    %v2949 = vadd.f32 %v2501, %v2948
    %v2950 = vpop.f32.mrb[0].mxu0
    %2951 = vmatprep.mubr.bf16.mxu0 %v832
    %2952 = vmatmul.mubr.bf16.gmra.mrb[0].mxu0 %v831
    %v2953 = vpop.f32.mrb[0].mxu0
    %v2954 = vadd.f32 %v2501, %v2953
    %v2955 = vpop.f32.mrb[0].mxu0
    %v2956 = vpop.f32.mrb[0].mxu0
    %v2957 = vadd.f32 %v2501, %v2956
    %v2958 = vpop.f32.mrb[0].mxu0
    %2959 = vmatprep.mubr.bf16.mxu0 %v834
    %2960 = vmatmul.mubr.bf16.gmra.mrb[0].mxu0 %v833
    %v2961 = vpop.f32.mrb[0].mxu0
    %v2962 = vadd.f32 %v2501, %v2961
    %v2963 = vpop.f32.mrb[0].mxu0
    %v2964 = vpop.f32.mrb[0].mxu0
    %v2965 = vadd.f32 %v2501, %v2964
    %v2966 = vpop.f32.mrb[0].mxu0
    %2967 = vmatprep.mubr.bf16.mxu0 %v836
    %2968 = vmatmul.mubr.bf16.gmra.mrb[0].mxu0 %v835
    %v2969 = vpop.f32.mrb[0].mxu0
    %v2970 = vadd.f32 %v2501, %v2969
    %v2971 = vpop.f32.mrb[0].mxu0
    %v2972 = vpop.f32.mrb[0].mxu0
    %v2973 = vadd.f32 %v2501, %v2972
    %v2974 = vpop.f32.mrb[0].mxu0
    %2975 = vmatprep.mubr.bf16.mxu0 %v838
    %2976 = vmatmul.mubr.bf16.gmra.mrb[0].mxu0 %v837
    %v2977 = vpop.f32.mrb[0].mxu0
    %v2978 = vadd.f32 %v2501, %v2977
    %v2979 = vpop.f32.mrb[0].mxu0
    %v2980 = vpop.f32.mrb[0].mxu0
    %v2981 = vadd.f32 %v2501, %v2980
    %v2982 = vpop.f32.mrb[0].mxu0
    %2983 = vmatprep.mubr.bf16.mxu0 %v840
    %2984 = vmatmul.mubr.bf16.gmra.mrb[0].mxu0 %v839
    %v2985 = vpop.f32.mrb[0].mxu0
    %v2986 = vadd.f32 %v2501, %v2985
    %v2987 = vpop.f32.mrb[0].mxu0
    %v2988 = vpop.f32.mrb[0].mxu0
    %v2989 = vadd.f32 %v2501, %v2988
    %v2990 = vpop.f32.mrb[0].mxu0
    %2991 = vmatprep.mubr.bf16.mxu0 %v842
    %2992 = vmatmul.mubr.bf16.gmra.mrb[0].mxu0 %v841
    %v2993 = vpop.f32.mrb[0].mxu0
    %v2994 = vadd.f32 %v2501, %v2993
    %v2995 = vpop.f32.mrb[0].mxu0
    %v2996 = vpop.f32.mrb[0].mxu0
    %v2997 = vadd.f32 %v2501, %v2996
    %v2998 = vpop.f32.mrb[0].mxu0
    %2999 = vmatprep.mubr.bf16.mxu0 %v844
    %3000 = vmatmul.mubr.bf16.gmra.mrb[0].mxu0 %v843
    %v3001 = vpop.f32.mrb[0].mxu0
    %v3002 = vadd.f32 %v2501, %v3001
    %v3003 = vpop.f32.mrb[0].mxu0
    %v3004 = vpop.f32.mrb[0].mxu0
    %v3005 = vadd.f32 %v2501, %v3004
    %v3006 = vpop.f32.mrb[0].mxu0
    %3007 = vmatprep.mubr.bf16.mxu0 %v846
    %3008 = vmatmul.mubr.bf16.gmra.mrb[0].mxu0 %v845
    %v3009 = vpop.f32.mrb[0].mxu0
    %v3010 = vadd.f32 %v2501, %v3009
    %v3011 = vpop.f32.mrb[0].mxu0
    %v3012 = vpop.f32.mrb[0].mxu0
    %v3013 = vadd.f32 %v2501, %v3012
    %v3014 = vpop.f32.mrb[0].mxu0
    %3015 = vmatprep.mubr.bf16.mxu0 %v848
    %3016 = vmatmul.mubr.bf16.gmra.mrb[0].mxu0 %v847
    %v3017 = vpop.f32.mrb[0].mxu0
    %v3018 = vadd.f32 %v2501, %v3017
    %v3019 = vpop.f32.mrb[0].mxu0
    %v3020 = vpop.f32.mrb[0].mxu0
    %v3021 = vadd.f32 %v2501, %v3020
    %v3022 = vpop.f32.mrb[0].mxu0
    %3023 = vmatprep.mubr.bf16.mxu0 %v850
    %3024 = vmatmul.mubr.bf16.gmra.mrb[0].mxu0 %v849
    %v3025 = vpop.f32.mrb[0].mxu0
    %v3026 = vadd.f32 %v2501, %v3025
    %v3027 = vpop.f32.mrb[0].mxu0
    %v3028 = vpop.f32.mrb[0].mxu0
    %v3029 = vadd.f32 %v2501, %v3028
    %v3030 = vpop.f32.mrb[0].mxu0
    %3031 = vmatprep.mubr.bf16.mxu0 %v852
    %3032 = vmatmul.mubr.bf16.gmra.mrb[0].mxu0 %v851
    %v3033 = vpop.f32.mrb[0].mxu0
    %v3034 = vadd.f32 %v2501, %v3033
    %v3035 = vpop.f32.mrb[0].mxu0
    %v3036 = vpop.f32.mrb[0].mxu0
    %v3037 = vadd.f32 %v2501, %v3036
    %v3038 = vpop.f32.mrb[0].mxu0
    %3039 = vmatprep.mubr.bf16.mxu0 %v854
    %3040 = vmatmul.mubr.bf16.gmra.mrb[0].mxu0 %v853
    %v3041 = vpop.f32.mrb[0].mxu0
    %v3042 = vadd.f32 %v2501, %v3041
    %v3043 = vpop.f32.mrb[0].mxu0
    %v3044 = vpop.f32.mrb[0].mxu0
    %v3045 = vadd.f32 %v2501, %v3044
    %v3046 = vpop.f32.mrb[0].mxu0
    %3047 = vmatprep.mubr.bf16.mxu0 %v856
    %3048 = vmatmul.mubr.bf16.gmra.mrb[0].mxu0 %v855
    %v3049 = vpop.f32.mrb[0].mxu0
    %v3050 = vadd.f32 %v2501, %v3049
    %v3051 = vpop.f32.mrb[0].mxu0
    %v3052 = vpop.f32.mrb[0].mxu0
    %v3053 = vadd.f32 %v2501, %v3052
    %v3054 = vpop.f32.mrb[0].mxu0
    %3055 = vmatprep.mubr.bf16.mxu0 %v858
    %3056 = vmatmul.mubr.bf16.gmra.mrb[0].mxu0 %v857
    %v3057 = vpop.f32.mrb[0].mxu0
    %v3058 = vadd.f32 %v2501, %v3057
    %v3059 = vpop.f32.mrb[0].mxu0
    %v3060 = vpop.f32.mrb[0].mxu0
    %v3061 = vadd.f32 %v2501, %v3060
    %v3062 = vpop.f32.mrb[0].mxu0
    %3063 = vmatprep.mubr.bf16.mxu0 %v860
    %3064 = vmatmul.mubr.bf16.gmra.mrb[0].mxu0 %v859
    %v3065 = vpop.f32.mrb[0].mxu0
    %v3066 = vadd.f32 %v2501, %v3065
    %v3067 = vpop.f32.mrb[0].mxu0
    %v3068 = vpop.f32.mrb[0].mxu0
    %v3069 = vadd.f32 %v2501, %v3068
    %v3070 = vpop.f32.mrb[0].mxu0
    %3071 = vmatprep.mubr.bf16.mxu0 %v862
    %3072 = vmatmul.mubr.bf16.gmra.mrb[0].mxu0 %v861
    %v3073 = vpop.f32.mrb[0].mxu0
    %v3074 = vadd.f32 %v2501, %v3073
    %v3075 = vpop.f32.mrb[0].mxu0
    %v3076 = vpop.f32.mrb[0].mxu0
    %v3077 = vadd.f32 %v2501, %v3076
    %v3078 = vpop.f32.mrb[0].mxu0
    %3079 = vmatprep.mubr.bf16.mxu0 %v864
    %3080 = vmatmul.mubr.bf16.gmra.mrb[0].mxu0 %v863
    %v3081 = vpop.f32.mrb[0].mxu0
    %v3082 = vadd.f32 %v2501, %v3081
    %v3083 = vpop.f32.mrb[0].mxu0
    %v3084 = vpop.f32.mrb[0].mxu0
    %v3085 = vadd.f32 %v2501, %v3084
    %v3086 = vpop.f32.mrb[0].mxu0
    %3087 = vmatprep.mubr.bf16.mxu0 %v866
    %3088 = vmatmul.mubr.bf16.gmra.mrb[0].mxu0 %v865
    %v3089 = vpop.f32.mrb[0].mxu0
    %v3090 = vadd.f32 %v2501, %v3089
    %v3091 = vpop.f32.mrb[0].mxu0
    %v3092 = vpop.f32.mrb[0].mxu0
    %v3093 = vadd.f32 %v2501, %v3092
    %v3094 = vpop.f32.mrb[0].mxu0
    %3095 = vmatprep.mubr.bf16.mxu0 %v868
    %3096 = vmatmul.mubr.bf16.gmra.mrb[0].mxu0 %v867
    %v3097 = vpop.f32.mrb[0].mxu0
    %v3098 = vadd.f32 %v2501, %v3097
    %v3099 = vpop.f32.mrb[0].mxu0
    %v3100 = vpop.f32.mrb[0].mxu0
    %v3101 = vadd.f32 %v2501, %v3100
    %v3102 = vpop.f32.mrb[0].mxu0
    %3103 = vmatprep.mubr.bf16.mxu0 %v870
    %3104 = vmatmul.mubr.bf16.gmra.mrb[0].mxu0 %v869
    %v3105 = vpop.f32.mrb[0].mxu0
    %v3106 = vadd.f32 %v2501, %v3105
    %v3107 = vpop.f32.mrb[0].mxu0
    %v3108 = vpop.f32.mrb[0].mxu0
    %v3109 = vadd.f32 %v2501, %v3108
    %v3110 = vpop.f32.mrb[0].mxu0
    %3111 = vmatprep.mubr.bf16.mxu0 %v872
    %3112 = vmatmul.mubr.bf16.gmra.mrb[0].mxu0 %v871
    %v3113 = vpop.f32.mrb[0].mxu0
    %v3114 = vadd.f32 %v2501, %v3113
    %v3115 = vpop.f32.mrb[0].mxu0
    %v3116 = vpop.f32.mrb[0].mxu0
    %v3117 = vadd.f32 %v2501, %v3116
    %v3118 = vpop.f32.mrb[0].mxu0
    %3119 = vmatprep.mubr.bf16.mxu0 %v874
    %3120 = vmatmul.mubr.bf16.gmra.mrb[0].mxu0 %v873
    %v3121 = vpop.f32.mrb[0].mxu0
    %v3122 = vadd.f32 %v2501, %v3121
    %v3123 = vpop.f32.mrb[0].mxu0
    %v3124 = vpop.f32.mrb[0].mxu0
    %v3125 = vadd.f32 %v2501, %v3124
    %v3126 = vpop.f32.mrb[0].mxu0
    %3127 = vmatprep.mubr.bf16.mxu0 %v876
    %3128 = vmatmul.mubr.bf16.gmra.mrb[0].mxu0 %v875
    %v3129 = vpop.f32.mrb[0].mxu0
    %v3130 = vadd.f32 %v2501, %v3129
    %v3131 = vpop.f32.mrb[0].mxu0
    %v3132 = vpop.f32.mrb[0].mxu0
    %v3133 = vadd.f32 %v2501, %v3132
    %v3134 = vpop.f32.mrb[0].mxu0
    %3135 = vdwg.mxu0
    %v3136 = vpack.c.bf16 %v1428, %v1425
    %v3137 = vpack.c.bf16 %v1965, %v1962
    %v3138 = vpack.c.bf16 %v2637, %v2634
    %v3139 = vpack.c.bf16 %v1436, %v1433
    %v3140 = vpack.c.bf16 %v1973, %v1970
    %v3141 = vpack.c.bf16 %v2645, %v2642
    %v3142 = vpack.c.bf16 %v1444, %v1441
    %v3143 = vpack.c.bf16 %v1981, %v1978
    %v3144 = vpack.c.bf16 %v2653, %v2650
    %v3145 = vpack.c.bf16 %v1452, %v1449
    %v3146 = vpack.c.bf16 %v1989, %v1986
    %v3147 = vpack.c.bf16 %v2661, %v2658
    %v3148 = vpack.c.bf16 %v1460, %v1457
    %v3149 = vpack.c.bf16 %v1997, %v1994
    %v3150 = vpack.c.bf16 %v2669, %v2666
    %v3151 = vpack.c.bf16 %v1468, %v1465
    %v3152 = vpack.c.bf16 %v2005, %v2002
    %v3153 = vpack.c.bf16 %v2677, %v2674
    %v3154 = vpack.c.bf16 %v1476, %v1473
    %v3155 = vpack.c.bf16 %v2013, %v2010
    %v3156 = vpack.c.bf16 %v2685, %v2682
    %v3157 = vpack.c.bf16 %v1484, %v1481
    %v3158 = vpack.c.bf16 %v2021, %v2018
    %v3159 = vpack.c.bf16 %v2693, %v2690
    %v3160 = vpack.c.bf16 %v1492, %v1489
    %v3161 = vpack.c.bf16 %v2029, %v2026
    %v3162 = vpack.c.bf16 %v2701, %v2698
    %v3163 = vpack.c.bf16 %v1500, %v1497
    %v3164 = vpack.c.bf16 %v2037, %v2034
    %v3165 = vpack.c.bf16 %v2709, %v2706
    %v3166 = vpack.c.bf16 %v1508, %v1505
    %v3167 = vpack.c.bf16 %v2045, %v2042
    %v3168 = vpack.c.bf16 %v2717, %v2714
    %v3169 = vpack.c.bf16 %v1516, %v1513
    %v3170 = vpack.c.bf16 %v2053, %v2050
    %v3171 = vpack.c.bf16 %v2725, %v2722
    %v3172 = vpack.c.bf16 %v1524, %v1521
    %v3173 = vpack.c.bf16 %v2061, %v2058
    %v3174 = vpack.c.bf16 %v2733, %v2730
    %v3175 = vpack.c.bf16 %v1532, %v1529
    %v3176 = vpack.c.bf16 %v2069, %v2066
    %v3177 = vpack.c.bf16 %v2741, %v2738
    %v3178 = vpack.c.bf16 %v1540, %v1537
    %v3179 = vpack.c.bf16 %v2077, %v2074
    %v3180 = vpack.c.bf16 %v2749, %v2746
    %v3181 = vpack.c.bf16 %v1548, %v1545
    %v3182 = vpack.c.bf16 %v2085, %v2082
    %v3183 = vpack.c.bf16 %v2757, %v2754
    %v3184 = vpack.c.bf16 %v1556, %v1553
    %v3185 = vpack.c.bf16 %v2093, %v2090
    %v3186 = vpack.c.bf16 %v2765, %v2762
    %v3187 = vpack.c.bf16 %v1564, %v1561
    %v3188 = vpack.c.bf16 %v2101, %v2098
    %v3189 = vpack.c.bf16 %v2773, %v2770
    %v3190 = vpack.c.bf16 %v1572, %v1569
    %v3191 = vpack.c.bf16 %v2109, %v2106
    %v3192 = vpack.c.bf16 %v2781, %v2778
    %v3193 = vpack.c.bf16 %v1580, %v1577
    %v3194 = vpack.c.bf16 %v2117, %v2114
    %v3195 = vpack.c.bf16 %v2789, %v2786
    %v3196 = vpack.c.bf16 %v1588, %v1585
    %v3197 = vpack.c.bf16 %v2125, %v2122
    %v3198 = vpack.c.bf16 %v2797, %v2794
    %v3199 = vpack.c.bf16 %v1596, %v1593
    %v3200 = vpack.c.bf16 %v2133, %v2130
    %v3201 = vpack.c.bf16 %v2805, %v2802
    %v3202 = vpack.c.bf16 %v1604, %v1601
    %v3203 = vpack.c.bf16 %v2141, %v2138
    %v3204 = vpack.c.bf16 %v2813, %v2810
    %v3205 = vpack.c.bf16 %v1612, %v1609
    %v3206 = vpack.c.bf16 %v2149, %v2146
    %v3207 = vpack.c.bf16 %v2821, %v2818
    %v3208 = vpack.c.bf16 %v1620, %v1617
    %v3209 = vpack.c.bf16 %v2157, %v2154
    %v3210 = vpack.c.bf16 %v2829, %v2826
    %v3211 = vpack.c.bf16 %v1628, %v1625
    %v3212 = vpack.c.bf16 %v2165, %v2162
    %v3213 = vpack.c.bf16 %v2837, %v2834
    %v3214 = vpack.c.bf16 %v1636, %v1633
    %v3215 = vpack.c.bf16 %v2173, %v2170
    %v3216 = vpack.c.bf16 %v2845, %v2842
    %v3217 = vpack.c.bf16 %v1644, %v1641
    %v3218 = vpack.c.bf16 %v2181, %v2178
    %v3219 = vpack.c.bf16 %v2853, %v2850
    %v3220 = vpack.c.bf16 %v1652, %v1649
    %v3221 = vpack.c.bf16 %v2189, %v2186
    %v3222 = vpack.c.bf16 %v2861, %v2858
    %v3223 = vpack.c.bf16 %v1660, %v1657
    %v3224 = vpack.c.bf16 %v2197, %v2194
    %v3225 = vpack.c.bf16 %v2869, %v2866
    %v3226 = vpack.c.bf16 %v1668, %v1665
    %v3227 = vpack.c.bf16 %v2205, %v2202
    %v3228 = vpack.c.bf16 %v2877, %v2874
    %v3229 = vpack.c.bf16 %v1676, %v1673
    %v3230 = vpack.c.bf16 %v2213, %v2210
    %v3231 = vpack.c.bf16 %v2885, %v2882
    %v3232 = vpack.c.bf16 %v1684, %v1681
    %v3233 = vpack.c.bf16 %v2221, %v2218
    %v3234 = vpack.c.bf16 %v2893, %v2890
    %v3235 = vpack.c.bf16 %v1692, %v1689
    %v3236 = vpack.c.bf16 %v2229, %v2226
    %v3237 = vpack.c.bf16 %v2901, %v2898
    %v3238 = vpack.c.bf16 %v1700, %v1697
    %v3239 = vpack.c.bf16 %v2237, %v2234
    %v3240 = vpack.c.bf16 %v2909, %v2906
    %v3241 = vpack.c.bf16 %v1708, %v1705
    %v3242 = vpack.c.bf16 %v2245, %v2242
    %v3243 = vpack.c.bf16 %v2917, %v2914
    %v3244 = vpack.c.bf16 %v1716, %v1713
    %v3245 = vpack.c.bf16 %v2253, %v2250
    %v3246 = vpack.c.bf16 %v2925, %v2922
    %v3247 = vpack.c.bf16 %v1724, %v1721
    %v3248 = vpack.c.bf16 %v2261, %v2258
    %v3249 = vpack.c.bf16 %v2933, %v2930
    %v3250 = vpack.c.bf16 %v1732, %v1729
    %v3251 = vpack.c.bf16 %v2269, %v2266
    %v3252 = vpack.c.bf16 %v2941, %v2938
    %v3253 = vpack.c.bf16 %v1740, %v1737
    %v3254 = vpack.c.bf16 %v2277, %v2274
    %v3255 = vpack.c.bf16 %v2949, %v2946
    %v3256 = vpack.c.bf16 %v1748, %v1745
    %v3257 = vpack.c.bf16 %v2285, %v2282
    %v3258 = vpack.c.bf16 %v2957, %v2954
    %v3259 = vpack.c.bf16 %v1756, %v1753
    %v3260 = vpack.c.bf16 %v2293, %v2290
    %v3261 = vpack.c.bf16 %v2965, %v2962
    %v3262 = vpack.c.bf16 %v1764, %v1761
    %v3263 = vpack.c.bf16 %v2301, %v2298
    %v3264 = vpack.c.bf16 %v2973, %v2970
    %v3265 = vpack.c.bf16 %v1772, %v1769
    %v3266 = vpack.c.bf16 %v2309, %v2306
    %v3267 = vpack.c.bf16 %v2981, %v2978
    %v3268 = vpack.c.bf16 %v1780, %v1777
    %v3269 = vpack.c.bf16 %v2317, %v2314
    %v3270 = vpack.c.bf16 %v2989, %v2986
    %v3271 = vpack.c.bf16 %v1788, %v1785
    %v3272 = vpack.c.bf16 %v2325, %v2322
    %v3273 = vpack.c.bf16 %v2997, %v2994
    %v3274 = vpack.c.bf16 %v1796, %v1793
    %v3275 = vpack.c.bf16 %v2333, %v2330
    %v3276 = vpack.c.bf16 %v3005, %v3002
    %v3277 = vpack.c.bf16 %v1804, %v1801
    %v3278 = vpack.c.bf16 %v2341, %v2338
    %v3279 = vpack.c.bf16 %v3013, %v3010
    %v3280 = vpack.c.bf16 %v1812, %v1809
    %v3281 = vpack.c.bf16 %v2349, %v2346
    %v3282 = vpack.c.bf16 %v3021, %v3018
    %v3283 = vpack.c.bf16 %v1820, %v1817
    %v3284 = vpack.c.bf16 %v2357, %v2354
    %v3285 = vpack.c.bf16 %v3029, %v3026
    %v3286 = vpack.c.bf16 %v1828, %v1825
    %v3287 = vpack.c.bf16 %v2365, %v2362
    %v3288 = vpack.c.bf16 %v3037, %v3034
    %v3289 = vpack.c.bf16 %v1836, %v1833
    %v3290 = vpack.c.bf16 %v2373, %v2370
    %v3291 = vpack.c.bf16 %v3045, %v3042
    %v3292 = vpack.c.bf16 %v1844, %v1841
    %v3293 = vpack.c.bf16 %v2381, %v2378
    %v3294 = vpack.c.bf16 %v3053, %v3050
    %v3295 = vpack.c.bf16 %v1852, %v1849
    %v3296 = vpack.c.bf16 %v2389, %v2386
    %v3297 = vpack.c.bf16 %v3061, %v3058
    %v3298 = vpack.c.bf16 %v1860, %v1857
    %v3299 = vpack.c.bf16 %v2397, %v2394
    %v3300 = vpack.c.bf16 %v3069, %v3066
    %v3301 = vpack.c.bf16 %v1868, %v1865
    %v3302 = vpack.c.bf16 %v2405, %v2402
    %v3303 = vpack.c.bf16 %v3077, %v3074
    %v3304 = vpack.c.bf16 %v1876, %v1873
    %v3305 = vpack.c.bf16 %v2413, %v2410
    %v3306 = vpack.c.bf16 %v3085, %v3082
    %v3307 = vpack.c.bf16 %v1884, %v1881
    %v3308 = vpack.c.bf16 %v2421, %v2418
    %v3309 = vpack.c.bf16 %v3093, %v3090
    %v3310 = vpack.c.bf16 %v1892, %v1889
    %v3311 = vpack.c.bf16 %v2429, %v2426
    %v3312 = vpack.c.bf16 %v3101, %v3098
    %v3313 = vpack.c.bf16 %v1900, %v1897
    %v3314 = vpack.c.bf16 %v2437, %v2434
    %v3315 = vpack.c.bf16 %v3109, %v3106
    %v3316 = vpack.c.bf16 %v1908, %v1905
    %v3317 = vpack.c.bf16 %v2445, %v2442
    %v3318 = vpack.c.bf16 %v3117, %v3114
    %v3319 = vpack.c.bf16 %v1916, %v1913
    %v3320 = vpack.c.bf16 %v2453, %v2450
    %v3321 = vpack.c.bf16 %v3125, %v3122
    %v3322 = vpack.c.bf16 %v1924, %v1921
    %v3323 = vpack.c.bf16 %v2461, %v2458
    %v3324 = vpack.c.bf16 %v3133, %v3130
    %v3325 = vld [vmem:[#allocation10] sm:$0xf]
    %v3326 = vld [vmem:[#allocation10 + $0x4] sm:$0xf]
    %v3327 = vld [vmem:[#allocation10 + $0x8] sm:$0xf]
    %v3328 = vld [vmem:[#allocation10 + $0xc] sm:$0xf]
    %v3329 = vld [vmem:[#allocation10 + $0x10] sm:$0xf]
    %v3330 = vld [vmem:[#allocation10 + $0x14] sm:$0xf]
    %v3331 = vld [vmem:[#allocation10 + $0x18] sm:$0xf]
    %v3332 = vld [vmem:[#allocation10 + $0x1c] sm:$0xf]
    %v3333 = vld [vmem:[#allocation10 + $0x20] sm:$0xf]
    %v3334 = vld [vmem:[#allocation10 + $0x24] sm:$0xf]
    %v3335 = vld [vmem:[#allocation10 + $0x28] sm:$0xf]
    %v3336 = vld [vmem:[#allocation10 + $0x2c] sm:$0xf]
    %v3337 = vld [vmem:[#allocation10 + $0x30] sm:$0xf]
    %v3338 = vld [vmem:[#allocation10 + $0x34] sm:$0xf]
    %v3339 = vld [vmem:[#allocation10 + $0x38] sm:$0xf]
    %v3340 = vld [vmem:[#allocation10 + $0x3c] sm:$0xf]
    %v3341 = vld [vmem:[#allocation10 + $0x40] sm:$0xf]
    %v3342 = vld [vmem:[#allocation10 + $0x44] sm:$0xf]
    %v3343 = vld [vmem:[#allocation10 + $0x48] sm:$0xf]
    %v3344 = vld [vmem:[#allocation10 + $0x4c] sm:$0xf]
    %v3345 = vld [vmem:[#allocation10 + $0x50] sm:$0xf]
    %v3346 = vld [vmem:[#allocation10 + $0x54] sm:$0xf]
    %v3347 = vld [vmem:[#allocation10 + $0x58] sm:$0xf]
    %v3348 = vld [vmem:[#allocation10 + $0x5c] sm:$0xf]
    %v3349 = vld [vmem:[#allocation10 + $0x60] sm:$0xf]
    %v3350 = vld [vmem:[#allocation10 + $0x64] sm:$0xf]
    %v3351 = vld [vmem:[#allocation10 + $0x68] sm:$0xf]
    %v3352 = vld [vmem:[#allocation10 + $0x6c] sm:$0xf]
    %v3353 = vld [vmem:[#allocation10 + $0x70] sm:$0xf]
    %v3354 = vld [vmem:[#allocation10 + $0x74] sm:$0xf]
    %v3355 = vld [vmem:[#allocation10 + $0x78] sm:$0xf]
    %v3356 = vld [vmem:[#allocation10 + $0x7c] sm:$0xf]
    %v3357 = vld [vmem:[#allocation10 + $0x80] sm:$0xf]
    %v3358 = vld [vmem:[#allocation10 + $0x84] sm:$0xf]
    %v3359 = vld [vmem:[#allocation10 + $0x88] sm:$0xf]
    %v3360 = vld [vmem:[#allocation10 + $0x8c] sm:$0xf]
    %v3361 = vld [vmem:[#allocation10 + $0x90] sm:$0xf]
    %v3362 = vld [vmem:[#allocation10 + $0x94] sm:$0xf]
    %v3363 = vld [vmem:[#allocation10 + $0x98] sm:$0xf]
    %v3364 = vld [vmem:[#allocation10 + $0x9c] sm:$0xf]
    %v3365 = vld [vmem:[#allocation10 + $0xa0] sm:$0xf]
    %v3366 = vld [vmem:[#allocation10 + $0xa4] sm:$0xf]
    %v3367 = vld [vmem:[#allocation10 + $0xa8] sm:$0xf]
    %v3368 = vld [vmem:[#allocation10 + $0xac] sm:$0xf]
    %v3369 = vld [vmem:[#allocation10 + $0xb0] sm:$0xf]
    %v3370 = vld [vmem:[#allocation10 + $0xb4] sm:$0xf]
    %v3371 = vld [vmem:[#allocation10 + $0xb8] sm:$0xf]
    %v3372 = vld [vmem:[#allocation10 + $0xbc] sm:$0xf]
    %v3373 = vld [vmem:[%s8] sm:$0x1]
    %v3375 = vlaneseq
    %v3376 = vshrl.u32 %v3375, 7
    %v3377 = vsub.s32 0, %v3376
    %v3378 = vrot.slane %v3373, %v3377
    %v3428 = vunpack.c.l.b16 %v3325
    %v3429 = vunpack.c.l.b16 %v3326
    %v3430 = vunpack.c.l.b16 %v3327
    %v3431 = vunpack.c.l.b16 %v3328
    %v3432 = vunpack.c.l.b16 %v3329
    %v3433 = vunpack.c.l.b16 %v3330
    %v3434 = vunpack.c.l.b16 %v3331
    %v3435 = vunpack.c.l.b16 %v3332
    %v3436 = vunpack.c.l.b16 %v3333
    %v3437 = vunpack.c.l.b16 %v3334
    %v3438 = vunpack.c.l.b16 %v3335
    %v3439 = vunpack.c.l.b16 %v3336
    %v3440 = vunpack.c.l.b16 %v3337
    %v3441 = vunpack.c.l.b16 %v3338
    %v3442 = vunpack.c.l.b16 %v3339
    %v3443 = vunpack.c.l.b16 %v3340
    %v3444 = vunpack.c.l.b16 %v3341
    %v3445 = vunpack.c.l.b16 %v3342
    %v3446 = vunpack.c.l.b16 %v3343
    %v3447 = vunpack.c.l.b16 %v3344
    %v3448 = vunpack.c.l.b16 %v3345
    %v3449 = vunpack.c.l.b16 %v3346
    %v3450 = vunpack.c.l.b16 %v3347
    %v3451 = vunpack.c.l.b16 %v3348
    %v3452 = vunpack.c.l.b16 %v3349
    %v3453 = vunpack.c.l.b16 %v3350
    %v3454 = vunpack.c.l.b16 %v3351
    %v3455 = vunpack.c.l.b16 %v3352
    %v3456 = vunpack.c.l.b16 %v3353
    %v3457 = vunpack.c.l.b16 %v3354
    %v3458 = vunpack.c.l.b16 %v3355
    %v3459 = vunpack.c.l.b16 %v3356
    %v3460 = vunpack.c.l.b16 %v3357
    %v3461 = vunpack.c.l.b16 %v3358
    %v3462 = vunpack.c.l.b16 %v3359
    %v3463 = vunpack.c.l.b16 %v3360
    %v3464 = vunpack.c.l.b16 %v3361
    %v3465 = vunpack.c.l.b16 %v3362
    %v3466 = vunpack.c.l.b16 %v3363
    %v3467 = vunpack.c.l.b16 %v3364
    %v3468 = vunpack.c.l.b16 %v3365
    %v3469 = vunpack.c.l.b16 %v3366
    %v3470 = vunpack.c.l.b16 %v3367
    %v3471 = vunpack.c.l.b16 %v3368
    %v3472 = vunpack.c.l.b16 %v3369
    %v3473 = vunpack.c.l.b16 %v3370
    %v3474 = vunpack.c.l.b16 %v3371
    %v3475 = vunpack.c.l.b16 %v3372
    %v3476 = vpack.c.b16 %v3429, %v3428
    %v3477 = vpack.c.b16 %v3431, %v3430
    %v3478 = vpack.c.b16 %v3433, %v3432
    %v3479 = vpack.c.b16 %v3435, %v3434
    %v3480 = vpack.c.b16 %v3437, %v3436
    %v3481 = vpack.c.b16 %v3439, %v3438
    %v3482 = vpack.c.b16 %v3441, %v3440
    %v3483 = vpack.c.b16 %v3443, %v3442
    %v3484 = vpack.c.b16 %v3445, %v3444
    %v3485 = vpack.c.b16 %v3447, %v3446
    %v3486 = vpack.c.b16 %v3449, %v3448
    %v3487 = vpack.c.b16 %v3451, %v3450
    %v3488 = vpack.c.b16 %v3453, %v3452
    %v3489 = vpack.c.b16 %v3455, %v3454
    %v3490 = vpack.c.b16 %v3457, %v3456
    %v3491 = vpack.c.b16 %v3459, %v3458
    %v3492 = vpack.c.b16 %v3461, %v3460
    %v3493 = vpack.c.b16 %v3463, %v3462
    %v3494 = vpack.c.b16 %v3465, %v3464
    %v3495 = vpack.c.b16 %v3467, %v3466
    %v3496 = vpack.c.b16 %v3469, %v3468
    %v3497 = vpack.c.b16 %v3471, %v3470
    %v3498 = vpack.c.b16 %v3473, %v3472
    %v3499 = vpack.c.b16 %v3475, %v3474
    %3524 = vmatprep.subr.bf16.mxu0 0
    %3525 = vmatpush1.bf16.msra.mxu0 %v3476
    %3526 = vmatprep.subr.bf16.mxu0 0
    %3527 = vmatpush1.bf16.msra.mxu0 %v3477
    %3528 = vmatprep.subr.bf16.mxu0 0
    %3529 = vmatpush1.bf16.msra.mxu0 %v3478
    %3530 = vmatprep.subr.bf16.mxu0 0
    %3531 = vmatpush1.bf16.msra.mxu0 %v3479
    %3532 = vmatprep.subr.bf16.mxu0 0
    %3533 = vmatpush1.bf16.msra.mxu0 %v3480
    %3534 = vmatprep.subr.bf16.mxu0 0
    %3535 = vmatpush1.bf16.msra.mxu0 %v3481
    %3536 = vmatprep.subr.bf16.mxu0 0
    %3537 = vmatpush1.bf16.msra.mxu0 %v3482
    %3538 = vmatprep.subr.bf16.mxu0 0
    %3539 = vmatpush1.bf16.msra.mxu0 %v3483
    %3540 = vmatprep.subr.bf16.mxu0 0
    %3541 = vmatpush1.bf16.msra.mxu0 %v3484
    %3542 = vmatprep.subr.bf16.mxu0 0
    %3543 = vmatpush1.bf16.msra.mxu0 %v3485
    %3544 = vmatprep.subr.bf16.mxu0 0
    %3545 = vmatpush1.bf16.msra.mxu0 %v3486
    %3546 = vmatprep.subr.bf16.mxu0 0
    %3547 = vmatpush1.bf16.msra.mxu0 %v3487
    %3548 = vmatprep.subr.bf16.mxu0 0
    %3549 = vmatpush1.bf16.msra.mxu0 %v3488
    %3550 = vmatprep.subr.bf16.mxu0 0
    %3551 = vmatpush1.bf16.msra.mxu0 %v3489
    %3552 = vmatprep.subr.bf16.mxu0 0
    %3553 = vmatpush1.bf16.msra.mxu0 %v3490
    %3554 = vmatprep.subr.bf16.mxu0 0
    %3555 = vmatpush1.bf16.msra.mxu0 %v3491
    %3556 = vmatprep.mubr.bf16.mxu0 %v3137
    %3557 = vmatmul.mubr.bf16.gmra.mrb[0].mxu0 %v3136
    %v3558 = vpop.f32.mrb[0].mxu0
    %v3559 = vadd.f32 %v3378, %v3558
    %v3560 = vpop.f32.mrb[0].mxu0
    %v3561 = vpop.f32.mrb[0].mxu0
    %v3562 = vadd.f32 %v3378, %v3561
    %v3563 = vpop.f32.mrb[0].mxu0
    %3564 = vmatprep.mubr.bf16.mxu0 %v3140
    %3565 = vmatmul.mubr.bf16.gmra.mrb[0].mxu0 %v3139
    %v3566 = vpop.f32.mrb[0].mxu0
    %v3567 = vadd.f32 %v3378, %v3566
    %v3568 = vpop.f32.mrb[0].mxu0
    %v3569 = vpop.f32.mrb[0].mxu0
    %v3570 = vadd.f32 %v3378, %v3569
    %v3571 = vpop.f32.mrb[0].mxu0
    %3572 = vmatprep.mubr.bf16.mxu0 %v3143
    %3573 = vmatmul.mubr.bf16.gmra.mrb[0].mxu0 %v3142
    %v3574 = vpop.f32.mrb[0].mxu0
    %v3575 = vadd.f32 %v3378, %v3574
    %v3576 = vpop.f32.mrb[0].mxu0
    %v3577 = vpop.f32.mrb[0].mxu0
    %v3578 = vadd.f32 %v3378, %v3577
    %v3579 = vpop.f32.mrb[0].mxu0
    %3580 = vmatprep.mubr.bf16.mxu0 %v3146
    %3581 = vmatmul.mubr.bf16.gmra.mrb[0].mxu0 %v3145
    %v3582 = vpop.f32.mrb[0].mxu0
    %v3583 = vadd.f32 %v3378, %v3582
    %v3584 = vpop.f32.mrb[0].mxu0
    %v3585 = vpop.f32.mrb[0].mxu0
    %v3586 = vadd.f32 %v3378, %v3585
    %v3587 = vpop.f32.mrb[0].mxu0
    %3588 = vmatprep.mubr.bf16.mxu0 %v3149
    %3589 = vmatmul.mubr.bf16.gmra.mrb[0].mxu0 %v3148
    %v3590 = vpop.f32.mrb[0].mxu0
    %v3591 = vadd.f32 %v3378, %v3590
    %v3592 = vpop.f32.mrb[0].mxu0
    %v3593 = vpop.f32.mrb[0].mxu0
    %v3594 = vadd.f32 %v3378, %v3593
    %v3595 = vpop.f32.mrb[0].mxu0
    %3596 = vmatprep.mubr.bf16.mxu0 %v3152
    %3597 = vmatmul.mubr.bf16.gmra.mrb[0].mxu0 %v3151
    %v3598 = vpop.f32.mrb[0].mxu0
    %v3599 = vadd.f32 %v3378, %v3598
    %v3600 = vpop.f32.mrb[0].mxu0
    %v3601 = vpop.f32.mrb[0].mxu0
    %v3602 = vadd.f32 %v3378, %v3601
    %v3603 = vpop.f32.mrb[0].mxu0
    %3604 = vmatprep.mubr.bf16.mxu0 %v3155
    %3605 = vmatmul.mubr.bf16.gmra.mrb[0].mxu0 %v3154
    %v3606 = vpop.f32.mrb[0].mxu0
    %v3607 = vadd.f32 %v3378, %v3606
    %v3608 = vpop.f32.mrb[0].mxu0
    %v3609 = vpop.f32.mrb[0].mxu0
    %v3610 = vadd.f32 %v3378, %v3609
    %v3611 = vpop.f32.mrb[0].mxu0
    %3612 = vmatprep.mubr.bf16.mxu0 %v3158
    %3613 = vmatmul.mubr.bf16.gmra.mrb[0].mxu0 %v3157
    %v3614 = vpop.f32.mrb[0].mxu0
    %v3615 = vadd.f32 %v3378, %v3614
    %v3616 = vpop.f32.mrb[0].mxu0
    %v3617 = vpop.f32.mrb[0].mxu0
    %v3618 = vadd.f32 %v3378, %v3617
    %v3619 = vpop.f32.mrb[0].mxu0
    %3620 = vmatprep.mubr.bf16.mxu0 %v3161
    %3621 = vmatmul.mubr.bf16.gmra.mrb[0].mxu0 %v3160
    %v3622 = vpop.f32.mrb[0].mxu0
    %v3623 = vadd.f32 %v3378, %v3622
    %v3624 = vpop.f32.mrb[0].mxu0
    %v3625 = vpop.f32.mrb[0].mxu0
    %v3626 = vadd.f32 %v3378, %v3625
    %v3627 = vpop.f32.mrb[0].mxu0
    %3628 = vmatprep.mubr.bf16.mxu0 %v3164
    %3629 = vmatmul.mubr.bf16.gmra.mrb[0].mxu0 %v3163
    %v3630 = vpop.f32.mrb[0].mxu0
    %v3631 = vadd.f32 %v3378, %v3630
    %v3632 = vpop.f32.mrb[0].mxu0
    %v3633 = vpop.f32.mrb[0].mxu0
    %v3634 = vadd.f32 %v3378, %v3633
    %v3635 = vpop.f32.mrb[0].mxu0
    %3636 = vmatprep.mubr.bf16.mxu0 %v3167
    %3637 = vmatmul.mubr.bf16.gmra.mrb[0].mxu0 %v3166
    %v3638 = vpop.f32.mrb[0].mxu0
    %v3639 = vadd.f32 %v3378, %v3638
    %v3640 = vpop.f32.mrb[0].mxu0
    %v3641 = vpop.f32.mrb[0].mxu0
    %v3642 = vadd.f32 %v3378, %v3641
    %v3643 = vpop.f32.mrb[0].mxu0
    %3644 = vmatprep.mubr.bf16.mxu0 %v3170
    %3645 = vmatmul.mubr.bf16.gmra.mrb[0].mxu0 %v3169
    %v3646 = vpop.f32.mrb[0].mxu0
    %v3647 = vadd.f32 %v3378, %v3646
    %v3648 = vpop.f32.mrb[0].mxu0
    %v3649 = vpop.f32.mrb[0].mxu0
    %v3650 = vadd.f32 %v3378, %v3649
    %v3651 = vpop.f32.mrb[0].mxu0
    %3652 = vmatprep.mubr.bf16.mxu0 %v3173
    %3653 = vmatmul.mubr.bf16.gmra.mrb[0].mxu0 %v3172
    %v3654 = vpop.f32.mrb[0].mxu0
    %v3655 = vadd.f32 %v3378, %v3654
    %v3656 = vpop.f32.mrb[0].mxu0
    %v3657 = vpop.f32.mrb[0].mxu0
    %v3658 = vadd.f32 %v3378, %v3657
    %v3659 = vpop.f32.mrb[0].mxu0
    %3660 = vmatprep.mubr.bf16.mxu0 %v3176
    %3661 = vmatmul.mubr.bf16.gmra.mrb[0].mxu0 %v3175
    %v3662 = vpop.f32.mrb[0].mxu0
    %v3663 = vadd.f32 %v3378, %v3662
    %v3664 = vpop.f32.mrb[0].mxu0
    %v3665 = vpop.f32.mrb[0].mxu0
    %v3666 = vadd.f32 %v3378, %v3665
    %v3667 = vpop.f32.mrb[0].mxu0
    %3668 = vmatprep.mubr.bf16.mxu0 %v3179
    %3669 = vmatmul.mubr.bf16.gmra.mrb[0].mxu0 %v3178
    %v3670 = vpop.f32.mrb[0].mxu0
    %v3671 = vadd.f32 %v3378, %v3670
    %v3672 = vpop.f32.mrb[0].mxu0
    %v3673 = vpop.f32.mrb[0].mxu0
    %v3674 = vadd.f32 %v3378, %v3673
    %v3675 = vpop.f32.mrb[0].mxu0
    %3676 = vmatprep.mubr.bf16.mxu0 %v3182
    %3677 = vmatmul.mubr.bf16.gmra.mrb[0].mxu0 %v3181
    %v3678 = vpop.f32.mrb[0].mxu0
    %v3679 = vadd.f32 %v3378, %v3678
    %v3680 = vpop.f32.mrb[0].mxu0
    %v3681 = vpop.f32.mrb[0].mxu0
    %v3682 = vadd.f32 %v3378, %v3681
    %v3683 = vpop.f32.mrb[0].mxu0
    %3684 = vmatprep.mubr.bf16.mxu0 %v3185
    %3685 = vmatmul.mubr.bf16.gmra.mrb[0].mxu0 %v3184
    %v3686 = vpop.f32.mrb[0].mxu0
    %v3687 = vadd.f32 %v3378, %v3686
    %v3688 = vpop.f32.mrb[0].mxu0
    %v3689 = vpop.f32.mrb[0].mxu0
    %v3690 = vadd.f32 %v3378, %v3689
    %v3691 = vpop.f32.mrb[0].mxu0
    %3692 = vmatprep.mubr.bf16.mxu0 %v3188
    %3693 = vmatmul.mubr.bf16.gmra.mrb[0].mxu0 %v3187
    %v3694 = vpop.f32.mrb[0].mxu0
    %v3695 = vadd.f32 %v3378, %v3694
    %v3696 = vpop.f32.mrb[0].mxu0
    %v3697 = vpop.f32.mrb[0].mxu0
    %v3698 = vadd.f32 %v3378, %v3697
    %v3699 = vpop.f32.mrb[0].mxu0
    %3700 = vmatprep.mubr.bf16.mxu0 %v3191
    %3701 = vmatmul.mubr.bf16.gmra.mrb[0].mxu0 %v3190
    %v3702 = vpop.f32.mrb[0].mxu0
    %v3703 = vadd.f32 %v3378, %v3702
    %v3704 = vpop.f32.mrb[0].mxu0
    %v3705 = vpop.f32.mrb[0].mxu0
    %v3706 = vadd.f32 %v3378, %v3705
    %v3707 = vpop.f32.mrb[0].mxu0
    %3708 = vmatprep.mubr.bf16.mxu0 %v3194
    %3709 = vmatmul.mubr.bf16.gmra.mrb[0].mxu0 %v3193
    %v3710 = vpop.f32.mrb[0].mxu0
    %v3711 = vadd.f32 %v3378, %v3710
    %v3712 = vpop.f32.mrb[0].mxu0
    %v3713 = vpop.f32.mrb[0].mxu0
    %v3714 = vadd.f32 %v3378, %v3713
    %v3715 = vpop.f32.mrb[0].mxu0
    %3716 = vmatprep.mubr.bf16.mxu0 %v3197
    %3717 = vmatmul.mubr.bf16.gmra.mrb[0].mxu0 %v3196
    %v3718 = vpop.f32.mrb[0].mxu0
    %v3719 = vadd.f32 %v3378, %v3718
    %v3720 = vpop.f32.mrb[0].mxu0
    %v3721 = vpop.f32.mrb[0].mxu0
    %v3722 = vadd.f32 %v3378, %v3721
    %v3723 = vpop.f32.mrb[0].mxu0
    %3724 = vmatprep.mubr.bf16.mxu0 %v3200
    %3725 = vmatmul.mubr.bf16.gmra.mrb[0].mxu0 %v3199
    %v3726 = vpop.f32.mrb[0].mxu0
    %v3727 = vadd.f32 %v3378, %v3726
    %v3728 = vpop.f32.mrb[0].mxu0
    %v3729 = vpop.f32.mrb[0].mxu0
    %v3730 = vadd.f32 %v3378, %v3729
    %v3731 = vpop.f32.mrb[0].mxu0
    %3732 = vmatprep.mubr.bf16.mxu0 %v3203
    %3733 = vmatmul.mubr.bf16.gmra.mrb[0].mxu0 %v3202
    %v3734 = vpop.f32.mrb[0].mxu0
    %v3735 = vadd.f32 %v3378, %v3734
    %v3736 = vpop.f32.mrb[0].mxu0
    %v3737 = vpop.f32.mrb[0].mxu0
    %v3738 = vadd.f32 %v3378, %v3737
    %v3739 = vpop.f32.mrb[0].mxu0
    %3740 = vmatprep.mubr.bf16.mxu0 %v3206
    %3741 = vmatmul.mubr.bf16.gmra.mrb[0].mxu0 %v3205
    %v3742 = vpop.f32.mrb[0].mxu0
    %v3743 = vadd.f32 %v3378, %v3742
    %v3744 = vpop.f32.mrb[0].mxu0
    %v3745 = vpop.f32.mrb[0].mxu0
    %v3746 = vadd.f32 %v3378, %v3745
    %v3747 = vpop.f32.mrb[0].mxu0
    %3748 = vmatprep.mubr.bf16.mxu0 %v3209
    %3749 = vmatmul.mubr.bf16.gmra.mrb[0].mxu0 %v3208
    %v3750 = vpop.f32.mrb[0].mxu0
    %v3751 = vadd.f32 %v3378, %v3750
    %v3752 = vpop.f32.mrb[0].mxu0
    %v3753 = vpop.f32.mrb[0].mxu0
    %v3754 = vadd.f32 %v3378, %v3753
    %v3755 = vpop.f32.mrb[0].mxu0
    %3756 = vmatprep.mubr.bf16.mxu0 %v3212
    %3757 = vmatmul.mubr.bf16.gmra.mrb[0].mxu0 %v3211
    %v3758 = vpop.f32.mrb[0].mxu0
    %v3759 = vadd.f32 %v3378, %v3758
    %v3760 = vpop.f32.mrb[0].mxu0
    %v3761 = vpop.f32.mrb[0].mxu0
    %v3762 = vadd.f32 %v3378, %v3761
    %v3763 = vpop.f32.mrb[0].mxu0
    %3764 = vmatprep.mubr.bf16.mxu0 %v3215
    %3765 = vmatmul.mubr.bf16.gmra.mrb[0].mxu0 %v3214
    %v3766 = vpop.f32.mrb[0].mxu0
    %v3767 = vadd.f32 %v3378, %v3766
    %v3768 = vpop.f32.mrb[0].mxu0
    %v3769 = vpop.f32.mrb[0].mxu0
    %v3770 = vadd.f32 %v3378, %v3769
    %v3771 = vpop.f32.mrb[0].mxu0
    %3772 = vmatprep.mubr.bf16.mxu0 %v3218
    %3773 = vmatmul.mubr.bf16.gmra.mrb[0].mxu0 %v3217
    %v3774 = vpop.f32.mrb[0].mxu0
    %v3775 = vadd.f32 %v3378, %v3774
    %v3776 = vpop.f32.mrb[0].mxu0
    %v3777 = vpop.f32.mrb[0].mxu0
    %v3778 = vadd.f32 %v3378, %v3777
    %v3779 = vpop.f32.mrb[0].mxu0
    %3780 = vmatprep.mubr.bf16.mxu0 %v3221
    %3781 = vmatmul.mubr.bf16.gmra.mrb[0].mxu0 %v3220
    %v3782 = vpop.f32.mrb[0].mxu0
    %v3783 = vadd.f32 %v3378, %v3782
    %v3784 = vpop.f32.mrb[0].mxu0
    %v3785 = vpop.f32.mrb[0].mxu0
    %v3786 = vadd.f32 %v3378, %v3785
    %v3787 = vpop.f32.mrb[0].mxu0
    %3788 = vmatprep.mubr.bf16.mxu0 %v3224
    %3789 = vmatmul.mubr.bf16.gmra.mrb[0].mxu0 %v3223
    %v3790 = vpop.f32.mrb[0].mxu0
    %v3791 = vadd.f32 %v3378, %v3790
    %v3792 = vpop.f32.mrb[0].mxu0
    %v3793 = vpop.f32.mrb[0].mxu0
    %v3794 = vadd.f32 %v3378, %v3793
    %v3795 = vpop.f32.mrb[0].mxu0
    %3796 = vmatprep.mubr.bf16.mxu0 %v3227
    %3797 = vmatmul.mubr.bf16.gmra.mrb[0].mxu0 %v3226
    %v3798 = vpop.f32.mrb[0].mxu0
    %v3799 = vadd.f32 %v3378, %v3798
    %v3800 = vpop.f32.mrb[0].mxu0
    %v3801 = vpop.f32.mrb[0].mxu0
    %v3802 = vadd.f32 %v3378, %v3801
    %v3803 = vpop.f32.mrb[0].mxu0
    %3804 = vmatprep.mubr.bf16.mxu0 %v3230
    %3805 = vmatmul.mubr.bf16.gmra.mrb[0].mxu0 %v3229
    %v3806 = vpop.f32.mrb[0].mxu0
    %v3807 = vadd.f32 %v3378, %v3806
    %v3808 = vpop.f32.mrb[0].mxu0
    %v3809 = vpop.f32.mrb[0].mxu0
    %v3810 = vadd.f32 %v3378, %v3809
    %v3811 = vpop.f32.mrb[0].mxu0
    %3812 = vmatprep.mubr.bf16.mxu0 %v3233
    %3813 = vmatmul.mubr.bf16.gmra.mrb[0].mxu0 %v3232
    %v3814 = vpop.f32.mrb[0].mxu0
    %v3815 = vadd.f32 %v3378, %v3814
    %v3816 = vpop.f32.mrb[0].mxu0
    %v3817 = vpop.f32.mrb[0].mxu0
    %v3818 = vadd.f32 %v3378, %v3817
    %v3819 = vpop.f32.mrb[0].mxu0
    %3820 = vmatprep.mubr.bf16.mxu0 %v3236
    %3821 = vmatmul.mubr.bf16.gmra.mrb[0].mxu0 %v3235
    %v3822 = vpop.f32.mrb[0].mxu0
    %v3823 = vadd.f32 %v3378, %v3822
    %v3824 = vpop.f32.mrb[0].mxu0
    %v3825 = vpop.f32.mrb[0].mxu0
    %v3826 = vadd.f32 %v3378, %v3825
    %v3827 = vpop.f32.mrb[0].mxu0
    %3828 = vmatprep.mubr.bf16.mxu0 %v3239
    %3829 = vmatmul.mubr.bf16.gmra.mrb[0].mxu0 %v3238
    %v3830 = vpop.f32.mrb[0].mxu0
    %v3831 = vadd.f32 %v3378, %v3830
    %v3832 = vpop.f32.mrb[0].mxu0
    %v3833 = vpop.f32.mrb[0].mxu0
    %v3834 = vadd.f32 %v3378, %v3833
    %v3835 = vpop.f32.mrb[0].mxu0
    %3836 = vmatprep.mubr.bf16.mxu0 %v3242
    %3837 = vmatmul.mubr.bf16.gmra.mrb[0].mxu0 %v3241
    %v3838 = vpop.f32.mrb[0].mxu0
    %v3839 = vadd.f32 %v3378, %v3838
    %v3840 = vpop.f32.mrb[0].mxu0
    %v3841 = vpop.f32.mrb[0].mxu0
    %v3842 = vadd.f32 %v3378, %v3841
    %v3843 = vpop.f32.mrb[0].mxu0
    %3844 = vmatprep.mubr.bf16.mxu0 %v3245
    %3845 = vmatmul.mubr.bf16.gmra.mrb[0].mxu0 %v3244
    %v3846 = vpop.f32.mrb[0].mxu0
    %v3847 = vadd.f32 %v3378, %v3846
    %v3848 = vpop.f32.mrb[0].mxu0
    %v3849 = vpop.f32.mrb[0].mxu0
    %v3850 = vadd.f32 %v3378, %v3849
    %v3851 = vpop.f32.mrb[0].mxu0
    %3852 = vmatprep.mubr.bf16.mxu0 %v3248
    %3853 = vmatmul.mubr.bf16.gmra.mrb[0].mxu0 %v3247
    %v3854 = vpop.f32.mrb[0].mxu0
    %v3855 = vadd.f32 %v3378, %v3854
    %v3856 = vpop.f32.mrb[0].mxu0
    %v3857 = vpop.f32.mrb[0].mxu0
    %v3858 = vadd.f32 %v3378, %v3857
    %v3859 = vpop.f32.mrb[0].mxu0
    %3860 = vmatprep.mubr.bf16.mxu0 %v3251
    %3861 = vmatmul.mubr.bf16.gmra.mrb[0].mxu0 %v3250
    %v3862 = vpop.f32.mrb[0].mxu0
    %v3863 = vadd.f32 %v3378, %v3862
    %v3864 = vpop.f32.mrb[0].mxu0
    %v3865 = vpop.f32.mrb[0].mxu0
    %v3866 = vadd.f32 %v3378, %v3865
    %v3867 = vpop.f32.mrb[0].mxu0
    %3868 = vmatprep.mubr.bf16.mxu0 %v3254
    %3869 = vmatmul.mubr.bf16.gmra.mrb[0].mxu0 %v3253
    %v3870 = vpop.f32.mrb[0].mxu0
    %v3871 = vadd.f32 %v3378, %v3870
    %v3872 = vpop.f32.mrb[0].mxu0
    %v3873 = vpop.f32.mrb[0].mxu0
    %v3874 = vadd.f32 %v3378, %v3873
    %v3875 = vpop.f32.mrb[0].mxu0
    %3876 = vmatprep.mubr.bf16.mxu0 %v3257
    %3877 = vmatmul.mubr.bf16.gmra.mrb[0].mxu0 %v3256
    %v3878 = vpop.f32.mrb[0].mxu0
    %v3879 = vadd.f32 %v3378, %v3878
    %v3880 = vpop.f32.mrb[0].mxu0
    %v3881 = vpop.f32.mrb[0].mxu0
    %v3882 = vadd.f32 %v3378, %v3881
    %v3883 = vpop.f32.mrb[0].mxu0
    %3884 = vmatprep.mubr.bf16.mxu0 %v3260
    %3885 = vmatmul.mubr.bf16.gmra.mrb[0].mxu0 %v3259
    %v3886 = vpop.f32.mrb[0].mxu0
    %v3887 = vadd.f32 %v3378, %v3886
    %v3888 = vpop.f32.mrb[0].mxu0
    %v3889 = vpop.f32.mrb[0].mxu0
    %v3890 = vadd.f32 %v3378, %v3889
    %v3891 = vpop.f32.mrb[0].mxu0
    %3892 = vmatprep.mubr.bf16.mxu0 %v3263
    %3893 = vmatmul.mubr.bf16.gmra.mrb[0].mxu0 %v3262
    %v3894 = vpop.f32.mrb[0].mxu0
    %v3895 = vadd.f32 %v3378, %v3894
    %v3896 = vpop.f32.mrb[0].mxu0
    %v3897 = vpop.f32.mrb[0].mxu0
    %v3898 = vadd.f32 %v3378, %v3897
    %v3899 = vpop.f32.mrb[0].mxu0
    %3900 = vmatprep.mubr.bf16.mxu0 %v3266
    %3901 = vmatmul.mubr.bf16.gmra.mrb[0].mxu0 %v3265
    %v3902 = vpop.f32.mrb[0].mxu0
    %v3903 = vadd.f32 %v3378, %v3902
    %v3904 = vpop.f32.mrb[0].mxu0
    %v3905 = vpop.f32.mrb[0].mxu0
    %v3906 = vadd.f32 %v3378, %v3905
    %v3907 = vpop.f32.mrb[0].mxu0
    %3908 = vmatprep.mubr.bf16.mxu0 %v3269
    %3909 = vmatmul.mubr.bf16.gmra.mrb[0].mxu0 %v3268
    %v3910 = vpop.f32.mrb[0].mxu0
    %v3911 = vadd.f32 %v3378, %v3910
    %v3912 = vpop.f32.mrb[0].mxu0
    %v3913 = vpop.f32.mrb[0].mxu0
    %v3914 = vadd.f32 %v3378, %v3913
    %v3915 = vpop.f32.mrb[0].mxu0
    %3916 = vmatprep.mubr.bf16.mxu0 %v3272
    %3917 = vmatmul.mubr.bf16.gmra.mrb[0].mxu0 %v3271
    %v3918 = vpop.f32.mrb[0].mxu0
    %v3919 = vadd.f32 %v3378, %v3918
    %v3920 = vpop.f32.mrb[0].mxu0
    %v3921 = vpop.f32.mrb[0].mxu0
    %v3922 = vadd.f32 %v3378, %v3921
    %v3923 = vpop.f32.mrb[0].mxu0
    %3924 = vmatprep.mubr.bf16.mxu0 %v3275
    %3925 = vmatmul.mubr.bf16.gmra.mrb[0].mxu0 %v3274
    %v3926 = vpop.f32.mrb[0].mxu0
    %v3927 = vadd.f32 %v3378, %v3926
    %v3928 = vpop.f32.mrb[0].mxu0
    %v3929 = vpop.f32.mrb[0].mxu0
    %v3930 = vadd.f32 %v3378, %v3929
    %v3931 = vpop.f32.mrb[0].mxu0
    %3932 = vmatprep.mubr.bf16.mxu0 %v3278
    %3933 = vmatmul.mubr.bf16.gmra.mrb[0].mxu0 %v3277
    %v3934 = vpop.f32.mrb[0].mxu0
    %v3935 = vadd.f32 %v3378, %v3934
    %v3936 = vpop.f32.mrb[0].mxu0
    %v3937 = vpop.f32.mrb[0].mxu0
    %v3938 = vadd.f32 %v3378, %v3937
    %v3939 = vpop.f32.mrb[0].mxu0
    %3940 = vmatprep.mubr.bf16.mxu0 %v3281
    %3941 = vmatmul.mubr.bf16.gmra.mrb[0].mxu0 %v3280
    %v3942 = vpop.f32.mrb[0].mxu0
    %v3943 = vadd.f32 %v3378, %v3942
    %v3944 = vpop.f32.mrb[0].mxu0
    %v3945 = vpop.f32.mrb[0].mxu0
    %v3946 = vadd.f32 %v3378, %v3945
    %v3947 = vpop.f32.mrb[0].mxu0
    %3948 = vmatprep.mubr.bf16.mxu0 %v3284
    %3949 = vmatmul.mubr.bf16.gmra.mrb[0].mxu0 %v3283
    %v3950 = vpop.f32.mrb[0].mxu0
    %v3951 = vadd.f32 %v3378, %v3950
    %v3952 = vpop.f32.mrb[0].mxu0
    %v3953 = vpop.f32.mrb[0].mxu0
    %v3954 = vadd.f32 %v3378, %v3953
    %v3955 = vpop.f32.mrb[0].mxu0
    %3956 = vmatprep.mubr.bf16.mxu0 %v3287
    %3957 = vmatmul.mubr.bf16.gmra.mrb[0].mxu0 %v3286
    %v3958 = vpop.f32.mrb[0].mxu0
    %v3959 = vadd.f32 %v3378, %v3958
    %v3960 = vpop.f32.mrb[0].mxu0
    %v3961 = vpop.f32.mrb[0].mxu0
    %v3962 = vadd.f32 %v3378, %v3961
    %v3963 = vpop.f32.mrb[0].mxu0
    %3964 = vmatprep.mubr.bf16.mxu0 %v3290
    %3965 = vmatmul.mubr.bf16.gmra.mrb[0].mxu0 %v3289
    %v3966 = vpop.f32.mrb[0].mxu0
    %v3967 = vadd.f32 %v3378, %v3966
    %v3968 = vpop.f32.mrb[0].mxu0
    %v3969 = vpop.f32.mrb[0].mxu0
    %v3970 = vadd.f32 %v3378, %v3969
    %v3971 = vpop.f32.mrb[0].mxu0
    %3972 = vmatprep.mubr.bf16.mxu0 %v3293
    %3973 = vmatmul.mubr.bf16.gmra.mrb[0].mxu0 %v3292
    %v3974 = vpop.f32.mrb[0].mxu0
    %v3975 = vadd.f32 %v3378, %v3974
    %v3976 = vpop.f32.mrb[0].mxu0
    %v3977 = vpop.f32.mrb[0].mxu0
    %v3978 = vadd.f32 %v3378, %v3977
    %v3979 = vpop.f32.mrb[0].mxu0
    %3980 = vmatprep.mubr.bf16.mxu0 %v3296
    %3981 = vmatmul.mubr.bf16.gmra.mrb[0].mxu0 %v3295
    %v3982 = vpop.f32.mrb[0].mxu0
    %v3983 = vadd.f32 %v3378, %v3982
    %v3984 = vpop.f32.mrb[0].mxu0
    %v3985 = vpop.f32.mrb[0].mxu0
    %v3986 = vadd.f32 %v3378, %v3985
    %v3987 = vpop.f32.mrb[0].mxu0
    %3988 = vmatprep.mubr.bf16.mxu0 %v3299
    %3989 = vmatmul.mubr.bf16.gmra.mrb[0].mxu0 %v3298
    %v3990 = vpop.f32.mrb[0].mxu0
    %v3991 = vadd.f32 %v3378, %v3990
    %v3992 = vpop.f32.mrb[0].mxu0
    %v3993 = vpop.f32.mrb[0].mxu0
    %v3994 = vadd.f32 %v3378, %v3993
    %v3995 = vpop.f32.mrb[0].mxu0
    %3996 = vmatprep.mubr.bf16.mxu0 %v3302
    %3997 = vmatmul.mubr.bf16.gmra.mrb[0].mxu0 %v3301
    %v3998 = vpop.f32.mrb[0].mxu0
    %v3999 = vadd.f32 %v3378, %v3998
    %v4000 = vpop.f32.mrb[0].mxu0
    %v4001 = vpop.f32.mrb[0].mxu0
    %v4002 = vadd.f32 %v3378, %v4001
    %v4003 = vpop.f32.mrb[0].mxu0
    %4004 = vmatprep.mubr.bf16.mxu0 %v3305
    %4005 = vmatmul.mubr.bf16.gmra.mrb[0].mxu0 %v3304
    %v4006 = vpop.f32.mrb[0].mxu0
    %v4007 = vadd.f32 %v3378, %v4006
    %v4008 = vpop.f32.mrb[0].mxu0
    %v4009 = vpop.f32.mrb[0].mxu0
    %v4010 = vadd.f32 %v3378, %v4009
    %v4011 = vpop.f32.mrb[0].mxu0
    %4012 = vmatprep.mubr.bf16.mxu0 %v3308
    %4013 = vmatmul.mubr.bf16.gmra.mrb[0].mxu0 %v3307
    %v4014 = vpop.f32.mrb[0].mxu0
    %v4015 = vadd.f32 %v3378, %v4014
    %v4016 = vpop.f32.mrb[0].mxu0
    %v4017 = vpop.f32.mrb[0].mxu0
    %v4018 = vadd.f32 %v3378, %v4017
    %v4019 = vpop.f32.mrb[0].mxu0
    %4020 = vmatprep.mubr.bf16.mxu0 %v3311
    %4021 = vmatmul.mubr.bf16.gmra.mrb[0].mxu0 %v3310
    %v4022 = vpop.f32.mrb[0].mxu0
    %v4023 = vadd.f32 %v3378, %v4022
    %v4024 = vpop.f32.mrb[0].mxu0
    %v4025 = vpop.f32.mrb[0].mxu0
    %v4026 = vadd.f32 %v3378, %v4025
    %v4027 = vpop.f32.mrb[0].mxu0
    %4028 = vmatprep.mubr.bf16.mxu0 %v3314
    %4029 = vmatmul.mubr.bf16.gmra.mrb[0].mxu0 %v3313
    %v4030 = vpop.f32.mrb[0].mxu0
    %v4031 = vadd.f32 %v3378, %v4030
    %v4032 = vpop.f32.mrb[0].mxu0
    %v4033 = vpop.f32.mrb[0].mxu0
    %v4034 = vadd.f32 %v3378, %v4033
    %v4035 = vpop.f32.mrb[0].mxu0
    %4036 = vmatprep.mubr.bf16.mxu0 %v3317
    %4037 = vmatmul.mubr.bf16.gmra.mrb[0].mxu0 %v3316
    %v4038 = vpop.f32.mrb[0].mxu0
    %v4039 = vadd.f32 %v3378, %v4038
    %v4040 = vpop.f32.mrb[0].mxu0
    %v4041 = vpop.f32.mrb[0].mxu0
    %v4042 = vadd.f32 %v3378, %v4041
    %v4043 = vpop.f32.mrb[0].mxu0
    %4044 = vmatprep.mubr.bf16.mxu0 %v3320
    %4045 = vmatmul.mubr.bf16.gmra.mrb[0].mxu0 %v3319
    %v4046 = vpop.f32.mrb[0].mxu0
    %v4047 = vadd.f32 %v3378, %v4046
    %v4048 = vpop.f32.mrb[0].mxu0
    %v4049 = vpop.f32.mrb[0].mxu0
    %v4050 = vadd.f32 %v3378, %v4049
    %v4051 = vpop.f32.mrb[0].mxu0
    %4052 = vmatprep.mubr.bf16.mxu0 %v3323
    %4053 = vmatmul.mubr.bf16.gmra.mrb[0].mxu0 %v3322
    %v4054 = vpop.f32.mrb[0].mxu0
    %v4055 = vadd.f32 %v3378, %v4054
    %v4056 = vpop.f32.mrb[0].mxu0
    %v4057 = vpop.f32.mrb[0].mxu0
    %v4058 = vadd.f32 %v3378, %v4057
    %v4059 = vpop.f32.mrb[0].mxu0
    %4060 = vdwg.mxu0
    %4061 = vmatprep.subr.bf16.mxu0 0
    %4062 = vmatpush1.bf16.msra.mxu0 %v3492
    %4063 = vmatprep.subr.bf16.mxu0 0
    %4064 = vmatpush1.bf16.msra.mxu0 %v3493
    %4065 = vmatprep.subr.bf16.mxu0 0
    %4066 = vmatpush1.bf16.msra.mxu0 %v3494
    %4067 = vmatprep.subr.bf16.mxu0 0
    %4068 = vmatpush1.bf16.msra.mxu0 %v3495
    %4069 = vmatprep.subr.bf16.mxu0 0
    %4070 = vmatpush1.bf16.msra.mxu0 %v3496
    %4071 = vmatprep.subr.bf16.mxu0 0
    %4072 = vmatpush1.bf16.msra.mxu0 %v3497
    %4073 = vmatprep.subr.bf16.mxu0 0
    %4074 = vmatpush1.bf16.msra.mxu0 %v3498
    %4075 = vmatprep.subr.bf16.mxu0 0
    %4076 = vmatpush1.bf16.msra.mxu0 %v3499
    %4077 = vmatprep.subr.bf16.mxu0 0
    %4078 = vmatpush1.bf16.msra.mxu0 0
    %4079 = vmatprep.subr.bf16.mxu0 0
    %4080 = vmatpush1.bf16.msra.mxu0 0
    %4081 = vmatprep.subr.bf16.mxu0 0
    %4082 = vmatpush1.bf16.msra.mxu0 0
    %4083 = vmatprep.subr.bf16.mxu0 0
    %4084 = vmatpush1.bf16.msra.mxu0 0
    %4085 = vmatprep.subr.bf16.mxu0 0
    %4086 = vmatpush1.bf16.msra.mxu0 0
    %4087 = vmatprep.subr.bf16.mxu0 0
    %4088 = vmatpush1.bf16.msra.mxu0 0
    %4089 = vmatprep.subr.bf16.mxu0 0
    %4090 = vmatpush1.bf16.msra.mxu0 0
    %4091 = vmatprep.subr.bf16.mxu0 0
    %4092 = vmatpush1.bf16.msra.mxu0 0
    %4093 = vmatprep.mubr.bf16.mxu0 0
    %4094 = vmatmul.mubr.bf16.gmra.mrb[0].mxu0 %v3138
    %v4095 = vpop.f32.mrb[0].mxu0
    %v4096 = vadd.f32 %v3559, %v4095
    %v4097 = vpop.f32.mrb[0].mxu0
    %v4098 = vpop.f32.mrb[0].mxu0
    %v4099 = vadd.f32 %v3562, %v4098
    %v4100 = vpop.f32.mrb[0].mxu0
    %4101 = vmatprep.mubr.bf16.mxu0 0
    %4102 = vmatmul.mubr.bf16.gmra.mrb[0].mxu0 %v3141
    %v4103 = vpop.f32.mrb[0].mxu0
    %v4104 = vadd.f32 %v3567, %v4103
    %v4105 = vpop.f32.mrb[0].mxu0
    %v4106 = vpop.f32.mrb[0].mxu0
    %v4107 = vadd.f32 %v3570, %v4106
    %v4108 = vpop.f32.mrb[0].mxu0
    %4109 = vmatprep.mubr.bf16.mxu0 0
    %4110 = vmatmul.mubr.bf16.gmra.mrb[0].mxu0 %v3144
    %v4111 = vpop.f32.mrb[0].mxu0
    %v4112 = vadd.f32 %v3575, %v4111
    %v4113 = vpop.f32.mrb[0].mxu0
    %v4114 = vpop.f32.mrb[0].mxu0
    %v4115 = vadd.f32 %v3578, %v4114
    %v4116 = vpop.f32.mrb[0].mxu0
    %4117 = vmatprep.mubr.bf16.mxu0 0
    %4118 = vmatmul.mubr.bf16.gmra.mrb[0].mxu0 %v3147
    %v4119 = vpop.f32.mrb[0].mxu0
    %v4120 = vadd.f32 %v3583, %v4119
    %v4121 = vpop.f32.mrb[0].mxu0
    %v4122 = vpop.f32.mrb[0].mxu0
    %v4123 = vadd.f32 %v3586, %v4122
    %v4124 = vpop.f32.mrb[0].mxu0
    %4125 = vmatprep.mubr.bf16.mxu0 0
    %4126 = vmatmul.mubr.bf16.gmra.mrb[0].mxu0 %v3150
    %v4127 = vpop.f32.mrb[0].mxu0
    %v4128 = vadd.f32 %v3591, %v4127
    %v4129 = vpop.f32.mrb[0].mxu0
    %v4130 = vpop.f32.mrb[0].mxu0
    %v4131 = vadd.f32 %v3594, %v4130
    %v4132 = vpop.f32.mrb[0].mxu0
    %4133 = vmatprep.mubr.bf16.mxu0 0
    %4134 = vmatmul.mubr.bf16.gmra.mrb[0].mxu0 %v3153
    %v4135 = vpop.f32.mrb[0].mxu0
    %v4136 = vadd.f32 %v3599, %v4135
    %v4137 = vpop.f32.mrb[0].mxu0
    %v4138 = vpop.f32.mrb[0].mxu0
    %v4139 = vadd.f32 %v3602, %v4138
    %v4140 = vpop.f32.mrb[0].mxu0
    %4141 = vmatprep.mubr.bf16.mxu0 0
    %4142 = vmatmul.mubr.bf16.gmra.mrb[0].mxu0 %v3156
    %v4143 = vpop.f32.mrb[0].mxu0
    %v4144 = vadd.f32 %v3607, %v4143
    %v4145 = vpop.f32.mrb[0].mxu0
    %v4146 = vpop.f32.mrb[0].mxu0
    %v4147 = vadd.f32 %v3610, %v4146
    %v4148 = vpop.f32.mrb[0].mxu0
    %4149 = vmatprep.mubr.bf16.mxu0 0
    %4150 = vmatmul.mubr.bf16.gmra.mrb[0].mxu0 %v3159
    %v4151 = vpop.f32.mrb[0].mxu0
    %v4152 = vadd.f32 %v3615, %v4151
    %v4153 = vpop.f32.mrb[0].mxu0
    %v4154 = vpop.f32.mrb[0].mxu0
    %v4155 = vadd.f32 %v3618, %v4154
    %v4156 = vpop.f32.mrb[0].mxu0
    %4157 = vmatprep.mubr.bf16.mxu0 0
    %4158 = vmatmul.mubr.bf16.gmra.mrb[0].mxu0 %v3162
    %v4159 = vpop.f32.mrb[0].mxu0
    %v4160 = vadd.f32 %v3623, %v4159
    %v4161 = vpop.f32.mrb[0].mxu0
    %v4162 = vpop.f32.mrb[0].mxu0
    %v4163 = vadd.f32 %v3626, %v4162
    %v4164 = vpop.f32.mrb[0].mxu0
    %4165 = vmatprep.mubr.bf16.mxu0 0
    %4166 = vmatmul.mubr.bf16.gmra.mrb[0].mxu0 %v3165
    %v4167 = vpop.f32.mrb[0].mxu0
    %v4168 = vadd.f32 %v3631, %v4167
    %v4169 = vpop.f32.mrb[0].mxu0
    %v4170 = vpop.f32.mrb[0].mxu0
    %v4171 = vadd.f32 %v3634, %v4170
    %v4172 = vpop.f32.mrb[0].mxu0
    %4173 = vmatprep.mubr.bf16.mxu0 0
    %4174 = vmatmul.mubr.bf16.gmra.mrb[0].mxu0 %v3168
    %v4175 = vpop.f32.mrb[0].mxu0
    %v4176 = vadd.f32 %v3639, %v4175
    %v4177 = vpop.f32.mrb[0].mxu0
    %v4178 = vpop.f32.mrb[0].mxu0
    %v4179 = vadd.f32 %v3642, %v4178
    %v4180 = vpop.f32.mrb[0].mxu0
    %4181 = vmatprep.mubr.bf16.mxu0 0
    %4182 = vmatmul.mubr.bf16.gmra.mrb[0].mxu0 %v3171
    %v4183 = vpop.f32.mrb[0].mxu0
    %v4184 = vadd.f32 %v3647, %v4183
    %v4185 = vpop.f32.mrb[0].mxu0
    %v4186 = vpop.f32.mrb[0].mxu0
    %v4187 = vadd.f32 %v3650, %v4186
    %v4188 = vpop.f32.mrb[0].mxu0
    %4189 = vmatprep.mubr.bf16.mxu0 0
    %4190 = vmatmul.mubr.bf16.gmra.mrb[0].mxu0 %v3174
    %v4191 = vpop.f32.mrb[0].mxu0
    %v4192 = vadd.f32 %v3655, %v4191
    %v4193 = vpop.f32.mrb[0].mxu0
    %v4194 = vpop.f32.mrb[0].mxu0
    %v4195 = vadd.f32 %v3658, %v4194
    %v4196 = vpop.f32.mrb[0].mxu0
    %4197 = vmatprep.mubr.bf16.mxu0 0
    %4198 = vmatmul.mubr.bf16.gmra.mrb[0].mxu0 %v3177
    %v4199 = vpop.f32.mrb[0].mxu0
    %v4200 = vadd.f32 %v3663, %v4199
    %v4201 = vpop.f32.mrb[0].mxu0
    %v4202 = vpop.f32.mrb[0].mxu0
    %v4203 = vadd.f32 %v3666, %v4202
    %v4204 = vpop.f32.mrb[0].mxu0
    %4205 = vmatprep.mubr.bf16.mxu0 0
    %4206 = vmatmul.mubr.bf16.gmra.mrb[0].mxu0 %v3180
    %v4207 = vpop.f32.mrb[0].mxu0
    %v4208 = vadd.f32 %v3671, %v4207
    %v4209 = vpop.f32.mrb[0].mxu0
    %v4210 = vpop.f32.mrb[0].mxu0
    %v4211 = vadd.f32 %v3674, %v4210
    %v4212 = vpop.f32.mrb[0].mxu0
    %4213 = vmatprep.mubr.bf16.mxu0 0
    %4214 = vmatmul.mubr.bf16.gmra.mrb[0].mxu0 %v3183
    %v4215 = vpop.f32.mrb[0].mxu0
    %v4216 = vadd.f32 %v3679, %v4215
    %v4217 = vpop.f32.mrb[0].mxu0
    %v4218 = vpop.f32.mrb[0].mxu0
    %v4219 = vadd.f32 %v3682, %v4218
    %v4220 = vpop.f32.mrb[0].mxu0
    %4221 = vmatprep.mubr.bf16.mxu0 0
    %4222 = vmatmul.mubr.bf16.gmra.mrb[0].mxu0 %v3186
    %v4223 = vpop.f32.mrb[0].mxu0
    %v4224 = vadd.f32 %v3687, %v4223
    %v4225 = vpop.f32.mrb[0].mxu0
    %v4226 = vpop.f32.mrb[0].mxu0
    %v4227 = vadd.f32 %v3690, %v4226
    %v4228 = vpop.f32.mrb[0].mxu0
    %4229 = vmatprep.mubr.bf16.mxu0 0
    %4230 = vmatmul.mubr.bf16.gmra.mrb[0].mxu0 %v3189
    %v4231 = vpop.f32.mrb[0].mxu0
    %v4232 = vadd.f32 %v3695, %v4231
    %v4233 = vpop.f32.mrb[0].mxu0
    %v4234 = vpop.f32.mrb[0].mxu0
    %v4235 = vadd.f32 %v3698, %v4234
    %v4236 = vpop.f32.mrb[0].mxu0
    %4237 = vmatprep.mubr.bf16.mxu0 0
    %4238 = vmatmul.mubr.bf16.gmra.mrb[0].mxu0 %v3192
    %v4239 = vpop.f32.mrb[0].mxu0
    %v4240 = vadd.f32 %v3703, %v4239
    %v4241 = vpop.f32.mrb[0].mxu0
    %v4242 = vpop.f32.mrb[0].mxu0
    %v4243 = vadd.f32 %v3706, %v4242
    %v4244 = vpop.f32.mrb[0].mxu0
    %4245 = vmatprep.mubr.bf16.mxu0 0
    %4246 = vmatmul.mubr.bf16.gmra.mrb[0].mxu0 %v3195
    %v4247 = vpop.f32.mrb[0].mxu0
    %v4248 = vadd.f32 %v3711, %v4247
    %v4249 = vpop.f32.mrb[0].mxu0
    %v4250 = vpop.f32.mrb[0].mxu0
    %v4251 = vadd.f32 %v3714, %v4250
    %v4252 = vpop.f32.mrb[0].mxu0
    %4253 = vmatprep.mubr.bf16.mxu0 0
    %4254 = vmatmul.mubr.bf16.gmra.mrb[0].mxu0 %v3198
    %v4255 = vpop.f32.mrb[0].mxu0
    %v4256 = vadd.f32 %v3719, %v4255
    %v4257 = vpop.f32.mrb[0].mxu0
    %v4258 = vpop.f32.mrb[0].mxu0
    %v4259 = vadd.f32 %v3722, %v4258
    %v4260 = vpop.f32.mrb[0].mxu0
    %4261 = vmatprep.mubr.bf16.mxu0 0
    %4262 = vmatmul.mubr.bf16.gmra.mrb[0].mxu0 %v3201
    %v4263 = vpop.f32.mrb[0].mxu0
    %v4264 = vadd.f32 %v3727, %v4263
    %v4265 = vpop.f32.mrb[0].mxu0
    %v4266 = vpop.f32.mrb[0].mxu0
    %v4267 = vadd.f32 %v3730, %v4266
    %v4268 = vpop.f32.mrb[0].mxu0
    %4269 = vmatprep.mubr.bf16.mxu0 0
    %4270 = vmatmul.mubr.bf16.gmra.mrb[0].mxu0 %v3204
    %v4271 = vpop.f32.mrb[0].mxu0
    %v4272 = vadd.f32 %v3735, %v4271
    %v4273 = vpop.f32.mrb[0].mxu0
    %v4274 = vpop.f32.mrb[0].mxu0
    %v4275 = vadd.f32 %v3738, %v4274
    %v4276 = vpop.f32.mrb[0].mxu0
    %4277 = vmatprep.mubr.bf16.mxu0 0
    %4278 = vmatmul.mubr.bf16.gmra.mrb[0].mxu0 %v3207
    %v4279 = vpop.f32.mrb[0].mxu0
    %v4280 = vadd.f32 %v3743, %v4279
    %v4281 = vpop.f32.mrb[0].mxu0
    %v4282 = vpop.f32.mrb[0].mxu0
    %v4283 = vadd.f32 %v3746, %v4282
    %v4284 = vpop.f32.mrb[0].mxu0
    %4285 = vmatprep.mubr.bf16.mxu0 0
    %4286 = vmatmul.mubr.bf16.gmra.mrb[0].mxu0 %v3210
    %v4287 = vpop.f32.mrb[0].mxu0
    %v4288 = vadd.f32 %v3751, %v4287
    %v4289 = vpop.f32.mrb[0].mxu0
    %v4290 = vpop.f32.mrb[0].mxu0
    %v4291 = vadd.f32 %v3754, %v4290
    %v4292 = vpop.f32.mrb[0].mxu0
    %4293 = vmatprep.mubr.bf16.mxu0 0
    %4294 = vmatmul.mubr.bf16.gmra.mrb[0].mxu0 %v3213
    %v4295 = vpop.f32.mrb[0].mxu0
    %v4296 = vadd.f32 %v3759, %v4295
    %v4297 = vpop.f32.mrb[0].mxu0
    %v4298 = vpop.f32.mrb[0].mxu0
    %v4299 = vadd.f32 %v3762, %v4298
    %v4300 = vpop.f32.mrb[0].mxu0
    %4301 = vmatprep.mubr.bf16.mxu0 0
    %4302 = vmatmul.mubr.bf16.gmra.mrb[0].mxu0 %v3216
    %v4303 = vpop.f32.mrb[0].mxu0
    %v4304 = vadd.f32 %v3767, %v4303
    %v4305 = vpop.f32.mrb[0].mxu0
    %v4306 = vpop.f32.mrb[0].mxu0
    %v4307 = vadd.f32 %v3770, %v4306
    %v4308 = vpop.f32.mrb[0].mxu0
    %4309 = vmatprep.mubr.bf16.mxu0 0
    %4310 = vmatmul.mubr.bf16.gmra.mrb[0].mxu0 %v3219
    %v4311 = vpop.f32.mrb[0].mxu0
    %v4312 = vadd.f32 %v3775, %v4311
    %v4313 = vpop.f32.mrb[0].mxu0
    %v4314 = vpop.f32.mrb[0].mxu0
    %v4315 = vadd.f32 %v3778, %v4314
    %v4316 = vpop.f32.mrb[0].mxu0
    %4317 = vmatprep.mubr.bf16.mxu0 0
    %4318 = vmatmul.mubr.bf16.gmra.mrb[0].mxu0 %v3222
    %v4319 = vpop.f32.mrb[0].mxu0
    %v4320 = vadd.f32 %v3783, %v4319
    %v4321 = vpop.f32.mrb[0].mxu0
    %v4322 = vpop.f32.mrb[0].mxu0
    %v4323 = vadd.f32 %v3786, %v4322
    %v4324 = vpop.f32.mrb[0].mxu0
    %4325 = vmatprep.mubr.bf16.mxu0 0
    %4326 = vmatmul.mubr.bf16.gmra.mrb[0].mxu0 %v3225
    %v4327 = vpop.f32.mrb[0].mxu0
    %v4328 = vadd.f32 %v3791, %v4327
    %v4329 = vpop.f32.mrb[0].mxu0
    %v4330 = vpop.f32.mrb[0].mxu0
    %v4331 = vadd.f32 %v3794, %v4330
    %v4332 = vpop.f32.mrb[0].mxu0
    %4333 = vmatprep.mubr.bf16.mxu0 0
    %4334 = vmatmul.mubr.bf16.gmra.mrb[0].mxu0 %v3228
    %v4335 = vpop.f32.mrb[0].mxu0
    %v4336 = vadd.f32 %v3799, %v4335
    %v4337 = vpop.f32.mrb[0].mxu0
    %v4338 = vpop.f32.mrb[0].mxu0
    %v4339 = vadd.f32 %v3802, %v4338
    %v4340 = vpop.f32.mrb[0].mxu0
    %4341 = vmatprep.mubr.bf16.mxu0 0
    %4342 = vmatmul.mubr.bf16.gmra.mrb[0].mxu0 %v3231
    %v4343 = vpop.f32.mrb[0].mxu0
    %v4344 = vadd.f32 %v3807, %v4343
    %v4345 = vpop.f32.mrb[0].mxu0
    %v4346 = vpop.f32.mrb[0].mxu0
    %v4347 = vadd.f32 %v3810, %v4346
    %v4348 = vpop.f32.mrb[0].mxu0
    %4349 = vmatprep.mubr.bf16.mxu0 0
    %4350 = vmatmul.mubr.bf16.gmra.mrb[0].mxu0 %v3234
    %v4351 = vpop.f32.mrb[0].mxu0
    %v4352 = vadd.f32 %v3815, %v4351
    %v4353 = vpop.f32.mrb[0].mxu0
    %v4354 = vpop.f32.mrb[0].mxu0
    %v4355 = vadd.f32 %v3818, %v4354
    %v4356 = vpop.f32.mrb[0].mxu0
    %4357 = vmatprep.mubr.bf16.mxu0 0
    %4358 = vmatmul.mubr.bf16.gmra.mrb[0].mxu0 %v3237
    %v4359 = vpop.f32.mrb[0].mxu0
    %v4360 = vadd.f32 %v3823, %v4359
    %v4361 = vpop.f32.mrb[0].mxu0
    %v4362 = vpop.f32.mrb[0].mxu0
    %v4363 = vadd.f32 %v3826, %v4362
    %v4364 = vpop.f32.mrb[0].mxu0
    %4365 = vmatprep.mubr.bf16.mxu0 0
    %4366 = vmatmul.mubr.bf16.gmra.mrb[0].mxu0 %v3240
    %v4367 = vpop.f32.mrb[0].mxu0
    %v4368 = vadd.f32 %v3831, %v4367
    %v4369 = vpop.f32.mrb[0].mxu0
    %v4370 = vpop.f32.mrb[0].mxu0
    %v4371 = vadd.f32 %v3834, %v4370
    %v4372 = vpop.f32.mrb[0].mxu0
    %4373 = vmatprep.mubr.bf16.mxu0 0
    %4374 = vmatmul.mubr.bf16.gmra.mrb[0].mxu0 %v3243
    %v4375 = vpop.f32.mrb[0].mxu0
    %v4376 = vadd.f32 %v3839, %v4375
    %v4377 = vpop.f32.mrb[0].mxu0
    %v4378 = vpop.f32.mrb[0].mxu0
    %v4379 = vadd.f32 %v3842, %v4378
    %v4380 = vpop.f32.mrb[0].mxu0
    %4381 = vmatprep.mubr.bf16.mxu0 0
    %4382 = vmatmul.mubr.bf16.gmra.mrb[0].mxu0 %v3246
    %v4383 = vpop.f32.mrb[0].mxu0
    %v4384 = vadd.f32 %v3847, %v4383
    %v4385 = vpop.f32.mrb[0].mxu0
    %v4386 = vpop.f32.mrb[0].mxu0
    %v4387 = vadd.f32 %v3850, %v4386
    %v4388 = vpop.f32.mrb[0].mxu0
    %4389 = vmatprep.mubr.bf16.mxu0 0
    %4390 = vmatmul.mubr.bf16.gmra.mrb[0].mxu0 %v3249
    %v4391 = vpop.f32.mrb[0].mxu0
    %v4392 = vadd.f32 %v3855, %v4391
    %v4393 = vpop.f32.mrb[0].mxu0
    %v4394 = vpop.f32.mrb[0].mxu0
    %v4395 = vadd.f32 %v3858, %v4394
    %v4396 = vpop.f32.mrb[0].mxu0
    %4397 = vmatprep.mubr.bf16.mxu0 0
    %4398 = vmatmul.mubr.bf16.gmra.mrb[0].mxu0 %v3252
    %v4399 = vpop.f32.mrb[0].mxu0
    %v4400 = vadd.f32 %v3863, %v4399
    %v4401 = vpop.f32.mrb[0].mxu0
    %v4402 = vpop.f32.mrb[0].mxu0
    %v4403 = vadd.f32 %v3866, %v4402
    %v4404 = vpop.f32.mrb[0].mxu0
    %4405 = vmatprep.mubr.bf16.mxu0 0
    %4406 = vmatmul.mubr.bf16.gmra.mrb[0].mxu0 %v3255
    %v4407 = vpop.f32.mrb[0].mxu0
    %v4408 = vadd.f32 %v3871, %v4407
    %v4409 = vpop.f32.mrb[0].mxu0
    %v4410 = vpop.f32.mrb[0].mxu0
    %v4411 = vadd.f32 %v3874, %v4410
    %v4412 = vpop.f32.mrb[0].mxu0
    %4413 = vmatprep.mubr.bf16.mxu0 0
    %4414 = vmatmul.mubr.bf16.gmra.mrb[0].mxu0 %v3258
    %v4415 = vpop.f32.mrb[0].mxu0
    %v4416 = vadd.f32 %v3879, %v4415
    %v4417 = vpop.f32.mrb[0].mxu0
    %v4418 = vpop.f32.mrb[0].mxu0
    %v4419 = vadd.f32 %v3882, %v4418
    %v4420 = vpop.f32.mrb[0].mxu0
    %4421 = vmatprep.mubr.bf16.mxu0 0
    %4422 = vmatmul.mubr.bf16.gmra.mrb[0].mxu0 %v3261
    %v4423 = vpop.f32.mrb[0].mxu0
    %v4424 = vadd.f32 %v3887, %v4423
    %v4425 = vpop.f32.mrb[0].mxu0
    %v4426 = vpop.f32.mrb[0].mxu0
    %v4427 = vadd.f32 %v3890, %v4426
    %v4428 = vpop.f32.mrb[0].mxu0
    %4429 = vmatprep.mubr.bf16.mxu0 0
    %4430 = vmatmul.mubr.bf16.gmra.mrb[0].mxu0 %v3264
    %v4431 = vpop.f32.mrb[0].mxu0
    %v4432 = vadd.f32 %v3895, %v4431
    %v4433 = vpop.f32.mrb[0].mxu0
    %v4434 = vpop.f32.mrb[0].mxu0
    %v4435 = vadd.f32 %v3898, %v4434
    %v4436 = vpop.f32.mrb[0].mxu0
    %4437 = vmatprep.mubr.bf16.mxu0 0
    %4438 = vmatmul.mubr.bf16.gmra.mrb[0].mxu0 %v3267
    %v4439 = vpop.f32.mrb[0].mxu0
    %v4440 = vadd.f32 %v3903, %v4439
    %v4441 = vpop.f32.mrb[0].mxu0
    %v4442 = vpop.f32.mrb[0].mxu0
    %v4443 = vadd.f32 %v3906, %v4442
    %v4444 = vpop.f32.mrb[0].mxu0
    %4445 = vmatprep.mubr.bf16.mxu0 0
    %4446 = vmatmul.mubr.bf16.gmra.mrb[0].mxu0 %v3270
    %v4447 = vpop.f32.mrb[0].mxu0
    %v4448 = vadd.f32 %v3911, %v4447
    %v4449 = vpop.f32.mrb[0].mxu0
    %v4450 = vpop.f32.mrb[0].mxu0
    %v4451 = vadd.f32 %v3914, %v4450
    %v4452 = vpop.f32.mrb[0].mxu0
    %4453 = vmatprep.mubr.bf16.mxu0 0
    %4454 = vmatmul.mubr.bf16.gmra.mrb[0].mxu0 %v3273
    %v4455 = vpop.f32.mrb[0].mxu0
    %v4456 = vadd.f32 %v3919, %v4455
    %v4457 = vpop.f32.mrb[0].mxu0
    %v4458 = vpop.f32.mrb[0].mxu0
    %v4459 = vadd.f32 %v3922, %v4458
    %v4460 = vpop.f32.mrb[0].mxu0
    %4461 = vmatprep.mubr.bf16.mxu0 0
    %4462 = vmatmul.mubr.bf16.gmra.mrb[0].mxu0 %v3276
    %v4463 = vpop.f32.mrb[0].mxu0
    %v4464 = vadd.f32 %v3927, %v4463
    %v4465 = vpop.f32.mrb[0].mxu0
    %v4466 = vpop.f32.mrb[0].mxu0
    %v4467 = vadd.f32 %v3930, %v4466
    %v4468 = vpop.f32.mrb[0].mxu0
    %4469 = vmatprep.mubr.bf16.mxu0 0
    %4470 = vmatmul.mubr.bf16.gmra.mrb[0].mxu0 %v3279
    %v4471 = vpop.f32.mrb[0].mxu0
    %v4472 = vadd.f32 %v3935, %v4471
    %v4473 = vpop.f32.mrb[0].mxu0
    %v4474 = vpop.f32.mrb[0].mxu0
    %v4475 = vadd.f32 %v3938, %v4474
    %v4476 = vpop.f32.mrb[0].mxu0
    %4477 = vmatprep.mubr.bf16.mxu0 0
    %4478 = vmatmul.mubr.bf16.gmra.mrb[0].mxu0 %v3282
    %v4479 = vpop.f32.mrb[0].mxu0
    %v4480 = vadd.f32 %v3943, %v4479
    %v4481 = vpop.f32.mrb[0].mxu0
    %v4482 = vpop.f32.mrb[0].mxu0
    %v4483 = vadd.f32 %v3946, %v4482
    %v4484 = vpop.f32.mrb[0].mxu0
    %4485 = vmatprep.mubr.bf16.mxu0 0
    %4486 = vmatmul.mubr.bf16.gmra.mrb[0].mxu0 %v3285
    %v4487 = vpop.f32.mrb[0].mxu0
    %v4488 = vadd.f32 %v3951, %v4487
    %v4489 = vpop.f32.mrb[0].mxu0
    %v4490 = vpop.f32.mrb[0].mxu0
    %v4491 = vadd.f32 %v3954, %v4490
    %v4492 = vpop.f32.mrb[0].mxu0
    %4493 = vmatprep.mubr.bf16.mxu0 0
    %4494 = vmatmul.mubr.bf16.gmra.mrb[0].mxu0 %v3288
    %v4495 = vpop.f32.mrb[0].mxu0
    %v4496 = vadd.f32 %v3959, %v4495
    %v4497 = vpop.f32.mrb[0].mxu0
    %v4498 = vpop.f32.mrb[0].mxu0
    %v4499 = vadd.f32 %v3962, %v4498
    %v4500 = vpop.f32.mrb[0].mxu0
    %4501 = vmatprep.mubr.bf16.mxu0 0
    %4502 = vmatmul.mubr.bf16.gmra.mrb[0].mxu0 %v3291
    %v4503 = vpop.f32.mrb[0].mxu0
    %v4504 = vadd.f32 %v3967, %v4503
    %v4505 = vpop.f32.mrb[0].mxu0
    %v4506 = vpop.f32.mrb[0].mxu0
    %v4507 = vadd.f32 %v3970, %v4506
    %v4508 = vpop.f32.mrb[0].mxu0
    %4509 = vmatprep.mubr.bf16.mxu0 0
    %4510 = vmatmul.mubr.bf16.gmra.mrb[0].mxu0 %v3294
    %v4511 = vpop.f32.mrb[0].mxu0
    %v4512 = vadd.f32 %v3975, %v4511
    %v4513 = vpop.f32.mrb[0].mxu0
    %v4514 = vpop.f32.mrb[0].mxu0
    %v4515 = vadd.f32 %v3978, %v4514
    %v4516 = vpop.f32.mrb[0].mxu0
    %4517 = vmatprep.mubr.bf16.mxu0 0
    %4518 = vmatmul.mubr.bf16.gmra.mrb[0].mxu0 %v3297
    %v4519 = vpop.f32.mrb[0].mxu0
    %v4520 = vadd.f32 %v3983, %v4519
    %v4521 = vpop.f32.mrb[0].mxu0
    %v4522 = vpop.f32.mrb[0].mxu0
    %v4523 = vadd.f32 %v3986, %v4522
    %v4524 = vpop.f32.mrb[0].mxu0
    %4525 = vmatprep.mubr.bf16.mxu0 0
    %4526 = vmatmul.mubr.bf16.gmra.mrb[0].mxu0 %v3300
    %v4527 = vpop.f32.mrb[0].mxu0
    %v4528 = vadd.f32 %v3991, %v4527
    %v4529 = vpop.f32.mrb[0].mxu0
    %v4530 = vpop.f32.mrb[0].mxu0
    %v4531 = vadd.f32 %v3994, %v4530
    %v4532 = vpop.f32.mrb[0].mxu0
    %4533 = vmatprep.mubr.bf16.mxu0 0
    %4534 = vmatmul.mubr.bf16.gmra.mrb[0].mxu0 %v3303
    %v4535 = vpop.f32.mrb[0].mxu0
    %v4536 = vadd.f32 %v3999, %v4535
    %v4537 = vpop.f32.mrb[0].mxu0
    %v4538 = vpop.f32.mrb[0].mxu0
    %v4539 = vadd.f32 %v4002, %v4538
    %v4540 = vpop.f32.mrb[0].mxu0
    %4541 = vmatprep.mubr.bf16.mxu0 0
    %4542 = vmatmul.mubr.bf16.gmra.mrb[0].mxu0 %v3306
    %v4543 = vpop.f32.mrb[0].mxu0
    %v4544 = vadd.f32 %v4007, %v4543
    %v4545 = vpop.f32.mrb[0].mxu0
    %v4546 = vpop.f32.mrb[0].mxu0
    %v4547 = vadd.f32 %v4010, %v4546
    %v4548 = vpop.f32.mrb[0].mxu0
    %4549 = vmatprep.mubr.bf16.mxu0 0
    %4550 = vmatmul.mubr.bf16.gmra.mrb[0].mxu0 %v3309
    %v4551 = vpop.f32.mrb[0].mxu0
    %v4552 = vadd.f32 %v4015, %v4551
    %v4553 = vpop.f32.mrb[0].mxu0
    %v4554 = vpop.f32.mrb[0].mxu0
    %v4555 = vadd.f32 %v4018, %v4554
    %v4556 = vpop.f32.mrb[0].mxu0
    %4557 = vmatprep.mubr.bf16.mxu0 0
    %4558 = vmatmul.mubr.bf16.gmra.mrb[0].mxu0 %v3312
    %v4559 = vpop.f32.mrb[0].mxu0
    %v4560 = vadd.f32 %v4023, %v4559
    %v4561 = vpop.f32.mrb[0].mxu0
    %v4562 = vpop.f32.mrb[0].mxu0
    %v4563 = vadd.f32 %v4026, %v4562
    %v4564 = vpop.f32.mrb[0].mxu0
    %4565 = vmatprep.mubr.bf16.mxu0 0
    %4566 = vmatmul.mubr.bf16.gmra.mrb[0].mxu0 %v3315
    %v4567 = vpop.f32.mrb[0].mxu0
    %v4568 = vadd.f32 %v4031, %v4567
    %v4569 = vpop.f32.mrb[0].mxu0
    %v4570 = vpop.f32.mrb[0].mxu0
    %v4571 = vadd.f32 %v4034, %v4570
    %v4572 = vpop.f32.mrb[0].mxu0
    %4573 = vmatprep.mubr.bf16.mxu0 0
    %4574 = vmatmul.mubr.bf16.gmra.mrb[0].mxu0 %v3318
    %v4575 = vpop.f32.mrb[0].mxu0
    %v4576 = vadd.f32 %v4039, %v4575
    %v4577 = vpop.f32.mrb[0].mxu0
    %v4578 = vpop.f32.mrb[0].mxu0
    %v4579 = vadd.f32 %v4042, %v4578
    %v4580 = vpop.f32.mrb[0].mxu0
    %4581 = vmatprep.mubr.bf16.mxu0 0
    %4582 = vmatmul.mubr.bf16.gmra.mrb[0].mxu0 %v3321
    %v4583 = vpop.f32.mrb[0].mxu0
    %v4584 = vadd.f32 %v4047, %v4583
    %v4585 = vpop.f32.mrb[0].mxu0
    %v4586 = vpop.f32.mrb[0].mxu0
    %v4587 = vadd.f32 %v4050, %v4586
    %v4588 = vpop.f32.mrb[0].mxu0
    %4589 = vmatprep.mubr.bf16.mxu0 0
    %4590 = vmatmul.mubr.bf16.gmra.mrb[0].mxu0 %v3324
    %v4591 = vpop.f32.mrb[0].mxu0
    %v4592 = vadd.f32 %v4055, %v4591
    %v4593 = vpop.f32.mrb[0].mxu0
    %v4594 = vpop.f32.mrb[0].mxu0
    %v4595 = vadd.f32 %v4058, %v4594
    %v4596 = vpop.f32.mrb[0].mxu0
    %4597 = vdwg.mxu0
    %v4598 = vmax.f32 %v4096, 0.0
    %v4599 = vmax.f32 %v4099, 0.0
    %v4600 = vmax.f32 %v4104, 0.0
    %v4601 = vmax.f32 %v4107, 0.0
    %v4602 = vmax.f32 %v4112, 0.0
    %v4603 = vmax.f32 %v4115, 0.0
    %v4604 = vmax.f32 %v4120, 0.0
    %v4605 = vmax.f32 %v4123, 0.0
    %v4606 = vmax.f32 %v4128, 0.0
    %v4607 = vmax.f32 %v4131, 0.0
    %v4608 = vmax.f32 %v4136, 0.0
    %v4609 = vmax.f32 %v4139, 0.0
    %v4610 = vmax.f32 %v4144, 0.0
    %v4611 = vmax.f32 %v4147, 0.0
    %v4612 = vmax.f32 %v4152, 0.0
    %v4613 = vmax.f32 %v4155, 0.0
    %v4614 = vmax.f32 %v4160, 0.0
    %v4615 = vmax.f32 %v4163, 0.0
    %v4616 = vmax.f32 %v4168, 0.0
    %v4617 = vmax.f32 %v4171, 0.0
    %v4618 = vmax.f32 %v4176, 0.0
    %v4619 = vmax.f32 %v4179, 0.0
    %v4620 = vmax.f32 %v4184, 0.0
    %v4621 = vmax.f32 %v4187, 0.0
    %v4622 = vmax.f32 %v4192, 0.0
    %v4623 = vmax.f32 %v4195, 0.0
    %v4624 = vmax.f32 %v4200, 0.0
    %v4625 = vmax.f32 %v4203, 0.0
    %v4626 = vmax.f32 %v4208, 0.0
    %v4627 = vmax.f32 %v4211, 0.0
    %v4628 = vmax.f32 %v4216, 0.0
    %v4629 = vmax.f32 %v4219, 0.0
    %v4630 = vmax.f32 %v4224, 0.0
    %v4631 = vmax.f32 %v4227, 0.0
    %v4632 = vmax.f32 %v4232, 0.0
    %v4633 = vmax.f32 %v4235, 0.0
    %v4634 = vmax.f32 %v4240, 0.0
    %v4635 = vmax.f32 %v4243, 0.0
    %v4636 = vmax.f32 %v4248, 0.0
    %v4637 = vmax.f32 %v4251, 0.0
    %v4638 = vmax.f32 %v4256, 0.0
    %v4639 = vmax.f32 %v4259, 0.0
    %v4640 = vmax.f32 %v4264, 0.0
    %v4641 = vmax.f32 %v4267, 0.0
    %v4642 = vmax.f32 %v4272, 0.0
    %v4643 = vmax.f32 %v4275, 0.0
    %v4644 = vmax.f32 %v4280, 0.0
    %v4645 = vmax.f32 %v4283, 0.0
    %v4646 = vmax.f32 %v4288, 0.0
    %v4647 = vmax.f32 %v4291, 0.0
    %v4648 = vmax.f32 %v4296, 0.0
    %v4649 = vmax.f32 %v4299, 0.0
    %v4650 = vmax.f32 %v4304, 0.0
    %v4651 = vmax.f32 %v4307, 0.0
    %v4652 = vmax.f32 %v4312, 0.0
    %v4653 = vmax.f32 %v4315, 0.0
    %v4654 = vmax.f32 %v4320, 0.0
    %v4655 = vmax.f32 %v4323, 0.0
    %v4656 = vmax.f32 %v4328, 0.0
    %v4657 = vmax.f32 %v4331, 0.0
    %v4658 = vmax.f32 %v4336, 0.0
    %v4659 = vmax.f32 %v4339, 0.0
    %v4660 = vmax.f32 %v4344, 0.0
    %v4661 = vmax.f32 %v4347, 0.0
    %v4662 = vmax.f32 %v4352, 0.0
    %v4663 = vmax.f32 %v4355, 0.0
    %v4664 = vmax.f32 %v4360, 0.0
    %v4665 = vmax.f32 %v4363, 0.0
    %v4666 = vmax.f32 %v4368, 0.0
    %v4667 = vmax.f32 %v4371, 0.0
    %v4668 = vmax.f32 %v4376, 0.0
    %v4669 = vmax.f32 %v4379, 0.0
    %v4670 = vmax.f32 %v4384, 0.0
    %v4671 = vmax.f32 %v4387, 0.0
    %v4672 = vmax.f32 %v4392, 0.0
    %v4673 = vmax.f32 %v4395, 0.0
    %v4674 = vmax.f32 %v4400, 0.0
    %v4675 = vmax.f32 %v4403, 0.0
    %v4676 = vmax.f32 %v4408, 0.0
    %v4677 = vmax.f32 %v4411, 0.0
    %v4678 = vmax.f32 %v4416, 0.0
    %v4679 = vmax.f32 %v4419, 0.0
    %v4680 = vmax.f32 %v4424, 0.0
    %v4681 = vmax.f32 %v4427, 0.0
    %v4682 = vmax.f32 %v4432, 0.0
    %v4683 = vmax.f32 %v4435, 0.0
    %v4684 = vmax.f32 %v4440, 0.0
    %v4685 = vmax.f32 %v4443, 0.0
    %v4686 = vmax.f32 %v4448, 0.0
    %v4687 = vmax.f32 %v4451, 0.0
    %v4688 = vmax.f32 %v4456, 0.0
    %v4689 = vmax.f32 %v4459, 0.0
    %v4690 = vmax.f32 %v4464, 0.0
    %v4691 = vmax.f32 %v4467, 0.0
    %v4692 = vmax.f32 %v4472, 0.0
    %v4693 = vmax.f32 %v4475, 0.0
    %v4694 = vmax.f32 %v4480, 0.0
    %v4695 = vmax.f32 %v4483, 0.0
    %v4696 = vmax.f32 %v4488, 0.0
    %v4697 = vmax.f32 %v4491, 0.0
    %v4698 = vmax.f32 %v4496, 0.0
    %v4699 = vmax.f32 %v4499, 0.0
    %v4700 = vmax.f32 %v4504, 0.0
    %v4701 = vmax.f32 %v4507, 0.0
    %v4702 = vmax.f32 %v4512, 0.0
    %v4703 = vmax.f32 %v4515, 0.0
    %v4704 = vmax.f32 %v4520, 0.0
    %v4705 = vmax.f32 %v4523, 0.0
    %v4706 = vmax.f32 %v4528, 0.0
    %v4707 = vmax.f32 %v4531, 0.0
    %v4708 = vmax.f32 %v4536, 0.0
    %v4709 = vmax.f32 %v4539, 0.0
    %v4710 = vmax.f32 %v4544, 0.0
    %v4711 = vmax.f32 %v4547, 0.0
    %v4712 = vmax.f32 %v4552, 0.0
    %v4713 = vmax.f32 %v4555, 0.0
    %v4714 = vmax.f32 %v4560, 0.0
    %v4715 = vmax.f32 %v4563, 0.0
    %v4716 = vmax.f32 %v4568, 0.0
    %v4717 = vmax.f32 %v4571, 0.0
    %v4718 = vmax.f32 %v4576, 0.0
    %v4719 = vmax.f32 %v4579, 0.0
    %v4720 = vmax.f32 %v4584, 0.0
    %v4721 = vmax.f32 %v4587, 0.0
    %v4722 = vmax.f32 %v4592, 0.0
    %v4723 = vmax.f32 %v4595, 0.0
    %v4724 = vpack.c.bf16 %v4599, %v4598
    %v4725 = vpack.c.bf16 %v4601, %v4600
    %v4726 = vpack.c.bf16 %v4603, %v4602
    %v4727 = vpack.c.bf16 %v4605, %v4604
    %v4728 = vpack.c.bf16 %v4607, %v4606
    %v4729 = vpack.c.bf16 %v4609, %v4608
    %v4730 = vpack.c.bf16 %v4611, %v4610
    %v4731 = vpack.c.bf16 %v4613, %v4612
    %v4732 = vpack.c.bf16 %v4615, %v4614
    %v4733 = vpack.c.bf16 %v4617, %v4616
    %v4734 = vpack.c.bf16 %v4619, %v4618
    %v4735 = vpack.c.bf16 %v4621, %v4620
    %v4736 = vpack.c.bf16 %v4623, %v4622
    %v4737 = vpack.c.bf16 %v4625, %v4624
    %v4738 = vpack.c.bf16 %v4627, %v4626
    %v4739 = vpack.c.bf16 %v4629, %v4628
    %v4740 = vpack.c.bf16 %v4631, %v4630
    %v4741 = vpack.c.bf16 %v4633, %v4632
    %v4742 = vpack.c.bf16 %v4635, %v4634
    %v4743 = vpack.c.bf16 %v4637, %v4636
    %v4744 = vpack.c.bf16 %v4639, %v4638
    %v4745 = vpack.c.bf16 %v4641, %v4640
    %v4746 = vpack.c.bf16 %v4643, %v4642
    %v4747 = vpack.c.bf16 %v4645, %v4644
    %v4748 = vpack.c.bf16 %v4647, %v4646
    %v4749 = vpack.c.bf16 %v4649, %v4648
    %v4750 = vpack.c.bf16 %v4651, %v4650
    %v4751 = vpack.c.bf16 %v4653, %v4652
    %v4752 = vpack.c.bf16 %v4655, %v4654
    %v4753 = vpack.c.bf16 %v4657, %v4656
    %v4754 = vpack.c.bf16 %v4659, %v4658
    %v4755 = vpack.c.bf16 %v4661, %v4660
    %v4756 = vpack.c.bf16 %v4663, %v4662
    %v4757 = vpack.c.bf16 %v4665, %v4664
    %v4758 = vpack.c.bf16 %v4667, %v4666
    %v4759 = vpack.c.bf16 %v4669, %v4668
    %v4760 = vpack.c.bf16 %v4671, %v4670
    %v4761 = vpack.c.bf16 %v4673, %v4672
    %v4762 = vpack.c.bf16 %v4675, %v4674
    %v4763 = vpack.c.bf16 %v4677, %v4676
    %v4764 = vpack.c.bf16 %v4679, %v4678
    %v4765 = vpack.c.bf16 %v4681, %v4680
    %v4766 = vpack.c.bf16 %v4683, %v4682
    %v4767 = vpack.c.bf16 %v4685, %v4684
    %v4768 = vpack.c.bf16 %v4687, %v4686
    %v4769 = vpack.c.bf16 %v4689, %v4688
    %v4770 = vpack.c.bf16 %v4691, %v4690
    %v4771 = vpack.c.bf16 %v4693, %v4692
    %v4772 = vpack.c.bf16 %v4695, %v4694
    %v4773 = vpack.c.bf16 %v4697, %v4696
    %v4774 = vpack.c.bf16 %v4699, %v4698
    %v4775 = vpack.c.bf16 %v4701, %v4700
    %v4776 = vpack.c.bf16 %v4703, %v4702
    %v4777 = vpack.c.bf16 %v4705, %v4704
    %v4778 = vpack.c.bf16 %v4707, %v4706
    %v4779 = vpack.c.bf16 %v4709, %v4708
    %v4780 = vpack.c.bf16 %v4711, %v4710
    %v4781 = vpack.c.bf16 %v4713, %v4712
    %v4782 = vpack.c.bf16 %v4715, %v4714
    %v4783 = vpack.c.bf16 %v4717, %v4716
    %v4784 = vpack.c.bf16 %v4719, %v4718
    %v4785 = vpack.c.bf16 %v4721, %v4720
    %v4786 = vpack.c.bf16 %v4723, %v4722
    %v4787 = vld [vmem:[%s9] sm:$0xf]
    %v4788 = vld [vmem:[%s9 + $0x4] sm:$0xf]
    %v4789 = vld [vmem:[%s9 + $0x8] sm:$0xf]
    %v4790 = vld [vmem:[%s9 + $0xc] sm:$0xf]
    %v4791 = vld [vmem:[%s9 + $0x10] sm:$0xf]
    %v4792 = vld [vmem:[%s9 + $0x14] sm:$0xf]
    %v4793 = vld [vmem:[%s9 + $0x18] sm:$0xf]
    %v4794 = vld [vmem:[%s9 + $0x1c] sm:$0xf]
    %v4795 = vld [vmem:[%s9 + $0x20] sm:$0xf]
    %v4796 = vld [vmem:[%s9 + $0x24] sm:$0xf]
    %v4797 = vld [vmem:[%s9 + $0x28] sm:$0xf]
    %v4798 = vld [vmem:[%s9 + $0x2c] sm:$0xf]
    %v4799 = vld [vmem:[%s9 + $0x30] sm:$0xf]
    %v4800 = vld [vmem:[%s9 + $0x34] sm:$0xf]
    %v4801 = vld [vmem:[%s9 + $0x38] sm:$0xf]
    %v4802 = vld [vmem:[%s9 + $0x3c] sm:$0xf]
    %v4803 = vld [vmem:[%s10] sm:$0x1]
    %v4805 = vlaneseq
    %v4806 = vshrl.u32 %v4805, 7
    %v4807 = vsub.s32 0, %v4806
    %v4808 = vrot.slane %v4803, %v4807
    %v4826 = vunpack.c.l.b16 %v4787
    %v4827 = vunpack.c.l.b16 %v4788
    %v4828 = vunpack.c.l.b16 %v4789
    %v4829 = vunpack.c.l.b16 %v4790
    %v4830 = vunpack.c.l.b16 %v4791
    %v4831 = vunpack.c.l.b16 %v4792
    %v4832 = vunpack.c.l.b16 %v4793
    %v4833 = vunpack.c.l.b16 %v4794
    %v4834 = vunpack.c.l.b16 %v4795
    %v4835 = vunpack.c.l.b16 %v4796
    %v4836 = vunpack.c.l.b16 %v4797
    %v4837 = vunpack.c.l.b16 %v4798
    %v4838 = vunpack.c.l.b16 %v4799
    %v4839 = vunpack.c.l.b16 %v4800
    %v4840 = vunpack.c.l.b16 %v4801
    %v4841 = vunpack.c.l.b16 %v4802
    %v4842 = vpack.c.b16 %v4827, %v4826
    %v4843 = vpack.c.b16 %v4829, %v4828
    %v4844 = vpack.c.b16 %v4831, %v4830
    %v4845 = vpack.c.b16 %v4833, %v4832
    %v4846 = vpack.c.b16 %v4835, %v4834
    %v4847 = vpack.c.b16 %v4837, %v4836
    %v4848 = vpack.c.b16 %v4839, %v4838
    %v4849 = vpack.c.b16 %v4841, %v4840
    %4858 = vmatprep.subr.bf16.mxu0 0
    %4859 = vmatpush1.bf16.msra.mxu0 %v4842
    %4860 = vmatprep.subr.bf16.mxu0 0
    %4861 = vmatpush1.bf16.msra.mxu0 %v4843
    %4862 = vmatprep.subr.bf16.mxu0 0
    %4863 = vmatpush1.bf16.msra.mxu0 %v4844
    %4864 = vmatprep.subr.bf16.mxu0 0
    %4865 = vmatpush1.bf16.msra.mxu0 %v4845
    %4866 = vmatprep.subr.bf16.mxu0 0
    %4867 = vmatpush1.bf16.msra.mxu0 %v4846
    %4868 = vmatprep.subr.bf16.mxu0 0
    %4869 = vmatpush1.bf16.msra.mxu0 %v4847
    %4870 = vmatprep.subr.bf16.mxu0 0
    %4871 = vmatpush1.bf16.msra.mxu0 %v4848
    %4872 = vmatprep.subr.bf16.mxu0 0
    %4873 = vmatpush1.bf16.msra.mxu0 %v4849
    %4874 = vmatprep.subr.bf16.mxu0 0
    %4875 = vmatpush1.bf16.msra.mxu0 0
    %4876 = vmatprep.subr.bf16.mxu0 0
    %4877 = vmatpush1.bf16.msra.mxu0 0
    %4878 = vmatprep.subr.bf16.mxu0 0
    %4879 = vmatpush1.bf16.msra.mxu0 0
    %4880 = vmatprep.subr.bf16.mxu0 0
    %4881 = vmatpush1.bf16.msra.mxu0 0
    %4882 = vmatprep.subr.bf16.mxu0 0
    %4883 = vmatpush1.bf16.msra.mxu0 0
    %4884 = vmatprep.subr.bf16.mxu0 0
    %4885 = vmatpush1.bf16.msra.mxu0 0
    %4886 = vmatprep.subr.bf16.mxu0 0
    %4887 = vmatpush1.bf16.msra.mxu0 0
    %4888 = vmatprep.subr.bf16.mxu0 0
    %4889 = vmatpush1.bf16.msra.mxu0 0
    %4890 = vmatprep.mubr.bf16.mxu0 0
    %4891 = vmatmul.mubr.bf16.gmra.mrb[0].mxu0 %v4724
    %v4892 = vpop.f32.mrb[0].mxu0
    %v4893 = vadd.f32 %v4808, %v4892
    %v4894 = vpop.f32.mrb[0].mxu0
    %v4895 = vpop.f32.mrb[0].mxu0
    %v4896 = vadd.f32 %v4808, %v4895
    %v4897 = vpop.f32.mrb[0].mxu0
    %4898 = vmatprep.mubr.bf16.mxu0 0
    %4899 = vmatmul.mubr.bf16.gmra.mrb[0].mxu0 %v4725
    %v4900 = vpop.f32.mrb[0].mxu0
    %v4901 = vadd.f32 %v4808, %v4900
    %v4902 = vpop.f32.mrb[0].mxu0
    %v4903 = vpop.f32.mrb[0].mxu0
    %v4904 = vadd.f32 %v4808, %v4903
    %v4905 = vpop.f32.mrb[0].mxu0
    %4906 = vmatprep.mubr.bf16.mxu0 0
    %4907 = vmatmul.mubr.bf16.gmra.mrb[0].mxu0 %v4726
    %v4908 = vpop.f32.mrb[0].mxu0
    %v4909 = vadd.f32 %v4808, %v4908
    %v4910 = vpop.f32.mrb[0].mxu0
    %v4911 = vpop.f32.mrb[0].mxu0
    %v4912 = vadd.f32 %v4808, %v4911
    %v4913 = vpop.f32.mrb[0].mxu0
    %4914 = vmatprep.mubr.bf16.mxu0 0
    %4915 = vmatmul.mubr.bf16.gmra.mrb[0].mxu0 %v4727
    %v4916 = vpop.f32.mrb[0].mxu0
    %v4917 = vadd.f32 %v4808, %v4916
    %v4918 = vpop.f32.mrb[0].mxu0
    %v4919 = vpop.f32.mrb[0].mxu0
    %v4920 = vadd.f32 %v4808, %v4919
    %v4921 = vpop.f32.mrb[0].mxu0
    %4922 = vmatprep.mubr.bf16.mxu0 0
    %4923 = vmatmul.mubr.bf16.gmra.mrb[0].mxu0 %v4728
    %v4924 = vpop.f32.mrb[0].mxu0
    %v4925 = vadd.f32 %v4808, %v4924
    %v4926 = vpop.f32.mrb[0].mxu0
    %v4927 = vpop.f32.mrb[0].mxu0
    %v4928 = vadd.f32 %v4808, %v4927
    %v4929 = vpop.f32.mrb[0].mxu0
    %4930 = vmatprep.mubr.bf16.mxu0 0
    %4931 = vmatmul.mubr.bf16.gmra.mrb[0].mxu0 %v4729
    %v4932 = vpop.f32.mrb[0].mxu0
    %v4933 = vadd.f32 %v4808, %v4932
    %v4934 = vpop.f32.mrb[0].mxu0
    %v4935 = vpop.f32.mrb[0].mxu0
    %v4936 = vadd.f32 %v4808, %v4935
    %v4937 = vpop.f32.mrb[0].mxu0
    %4938 = vmatprep.mubr.bf16.mxu0 0
    %4939 = vmatmul.mubr.bf16.gmra.mrb[0].mxu0 %v4730
    %v4940 = vpop.f32.mrb[0].mxu0
    %v4941 = vadd.f32 %v4808, %v4940
    %v4942 = vpop.f32.mrb[0].mxu0
    %v4943 = vpop.f32.mrb[0].mxu0
    %v4944 = vadd.f32 %v4808, %v4943
    %v4945 = vpop.f32.mrb[0].mxu0
    %4946 = vmatprep.mubr.bf16.mxu0 0
    %4947 = vmatmul.mubr.bf16.gmra.mrb[0].mxu0 %v4731
    %v4948 = vpop.f32.mrb[0].mxu0
    %v4949 = vadd.f32 %v4808, %v4948
    %v4950 = vpop.f32.mrb[0].mxu0
    %v4951 = vpop.f32.mrb[0].mxu0
    %v4952 = vadd.f32 %v4808, %v4951
    %v4953 = vpop.f32.mrb[0].mxu0
    %4954 = vmatprep.mubr.bf16.mxu0 0
    %4955 = vmatmul.mubr.bf16.gmra.mrb[0].mxu0 %v4732
    %v4956 = vpop.f32.mrb[0].mxu0
    %v4957 = vadd.f32 %v4808, %v4956
    %v4958 = vpop.f32.mrb[0].mxu0
    %v4959 = vpop.f32.mrb[0].mxu0
    %v4960 = vadd.f32 %v4808, %v4959
    %v4961 = vpop.f32.mrb[0].mxu0
    %4962 = vmatprep.mubr.bf16.mxu0 0
    %4963 = vmatmul.mubr.bf16.gmra.mrb[0].mxu0 %v4733
    %v4964 = vpop.f32.mrb[0].mxu0
    %v4965 = vadd.f32 %v4808, %v4964
    %v4966 = vpop.f32.mrb[0].mxu0
    %v4967 = vpop.f32.mrb[0].mxu0
    %v4968 = vadd.f32 %v4808, %v4967
    %v4969 = vpop.f32.mrb[0].mxu0
    %4970 = vmatprep.mubr.bf16.mxu0 0
    %4971 = vmatmul.mubr.bf16.gmra.mrb[0].mxu0 %v4734
    %v4972 = vpop.f32.mrb[0].mxu0
    %v4973 = vadd.f32 %v4808, %v4972
    %v4974 = vpop.f32.mrb[0].mxu0
    %v4975 = vpop.f32.mrb[0].mxu0
    %v4976 = vadd.f32 %v4808, %v4975
    %v4977 = vpop.f32.mrb[0].mxu0
    %4978 = vmatprep.mubr.bf16.mxu0 0
    %4979 = vmatmul.mubr.bf16.gmra.mrb[0].mxu0 %v4735
    %v4980 = vpop.f32.mrb[0].mxu0
    %v4981 = vadd.f32 %v4808, %v4980
    %v4982 = vpop.f32.mrb[0].mxu0
    %v4983 = vpop.f32.mrb[0].mxu0
    %v4984 = vadd.f32 %v4808, %v4983
    %v4985 = vpop.f32.mrb[0].mxu0
    %4986 = vmatprep.mubr.bf16.mxu0 0
    %4987 = vmatmul.mubr.bf16.gmra.mrb[0].mxu0 %v4736
    %v4988 = vpop.f32.mrb[0].mxu0
    %v4989 = vadd.f32 %v4808, %v4988
    %v4990 = vpop.f32.mrb[0].mxu0
    %v4991 = vpop.f32.mrb[0].mxu0
    %v4992 = vadd.f32 %v4808, %v4991
    %v4993 = vpop.f32.mrb[0].mxu0
    %4994 = vmatprep.mubr.bf16.mxu0 0
    %4995 = vmatmul.mubr.bf16.gmra.mrb[0].mxu0 %v4737
    %v4996 = vpop.f32.mrb[0].mxu0
    %v4997 = vadd.f32 %v4808, %v4996
    %v4998 = vpop.f32.mrb[0].mxu0
    %v4999 = vpop.f32.mrb[0].mxu0
    %v5000 = vadd.f32 %v4808, %v4999
    %v5001 = vpop.f32.mrb[0].mxu0
    %5002 = vmatprep.mubr.bf16.mxu0 0
    %5003 = vmatmul.mubr.bf16.gmra.mrb[0].mxu0 %v4738
    %v5004 = vpop.f32.mrb[0].mxu0
    %v5005 = vadd.f32 %v4808, %v5004
    %v5006 = vpop.f32.mrb[0].mxu0
    %v5007 = vpop.f32.mrb[0].mxu0
    %v5008 = vadd.f32 %v4808, %v5007
    %v5009 = vpop.f32.mrb[0].mxu0
    %5010 = vmatprep.mubr.bf16.mxu0 0
    %5011 = vmatmul.mubr.bf16.gmra.mrb[0].mxu0 %v4739
    %v5012 = vpop.f32.mrb[0].mxu0
    %v5013 = vadd.f32 %v4808, %v5012
    %v5014 = vpop.f32.mrb[0].mxu0
    %v5015 = vpop.f32.mrb[0].mxu0
    %v5016 = vadd.f32 %v4808, %v5015
    %v5017 = vpop.f32.mrb[0].mxu0
    %5018 = vmatprep.mubr.bf16.mxu0 0
    %5019 = vmatmul.mubr.bf16.gmra.mrb[0].mxu0 %v4740
    %v5020 = vpop.f32.mrb[0].mxu0
    %v5021 = vadd.f32 %v4808, %v5020
    %v5022 = vpop.f32.mrb[0].mxu0
    %v5023 = vpop.f32.mrb[0].mxu0
    %v5024 = vadd.f32 %v4808, %v5023
    %v5025 = vpop.f32.mrb[0].mxu0
    %5026 = vmatprep.mubr.bf16.mxu0 0
    %5027 = vmatmul.mubr.bf16.gmra.mrb[0].mxu0 %v4741
    %v5028 = vpop.f32.mrb[0].mxu0
    %v5029 = vadd.f32 %v4808, %v5028
    %v5030 = vpop.f32.mrb[0].mxu0
    %v5031 = vpop.f32.mrb[0].mxu0
    %v5032 = vadd.f32 %v4808, %v5031
    %v5033 = vpop.f32.mrb[0].mxu0
    %5034 = vmatprep.mubr.bf16.mxu0 0
    %5035 = vmatmul.mubr.bf16.gmra.mrb[0].mxu0 %v4742
    %v5036 = vpop.f32.mrb[0].mxu0
    %v5037 = vadd.f32 %v4808, %v5036
    %v5038 = vpop.f32.mrb[0].mxu0
    %v5039 = vpop.f32.mrb[0].mxu0
    %v5040 = vadd.f32 %v4808, %v5039
    %v5041 = vpop.f32.mrb[0].mxu0
    %5042 = vmatprep.mubr.bf16.mxu0 0
    %5043 = vmatmul.mubr.bf16.gmra.mrb[0].mxu0 %v4743
    %v5044 = vpop.f32.mrb[0].mxu0
    %v5045 = vadd.f32 %v4808, %v5044
    %v5046 = vpop.f32.mrb[0].mxu0
    %v5047 = vpop.f32.mrb[0].mxu0
    %v5048 = vadd.f32 %v4808, %v5047
    %v5049 = vpop.f32.mrb[0].mxu0
    %5050 = vmatprep.mubr.bf16.mxu0 0
    %5051 = vmatmul.mubr.bf16.gmra.mrb[0].mxu0 %v4744
    %v5052 = vpop.f32.mrb[0].mxu0
    %v5053 = vadd.f32 %v4808, %v5052
    %v5054 = vpop.f32.mrb[0].mxu0
    %v5055 = vpop.f32.mrb[0].mxu0
    %v5056 = vadd.f32 %v4808, %v5055
    %v5057 = vpop.f32.mrb[0].mxu0
    %5058 = vmatprep.mubr.bf16.mxu0 0
    %5059 = vmatmul.mubr.bf16.gmra.mrb[0].mxu0 %v4745
    %v5060 = vpop.f32.mrb[0].mxu0
    %v5061 = vadd.f32 %v4808, %v5060
    %v5062 = vpop.f32.mrb[0].mxu0
    %v5063 = vpop.f32.mrb[0].mxu0
    %v5064 = vadd.f32 %v4808, %v5063
    %v5065 = vpop.f32.mrb[0].mxu0
    %5066 = vmatprep.mubr.bf16.mxu0 0
    %5067 = vmatmul.mubr.bf16.gmra.mrb[0].mxu0 %v4746
    %v5068 = vpop.f32.mrb[0].mxu0
    %v5069 = vadd.f32 %v4808, %v5068
    %v5070 = vpop.f32.mrb[0].mxu0
    %v5071 = vpop.f32.mrb[0].mxu0
    %v5072 = vadd.f32 %v4808, %v5071
    %v5073 = vpop.f32.mrb[0].mxu0
    %5074 = vmatprep.mubr.bf16.mxu0 0
    %5075 = vmatmul.mubr.bf16.gmra.mrb[0].mxu0 %v4747
    %v5076 = vpop.f32.mrb[0].mxu0
    %v5077 = vadd.f32 %v4808, %v5076
    %v5078 = vpop.f32.mrb[0].mxu0
    %v5079 = vpop.f32.mrb[0].mxu0
    %v5080 = vadd.f32 %v4808, %v5079
    %v5081 = vpop.f32.mrb[0].mxu0
    %5082 = vmatprep.mubr.bf16.mxu0 0
    %5083 = vmatmul.mubr.bf16.gmra.mrb[0].mxu0 %v4748
    %v5084 = vpop.f32.mrb[0].mxu0
    %v5085 = vadd.f32 %v4808, %v5084
    %v5086 = vpop.f32.mrb[0].mxu0
    %v5087 = vpop.f32.mrb[0].mxu0
    %v5088 = vadd.f32 %v4808, %v5087
    %v5089 = vpop.f32.mrb[0].mxu0
    %5090 = vmatprep.mubr.bf16.mxu0 0
    %5091 = vmatmul.mubr.bf16.gmra.mrb[0].mxu0 %v4749
    %v5092 = vpop.f32.mrb[0].mxu0
    %v5093 = vadd.f32 %v4808, %v5092
    %v5094 = vpop.f32.mrb[0].mxu0
    %v5095 = vpop.f32.mrb[0].mxu0
    %v5096 = vadd.f32 %v4808, %v5095
    %v5097 = vpop.f32.mrb[0].mxu0
    %5098 = vmatprep.mubr.bf16.mxu0 0
    %5099 = vmatmul.mubr.bf16.gmra.mrb[0].mxu0 %v4750
    %v5100 = vpop.f32.mrb[0].mxu0
    %v5101 = vadd.f32 %v4808, %v5100
    %v5102 = vpop.f32.mrb[0].mxu0
    %v5103 = vpop.f32.mrb[0].mxu0
    %v5104 = vadd.f32 %v4808, %v5103
    %v5105 = vpop.f32.mrb[0].mxu0
    %5106 = vmatprep.mubr.bf16.mxu0 0
    %5107 = vmatmul.mubr.bf16.gmra.mrb[0].mxu0 %v4751
    %v5108 = vpop.f32.mrb[0].mxu0
    %v5109 = vadd.f32 %v4808, %v5108
    %v5110 = vpop.f32.mrb[0].mxu0
    %v5111 = vpop.f32.mrb[0].mxu0
    %v5112 = vadd.f32 %v4808, %v5111
    %v5113 = vpop.f32.mrb[0].mxu0
    %5114 = vmatprep.mubr.bf16.mxu0 0
    %5115 = vmatmul.mubr.bf16.gmra.mrb[0].mxu0 %v4752
    %v5116 = vpop.f32.mrb[0].mxu0
    %v5117 = vadd.f32 %v4808, %v5116
    %v5118 = vpop.f32.mrb[0].mxu0
    %v5119 = vpop.f32.mrb[0].mxu0
    %v5120 = vadd.f32 %v4808, %v5119
    %v5121 = vpop.f32.mrb[0].mxu0
    %5122 = vmatprep.mubr.bf16.mxu0 0
    %5123 = vmatmul.mubr.bf16.gmra.mrb[0].mxu0 %v4753
    %v5124 = vpop.f32.mrb[0].mxu0
    %v5125 = vadd.f32 %v4808, %v5124
    %v5126 = vpop.f32.mrb[0].mxu0
    %v5127 = vpop.f32.mrb[0].mxu0
    %v5128 = vadd.f32 %v4808, %v5127
    %v5129 = vpop.f32.mrb[0].mxu0
    %5130 = vmatprep.mubr.bf16.mxu0 0
    %5131 = vmatmul.mubr.bf16.gmra.mrb[0].mxu0 %v4754
    %v5132 = vpop.f32.mrb[0].mxu0
    %v5133 = vadd.f32 %v4808, %v5132
    %v5134 = vpop.f32.mrb[0].mxu0
    %v5135 = vpop.f32.mrb[0].mxu0
    %v5136 = vadd.f32 %v4808, %v5135
    %v5137 = vpop.f32.mrb[0].mxu0
    %5138 = vmatprep.mubr.bf16.mxu0 0
    %5139 = vmatmul.mubr.bf16.gmra.mrb[0].mxu0 %v4755
    %v5140 = vpop.f32.mrb[0].mxu0
    %v5141 = vadd.f32 %v4808, %v5140
    %v5142 = vpop.f32.mrb[0].mxu0
    %v5143 = vpop.f32.mrb[0].mxu0
    %v5144 = vadd.f32 %v4808, %v5143
    %v5145 = vpop.f32.mrb[0].mxu0
    %5146 = vmatprep.mubr.bf16.mxu0 0
    %5147 = vmatmul.mubr.bf16.gmra.mrb[0].mxu0 %v4756
    %v5148 = vpop.f32.mrb[0].mxu0
    %v5149 = vadd.f32 %v4808, %v5148
    %v5150 = vpop.f32.mrb[0].mxu0
    %v5151 = vpop.f32.mrb[0].mxu0
    %v5152 = vadd.f32 %v4808, %v5151
    %v5153 = vpop.f32.mrb[0].mxu0
    %5154 = vmatprep.mubr.bf16.mxu0 0
    %5155 = vmatmul.mubr.bf16.gmra.mrb[0].mxu0 %v4757
    %v5156 = vpop.f32.mrb[0].mxu0
    %v5157 = vadd.f32 %v4808, %v5156
    %v5158 = vpop.f32.mrb[0].mxu0
    %v5159 = vpop.f32.mrb[0].mxu0
    %v5160 = vadd.f32 %v4808, %v5159
    %v5161 = vpop.f32.mrb[0].mxu0
    %5162 = vmatprep.mubr.bf16.mxu0 0
    %5163 = vmatmul.mubr.bf16.gmra.mrb[0].mxu0 %v4758
    %v5164 = vpop.f32.mrb[0].mxu0
    %v5165 = vadd.f32 %v4808, %v5164
    %v5166 = vpop.f32.mrb[0].mxu0
    %v5167 = vpop.f32.mrb[0].mxu0
    %v5168 = vadd.f32 %v4808, %v5167
    %v5169 = vpop.f32.mrb[0].mxu0
    %5170 = vmatprep.mubr.bf16.mxu0 0
    %5171 = vmatmul.mubr.bf16.gmra.mrb[0].mxu0 %v4759
    %v5172 = vpop.f32.mrb[0].mxu0
    %v5173 = vadd.f32 %v4808, %v5172
    %v5174 = vpop.f32.mrb[0].mxu0
    %v5175 = vpop.f32.mrb[0].mxu0
    %v5176 = vadd.f32 %v4808, %v5175
    %v5177 = vpop.f32.mrb[0].mxu0
    %5178 = vmatprep.mubr.bf16.mxu0 0
    %5179 = vmatmul.mubr.bf16.gmra.mrb[0].mxu0 %v4760
    %v5180 = vpop.f32.mrb[0].mxu0
    %v5181 = vadd.f32 %v4808, %v5180
    %v5182 = vpop.f32.mrb[0].mxu0
    %v5183 = vpop.f32.mrb[0].mxu0
    %v5184 = vadd.f32 %v4808, %v5183
    %v5185 = vpop.f32.mrb[0].mxu0
    %5186 = vmatprep.mubr.bf16.mxu0 0
    %5187 = vmatmul.mubr.bf16.gmra.mrb[0].mxu0 %v4761
    %v5188 = vpop.f32.mrb[0].mxu0
    %v5189 = vadd.f32 %v4808, %v5188
    %v5190 = vpop.f32.mrb[0].mxu0
    %v5191 = vpop.f32.mrb[0].mxu0
    %v5192 = vadd.f32 %v4808, %v5191
    %v5193 = vpop.f32.mrb[0].mxu0
    %5194 = vmatprep.mubr.bf16.mxu0 0
    %5195 = vmatmul.mubr.bf16.gmra.mrb[0].mxu0 %v4762
    %v5196 = vpop.f32.mrb[0].mxu0
    %v5197 = vadd.f32 %v4808, %v5196
    %v5198 = vpop.f32.mrb[0].mxu0
    %v5199 = vpop.f32.mrb[0].mxu0
    %v5200 = vadd.f32 %v4808, %v5199
    %v5201 = vpop.f32.mrb[0].mxu0
    %5202 = vmatprep.mubr.bf16.mxu0 0
    %5203 = vmatmul.mubr.bf16.gmra.mrb[0].mxu0 %v4763
    %v5204 = vpop.f32.mrb[0].mxu0
    %v5205 = vadd.f32 %v4808, %v5204
    %v5206 = vpop.f32.mrb[0].mxu0
    %v5207 = vpop.f32.mrb[0].mxu0
    %v5208 = vadd.f32 %v4808, %v5207
    %v5209 = vpop.f32.mrb[0].mxu0
    %5210 = vmatprep.mubr.bf16.mxu0 0
    %5211 = vmatmul.mubr.bf16.gmra.mrb[0].mxu0 %v4764
    %v5212 = vpop.f32.mrb[0].mxu0
    %v5213 = vadd.f32 %v4808, %v5212
    %v5214 = vpop.f32.mrb[0].mxu0
    %v5215 = vpop.f32.mrb[0].mxu0
    %v5216 = vadd.f32 %v4808, %v5215
    %v5217 = vpop.f32.mrb[0].mxu0
    %5218 = vmatprep.mubr.bf16.mxu0 0
    %5219 = vmatmul.mubr.bf16.gmra.mrb[0].mxu0 %v4765
    %v5220 = vpop.f32.mrb[0].mxu0
    %v5221 = vadd.f32 %v4808, %v5220
    %v5222 = vpop.f32.mrb[0].mxu0
    %v5223 = vpop.f32.mrb[0].mxu0
    %v5224 = vadd.f32 %v4808, %v5223
    %v5225 = vpop.f32.mrb[0].mxu0
    %5226 = vmatprep.mubr.bf16.mxu0 0
    %5227 = vmatmul.mubr.bf16.gmra.mrb[0].mxu0 %v4766
    %v5228 = vpop.f32.mrb[0].mxu0
    %v5229 = vadd.f32 %v4808, %v5228
    %v5230 = vpop.f32.mrb[0].mxu0
    %v5231 = vpop.f32.mrb[0].mxu0
    %v5232 = vadd.f32 %v4808, %v5231
    %v5233 = vpop.f32.mrb[0].mxu0
    %5234 = vmatprep.mubr.bf16.mxu0 0
    %5235 = vmatmul.mubr.bf16.gmra.mrb[0].mxu0 %v4767
    %v5236 = vpop.f32.mrb[0].mxu0
    %v5237 = vadd.f32 %v4808, %v5236
    %v5238 = vpop.f32.mrb[0].mxu0
    %v5239 = vpop.f32.mrb[0].mxu0
    %v5240 = vadd.f32 %v4808, %v5239
    %v5241 = vpop.f32.mrb[0].mxu0
    %5242 = vmatprep.mubr.bf16.mxu0 0
    %5243 = vmatmul.mubr.bf16.gmra.mrb[0].mxu0 %v4768
    %v5244 = vpop.f32.mrb[0].mxu0
    %v5245 = vadd.f32 %v4808, %v5244
    %v5246 = vpop.f32.mrb[0].mxu0
    %v5247 = vpop.f32.mrb[0].mxu0
    %v5248 = vadd.f32 %v4808, %v5247
    %v5249 = vpop.f32.mrb[0].mxu0
    %5250 = vmatprep.mubr.bf16.mxu0 0
    %5251 = vmatmul.mubr.bf16.gmra.mrb[0].mxu0 %v4769
    %v5252 = vpop.f32.mrb[0].mxu0
    %v5253 = vadd.f32 %v4808, %v5252
    %v5254 = vpop.f32.mrb[0].mxu0
    %v5255 = vpop.f32.mrb[0].mxu0
    %v5256 = vadd.f32 %v4808, %v5255
    %v5257 = vpop.f32.mrb[0].mxu0
    %5258 = vmatprep.mubr.bf16.mxu0 0
    %5259 = vmatmul.mubr.bf16.gmra.mrb[0].mxu0 %v4770
    %v5260 = vpop.f32.mrb[0].mxu0
    %v5261 = vadd.f32 %v4808, %v5260
    %v5262 = vpop.f32.mrb[0].mxu0
    %v5263 = vpop.f32.mrb[0].mxu0
    %v5264 = vadd.f32 %v4808, %v5263
    %v5265 = vpop.f32.mrb[0].mxu0
    %5266 = vmatprep.mubr.bf16.mxu0 0
    %5267 = vmatmul.mubr.bf16.gmra.mrb[0].mxu0 %v4771
    %v5268 = vpop.f32.mrb[0].mxu0
    %v5269 = vadd.f32 %v4808, %v5268
    %v5270 = vpop.f32.mrb[0].mxu0
    %v5271 = vpop.f32.mrb[0].mxu0
    %v5272 = vadd.f32 %v4808, %v5271
    %v5273 = vpop.f32.mrb[0].mxu0
    %5274 = vmatprep.mubr.bf16.mxu0 0
    %5275 = vmatmul.mubr.bf16.gmra.mrb[0].mxu0 %v4772
    %v5276 = vpop.f32.mrb[0].mxu0
    %v5277 = vadd.f32 %v4808, %v5276
    %v5278 = vpop.f32.mrb[0].mxu0
    %v5279 = vpop.f32.mrb[0].mxu0
    %v5280 = vadd.f32 %v4808, %v5279
    %v5281 = vpop.f32.mrb[0].mxu0
    %5282 = vmatprep.mubr.bf16.mxu0 0
    %5283 = vmatmul.mubr.bf16.gmra.mrb[0].mxu0 %v4773
    %v5284 = vpop.f32.mrb[0].mxu0
    %v5285 = vadd.f32 %v4808, %v5284
    %v5286 = vpop.f32.mrb[0].mxu0
    %v5287 = vpop.f32.mrb[0].mxu0
    %v5288 = vadd.f32 %v4808, %v5287
    %v5289 = vpop.f32.mrb[0].mxu0
    %5290 = vmatprep.mubr.bf16.mxu0 0
    %5291 = vmatmul.mubr.bf16.gmra.mrb[0].mxu0 %v4774
    %v5292 = vpop.f32.mrb[0].mxu0
    %v5293 = vadd.f32 %v4808, %v5292
    %v5294 = vpop.f32.mrb[0].mxu0
    %v5295 = vpop.f32.mrb[0].mxu0
    %v5296 = vadd.f32 %v4808, %v5295
    %v5297 = vpop.f32.mrb[0].mxu0
    %5298 = vmatprep.mubr.bf16.mxu0 0
    %5299 = vmatmul.mubr.bf16.gmra.mrb[0].mxu0 %v4775
    %v5300 = vpop.f32.mrb[0].mxu0
    %v5301 = vadd.f32 %v4808, %v5300
    %v5302 = vpop.f32.mrb[0].mxu0
    %v5303 = vpop.f32.mrb[0].mxu0
    %v5304 = vadd.f32 %v4808, %v5303
    %v5305 = vpop.f32.mrb[0].mxu0
    %5306 = vmatprep.mubr.bf16.mxu0 0
    %5307 = vmatmul.mubr.bf16.gmra.mrb[0].mxu0 %v4776
    %v5308 = vpop.f32.mrb[0].mxu0
    %v5309 = vadd.f32 %v4808, %v5308
    %v5310 = vpop.f32.mrb[0].mxu0
    %v5311 = vpop.f32.mrb[0].mxu0
    %v5312 = vadd.f32 %v4808, %v5311
    %v5313 = vpop.f32.mrb[0].mxu0
    %5314 = vmatprep.mubr.bf16.mxu0 0
    %5315 = vmatmul.mubr.bf16.gmra.mrb[0].mxu0 %v4777
    %v5316 = vpop.f32.mrb[0].mxu0
    %v5317 = vadd.f32 %v4808, %v5316
    %v5318 = vpop.f32.mrb[0].mxu0
    %v5319 = vpop.f32.mrb[0].mxu0
    %v5320 = vadd.f32 %v4808, %v5319
    %v5321 = vpop.f32.mrb[0].mxu0
    %5322 = vmatprep.mubr.bf16.mxu0 0
    %5323 = vmatmul.mubr.bf16.gmra.mrb[0].mxu0 %v4778
    %v5324 = vpop.f32.mrb[0].mxu0
    %v5325 = vadd.f32 %v4808, %v5324
    %v5326 = vpop.f32.mrb[0].mxu0
    %v5327 = vpop.f32.mrb[0].mxu0
    %v5328 = vadd.f32 %v4808, %v5327
    %v5329 = vpop.f32.mrb[0].mxu0
    %5330 = vmatprep.mubr.bf16.mxu0 0
    %5331 = vmatmul.mubr.bf16.gmra.mrb[0].mxu0 %v4779
    %v5332 = vpop.f32.mrb[0].mxu0
    %v5333 = vadd.f32 %v4808, %v5332
    %v5334 = vpop.f32.mrb[0].mxu0
    %v5335 = vpop.f32.mrb[0].mxu0
    %v5336 = vadd.f32 %v4808, %v5335
    %v5337 = vpop.f32.mrb[0].mxu0
    %5338 = vmatprep.mubr.bf16.mxu0 0
    %5339 = vmatmul.mubr.bf16.gmra.mrb[0].mxu0 %v4780
    %v5340 = vpop.f32.mrb[0].mxu0
    %v5341 = vadd.f32 %v4808, %v5340
    %v5342 = vpop.f32.mrb[0].mxu0
    %v5343 = vpop.f32.mrb[0].mxu0
    %v5344 = vadd.f32 %v4808, %v5343
    %v5345 = vpop.f32.mrb[0].mxu0
    %5346 = vmatprep.mubr.bf16.mxu0 0
    %5347 = vmatmul.mubr.bf16.gmra.mrb[0].mxu0 %v4781
    %v5348 = vpop.f32.mrb[0].mxu0
    %v5349 = vadd.f32 %v4808, %v5348
    %v5350 = vpop.f32.mrb[0].mxu0
    %v5351 = vpop.f32.mrb[0].mxu0
    %v5352 = vadd.f32 %v4808, %v5351
    %v5353 = vpop.f32.mrb[0].mxu0
    %5354 = vmatprep.mubr.bf16.mxu0 0
    %5355 = vmatmul.mubr.bf16.gmra.mrb[0].mxu0 %v4782
    %v5356 = vpop.f32.mrb[0].mxu0
    %v5357 = vadd.f32 %v4808, %v5356
    %v5358 = vpop.f32.mrb[0].mxu0
    %v5359 = vpop.f32.mrb[0].mxu0
    %v5360 = vadd.f32 %v4808, %v5359
    %v5361 = vpop.f32.mrb[0].mxu0
    %5362 = vmatprep.mubr.bf16.mxu0 0
    %5363 = vmatmul.mubr.bf16.gmra.mrb[0].mxu0 %v4783
    %v5364 = vpop.f32.mrb[0].mxu0
    %v5365 = vadd.f32 %v4808, %v5364
    %v5366 = vpop.f32.mrb[0].mxu0
    %v5367 = vpop.f32.mrb[0].mxu0
    %v5368 = vadd.f32 %v4808, %v5367
    %v5369 = vpop.f32.mrb[0].mxu0
    %5370 = vmatprep.mubr.bf16.mxu0 0
    %5371 = vmatmul.mubr.bf16.gmra.mrb[0].mxu0 %v4784
    %v5372 = vpop.f32.mrb[0].mxu0
    %v5373 = vadd.f32 %v4808, %v5372
    %v5374 = vpop.f32.mrb[0].mxu0
    %v5375 = vpop.f32.mrb[0].mxu0
    %v5376 = vadd.f32 %v4808, %v5375
    %v5377 = vpop.f32.mrb[0].mxu0
    %5378 = vmatprep.mubr.bf16.mxu0 0
    %5379 = vmatmul.mubr.bf16.gmra.mrb[0].mxu0 %v4785
    %v5380 = vpop.f32.mrb[0].mxu0
    %v5381 = vadd.f32 %v4808, %v5380
    %v5382 = vpop.f32.mrb[0].mxu0
    %v5383 = vpop.f32.mrb[0].mxu0
    %v5384 = vadd.f32 %v4808, %v5383
    %v5385 = vpop.f32.mrb[0].mxu0
    %5386 = vmatprep.mubr.bf16.mxu0 0
    %5387 = vmatmul.mubr.bf16.gmra.mrb[0].mxu0 %v4786
    %v5388 = vpop.f32.mrb[0].mxu0
    %v5389 = vadd.f32 %v4808, %v5388
    %v5390 = vpop.f32.mrb[0].mxu0
    %v5391 = vpop.f32.mrb[0].mxu0
    %v5392 = vadd.f32 %v4808, %v5391
    %v5393 = vpop.f32.mrb[0].mxu0
    %5394 = vdwg.mxu0
    %v5395 = vxor.u32 %v4893, 2147483648
    %v5396 = vxor.u32 %v4896, 2147483648
    %v5397 = vxor.u32 %v4901, 2147483648
    %v5398 = vxor.u32 %v4904, 2147483648
    %v5399 = vxor.u32 %v4909, 2147483648
    %v5400 = vxor.u32 %v4912, 2147483648
    %v5401 = vxor.u32 %v4917, 2147483648
    %v5402 = vxor.u32 %v4920, 2147483648
    %v5403 = vxor.u32 %v4925, 2147483648
    %v5404 = vxor.u32 %v4928, 2147483648
    %v5405 = vxor.u32 %v4933, 2147483648
    %v5406 = vxor.u32 %v4936, 2147483648
    %v5407 = vxor.u32 %v4941, 2147483648
    %v5408 = vxor.u32 %v4944, 2147483648
    %v5409 = vxor.u32 %v4949, 2147483648
    %v5410 = vxor.u32 %v4952, 2147483648
    %v5411 = vxor.u32 %v4957, 2147483648
    %v5412 = vxor.u32 %v4960, 2147483648
    %v5413 = vxor.u32 %v4965, 2147483648
    %v5414 = vxor.u32 %v4968, 2147483648
    %v5415 = vxor.u32 %v4973, 2147483648
    %v5416 = vxor.u32 %v4976, 2147483648
    %v5417 = vxor.u32 %v4981, 2147483648
    %v5418 = vxor.u32 %v4984, 2147483648
    %v5419 = vxor.u32 %v4989, 2147483648
    %v5420 = vxor.u32 %v4992, 2147483648
    %v5421 = vxor.u32 %v4997, 2147483648
    %v5422 = vxor.u32 %v5000, 2147483648
    %v5423 = vxor.u32 %v5005, 2147483648
    %v5424 = vxor.u32 %v5008, 2147483648
    %v5425 = vxor.u32 %v5013, 2147483648
    %v5426 = vxor.u32 %v5016, 2147483648
    %v5427 = vxor.u32 %v5021, 2147483648
    %v5428 = vxor.u32 %v5024, 2147483648
    %v5429 = vxor.u32 %v5029, 2147483648
    %v5430 = vxor.u32 %v5032, 2147483648
    %v5431 = vxor.u32 %v5037, 2147483648
    %v5432 = vxor.u32 %v5040, 2147483648
    %v5433 = vxor.u32 %v5045, 2147483648
    %v5434 = vxor.u32 %v5048, 2147483648
    %v5435 = vxor.u32 %v5053, 2147483648
    %v5436 = vxor.u32 %v5056, 2147483648
    %v5437 = vxor.u32 %v5061, 2147483648
    %v5438 = vxor.u32 %v5064, 2147483648
    %v5439 = vxor.u32 %v5069, 2147483648
    %v5440 = vxor.u32 %v5072, 2147483648
    %v5441 = vxor.u32 %v5077, 2147483648
    %v5442 = vxor.u32 %v5080, 2147483648
    %v5443 = vxor.u32 %v5085, 2147483648
    %v5444 = vxor.u32 %v5088, 2147483648
    %v5445 = vxor.u32 %v5093, 2147483648
    %v5446 = vxor.u32 %v5096, 2147483648
    %v5447 = vxor.u32 %v5101, 2147483648
    %v5448 = vxor.u32 %v5104, 2147483648
    %v5449 = vxor.u32 %v5109, 2147483648
    %v5450 = vxor.u32 %v5112, 2147483648
    %v5451 = vxor.u32 %v5117, 2147483648
    %v5452 = vxor.u32 %v5120, 2147483648
    %v5453 = vxor.u32 %v5125, 2147483648
    %v5454 = vxor.u32 %v5128, 2147483648
    %v5455 = vxor.u32 %v5133, 2147483648
    %v5456 = vxor.u32 %v5136, 2147483648
    %v5457 = vxor.u32 %v5141, 2147483648
    %v5458 = vxor.u32 %v5144, 2147483648
    %v5459 = vxor.u32 %v5149, 2147483648
    %v5460 = vxor.u32 %v5152, 2147483648
    %v5461 = vxor.u32 %v5157, 2147483648
    %v5462 = vxor.u32 %v5160, 2147483648
    %v5463 = vxor.u32 %v5165, 2147483648
    %v5464 = vxor.u32 %v5168, 2147483648
    %v5465 = vxor.u32 %v5173, 2147483648
    %v5466 = vxor.u32 %v5176, 2147483648
    %v5467 = vxor.u32 %v5181, 2147483648
    %v5468 = vxor.u32 %v5184, 2147483648
    %v5469 = vxor.u32 %v5189, 2147483648
    %v5470 = vxor.u32 %v5192, 2147483648
    %v5471 = vxor.u32 %v5197, 2147483648
    %v5472 = vxor.u32 %v5200, 2147483648
    %v5473 = vxor.u32 %v5205, 2147483648
    %v5474 = vxor.u32 %v5208, 2147483648
    %v5475 = vxor.u32 %v5213, 2147483648
    %v5476 = vxor.u32 %v5216, 2147483648
    %v5477 = vxor.u32 %v5221, 2147483648
    %v5478 = vxor.u32 %v5224, 2147483648
    %v5479 = vxor.u32 %v5229, 2147483648
    %v5480 = vxor.u32 %v5232, 2147483648
    %v5481 = vxor.u32 %v5237, 2147483648
    %v5482 = vxor.u32 %v5240, 2147483648
    %v5483 = vxor.u32 %v5245, 2147483648
    %v5484 = vxor.u32 %v5248, 2147483648
    %v5485 = vxor.u32 %v5253, 2147483648
    %v5486 = vxor.u32 %v5256, 2147483648
    %v5487 = vxor.u32 %v5261, 2147483648
    %v5488 = vxor.u32 %v5264, 2147483648
    %v5489 = vxor.u32 %v5269, 2147483648
    %v5490 = vxor.u32 %v5272, 2147483648
    %v5491 = vxor.u32 %v5277, 2147483648
    %v5492 = vxor.u32 %v5280, 2147483648
    %v5493 = vxor.u32 %v5285, 2147483648
    %v5494 = vxor.u32 %v5288, 2147483648
    %v5495 = vxor.u32 %v5293, 2147483648
    %v5496 = vxor.u32 %v5296, 2147483648
    %v5497 = vxor.u32 %v5301, 2147483648
    %v5498 = vxor.u32 %v5304, 2147483648
    %v5499 = vxor.u32 %v5309, 2147483648
    %v5500 = vxor.u32 %v5312, 2147483648
    %v5501 = vxor.u32 %v5317, 2147483648
    %v5502 = vxor.u32 %v5320, 2147483648
    %v5503 = vxor.u32 %v5325, 2147483648
    %v5504 = vxor.u32 %v5328, 2147483648
    %v5505 = vxor.u32 %v5333, 2147483648
    %v5506 = vxor.u32 %v5336, 2147483648
    %v5507 = vxor.u32 %v5341, 2147483648
    %v5508 = vxor.u32 %v5344, 2147483648
    %v5509 = vxor.u32 %v5349, 2147483648
    %v5510 = vxor.u32 %v5352, 2147483648
    %v5511 = vxor.u32 %v5357, 2147483648
    %v5512 = vxor.u32 %v5360, 2147483648
    %v5513 = vxor.u32 %v5365, 2147483648
    %v5514 = vxor.u32 %v5368, 2147483648
    %v5515 = vxor.u32 %v5373, 2147483648
    %v5516 = vxor.u32 %v5376, 2147483648
    %v5517 = vxor.u32 %v5381, 2147483648
    %v5518 = vxor.u32 %v5384, 2147483648
    %v5519 = vxor.u32 %v5389, 2147483648
    %v5520 = vxor.u32 %v5392, 2147483648
    %v5521 = vmul.f32 %v5395, 1.442695
    %v5522 = vpow.pop %v5521
    %v5523 = vmul.f32 %v5396, 1.442695
    %v5524 = vpow.pop %v5523
    %v5525 = vmul.f32 %v5397, 1.442695
    %v5526 = vpow.pop %v5525
    %v5527 = vmul.f32 %v5398, 1.442695
    %v5528 = vpow.pop %v5527
    %v5529 = vmul.f32 %v5399, 1.442695
    %v5530 = vpow.pop %v5529
    %v5531 = vmul.f32 %v5400, 1.442695
    %v5532 = vpow.pop %v5531
    %v5533 = vmul.f32 %v5401, 1.442695
    %v5534 = vpow.pop %v5533
    %v5535 = vmul.f32 %v5402, 1.442695
    %v5536 = vpow.pop %v5535
    %v5537 = vmul.f32 %v5403, 1.442695
    %v5538 = vpow.pop %v5537
    %v5539 = vmul.f32 %v5404, 1.442695
    %v5540 = vpow.pop %v5539
    %v5541 = vmul.f32 %v5405, 1.442695
    %v5542 = vpow.pop %v5541
    %v5543 = vmul.f32 %v5406, 1.442695
    %v5544 = vpow.pop %v5543
    %v5545 = vmul.f32 %v5407, 1.442695
    %v5546 = vpow.pop %v5545
    %v5547 = vmul.f32 %v5408, 1.442695
    %v5548 = vpow.pop %v5547
    %v5549 = vmul.f32 %v5409, 1.442695
    %v5550 = vpow.pop %v5549
    %v5551 = vmul.f32 %v5410, 1.442695
    %v5552 = vpow.pop %v5551
    %v5553 = vmul.f32 %v5411, 1.442695
    %v5554 = vpow.pop %v5553
    %v5555 = vmul.f32 %v5412, 1.442695
    %v5556 = vpow.pop %v5555
    %v5557 = vmul.f32 %v5413, 1.442695
    %v5558 = vpow.pop %v5557
    %v5559 = vmul.f32 %v5414, 1.442695
    %v5560 = vpow.pop %v5559
    %v5561 = vmul.f32 %v5415, 1.442695
    %v5562 = vpow.pop %v5561
    %v5563 = vmul.f32 %v5416, 1.442695
    %v5564 = vpow.pop %v5563
    %v5565 = vmul.f32 %v5417, 1.442695
    %v5566 = vpow.pop %v5565
    %v5567 = vmul.f32 %v5418, 1.442695
    %v5568 = vpow.pop %v5567
    %v5569 = vmul.f32 %v5419, 1.442695
    %v5570 = vpow.pop %v5569
    %v5571 = vmul.f32 %v5420, 1.442695
    %v5572 = vpow.pop %v5571
    %v5573 = vmul.f32 %v5421, 1.442695
    %v5574 = vpow.pop %v5573
    %v5575 = vmul.f32 %v5422, 1.442695
    %v5576 = vpow.pop %v5575
    %v5577 = vmul.f32 %v5423, 1.442695
    %v5578 = vpow.pop %v5577
    %v5579 = vmul.f32 %v5424, 1.442695
    %v5580 = vpow.pop %v5579
    %v5581 = vmul.f32 %v5425, 1.442695
    %v5582 = vpow.pop %v5581
    %v5583 = vmul.f32 %v5426, 1.442695
    %v5584 = vpow.pop %v5583
    %v5585 = vmul.f32 %v5427, 1.442695
    %v5586 = vpow.pop %v5585
    %v5587 = vmul.f32 %v5428, 1.442695
    %v5588 = vpow.pop %v5587
    %v5589 = vmul.f32 %v5429, 1.442695
    %v5590 = vpow.pop %v5589
    %v5591 = vmul.f32 %v5430, 1.442695
    %v5592 = vpow.pop %v5591
    %v5593 = vmul.f32 %v5431, 1.442695
    %v5594 = vpow.pop %v5593
    %v5595 = vmul.f32 %v5432, 1.442695
    %v5596 = vpow.pop %v5595
    %v5597 = vmul.f32 %v5433, 1.442695
    %v5598 = vpow.pop %v5597
    %v5599 = vmul.f32 %v5434, 1.442695
    %v5600 = vpow.pop %v5599
    %v5601 = vmul.f32 %v5435, 1.442695
    %v5602 = vpow.pop %v5601
    %v5603 = vmul.f32 %v5436, 1.442695
    %v5604 = vpow.pop %v5603
    %v5605 = vmul.f32 %v5437, 1.442695
    %v5606 = vpow.pop %v5605
    %v5607 = vmul.f32 %v5438, 1.442695
    %v5608 = vpow.pop %v5607
    %v5609 = vmul.f32 %v5439, 1.442695
    %v5610 = vpow.pop %v5609
    %v5611 = vmul.f32 %v5440, 1.442695
    %v5612 = vpow.pop %v5611
    %v5613 = vmul.f32 %v5441, 1.442695
    %v5614 = vpow.pop %v5613
    %v5615 = vmul.f32 %v5442, 1.442695
    %v5616 = vpow.pop %v5615
    %v5617 = vmul.f32 %v5443, 1.442695
    %v5618 = vpow.pop %v5617
    %v5619 = vmul.f32 %v5444, 1.442695
    %v5620 = vpow.pop %v5619
    %v5621 = vmul.f32 %v5445, 1.442695
    %v5622 = vpow.pop %v5621
    %v5623 = vmul.f32 %v5446, 1.442695
    %v5624 = vpow.pop %v5623
    %v5625 = vmul.f32 %v5447, 1.442695
    %v5626 = vpow.pop %v5625
    %v5627 = vmul.f32 %v5448, 1.442695
    %v5628 = vpow.pop %v5627
    %v5629 = vmul.f32 %v5449, 1.442695
    %v5630 = vpow.pop %v5629
    %v5631 = vmul.f32 %v5450, 1.442695
    %v5632 = vpow.pop %v5631
    %v5633 = vmul.f32 %v5451, 1.442695
    %v5634 = vpow.pop %v5633
    %v5635 = vmul.f32 %v5452, 1.442695
    %v5636 = vpow.pop %v5635
    %v5637 = vmul.f32 %v5453, 1.442695
    %v5638 = vpow.pop %v5637
    %v5639 = vmul.f32 %v5454, 1.442695
    %v5640 = vpow.pop %v5639
    %v5641 = vmul.f32 %v5455, 1.442695
    %v5642 = vpow.pop %v5641
    %v5643 = vmul.f32 %v5456, 1.442695
    %v5644 = vpow.pop %v5643
    %v5645 = vmul.f32 %v5457, 1.442695
    %v5646 = vpow.pop %v5645
    %v5647 = vmul.f32 %v5458, 1.442695
    %v5648 = vpow.pop %v5647
    %v5649 = vmul.f32 %v5459, 1.442695
    %v5650 = vpow.pop %v5649
    %v5651 = vmul.f32 %v5460, 1.442695
    %v5652 = vpow.pop %v5651
    %v5653 = vmul.f32 %v5461, 1.442695
    %v5654 = vpow.pop %v5653
    %v5655 = vmul.f32 %v5462, 1.442695
    %v5656 = vpow.pop %v5655
    %v5657 = vmul.f32 %v5463, 1.442695
    %v5658 = vpow.pop %v5657
    %v5659 = vmul.f32 %v5464, 1.442695
    %v5660 = vpow.pop %v5659
    %v5661 = vmul.f32 %v5465, 1.442695
    %v5662 = vpow.pop %v5661
    %v5663 = vmul.f32 %v5466, 1.442695
    %v5664 = vpow.pop %v5663
    %v5665 = vmul.f32 %v5467, 1.442695
    %v5666 = vpow.pop %v5665
    %v5667 = vmul.f32 %v5468, 1.442695
    %v5668 = vpow.pop %v5667
    %v5669 = vmul.f32 %v5469, 1.442695
    %v5670 = vpow.pop %v5669
    %v5671 = vmul.f32 %v5470, 1.442695
    %v5672 = vpow.pop %v5671
    %v5673 = vmul.f32 %v5471, 1.442695
    %v5674 = vpow.pop %v5673
    %v5675 = vmul.f32 %v5472, 1.442695
    %v5676 = vpow.pop %v5675
    %v5677 = vmul.f32 %v5473, 1.442695
    %v5678 = vpow.pop %v5677
    %v5679 = vmul.f32 %v5474, 1.442695
    %v5680 = vpow.pop %v5679
    %v5681 = vmul.f32 %v5475, 1.442695
    %v5682 = vpow.pop %v5681
    %v5683 = vmul.f32 %v5476, 1.442695
    %v5684 = vpow.pop %v5683
    %v5685 = vmul.f32 %v5477, 1.442695
    %v5686 = vpow.pop %v5685
    %v5687 = vmul.f32 %v5478, 1.442695
    %v5688 = vpow.pop %v5687
    %v5689 = vmul.f32 %v5479, 1.442695
    %v5690 = vpow.pop %v5689
    %v5691 = vmul.f32 %v5480, 1.442695
    %v5692 = vpow.pop %v5691
    %v5693 = vmul.f32 %v5481, 1.442695
    %v5694 = vpow.pop %v5693
    %v5695 = vmul.f32 %v5482, 1.442695
    %v5696 = vpow.pop %v5695
    %v5697 = vmul.f32 %v5483, 1.442695
    %v5698 = vpow.pop %v5697
    %v5699 = vmul.f32 %v5484, 1.442695
    %v5700 = vpow.pop %v5699
    %v5701 = vmul.f32 %v5485, 1.442695
    %v5702 = vpow.pop %v5701
    %v5703 = vmul.f32 %v5486, 1.442695
    %v5704 = vpow.pop %v5703
    %v5705 = vmul.f32 %v5487, 1.442695
    %v5706 = vpow.pop %v5705
    %v5707 = vmul.f32 %v5488, 1.442695
    %v5708 = vpow.pop %v5707
    %v5709 = vmul.f32 %v5489, 1.442695
    %v5710 = vpow.pop %v5709
    %v5711 = vmul.f32 %v5490, 1.442695
    %v5712 = vpow.pop %v5711
    %v5713 = vmul.f32 %v5491, 1.442695
    %v5714 = vpow.pop %v5713
    %v5715 = vmul.f32 %v5492, 1.442695
    %v5716 = vpow.pop %v5715
    %v5717 = vmul.f32 %v5493, 1.442695
    %v5718 = vpow.pop %v5717
    %v5719 = vmul.f32 %v5494, 1.442695
    %v5720 = vpow.pop %v5719
    %v5721 = vmul.f32 %v5495, 1.442695
    %v5722 = vpow.pop %v5721
    %v5723 = vmul.f32 %v5496, 1.442695
    %v5724 = vpow.pop %v5723
    %v5725 = vmul.f32 %v5497, 1.442695
    %v5726 = vpow.pop %v5725
    %v5727 = vmul.f32 %v5498, 1.442695
    %v5728 = vpow.pop %v5727
    %v5729 = vmul.f32 %v5499, 1.442695
    %v5730 = vpow.pop %v5729
    %v5731 = vmul.f32 %v5500, 1.442695
    %v5732 = vpow.pop %v5731
    %v5733 = vmul.f32 %v5501, 1.442695
    %v5734 = vpow.pop %v5733
    %v5735 = vmul.f32 %v5502, 1.442695
    %v5736 = vpow.pop %v5735
    %v5737 = vmul.f32 %v5503, 1.442695
    %v5738 = vpow.pop %v5737
    %v5739 = vmul.f32 %v5504, 1.442695
    %v5740 = vpow.pop %v5739
    %v5741 = vmul.f32 %v5505, 1.442695
    %v5742 = vpow.pop %v5741
    %v5743 = vmul.f32 %v5506, 1.442695
    %v5744 = vpow.pop %v5743
    %v5745 = vmul.f32 %v5507, 1.442695
    %v5746 = vpow.pop %v5745
    %v5747 = vmul.f32 %v5508, 1.442695
    %v5748 = vpow.pop %v5747
    %v5749 = vmul.f32 %v5509, 1.442695
    %v5750 = vpow.pop %v5749
    %v5751 = vmul.f32 %v5510, 1.442695
    %v5752 = vpow.pop %v5751
    %v5753 = vmul.f32 %v5511, 1.442695
    %v5754 = vpow.pop %v5753
    %v5755 = vmul.f32 %v5512, 1.442695
    %v5756 = vpow.pop %v5755
    %v5757 = vmul.f32 %v5513, 1.442695
    %v5758 = vpow.pop %v5757
    %v5759 = vmul.f32 %v5514, 1.442695
    %v5760 = vpow.pop %v5759
    %v5761 = vmul.f32 %v5515, 1.442695
    %v5762 = vpow.pop %v5761
    %v5763 = vmul.f32 %v5516, 1.442695
    %v5764 = vpow.pop %v5763
    %v5765 = vmul.f32 %v5517, 1.442695
    %v5766 = vpow.pop %v5765
    %v5767 = vmul.f32 %v5518, 1.442695
    %v5768 = vpow.pop %v5767
    %v5769 = vmul.f32 %v5519, 1.442695
    %v5770 = vpow.pop %v5769
    %v5771 = vmul.f32 %v5520, 1.442695
    %v5772 = vpow.pop %v5771
    %v5773 = vadd.f32 %v5522, 1.0
    %v5774 = vadd.f32 %v5524, 1.0
    %v5775 = vadd.f32 %v5526, 1.0
    %v5776 = vadd.f32 %v5528, 1.0
    %v5777 = vadd.f32 %v5530, 1.0
    %v5778 = vadd.f32 %v5532, 1.0
    %v5779 = vadd.f32 %v5534, 1.0
    %v5780 = vadd.f32 %v5536, 1.0
    %v5781 = vadd.f32 %v5538, 1.0
    %v5782 = vadd.f32 %v5540, 1.0
    %v5783 = vadd.f32 %v5542, 1.0
    %v5784 = vadd.f32 %v5544, 1.0
    %v5785 = vadd.f32 %v5546, 1.0
    %v5786 = vadd.f32 %v5548, 1.0
    %v5787 = vadd.f32 %v5550, 1.0
    %v5788 = vadd.f32 %v5552, 1.0
    %v5789 = vadd.f32 %v5554, 1.0
    %v5790 = vadd.f32 %v5556, 1.0
    %v5791 = vadd.f32 %v5558, 1.0
    %v5792 = vadd.f32 %v5560, 1.0
    %v5793 = vadd.f32 %v5562, 1.0
    %v5794 = vadd.f32 %v5564, 1.0
    %v5795 = vadd.f32 %v5566, 1.0
    %v5796 = vadd.f32 %v5568, 1.0
    %v5797 = vadd.f32 %v5570, 1.0
    %v5798 = vadd.f32 %v5572, 1.0
    %v5799 = vadd.f32 %v5574, 1.0
    %v5800 = vadd.f32 %v5576, 1.0
    %v5801 = vadd.f32 %v5578, 1.0
    %v5802 = vadd.f32 %v5580, 1.0
    %v5803 = vadd.f32 %v5582, 1.0
    %v5804 = vadd.f32 %v5584, 1.0
    %v5805 = vadd.f32 %v5586, 1.0
    %v5806 = vadd.f32 %v5588, 1.0
    %v5807 = vadd.f32 %v5590, 1.0
    %v5808 = vadd.f32 %v5592, 1.0
    %v5809 = vadd.f32 %v5594, 1.0
    %v5810 = vadd.f32 %v5596, 1.0
    %v5811 = vadd.f32 %v5598, 1.0
    %v5812 = vadd.f32 %v5600, 1.0
    %v5813 = vadd.f32 %v5602, 1.0
    %v5814 = vadd.f32 %v5604, 1.0
    %v5815 = vadd.f32 %v5606, 1.0
    %v5816 = vadd.f32 %v5608, 1.0
    %v5817 = vadd.f32 %v5610, 1.0
    %v5818 = vadd.f32 %v5612, 1.0
    %v5819 = vadd.f32 %v5614, 1.0
    %v5820 = vadd.f32 %v5616, 1.0
    %v5821 = vadd.f32 %v5618, 1.0
    %v5822 = vadd.f32 %v5620, 1.0
    %v5823 = vadd.f32 %v5622, 1.0
    %v5824 = vadd.f32 %v5624, 1.0
    %v5825 = vadd.f32 %v5626, 1.0
    %v5826 = vadd.f32 %v5628, 1.0
    %v5827 = vadd.f32 %v5630, 1.0
    %v5828 = vadd.f32 %v5632, 1.0
    %v5829 = vadd.f32 %v5634, 1.0
    %v5830 = vadd.f32 %v5636, 1.0
    %v5831 = vadd.f32 %v5638, 1.0
    %v5832 = vadd.f32 %v5640, 1.0
    %v5833 = vadd.f32 %v5642, 1.0
    %v5834 = vadd.f32 %v5644, 1.0
    %v5835 = vadd.f32 %v5646, 1.0
    %v5836 = vadd.f32 %v5648, 1.0
    %v5837 = vadd.f32 %v5650, 1.0
    %v5838 = vadd.f32 %v5652, 1.0
    %v5839 = vadd.f32 %v5654, 1.0
    %v5840 = vadd.f32 %v5656, 1.0
    %v5841 = vadd.f32 %v5658, 1.0
    %v5842 = vadd.f32 %v5660, 1.0
    %v5843 = vadd.f32 %v5662, 1.0
    %v5844 = vadd.f32 %v5664, 1.0
    %v5845 = vadd.f32 %v5666, 1.0
    %v5846 = vadd.f32 %v5668, 1.0
    %v5847 = vadd.f32 %v5670, 1.0
    %v5848 = vadd.f32 %v5672, 1.0
    %v5849 = vadd.f32 %v5674, 1.0
    %v5850 = vadd.f32 %v5676, 1.0
    %v5851 = vadd.f32 %v5678, 1.0
    %v5852 = vadd.f32 %v5680, 1.0
    %v5853 = vadd.f32 %v5682, 1.0
    %v5854 = vadd.f32 %v5684, 1.0
    %v5855 = vadd.f32 %v5686, 1.0
    %v5856 = vadd.f32 %v5688, 1.0
    %v5857 = vadd.f32 %v5690, 1.0
    %v5858 = vadd.f32 %v5692, 1.0
    %v5859 = vadd.f32 %v5694, 1.0
    %v5860 = vadd.f32 %v5696, 1.0
    %v5861 = vadd.f32 %v5698, 1.0
    %v5862 = vadd.f32 %v5700, 1.0
    %v5863 = vadd.f32 %v5702, 1.0
    %v5864 = vadd.f32 %v5704, 1.0
    %v5865 = vadd.f32 %v5706, 1.0
    %v5866 = vadd.f32 %v5708, 1.0
    %v5867 = vadd.f32 %v5710, 1.0
    %v5868 = vadd.f32 %v5712, 1.0
    %v5869 = vadd.f32 %v5714, 1.0
    %v5870 = vadd.f32 %v5716, 1.0
    %v5871 = vadd.f32 %v5718, 1.0
    %v5872 = vadd.f32 %v5720, 1.0
    %v5873 = vadd.f32 %v5722, 1.0
    %v5874 = vadd.f32 %v5724, 1.0
    %v5875 = vadd.f32 %v5726, 1.0
    %v5876 = vadd.f32 %v5728, 1.0
    %v5877 = vadd.f32 %v5730, 1.0
    %v5878 = vadd.f32 %v5732, 1.0
    %v5879 = vadd.f32 %v5734, 1.0
    %v5880 = vadd.f32 %v5736, 1.0
    %v5881 = vadd.f32 %v5738, 1.0
    %v5882 = vadd.f32 %v5740, 1.0
    %v5883 = vadd.f32 %v5742, 1.0
    %v5884 = vadd.f32 %v5744, 1.0
    %v5885 = vadd.f32 %v5746, 1.0
    %v5886 = vadd.f32 %v5748, 1.0
    %v5887 = vadd.f32 %v5750, 1.0
    %v5888 = vadd.f32 %v5752, 1.0
    %v5889 = vadd.f32 %v5754, 1.0
    %v5890 = vadd.f32 %v5756, 1.0
    %v5891 = vadd.f32 %v5758, 1.0
    %v5892 = vadd.f32 %v5760, 1.0
    %v5893 = vadd.f32 %v5762, 1.0
    %v5894 = vadd.f32 %v5764, 1.0
    %v5895 = vadd.f32 %v5766, 1.0
    %v5896 = vadd.f32 %v5768, 1.0
    %v5897 = vadd.f32 %v5770, 1.0
    %v5898 = vadd.f32 %v5772, 1.0
    %v5899 = vrcp.pop %v5773
    %v5900 = vmul.f32 1.0, %v5899
    %v5901 = vrcp.pop %v5774
    %v5902 = vmul.f32 1.0, %v5901
    %v5903 = vrcp.pop %v5775
    %v5904 = vmul.f32 1.0, %v5903
    %v5905 = vrcp.pop %v5776
    %v5906 = vmul.f32 1.0, %v5905
    %v5907 = vrcp.pop %v5777
    %v5908 = vmul.f32 1.0, %v5907
    %v5909 = vrcp.pop %v5778
    %v5910 = vmul.f32 1.0, %v5909
    %v5911 = vrcp.pop %v5779
    %v5912 = vmul.f32 1.0, %v5911
    %v5913 = vrcp.pop %v5780
    %v5914 = vmul.f32 1.0, %v5913
    %v5915 = vrcp.pop %v5781
    %v5916 = vmul.f32 1.0, %v5915
    %v5917 = vrcp.pop %v5782
    %v5918 = vmul.f32 1.0, %v5917
    %v5919 = vrcp.pop %v5783
    %v5920 = vmul.f32 1.0, %v5919
    %v5921 = vrcp.pop %v5784
    %v5922 = vmul.f32 1.0, %v5921
    %v5923 = vrcp.pop %v5785
    %v5924 = vmul.f32 1.0, %v5923
    %v5925 = vrcp.pop %v5786
    %v5926 = vmul.f32 1.0, %v5925
    %v5927 = vrcp.pop %v5787
    %v5928 = vmul.f32 1.0, %v5927
    %v5929 = vrcp.pop %v5788
    %v5930 = vmul.f32 1.0, %v5929
    %v5931 = vrcp.pop %v5789
    %v5932 = vmul.f32 1.0, %v5931
    %v5933 = vrcp.pop %v5790
    %v5934 = vmul.f32 1.0, %v5933
    %v5935 = vrcp.pop %v5791
    %v5936 = vmul.f32 1.0, %v5935
    %v5937 = vrcp.pop %v5792
    %v5938 = vmul.f32 1.0, %v5937
    %v5939 = vrcp.pop %v5793
    %v5940 = vmul.f32 1.0, %v5939
    %v5941 = vrcp.pop %v5794
    %v5942 = vmul.f32 1.0, %v5941
    %v5943 = vrcp.pop %v5795
    %v5944 = vmul.f32 1.0, %v5943
    %v5945 = vrcp.pop %v5796
    %v5946 = vmul.f32 1.0, %v5945
    %v5947 = vrcp.pop %v5797
    %v5948 = vmul.f32 1.0, %v5947
    %v5949 = vrcp.pop %v5798
    %v5950 = vmul.f32 1.0, %v5949
    %v5951 = vrcp.pop %v5799
    %v5952 = vmul.f32 1.0, %v5951
    %v5953 = vrcp.pop %v5800
    %v5954 = vmul.f32 1.0, %v5953
    %v5955 = vrcp.pop %v5801
    %v5956 = vmul.f32 1.0, %v5955
    %v5957 = vrcp.pop %v5802
    %v5958 = vmul.f32 1.0, %v5957
    %v5959 = vrcp.pop %v5803
    %v5960 = vmul.f32 1.0, %v5959
    %v5961 = vrcp.pop %v5804
    %v5962 = vmul.f32 1.0, %v5961
    %v5963 = vrcp.pop %v5805
    %v5964 = vmul.f32 1.0, %v5963
    %v5965 = vrcp.pop %v5806
    %v5966 = vmul.f32 1.0, %v5965
    %v5967 = vrcp.pop %v5807
    %v5968 = vmul.f32 1.0, %v5967
    %v5969 = vrcp.pop %v5808
    %v5970 = vmul.f32 1.0, %v5969
    %v5971 = vrcp.pop %v5809
    %v5972 = vmul.f32 1.0, %v5971
    %v5973 = vrcp.pop %v5810
    %v5974 = vmul.f32 1.0, %v5973
    %v5975 = vrcp.pop %v5811
    %v5976 = vmul.f32 1.0, %v5975
    %v5977 = vrcp.pop %v5812
    %v5978 = vmul.f32 1.0, %v5977
    %v5979 = vrcp.pop %v5813
    %v5980 = vmul.f32 1.0, %v5979
    %v5981 = vrcp.pop %v5814
    %v5982 = vmul.f32 1.0, %v5981
    %v5983 = vrcp.pop %v5815
    %v5984 = vmul.f32 1.0, %v5983
    %v5985 = vrcp.pop %v5816
    %v5986 = vmul.f32 1.0, %v5985
    %v5987 = vrcp.pop %v5817
    %v5988 = vmul.f32 1.0, %v5987
    %v5989 = vrcp.pop %v5818
    %v5990 = vmul.f32 1.0, %v5989
    %v5991 = vrcp.pop %v5819
    %v5992 = vmul.f32 1.0, %v5991
    %v5993 = vrcp.pop %v5820
    %v5994 = vmul.f32 1.0, %v5993
    %v5995 = vrcp.pop %v5821
    %v5996 = vmul.f32 1.0, %v5995
    %v5997 = vrcp.pop %v5822
    %v5998 = vmul.f32 1.0, %v5997
    %v5999 = vrcp.pop %v5823
    %v6000 = vmul.f32 1.0, %v5999
    %v6001 = vrcp.pop %v5824
    %v6002 = vmul.f32 1.0, %v6001
    %v6003 = vrcp.pop %v5825
    %v6004 = vmul.f32 1.0, %v6003
    %v6005 = vrcp.pop %v5826
    %v6006 = vmul.f32 1.0, %v6005
    %v6007 = vrcp.pop %v5827
    %v6008 = vmul.f32 1.0, %v6007
    %v6009 = vrcp.pop %v5828
    %v6010 = vmul.f32 1.0, %v6009
    %v6011 = vrcp.pop %v5829
    %v6012 = vmul.f32 1.0, %v6011
    %v6013 = vrcp.pop %v5830
    %v6014 = vmul.f32 1.0, %v6013
    %v6015 = vrcp.pop %v5831
    %v6016 = vmul.f32 1.0, %v6015
    %v6017 = vrcp.pop %v5832
    %v6018 = vmul.f32 1.0, %v6017
    %v6019 = vrcp.pop %v5833
    %v6020 = vmul.f32 1.0, %v6019
    %v6021 = vrcp.pop %v5834
    %v6022 = vmul.f32 1.0, %v6021
    %v6023 = vrcp.pop %v5835
    %v6024 = vmul.f32 1.0, %v6023
    %v6025 = vrcp.pop %v5836
    %v6026 = vmul.f32 1.0, %v6025
    %v6027 = vrcp.pop %v5837
    %v6028 = vmul.f32 1.0, %v6027
    %v6029 = vrcp.pop %v5838
    %v6030 = vmul.f32 1.0, %v6029
    %v6031 = vrcp.pop %v5839
    %v6032 = vmul.f32 1.0, %v6031
    %v6033 = vrcp.pop %v5840
    %v6034 = vmul.f32 1.0, %v6033
    %v6035 = vrcp.pop %v5841
    %v6036 = vmul.f32 1.0, %v6035
    %v6037 = vrcp.pop %v5842
    %v6038 = vmul.f32 1.0, %v6037
    %v6039 = vrcp.pop %v5843
    %v6040 = vmul.f32 1.0, %v6039
    %v6041 = vrcp.pop %v5844
    %v6042 = vmul.f32 1.0, %v6041
    %v6043 = vrcp.pop %v5845
    %v6044 = vmul.f32 1.0, %v6043
    %v6045 = vrcp.pop %v5846
    %v6046 = vmul.f32 1.0, %v6045
    %v6047 = vrcp.pop %v5847
    %v6048 = vmul.f32 1.0, %v6047
    %v6049 = vrcp.pop %v5848
    %v6050 = vmul.f32 1.0, %v6049
    %v6051 = vrcp.pop %v5849
    %v6052 = vmul.f32 1.0, %v6051
    %v6053 = vrcp.pop %v5850
    %v6054 = vmul.f32 1.0, %v6053
    %v6055 = vrcp.pop %v5851
    %v6056 = vmul.f32 1.0, %v6055
    %v6057 = vrcp.pop %v5852
    %v6058 = vmul.f32 1.0, %v6057
    %v6059 = vrcp.pop %v5853
    %v6060 = vmul.f32 1.0, %v6059
    %v6061 = vrcp.pop %v5854
    %v6062 = vmul.f32 1.0, %v6061
    %v6063 = vrcp.pop %v5855
    %v6064 = vmul.f32 1.0, %v6063
    %v6065 = vrcp.pop %v5856
    %v6066 = vmul.f32 1.0, %v6065
    %v6067 = vrcp.pop %v5857
    %v6068 = vmul.f32 1.0, %v6067
    %v6069 = vrcp.pop %v5858
    %v6070 = vmul.f32 1.0, %v6069
    %v6071 = vrcp.pop %v5859
    %v6072 = vmul.f32 1.0, %v6071
    %v6073 = vrcp.pop %v5860
    %v6074 = vmul.f32 1.0, %v6073
    %v6075 = vrcp.pop %v5861
    %v6076 = vmul.f32 1.0, %v6075
    %v6077 = vrcp.pop %v5862
    %v6078 = vmul.f32 1.0, %v6077
    %v6079 = vrcp.pop %v5863
    %v6080 = vmul.f32 1.0, %v6079
    %v6081 = vrcp.pop %v5864
    %v6082 = vmul.f32 1.0, %v6081
    %v6083 = vrcp.pop %v5865
    %v6084 = vmul.f32 1.0, %v6083
    %v6085 = vrcp.pop %v5866
    %v6086 = vmul.f32 1.0, %v6085
    %v6087 = vrcp.pop %v5867
    %v6088 = vmul.f32 1.0, %v6087
    %v6089 = vrcp.pop %v5868
    %v6090 = vmul.f32 1.0, %v6089
    %v6091 = vrcp.pop %v5869
    %v6092 = vmul.f32 1.0, %v6091
    %v6093 = vrcp.pop %v5870
    %v6094 = vmul.f32 1.0, %v6093
    %v6095 = vrcp.pop %v5871
    %v6096 = vmul.f32 1.0, %v6095
    %v6097 = vrcp.pop %v5872
    %v6098 = vmul.f32 1.0, %v6097
    %v6099 = vrcp.pop %v5873
    %v6100 = vmul.f32 1.0, %v6099
    %v6101 = vrcp.pop %v5874
    %v6102 = vmul.f32 1.0, %v6101
    %v6103 = vrcp.pop %v5875
    %v6104 = vmul.f32 1.0, %v6103
    %v6105 = vrcp.pop %v5876
    %v6106 = vmul.f32 1.0, %v6105
    %v6107 = vrcp.pop %v5877
    %v6108 = vmul.f32 1.0, %v6107
    %v6109 = vrcp.pop %v5878
    %v6110 = vmul.f32 1.0, %v6109
    %v6111 = vrcp.pop %v5879
    %v6112 = vmul.f32 1.0, %v6111
    %v6113 = vrcp.pop %v5880
    %v6114 = vmul.f32 1.0, %v6113
    %v6115 = vrcp.pop %v5881
    %v6116 = vmul.f32 1.0, %v6115
    %v6117 = vrcp.pop %v5882
    %v6118 = vmul.f32 1.0, %v6117
    %v6119 = vrcp.pop %v5883
    %v6120 = vmul.f32 1.0, %v6119
    %v6121 = vrcp.pop %v5884
    %v6122 = vmul.f32 1.0, %v6121
    %v6123 = vrcp.pop %v5885
    %v6124 = vmul.f32 1.0, %v6123
    %v6125 = vrcp.pop %v5886
    %v6126 = vmul.f32 1.0, %v6125
    %v6127 = vrcp.pop %v5887
    %v6128 = vmul.f32 1.0, %v6127
    %v6129 = vrcp.pop %v5888
    %v6130 = vmul.f32 1.0, %v6129
    %v6131 = vrcp.pop %v5889
    %v6132 = vmul.f32 1.0, %v6131
    %v6133 = vrcp.pop %v5890
    %v6134 = vmul.f32 1.0, %v6133
    %v6135 = vrcp.pop %v5891
    %v6136 = vmul.f32 1.0, %v6135
    %v6137 = vrcp.pop %v5892
    %v6138 = vmul.f32 1.0, %v6137
    %v6139 = vrcp.pop %v5893
    %v6140 = vmul.f32 1.0, %v6139
    %v6141 = vrcp.pop %v5894
    %v6142 = vmul.f32 1.0, %v6141
    %v6143 = vrcp.pop %v5895
    %v6144 = vmul.f32 1.0, %v6143
    %v6145 = vrcp.pop %v5896
    %v6146 = vmul.f32 1.0, %v6145
    %v6147 = vrcp.pop %v5897
    %v6148 = vmul.f32 1.0, %v6147
    %v6149 = vrcp.pop %v5898
    %v6150 = vmul.f32 1.0, %v6149
    %vm6151 = vcmask 15360
    %6152 = vst.msk [vmem:[#allocation12] sm:$0xff] %vm6151, %v5900
    %6153 = vst.msk [vmem:[#allocation12 + $0x8] sm:$0xff] %vm6151, %v5902
    %6154 = vst.msk [vmem:[#allocation12 + $0x10] sm:$0xff] %vm6151, %v5904
    %6155 = vst.msk [vmem:[#allocation12 + $0x18] sm:$0xff] %vm6151, %v5906
    %6156 = vst.msk [vmem:[#allocation12 + $0x20] sm:$0xff] %vm6151, %v5908
    %6157 = vst.msk [vmem:[#allocation12 + $0x28] sm:$0xff] %vm6151, %v5910
    %6158 = vst.msk [vmem:[#allocation12 + $0x30] sm:$0xff] %vm6151, %v5912
    %6159 = vst.msk [vmem:[#allocation12 + $0x38] sm:$0xff] %vm6151, %v5914
    %6160 = vst.msk [vmem:[#allocation12 + $0x40] sm:$0xff] %vm6151, %v5916
    %6161 = vst.msk [vmem:[#allocation12 + $0x48] sm:$0xff] %vm6151, %v5918
    %6162 = vst.msk [vmem:[#allocation12 + $0x50] sm:$0xff] %vm6151, %v5920
    %6163 = vst.msk [vmem:[#allocation12 + $0x58] sm:$0xff] %vm6151, %v5922
    %6164 = vst.msk [vmem:[#allocation12 + $0x60] sm:$0xff] %vm6151, %v5924
    %6165 = vst.msk [vmem:[#allocation12 + $0x68] sm:$0xff] %vm6151, %v5926
    %6166 = vst.msk [vmem:[#allocation12 + $0x70] sm:$0xff] %vm6151, %v5928
    %6167 = vst.msk [vmem:[#allocation12 + $0x78] sm:$0xff] %vm6151, %v5930
    %6168 = vst.msk [vmem:[#allocation12 + $0x80] sm:$0xff] %vm6151, %v5932
    %6169 = vst.msk [vmem:[#allocation12 + $0x88] sm:$0xff] %vm6151, %v5934
    %6170 = vst.msk [vmem:[#allocation12 + $0x90] sm:$0xff] %vm6151, %v5936
    %6171 = vst.msk [vmem:[#allocation12 + $0x98] sm:$0xff] %vm6151, %v5938
    %6172 = vst.msk [vmem:[#allocation12 + $0xa0] sm:$0xff] %vm6151, %v5940
    %6173 = vst.msk [vmem:[#allocation12 + $0xa8] sm:$0xff] %vm6151, %v5942
    %6174 = vst.msk [vmem:[#allocation12 + $0xb0] sm:$0xff] %vm6151, %v5944
    %6175 = vst.msk [vmem:[#allocation12 + $0xb8] sm:$0xff] %vm6151, %v5946
    %6176 = vst.msk [vmem:[#allocation12 + $0xc0] sm:$0xff] %vm6151, %v5948
    %6177 = vst.msk [vmem:[#allocation12 + $0xc8] sm:$0xff] %vm6151, %v5950
    %6178 = vst.msk [vmem:[#allocation12 + $0xd0] sm:$0xff] %vm6151, %v5952
    %6179 = vst.msk [vmem:[#allocation12 + $0xd8] sm:$0xff] %vm6151, %v5954
    %6180 = vst.msk [vmem:[#allocation12 + $0xe0] sm:$0xff] %vm6151, %v5956
    %6181 = vst.msk [vmem:[#allocation12 + $0xe8] sm:$0xff] %vm6151, %v5958
    %6182 = vst.msk [vmem:[#allocation12 + $0xf0] sm:$0xff] %vm6151, %v5960
    %6183 = vst.msk [vmem:[#allocation12 + $0xf8] sm:$0xff] %vm6151, %v5962
    %6184 = vst.msk [vmem:[#allocation12 + $0x100] sm:$0xff] %vm6151, %v5964
    %6185 = vst.msk [vmem:[#allocation12 + $0x108] sm:$0xff] %vm6151, %v5966
    %6186 = vst.msk [vmem:[#allocation12 + $0x110] sm:$0xff] %vm6151, %v5968
    %6187 = vst.msk [vmem:[#allocation12 + $0x118] sm:$0xff] %vm6151, %v5970
    %6188 = vst.msk [vmem:[#allocation12 + $0x120] sm:$0xff] %vm6151, %v5972
    %6189 = vst.msk [vmem:[#allocation12 + $0x128] sm:$0xff] %vm6151, %v5974
    %6190 = vst.msk [vmem:[#allocation12 + $0x130] sm:$0xff] %vm6151, %v5976
    %6191 = vst.msk [vmem:[#allocation12 + $0x138] sm:$0xff] %vm6151, %v5978
    %6192 = vst.msk [vmem:[#allocation12 + $0x140] sm:$0xff] %vm6151, %v5980
    %6193 = vst.msk [vmem:[#allocation12 + $0x148] sm:$0xff] %vm6151, %v5982
    %6194 = vst.msk [vmem:[#allocation12 + $0x150] sm:$0xff] %vm6151, %v5984
    %6195 = vst.msk [vmem:[#allocation12 + $0x158] sm:$0xff] %vm6151, %v5986
    %6196 = vst.msk [vmem:[#allocation12 + $0x160] sm:$0xff] %vm6151, %v5988
    %6197 = vst.msk [vmem:[#allocation12 + $0x168] sm:$0xff] %vm6151, %v5990
    %6198 = vst.msk [vmem:[#allocation12 + $0x170] sm:$0xff] %vm6151, %v5992
    %6199 = vst.msk [vmem:[#allocation12 + $0x178] sm:$0xff] %vm6151, %v5994
    %6200 = vst.msk [vmem:[#allocation12 + $0x180] sm:$0xff] %vm6151, %v5996
    %6201 = vst.msk [vmem:[#allocation12 + $0x188] sm:$0xff] %vm6151, %v5998
    %6202 = vst.msk [vmem:[#allocation12 + $0x190] sm:$0xff] %vm6151, %v6000
    %6203 = vst.msk [vmem:[#allocation12 + $0x198] sm:$0xff] %vm6151, %v6002
    %6204 = vst.msk [vmem:[#allocation12 + $0x1a0] sm:$0xff] %vm6151, %v6004
    %6205 = vst.msk [vmem:[#allocation12 + $0x1a8] sm:$0xff] %vm6151, %v6006
    %6206 = vst.msk [vmem:[#allocation12 + $0x1b0] sm:$0xff] %vm6151, %v6008
    %6207 = vst.msk [vmem:[#allocation12 + $0x1b8] sm:$0xff] %vm6151, %v6010
    %6208 = vst.msk [vmem:[#allocation12 + $0x1c0] sm:$0xff] %vm6151, %v6012
    %6209 = vst.msk [vmem:[#allocation12 + $0x1c8] sm:$0xff] %vm6151, %v6014
    %6210 = vst.msk [vmem:[#allocation12 + $0x1d0] sm:$0xff] %vm6151, %v6016
    %6211 = vst.msk [vmem:[#allocation12 + $0x1d8] sm:$0xff] %vm6151, %v6018
    %6212 = vst.msk [vmem:[#allocation12 + $0x1e0] sm:$0xff] %vm6151, %v6020
    %6213 = vst.msk [vmem:[#allocation12 + $0x1e8] sm:$0xff] %vm6151, %v6022
    %6214 = vst.msk [vmem:[#allocation12 + $0x1f0] sm:$0xff] %vm6151, %v6024
    %6215 = vst.msk [vmem:[#allocation12 + $0x1f8] sm:$0xff] %vm6151, %v6026
    %6216 = vst.msk [vmem:[#allocation12 + $0x200] sm:$0xff] %vm6151, %v6028
    %6217 = vst.msk [vmem:[#allocation12 + $0x208] sm:$0xff] %vm6151, %v6030
    %6218 = vst.msk [vmem:[#allocation12 + $0x210] sm:$0xff] %vm6151, %v6032
    %6219 = vst.msk [vmem:[#allocation12 + $0x218] sm:$0xff] %vm6151, %v6034
    %6220 = vst.msk [vmem:[#allocation12 + $0x220] sm:$0xff] %vm6151, %v6036
    %6221 = vst.msk [vmem:[#allocation12 + $0x228] sm:$0xff] %vm6151, %v6038
    %6222 = vst.msk [vmem:[#allocation12 + $0x230] sm:$0xff] %vm6151, %v6040
    %6223 = vst.msk [vmem:[#allocation12 + $0x238] sm:$0xff] %vm6151, %v6042
    %6224 = vst.msk [vmem:[#allocation12 + $0x240] sm:$0xff] %vm6151, %v6044
    %6225 = vst.msk [vmem:[#allocation12 + $0x248] sm:$0xff] %vm6151, %v6046
    %6226 = vst.msk [vmem:[#allocation12 + $0x250] sm:$0xff] %vm6151, %v6048
    %6227 = vst.msk [vmem:[#allocation12 + $0x258] sm:$0xff] %vm6151, %v6050
    %6228 = vst.msk [vmem:[#allocation12 + $0x260] sm:$0xff] %vm6151, %v6052
    %6229 = vst.msk [vmem:[#allocation12 + $0x268] sm:$0xff] %vm6151, %v6054
    %6230 = vst.msk [vmem:[#allocation12 + $0x270] sm:$0xff] %vm6151, %v6056
    %6231 = vst.msk [vmem:[#allocation12 + $0x278] sm:$0xff] %vm6151, %v6058
    %6232 = vst.msk [vmem:[#allocation12 + $0x280] sm:$0xff] %vm6151, %v6060
    %6233 = vst.msk [vmem:[#allocation12 + $0x288] sm:$0xff] %vm6151, %v6062
    %6234 = vst.msk [vmem:[#allocation12 + $0x290] sm:$0xff] %vm6151, %v6064
    %6235 = vst.msk [vmem:[#allocation12 + $0x298] sm:$0xff] %vm6151, %v6066
    %6236 = vst.msk [vmem:[#allocation12 + $0x2a0] sm:$0xff] %vm6151, %v6068
    %6237 = vst.msk [vmem:[#allocation12 + $0x2a8] sm:$0xff] %vm6151, %v6070
    %6238 = vst.msk [vmem:[#allocation12 + $0x2b0] sm:$0xff] %vm6151, %v6072
    %6239 = vst.msk [vmem:[#allocation12 + $0x2b8] sm:$0xff] %vm6151, %v6074
    %6240 = vst.msk [vmem:[#allocation12 + $0x2c0] sm:$0xff] %vm6151, %v6076
    %6241 = vst.msk [vmem:[#allocation12 + $0x2c8] sm:$0xff] %vm6151, %v6078
    %6242 = vst.msk [vmem:[#allocation12 + $0x2d0] sm:$0xff] %vm6151, %v6080
    %6243 = vst.msk [vmem:[#allocation12 + $0x2d8] sm:$0xff] %vm6151, %v6082
    %6244 = vst.msk [vmem:[#allocation12 + $0x2e0] sm:$0xff] %vm6151, %v6084
    %6245 = vst.msk [vmem:[#allocation12 + $0x2e8] sm:$0xff] %vm6151, %v6086
    %6246 = vst.msk [vmem:[#allocation12 + $0x2f0] sm:$0xff] %vm6151, %v6088
    %6247 = vst.msk [vmem:[#allocation12 + $0x2f8] sm:$0xff] %vm6151, %v6090
    %6248 = vst.msk [vmem:[#allocation12 + $0x300] sm:$0xff] %vm6151, %v6092
    %6249 = vst.msk [vmem:[#allocation12 + $0x308] sm:$0xff] %vm6151, %v6094
    %6250 = vst.msk [vmem:[#allocation12 + $0x310] sm:$0xff] %vm6151, %v6096
    %6251 = vst.msk [vmem:[#allocation12 + $0x318] sm:$0xff] %vm6151, %v6098
    %6252 = vst.msk [vmem:[#allocation12 + $0x320] sm:$0xff] %vm6151, %v6100
    %6253 = vst.msk [vmem:[#allocation12 + $0x328] sm:$0xff] %vm6151, %v6102
    %6254 = vst.msk [vmem:[#allocation12 + $0x330] sm:$0xff] %vm6151, %v6104
    %6255 = vst.msk [vmem:[#allocation12 + $0x338] sm:$0xff] %vm6151, %v6106
    %6256 = vst.msk [vmem:[#allocation12 + $0x340] sm:$0xff] %vm6151, %v6108
    %6257 = vst.msk [vmem:[#allocation12 + $0x348] sm:$0xff] %vm6151, %v6110
    %6258 = vst.msk [vmem:[#allocation12 + $0x350] sm:$0xff] %vm6151, %v6112
    %6259 = vst.msk [vmem:[#allocation12 + $0x358] sm:$0xff] %vm6151, %v6114
    %6260 = vst.msk [vmem:[#allocation12 + $0x360] sm:$0xff] %vm6151, %v6116
    %6261 = vst.msk [vmem:[#allocation12 + $0x368] sm:$0xff] %vm6151, %v6118
    %6262 = vst.msk [vmem:[#allocation12 + $0x370] sm:$0xff] %vm6151, %v6120
    %6263 = vst.msk [vmem:[#allocation12 + $0x378] sm:$0xff] %vm6151, %v6122
    %6264 = vst.msk [vmem:[#allocation12 + $0x380] sm:$0xff] %vm6151, %v6124
    %6265 = vst.msk [vmem:[#allocation12 + $0x388] sm:$0xff] %vm6151, %v6126
    %6266 = vst.msk [vmem:[#allocation12 + $0x390] sm:$0xff] %vm6151, %v6128
    %6267 = vst.msk [vmem:[#allocation12 + $0x398] sm:$0xff] %vm6151, %v6130
    %6268 = vst.msk [vmem:[#allocation12 + $0x3a0] sm:$0xff] %vm6151, %v6132
    %6269 = vst.msk [vmem:[#allocation12 + $0x3a8] sm:$0xff] %vm6151, %v6134
    %6270 = vst.msk [vmem:[#allocation12 + $0x3b0] sm:$0xff] %vm6151, %v6136
    %6271 = vst.msk [vmem:[#allocation12 + $0x3b8] sm:$0xff] %vm6151, %v6138
    %6272 = vst.msk [vmem:[#allocation12 + $0x3c0] sm:$0xff] %vm6151, %v6140
    %6273 = vst.msk [vmem:[#allocation12 + $0x3c8] sm:$0xff] %vm6151, %v6142
    %6274 = vst.msk [vmem:[#allocation12 + $0x3d0] sm:$0xff] %vm6151, %v6144
    %6275 = vst.msk [vmem:[#allocation12 + $0x3d8] sm:$0xff] %vm6151, %v6146
    %6276 = vst.msk [vmem:[#allocation12 + $0x3e0] sm:$0xff] %vm6151, %v6148
    %6277 = vst.msk [vmem:[#allocation12 + $0x3e8] sm:$0xff] %vm6151, %v6150
    // Predicated region
    $region70: #{tpu_custom_call.1} parent=1 // pred_check
      _
    $region71: #{tpu_custom_call.1} parent=1 // pred_check_branch
      %6279 = sbr.rel (0) target = $region73
    $region72: #{tpu_custom_call.1} parent=1 // pred_region
      // Predicated region
      $region74: #{tpu_custom_call.1} parent=72 // pred_check
        _
      $region75: #{tpu_custom_call.1} parent=72 // pred_check_branch
        %6281 = sbr.rel (0) target = $region77
      $region76: #{tpu_custom_call.1} parent=72 // pred_region
        // Predicated region
        $region78: #{tpu_custom_call.1} parent=76 // pred_check
          _
        $region79: #{tpu_custom_call.1} parent=76 // pred_check_branch
          %6283 = sbr.rel (0) target = $region81
        $region80: #{tpu_custom_call.1} parent=76 // pred_region
          // Predicated region
          $region93: #{tpu_custom_call.1} parent=80 // pred_check
            _
          $region94: #{tpu_custom_call.1} parent=80 // pred_check_branch
            %6546 = sbr.rel (0) target = $region96
          $region95: #{tpu_custom_call.1} parent=80 // pred_region
            loop: start=0, step=1, limit=1
            $region97: #{tpu_custom_call.1} parent=95 // loop_pre_header
              _
            $region98: #{tpu_custom_call.1} parent=95 // loop_header
              %s6548 = sphi 0, %s6552
              %p6549 = scmp.ge.s32.totalorder %s6548, 1
              %s6553 = sphi [#allocation12], [#allocation12]
              %s6554 = sphi %s11, %s11
            $region99: #{tpu_custom_call.1} parent=95 // loop_header_branch
              %6551 = sbr.rel (%p6549) target = $region103
            $region100: #{tpu_custom_call.1} parent=95 // loop_body
              %v6555 = vld [vmem:[%s6553] sm:$0xff]
              %6556 = vst [vmem:[%s6554] sm:$0xff] %v6555
              %v6557 = vld [vmem:[%s6553 + $0x8] sm:$0xff]
              %6558 = vst [vmem:[%s6554 + $0x8] sm:$0xff] %v6557
              %v6559 = vld [vmem:[%s6553 + $0x10] sm:$0xff]
              %6560 = vst [vmem:[%s6554 + $0x10] sm:$0xff] %v6559
              %v6561 = vld [vmem:[%s6553 + $0x18] sm:$0xff]
              %6562 = vst [vmem:[%s6554 + $0x18] sm:$0xff] %v6561
              %v6563 = vld [vmem:[%s6553 + $0x20] sm:$0xff]
              %6564 = vst [vmem:[%s6554 + $0x20] sm:$0xff] %v6563
              %v6565 = vld [vmem:[%s6553 + $0x28] sm:$0xff]
              %6566 = vst [vmem:[%s6554 + $0x28] sm:$0xff] %v6565
              %v6567 = vld [vmem:[%s6553 + $0x30] sm:$0xff]
              %6568 = vst [vmem:[%s6554 + $0x30] sm:$0xff] %v6567
              %v6569 = vld [vmem:[%s6553 + $0x38] sm:$0xff]
              %6570 = vst [vmem:[%s6554 + $0x38] sm:$0xff] %v6569
              %v6571 = vld [vmem:[%s6553 + $0x40] sm:$0xff]
              %6572 = vst [vmem:[%s6554 + $0x40] sm:$0xff] %v6571
              %v6573 = vld [vmem:[%s6553 + $0x48] sm:$0xff]
              %6574 = vst [vmem:[%s6554 + $0x48] sm:$0xff] %v6573
              %v6575 = vld [vmem:[%s6553 + $0x50] sm:$0xff]
              %6576 = vst [vmem:[%s6554 + $0x50] sm:$0xff] %v6575
              %v6577 = vld [vmem:[%s6553 + $0x58] sm:$0xff]
              %6578 = vst [vmem:[%s6554 + $0x58] sm:$0xff] %v6577
              %v6579 = vld [vmem:[%s6553 + $0x60] sm:$0xff]
              %6580 = vst [vmem:[%s6554 + $0x60] sm:$0xff] %v6579
              %v6581 = vld [vmem:[%s6553 + $0x68] sm:$0xff]
              %6582 = vst [vmem:[%s6554 + $0x68] sm:$0xff] %v6581
              %v6583 = vld [vmem:[%s6553 + $0x70] sm:$0xff]
              %6584 = vst [vmem:[%s6554 + $0x70] sm:$0xff] %v6583
              %v6585 = vld [vmem:[%s6553 + $0x78] sm:$0xff]
              %6586 = vst [vmem:[%s6554 + $0x78] sm:$0xff] %v6585
              %v6587 = vld [vmem:[%s6553 + $0x80] sm:$0xff]
              %6588 = vst [vmem:[%s6554 + $0x80] sm:$0xff] %v6587
              %v6589 = vld [vmem:[%s6553 + $0x88] sm:$0xff]
              %6590 = vst [vmem:[%s6554 + $0x88] sm:$0xff] %v6589
              %v6591 = vld [vmem:[%s6553 + $0x90] sm:$0xff]
              %6592 = vst [vmem:[%s6554 + $0x90] sm:$0xff] %v6591
              %v6593 = vld [vmem:[%s6553 + $0x98] sm:$0xff]
              %6594 = vst [vmem:[%s6554 + $0x98] sm:$0xff] %v6593
              %v6595 = vld [vmem:[%s6553 + $0xa0] sm:$0xff]
              %6596 = vst [vmem:[%s6554 + $0xa0] sm:$0xff] %v6595
              %v6597 = vld [vmem:[%s6553 + $0xa8] sm:$0xff]
              %6598 = vst [vmem:[%s6554 + $0xa8] sm:$0xff] %v6597
              %v6599 = vld [vmem:[%s6553 + $0xb0] sm:$0xff]
              %6600 = vst [vmem:[%s6554 + $0xb0] sm:$0xff] %v6599
              %v6601 = vld [vmem:[%s6553 + $0xb8] sm:$0xff]
              %6602 = vst [vmem:[%s6554 + $0xb8] sm:$0xff] %v6601
              %v6603 = vld [vmem:[%s6553 + $0xc0] sm:$0xff]
              %6604 = vst [vmem:[%s6554 + $0xc0] sm:$0xff] %v6603
              %v6605 = vld [vmem:[%s6553 + $0xc8] sm:$0xff]
              %6606 = vst [vmem:[%s6554 + $0xc8] sm:$0xff] %v6605
              %v6607 = vld [vmem:[%s6553 + $0xd0] sm:$0xff]
              %6608 = vst [vmem:[%s6554 + $0xd0] sm:$0xff] %v6607
              %v6609 = vld [vmem:[%s6553 + $0xd8] sm:$0xff]
              %6610 = vst [vmem:[%s6554 + $0xd8] sm:$0xff] %v6609
              %v6611 = vld [vmem:[%s6553 + $0xe0] sm:$0xff]
              %6612 = vst [vmem:[%s6554 + $0xe0] sm:$0xff] %v6611
              %v6613 = vld [vmem:[%s6553 + $0xe8] sm:$0xff]
              %6614 = vst [vmem:[%s6554 + $0xe8] sm:$0xff] %v6613
              %v6615 = vld [vmem:[%s6553 + $0xf0] sm:$0xff]
              %6616 = vst [vmem:[%s6554 + $0xf0] sm:$0xff] %v6615
              %v6617 = vld [vmem:[%s6553 + $0xf8] sm:$0xff]
              %6618 = vst [vmem:[%s6554 + $0xf8] sm:$0xff] %v6617
              %v6619 = vld [vmem:[%s6553 + $0x100] sm:$0xff]
              %6620 = vst [vmem:[%s6554 + $0x100] sm:$0xff] %v6619
              %v6621 = vld [vmem:[%s6553 + $0x108] sm:$0xff]
              %6622 = vst [vmem:[%s6554 + $0x108] sm:$0xff] %v6621
              %v6623 = vld [vmem:[%s6553 + $0x110] sm:$0xff]
              %6624 = vst [vmem:[%s6554 + $0x110] sm:$0xff] %v6623
              %v6625 = vld [vmem:[%s6553 + $0x118] sm:$0xff]
              %6626 = vst [vmem:[%s6554 + $0x118] sm:$0xff] %v6625
              %v6627 = vld [vmem:[%s6553 + $0x120] sm:$0xff]
              %6628 = vst [vmem:[%s6554 + $0x120] sm:$0xff] %v6627
              %v6629 = vld [vmem:[%s6553 + $0x128] sm:$0xff]
              %6630 = vst [vmem:[%s6554 + $0x128] sm:$0xff] %v6629
              %v6631 = vld [vmem:[%s6553 + $0x130] sm:$0xff]
              %6632 = vst [vmem:[%s6554 + $0x130] sm:$0xff] %v6631
              %v6633 = vld [vmem:[%s6553 + $0x138] sm:$0xff]
              %6634 = vst [vmem:[%s6554 + $0x138] sm:$0xff] %v6633
              %v6635 = vld [vmem:[%s6553 + $0x140] sm:$0xff]
              %6636 = vst [vmem:[%s6554 + $0x140] sm:$0xff] %v6635
              %v6637 = vld [vmem:[%s6553 + $0x148] sm:$0xff]
              %6638 = vst [vmem:[%s6554 + $0x148] sm:$0xff] %v6637
              %v6639 = vld [vmem:[%s6553 + $0x150] sm:$0xff]
              %6640 = vst [vmem:[%s6554 + $0x150] sm:$0xff] %v6639
              %v6641 = vld [vmem:[%s6553 + $0x158] sm:$0xff]
              %6642 = vst [vmem:[%s6554 + $0x158] sm:$0xff] %v6641
              %v6643 = vld [vmem:[%s6553 + $0x160] sm:$0xff]
              %6644 = vst [vmem:[%s6554 + $0x160] sm:$0xff] %v6643
              %v6645 = vld [vmem:[%s6553 + $0x168] sm:$0xff]
              %6646 = vst [vmem:[%s6554 + $0x168] sm:$0xff] %v6645
              %v6647 = vld [vmem:[%s6553 + $0x170] sm:$0xff]
              %6648 = vst [vmem:[%s6554 + $0x170] sm:$0xff] %v6647
              %v6649 = vld [vmem:[%s6553 + $0x178] sm:$0xff]
              %6650 = vst [vmem:[%s6554 + $0x178] sm:$0xff] %v6649
              %v6651 = vld [vmem:[%s6553 + $0x180] sm:$0xff]
              %6652 = vst [vmem:[%s6554 + $0x180] sm:$0xff] %v6651
              %v6653 = vld [vmem:[%s6553 + $0x188] sm:$0xff]
              %6654 = vst [vmem:[%s6554 + $0x188] sm:$0xff] %v6653
              %v6655 = vld [vmem:[%s6553 + $0x190] sm:$0xff]
              %6656 = vst [vmem:[%s6554 + $0x190] sm:$0xff] %v6655
              %v6657 = vld [vmem:[%s6553 + $0x198] sm:$0xff]
              %6658 = vst [vmem:[%s6554 + $0x198] sm:$0xff] %v6657
              %v6659 = vld [vmem:[%s6553 + $0x1a0] sm:$0xff]
              %6660 = vst [vmem:[%s6554 + $0x1a0] sm:$0xff] %v6659
              %v6661 = vld [vmem:[%s6553 + $0x1a8] sm:$0xff]
              %6662 = vst [vmem:[%s6554 + $0x1a8] sm:$0xff] %v6661
              %v6663 = vld [vmem:[%s6553 + $0x1b0] sm:$0xff]
              %6664 = vst [vmem:[%s6554 + $0x1b0] sm:$0xff] %v6663
              %v6665 = vld [vmem:[%s6553 + $0x1b8] sm:$0xff]
              %6666 = vst [vmem:[%s6554 + $0x1b8] sm:$0xff] %v6665
              %v6667 = vld [vmem:[%s6553 + $0x1c0] sm:$0xff]
              %6668 = vst [vmem:[%s6554 + $0x1c0] sm:$0xff] %v6667
              %v6669 = vld [vmem:[%s6553 + $0x1c8] sm:$0xff]
              %6670 = vst [vmem:[%s6554 + $0x1c8] sm:$0xff] %v6669
              %v6671 = vld [vmem:[%s6553 + $0x1d0] sm:$0xff]
              %6672 = vst [vmem:[%s6554 + $0x1d0] sm:$0xff] %v6671
              %v6673 = vld [vmem:[%s6553 + $0x1d8] sm:$0xff]
              %6674 = vst [vmem:[%s6554 + $0x1d8] sm:$0xff] %v6673
              %v6675 = vld [vmem:[%s6553 + $0x1e0] sm:$0xff]
              %6676 = vst [vmem:[%s6554 + $0x1e0] sm:$0xff] %v6675
              %v6677 = vld [vmem:[%s6553 + $0x1e8] sm:$0xff]
              %6678 = vst [vmem:[%s6554 + $0x1e8] sm:$0xff] %v6677
              %v6679 = vld [vmem:[%s6553 + $0x1f0] sm:$0xff]
              %6680 = vst [vmem:[%s6554 + $0x1f0] sm:$0xff] %v6679
              %v6681 = vld [vmem:[%s6553 + $0x1f8] sm:$0xff]
              %6682 = vst [vmem:[%s6554 + $0x1f8] sm:$0xff] %v6681
              %v6683 = vld [vmem:[%s6553 + $0x200] sm:$0xff]
              %6684 = vst [vmem:[%s6554 + $0x200] sm:$0xff] %v6683
              %v6685 = vld [vmem:[%s6553 + $0x208] sm:$0xff]
              %6686 = vst [vmem:[%s6554 + $0x208] sm:$0xff] %v6685
              %v6687 = vld [vmem:[%s6553 + $0x210] sm:$0xff]
              %6688 = vst [vmem:[%s6554 + $0x210] sm:$0xff] %v6687
              %v6689 = vld [vmem:[%s6553 + $0x218] sm:$0xff]
              %6690 = vst [vmem:[%s6554 + $0x218] sm:$0xff] %v6689
              %v6691 = vld [vmem:[%s6553 + $0x220] sm:$0xff]
              %6692 = vst [vmem:[%s6554 + $0x220] sm:$0xff] %v6691
              %v6693 = vld [vmem:[%s6553 + $0x228] sm:$0xff]
              %6694 = vst [vmem:[%s6554 + $0x228] sm:$0xff] %v6693
              %v6695 = vld [vmem:[%s6553 + $0x230] sm:$0xff]
              %6696 = vst [vmem:[%s6554 + $0x230] sm:$0xff] %v6695
              %v6697 = vld [vmem:[%s6553 + $0x238] sm:$0xff]
              %6698 = vst [vmem:[%s6554 + $0x238] sm:$0xff] %v6697
              %v6699 = vld [vmem:[%s6553 + $0x240] sm:$0xff]
              %6700 = vst [vmem:[%s6554 + $0x240] sm:$0xff] %v6699
              %v6701 = vld [vmem:[%s6553 + $0x248] sm:$0xff]
              %6702 = vst [vmem:[%s6554 + $0x248] sm:$0xff] %v6701
              %v6703 = vld [vmem:[%s6553 + $0x250] sm:$0xff]
              %6704 = vst [vmem:[%s6554 + $0x250] sm:$0xff] %v6703
              %v6705 = vld [vmem:[%s6553 + $0x258] sm:$0xff]
              %6706 = vst [vmem:[%s6554 + $0x258] sm:$0xff] %v6705
              %v6707 = vld [vmem:[%s6553 + $0x260] sm:$0xff]
              %6708 = vst [vmem:[%s6554 + $0x260] sm:$0xff] %v6707
              %v6709 = vld [vmem:[%s6553 + $0x268] sm:$0xff]
              %6710 = vst [vmem:[%s6554 + $0x268] sm:$0xff] %v6709
              %v6711 = vld [vmem:[%s6553 + $0x270] sm:$0xff]
              %6712 = vst [vmem:[%s6554 + $0x270] sm:$0xff] %v6711
              %v6713 = vld [vmem:[%s6553 + $0x278] sm:$0xff]
              %6714 = vst [vmem:[%s6554 + $0x278] sm:$0xff] %v6713
              %v6715 = vld [vmem:[%s6553 + $0x280] sm:$0xff]
              %6716 = vst [vmem:[%s6554 + $0x280] sm:$0xff] %v6715
              %v6717 = vld [vmem:[%s6553 + $0x288] sm:$0xff]
              %6718 = vst [vmem:[%s6554 + $0x288] sm:$0xff] %v6717
              %v6719 = vld [vmem:[%s6553 + $0x290] sm:$0xff]
              %6720 = vst [vmem:[%s6554 + $0x290] sm:$0xff] %v6719
              %v6721 = vld [vmem:[%s6553 + $0x298] sm:$0xff]
              %6722 = vst [vmem:[%s6554 + $0x298] sm:$0xff] %v6721
              %v6723 = vld [vmem:[%s6553 + $0x2a0] sm:$0xff]
              %6724 = vst [vmem:[%s6554 + $0x2a0] sm:$0xff] %v6723
              %v6725 = vld [vmem:[%s6553 + $0x2a8] sm:$0xff]
              %6726 = vst [vmem:[%s6554 + $0x2a8] sm:$0xff] %v6725
              %v6727 = vld [vmem:[%s6553 + $0x2b0] sm:$0xff]
              %6728 = vst [vmem:[%s6554 + $0x2b0] sm:$0xff] %v6727
              %v6729 = vld [vmem:[%s6553 + $0x2b8] sm:$0xff]
              %6730 = vst [vmem:[%s6554 + $0x2b8] sm:$0xff] %v6729
              %v6731 = vld [vmem:[%s6553 + $0x2c0] sm:$0xff]
              %6732 = vst [vmem:[%s6554 + $0x2c0] sm:$0xff] %v6731
              %v6733 = vld [vmem:[%s6553 + $0x2c8] sm:$0xff]
              %6734 = vst [vmem:[%s6554 + $0x2c8] sm:$0xff] %v6733
              %v6735 = vld [vmem:[%s6553 + $0x2d0] sm:$0xff]
              %6736 = vst [vmem:[%s6554 + $0x2d0] sm:$0xff] %v6735
              %v6737 = vld [vmem:[%s6553 + $0x2d8] sm:$0xff]
              %6738 = vst [vmem:[%s6554 + $0x2d8] sm:$0xff] %v6737
              %v6739 = vld [vmem:[%s6553 + $0x2e0] sm:$0xff]
              %6740 = vst [vmem:[%s6554 + $0x2e0] sm:$0xff] %v6739
              %v6741 = vld [vmem:[%s6553 + $0x2e8] sm:$0xff]
              %6742 = vst [vmem:[%s6554 + $0x2e8] sm:$0xff] %v6741
              %v6743 = vld [vmem:[%s6553 + $0x2f0] sm:$0xff]
              %6744 = vst [vmem:[%s6554 + $0x2f0] sm:$0xff] %v6743
              %v6745 = vld [vmem:[%s6553 + $0x2f8] sm:$0xff]
              %6746 = vst [vmem:[%s6554 + $0x2f8] sm:$0xff] %v6745
              %v6747 = vld [vmem:[%s6553 + $0x300] sm:$0xff]
              %6748 = vst [vmem:[%s6554 + $0x300] sm:$0xff] %v6747
              %v6749 = vld [vmem:[%s6553 + $0x308] sm:$0xff]
              %6750 = vst [vmem:[%s6554 + $0x308] sm:$0xff] %v6749
              %v6751 = vld [vmem:[%s6553 + $0x310] sm:$0xff]
              %6752 = vst [vmem:[%s6554 + $0x310] sm:$0xff] %v6751
              %v6753 = vld [vmem:[%s6553 + $0x318] sm:$0xff]
              %6754 = vst [vmem:[%s6554 + $0x318] sm:$0xff] %v6753
              %v6755 = vld [vmem:[%s6553 + $0x320] sm:$0xff]
              %6756 = vst [vmem:[%s6554 + $0x320] sm:$0xff] %v6755
              %v6757 = vld [vmem:[%s6553 + $0x328] sm:$0xff]
              %6758 = vst [vmem:[%s6554 + $0x328] sm:$0xff] %v6757
              %v6759 = vld [vmem:[%s6553 + $0x330] sm:$0xff]
              %6760 = vst [vmem:[%s6554 + $0x330] sm:$0xff] %v6759
              %v6761 = vld [vmem:[%s6553 + $0x338] sm:$0xff]
              %6762 = vst [vmem:[%s6554 + $0x338] sm:$0xff] %v6761
              %v6763 = vld [vmem:[%s6553 + $0x340] sm:$0xff]
              %6764 = vst [vmem:[%s6554 + $0x340] sm:$0xff] %v6763
              %v6765 = vld [vmem:[%s6553 + $0x348] sm:$0xff]
              %6766 = vst [vmem:[%s6554 + $0x348] sm:$0xff] %v6765
              %v6767 = vld [vmem:[%s6553 + $0x350] sm:$0xff]
              %6768 = vst [vmem:[%s6554 + $0x350] sm:$0xff] %v6767
              %v6769 = vld [vmem:[%s6553 + $0x358] sm:$0xff]
              %6770 = vst [vmem:[%s6554 + $0x358] sm:$0xff] %v6769
              %v6771 = vld [vmem:[%s6553 + $0x360] sm:$0xff]
              %6772 = vst [vmem:[%s6554 + $0x360] sm:$0xff] %v6771
              %v6773 = vld [vmem:[%s6553 + $0x368] sm:$0xff]
              %6774 = vst [vmem:[%s6554 + $0x368] sm:$0xff] %v6773
              %v6775 = vld [vmem:[%s6553 + $0x370] sm:$0xff]
              %6776 = vst [vmem:[%s6554 + $0x370] sm:$0xff] %v6775
              %v6777 = vld [vmem:[%s6553 + $0x378] sm:$0xff]
              %6778 = vst [vmem:[%s6554 + $0x378] sm:$0xff] %v6777
              %v6779 = vld [vmem:[%s6553 + $0x380] sm:$0xff]
              %6780 = vst [vmem:[%s6554 + $0x380] sm:$0xff] %v6779
              %v6781 = vld [vmem:[%s6553 + $0x388] sm:$0xff]
              %6782 = vst [vmem:[%s6554 + $0x388] sm:$0xff] %v6781
              %v6783 = vld [vmem:[%s6553 + $0x390] sm:$0xff]
              %6784 = vst [vmem:[%s6554 + $0x390] sm:$0xff] %v6783
              %v6785 = vld [vmem:[%s6553 + $0x398] sm:$0xff]
              %6786 = vst [vmem:[%s6554 + $0x398] sm:$0xff] %v6785
              %v6787 = vld [vmem:[%s6553 + $0x3a0] sm:$0xff]
              %6788 = vst [vmem:[%s6554 + $0x3a0] sm:$0xff] %v6787
              %v6789 = vld [vmem:[%s6553 + $0x3a8] sm:$0xff]
              %6790 = vst [vmem:[%s6554 + $0x3a8] sm:$0xff] %v6789
              %v6791 = vld [vmem:[%s6553 + $0x3b0] sm:$0xff]
              %6792 = vst [vmem:[%s6554 + $0x3b0] sm:$0xff] %v6791
              %v6793 = vld [vmem:[%s6553 + $0x3b8] sm:$0xff]
              %6794 = vst [vmem:[%s6554 + $0x3b8] sm:$0xff] %v6793
              %v6795 = vld [vmem:[%s6553 + $0x3c0] sm:$0xff]
              %6796 = vst [vmem:[%s6554 + $0x3c0] sm:$0xff] %v6795
              %v6797 = vld [vmem:[%s6553 + $0x3c8] sm:$0xff]
              %6798 = vst [vmem:[%s6554 + $0x3c8] sm:$0xff] %v6797
              %v6799 = vld [vmem:[%s6553 + $0x3d0] sm:$0xff]
              %6800 = vst [vmem:[%s6554 + $0x3d0] sm:$0xff] %v6799
              %v6801 = vld [vmem:[%s6553 + $0x3d8] sm:$0xff]
              %6802 = vst [vmem:[%s6554 + $0x3d8] sm:$0xff] %v6801
              %v6803 = vld [vmem:[%s6553 + $0x3e0] sm:$0xff]
              %6804 = vst [vmem:[%s6554 + $0x3e0] sm:$0xff] %v6803
            $region101: #{tpu_custom_call.1} parent=95 // loop_footer
              %s6552 = sadd.s32 1, %s6548
            $region102: #{tpu_custom_call.1} parent=95 // loop_footer_branch
              %6547 = sbr.rel target = $region98
            $region103: #{tpu_custom_call.1} parent=95 // loop_exit
              _
          $region96: #{tpu_custom_call.1} parent=80 // pred_fallthru
            _
          // Predicated region
          $region104: #{tpu_custom_call.1} parent=80 // pred_check
            _
          $region105: #{tpu_custom_call.1} parent=80 // pred_check_branch
            %6806 = sbr.rel target = $region107
          $region106: #{tpu_custom_call.1} parent=80 // pred_region
            _
          $region107: #{tpu_custom_call.1} parent=80 // pred_fallthru
            _
        $region81: #{tpu_custom_call.1} parent=76 // pred_fallthru
          _
        // Predicated region
        $region82: #{tpu_custom_call.1} parent=76 // pred_check
          _
        $region83: #{tpu_custom_call.1} parent=76 // pred_check_branch
          %6285 = sbr.rel target = $region85
        $region84: #{tpu_custom_call.1} parent=76 // pred_region
          loop: start=0, step=1, limit=1
          $region86: #{tpu_custom_call.1} parent=84 // loop_pre_header
            _
          $region87: #{tpu_custom_call.1} parent=84 // loop_header
            %s6288 = sphi 0, %s6292
            %p6289 = scmp.ge.s32.totalorder %s6288, 1
            %s6293 = sphi [#allocation12], [#allocation12]
            %s6294 = sphi %s11, %s11
          $region88: #{tpu_custom_call.1} parent=84 // loop_header_branch
            %6291 = sbr.rel (%p6289) target = $region92
          $region89: #{tpu_custom_call.1} parent=84 // loop_body
            %v6295 = vld [vmem:[%s6293] sm:$0xff]
            %6296 = vst [vmem:[%s6294] sm:$0xff] %v6295
            %v6297 = vld [vmem:[%s6293 + $0x8] sm:$0xff]
            %6298 = vst [vmem:[%s6294 + $0x8] sm:$0xff] %v6297
            %v6299 = vld [vmem:[%s6293 + $0x10] sm:$0xff]
            %6300 = vst [vmem:[%s6294 + $0x10] sm:$0xff] %v6299
            %v6301 = vld [vmem:[%s6293 + $0x18] sm:$0xff]
            %6302 = vst [vmem:[%s6294 + $0x18] sm:$0xff] %v6301
            %v6303 = vld [vmem:[%s6293 + $0x20] sm:$0xff]
            %6304 = vst [vmem:[%s6294 + $0x20] sm:$0xff] %v6303
            %v6305 = vld [vmem:[%s6293 + $0x28] sm:$0xff]
            %6306 = vst [vmem:[%s6294 + $0x28] sm:$0xff] %v6305
            %v6307 = vld [vmem:[%s6293 + $0x30] sm:$0xff]
            %6308 = vst [vmem:[%s6294 + $0x30] sm:$0xff] %v6307
            %v6309 = vld [vmem:[%s6293 + $0x38] sm:$0xff]
            %6310 = vst [vmem:[%s6294 + $0x38] sm:$0xff] %v6309
            %v6311 = vld [vmem:[%s6293 + $0x40] sm:$0xff]
            %6312 = vst [vmem:[%s6294 + $0x40] sm:$0xff] %v6311
            %v6313 = vld [vmem:[%s6293 + $0x48] sm:$0xff]
            %6314 = vst [vmem:[%s6294 + $0x48] sm:$0xff] %v6313
            %v6315 = vld [vmem:[%s6293 + $0x50] sm:$0xff]
            %6316 = vst [vmem:[%s6294 + $0x50] sm:$0xff] %v6315
            %v6317 = vld [vmem:[%s6293 + $0x58] sm:$0xff]
            %6318 = vst [vmem:[%s6294 + $0x58] sm:$0xff] %v6317
            %v6319 = vld [vmem:[%s6293 + $0x60] sm:$0xff]
            %6320 = vst [vmem:[%s6294 + $0x60] sm:$0xff] %v6319
            %v6321 = vld [vmem:[%s6293 + $0x68] sm:$0xff]
            %6322 = vst [vmem:[%s6294 + $0x68] sm:$0xff] %v6321
            %v6323 = vld [vmem:[%s6293 + $0x70] sm:$0xff]
            %6324 = vst [vmem:[%s6294 + $0x70] sm:$0xff] %v6323
            %v6325 = vld [vmem:[%s6293 + $0x78] sm:$0xff]
            %6326 = vst [vmem:[%s6294 + $0x78] sm:$0xff] %v6325
            %v6327 = vld [vmem:[%s6293 + $0x80] sm:$0xff]
            %6328 = vst [vmem:[%s6294 + $0x80] sm:$0xff] %v6327
            %v6329 = vld [vmem:[%s6293 + $0x88] sm:$0xff]
            %6330 = vst [vmem:[%s6294 + $0x88] sm:$0xff] %v6329
            %v6331 = vld [vmem:[%s6293 + $0x90] sm:$0xff]
            %6332 = vst [vmem:[%s6294 + $0x90] sm:$0xff] %v6331
            %v6333 = vld [vmem:[%s6293 + $0x98] sm:$0xff]
            %6334 = vst [vmem:[%s6294 + $0x98] sm:$0xff] %v6333
            %v6335 = vld [vmem:[%s6293 + $0xa0] sm:$0xff]
            %6336 = vst [vmem:[%s6294 + $0xa0] sm:$0xff] %v6335
            %v6337 = vld [vmem:[%s6293 + $0xa8] sm:$0xff]
            %6338 = vst [vmem:[%s6294 + $0xa8] sm:$0xff] %v6337
            %v6339 = vld [vmem:[%s6293 + $0xb0] sm:$0xff]
            %6340 = vst [vmem:[%s6294 + $0xb0] sm:$0xff] %v6339
            %v6341 = vld [vmem:[%s6293 + $0xb8] sm:$0xff]
            %6342 = vst [vmem:[%s6294 + $0xb8] sm:$0xff] %v6341
            %v6343 = vld [vmem:[%s6293 + $0xc0] sm:$0xff]
            %6344 = vst [vmem:[%s6294 + $0xc0] sm:$0xff] %v6343
            %v6345 = vld [vmem:[%s6293 + $0xc8] sm:$0xff]
            %6346 = vst [vmem:[%s6294 + $0xc8] sm:$0xff] %v6345
            %v6347 = vld [vmem:[%s6293 + $0xd0] sm:$0xff]
            %6348 = vst [vmem:[%s6294 + $0xd0] sm:$0xff] %v6347
            %v6349 = vld [vmem:[%s6293 + $0xd8] sm:$0xff]
            %6350 = vst [vmem:[%s6294 + $0xd8] sm:$0xff] %v6349
            %v6351 = vld [vmem:[%s6293 + $0xe0] sm:$0xff]
            %6352 = vst [vmem:[%s6294 + $0xe0] sm:$0xff] %v6351
            %v6353 = vld [vmem:[%s6293 + $0xe8] sm:$0xff]
            %6354 = vst [vmem:[%s6294 + $0xe8] sm:$0xff] %v6353
            %v6355 = vld [vmem:[%s6293 + $0xf0] sm:$0xff]
            %6356 = vst [vmem:[%s6294 + $0xf0] sm:$0xff] %v6355
            %v6357 = vld [vmem:[%s6293 + $0xf8] sm:$0xff]
            %6358 = vst [vmem:[%s6294 + $0xf8] sm:$0xff] %v6357
            %v6359 = vld [vmem:[%s6293 + $0x100] sm:$0xff]
            %6360 = vst [vmem:[%s6294 + $0x100] sm:$0xff] %v6359
            %v6361 = vld [vmem:[%s6293 + $0x108] sm:$0xff]
            %6362 = vst [vmem:[%s6294 + $0x108] sm:$0xff] %v6361
            %v6363 = vld [vmem:[%s6293 + $0x110] sm:$0xff]
            %6364 = vst [vmem:[%s6294 + $0x110] sm:$0xff] %v6363
            %v6365 = vld [vmem:[%s6293 + $0x118] sm:$0xff]
            %6366 = vst [vmem:[%s6294 + $0x118] sm:$0xff] %v6365
            %v6367 = vld [vmem:[%s6293 + $0x120] sm:$0xff]
            %6368 = vst [vmem:[%s6294 + $0x120] sm:$0xff] %v6367
            %v6369 = vld [vmem:[%s6293 + $0x128] sm:$0xff]
            %6370 = vst [vmem:[%s6294 + $0x128] sm:$0xff] %v6369
            %v6371 = vld [vmem:[%s6293 + $0x130] sm:$0xff]
            %6372 = vst [vmem:[%s6294 + $0x130] sm:$0xff] %v6371
            %v6373 = vld [vmem:[%s6293 + $0x138] sm:$0xff]
            %6374 = vst [vmem:[%s6294 + $0x138] sm:$0xff] %v6373
            %v6375 = vld [vmem:[%s6293 + $0x140] sm:$0xff]
            %6376 = vst [vmem:[%s6294 + $0x140] sm:$0xff] %v6375
            %v6377 = vld [vmem:[%s6293 + $0x148] sm:$0xff]
            %6378 = vst [vmem:[%s6294 + $0x148] sm:$0xff] %v6377
            %v6379 = vld [vmem:[%s6293 + $0x150] sm:$0xff]
            %6380 = vst [vmem:[%s6294 + $0x150] sm:$0xff] %v6379
            %v6381 = vld [vmem:[%s6293 + $0x158] sm:$0xff]
            %6382 = vst [vmem:[%s6294 + $0x158] sm:$0xff] %v6381
            %v6383 = vld [vmem:[%s6293 + $0x160] sm:$0xff]
            %6384 = vst [vmem:[%s6294 + $0x160] sm:$0xff] %v6383
            %v6385 = vld [vmem:[%s6293 + $0x168] sm:$0xff]
            %6386 = vst [vmem:[%s6294 + $0x168] sm:$0xff] %v6385
            %v6387 = vld [vmem:[%s6293 + $0x170] sm:$0xff]
            %6388 = vst [vmem:[%s6294 + $0x170] sm:$0xff] %v6387
            %v6389 = vld [vmem:[%s6293 + $0x178] sm:$0xff]
            %6390 = vst [vmem:[%s6294 + $0x178] sm:$0xff] %v6389
            %v6391 = vld [vmem:[%s6293 + $0x180] sm:$0xff]
            %6392 = vst [vmem:[%s6294 + $0x180] sm:$0xff] %v6391
            %v6393 = vld [vmem:[%s6293 + $0x188] sm:$0xff]
            %6394 = vst [vmem:[%s6294 + $0x188] sm:$0xff] %v6393
            %v6395 = vld [vmem:[%s6293 + $0x190] sm:$0xff]
            %6396 = vst [vmem:[%s6294 + $0x190] sm:$0xff] %v6395
            %v6397 = vld [vmem:[%s6293 + $0x198] sm:$0xff]
            %6398 = vst [vmem:[%s6294 + $0x198] sm:$0xff] %v6397
            %v6399 = vld [vmem:[%s6293 + $0x1a0] sm:$0xff]
            %6400 = vst [vmem:[%s6294 + $0x1a0] sm:$0xff] %v6399
            %v6401 = vld [vmem:[%s6293 + $0x1a8] sm:$0xff]
            %6402 = vst [vmem:[%s6294 + $0x1a8] sm:$0xff] %v6401
            %v6403 = vld [vmem:[%s6293 + $0x1b0] sm:$0xff]
            %6404 = vst [vmem:[%s6294 + $0x1b0] sm:$0xff] %v6403
            %v6405 = vld [vmem:[%s6293 + $0x1b8] sm:$0xff]
            %6406 = vst [vmem:[%s6294 + $0x1b8] sm:$0xff] %v6405
            %v6407 = vld [vmem:[%s6293 + $0x1c0] sm:$0xff]
            %6408 = vst [vmem:[%s6294 + $0x1c0] sm:$0xff] %v6407
            %v6409 = vld [vmem:[%s6293 + $0x1c8] sm:$0xff]
            %6410 = vst [vmem:[%s6294 + $0x1c8] sm:$0xff] %v6409
            %v6411 = vld [vmem:[%s6293 + $0x1d0] sm:$0xff]
            %6412 = vst [vmem:[%s6294 + $0x1d0] sm:$0xff] %v6411
            %v6413 = vld [vmem:[%s6293 + $0x1d8] sm:$0xff]
            %6414 = vst [vmem:[%s6294 + $0x1d8] sm:$0xff] %v6413
            %v6415 = vld [vmem:[%s6293 + $0x1e0] sm:$0xff]
            %6416 = vst [vmem:[%s6294 + $0x1e0] sm:$0xff] %v6415
            %v6417 = vld [vmem:[%s6293 + $0x1e8] sm:$0xff]
            %6418 = vst [vmem:[%s6294 + $0x1e8] sm:$0xff] %v6417
            %v6419 = vld [vmem:[%s6293 + $0x1f0] sm:$0xff]
            %6420 = vst [vmem:[%s6294 + $0x1f0] sm:$0xff] %v6419
            %v6421 = vld [vmem:[%s6293 + $0x1f8] sm:$0xff]
            %6422 = vst [vmem:[%s6294 + $0x1f8] sm:$0xff] %v6421
            %v6423 = vld [vmem:[%s6293 + $0x200] sm:$0xff]
            %6424 = vst [vmem:[%s6294 + $0x200] sm:$0xff] %v6423
            %v6425 = vld [vmem:[%s6293 + $0x208] sm:$0xff]
            %6426 = vst [vmem:[%s6294 + $0x208] sm:$0xff] %v6425
            %v6427 = vld [vmem:[%s6293 + $0x210] sm:$0xff]
            %6428 = vst [vmem:[%s6294 + $0x210] sm:$0xff] %v6427
            %v6429 = vld [vmem:[%s6293 + $0x218] sm:$0xff]
            %6430 = vst [vmem:[%s6294 + $0x218] sm:$0xff] %v6429
            %v6431 = vld [vmem:[%s6293 + $0x220] sm:$0xff]
            %6432 = vst [vmem:[%s6294 + $0x220] sm:$0xff] %v6431
            %v6433 = vld [vmem:[%s6293 + $0x228] sm:$0xff]
            %6434 = vst [vmem:[%s6294 + $0x228] sm:$0xff] %v6433
            %v6435 = vld [vmem:[%s6293 + $0x230] sm:$0xff]
            %6436 = vst [vmem:[%s6294 + $0x230] sm:$0xff] %v6435
            %v6437 = vld [vmem:[%s6293 + $0x238] sm:$0xff]
            %6438 = vst [vmem:[%s6294 + $0x238] sm:$0xff] %v6437
            %v6439 = vld [vmem:[%s6293 + $0x240] sm:$0xff]
            %6440 = vst [vmem:[%s6294 + $0x240] sm:$0xff] %v6439
            %v6441 = vld [vmem:[%s6293 + $0x248] sm:$0xff]
            %6442 = vst [vmem:[%s6294 + $0x248] sm:$0xff] %v6441
            %v6443 = vld [vmem:[%s6293 + $0x250] sm:$0xff]
            %6444 = vst [vmem:[%s6294 + $0x250] sm:$0xff] %v6443
            %v6445 = vld [vmem:[%s6293 + $0x258] sm:$0xff]
            %6446 = vst [vmem:[%s6294 + $0x258] sm:$0xff] %v6445
            %v6447 = vld [vmem:[%s6293 + $0x260] sm:$0xff]
            %6448 = vst [vmem:[%s6294 + $0x260] sm:$0xff] %v6447
            %v6449 = vld [vmem:[%s6293 + $0x268] sm:$0xff]
            %6450 = vst [vmem:[%s6294 + $0x268] sm:$0xff] %v6449
            %v6451 = vld [vmem:[%s6293 + $0x270] sm:$0xff]
            %6452 = vst [vmem:[%s6294 + $0x270] sm:$0xff] %v6451
            %v6453 = vld [vmem:[%s6293 + $0x278] sm:$0xff]
            %6454 = vst [vmem:[%s6294 + $0x278] sm:$0xff] %v6453
            %v6455 = vld [vmem:[%s6293 + $0x280] sm:$0xff]
            %6456 = vst [vmem:[%s6294 + $0x280] sm:$0xff] %v6455
            %v6457 = vld [vmem:[%s6293 + $0x288] sm:$0xff]
            %6458 = vst [vmem:[%s6294 + $0x288] sm:$0xff] %v6457
            %v6459 = vld [vmem:[%s6293 + $0x290] sm:$0xff]
            %6460 = vst [vmem:[%s6294 + $0x290] sm:$0xff] %v6459
            %v6461 = vld [vmem:[%s6293 + $0x298] sm:$0xff]
            %6462 = vst [vmem:[%s6294 + $0x298] sm:$0xff] %v6461
            %v6463 = vld [vmem:[%s6293 + $0x2a0] sm:$0xff]
            %6464 = vst [vmem:[%s6294 + $0x2a0] sm:$0xff] %v6463
            %v6465 = vld [vmem:[%s6293 + $0x2a8] sm:$0xff]
            %6466 = vst [vmem:[%s6294 + $0x2a8] sm:$0xff] %v6465
            %v6467 = vld [vmem:[%s6293 + $0x2b0] sm:$0xff]
            %6468 = vst [vmem:[%s6294 + $0x2b0] sm:$0xff] %v6467
            %v6469 = vld [vmem:[%s6293 + $0x2b8] sm:$0xff]
            %6470 = vst [vmem:[%s6294 + $0x2b8] sm:$0xff] %v6469
            %v6471 = vld [vmem:[%s6293 + $0x2c0] sm:$0xff]
            %6472 = vst [vmem:[%s6294 + $0x2c0] sm:$0xff] %v6471
            %v6473 = vld [vmem:[%s6293 + $0x2c8] sm:$0xff]
            %6474 = vst [vmem:[%s6294 + $0x2c8] sm:$0xff] %v6473
            %v6475 = vld [vmem:[%s6293 + $0x2d0] sm:$0xff]
            %6476 = vst [vmem:[%s6294 + $0x2d0] sm:$0xff] %v6475
            %v6477 = vld [vmem:[%s6293 + $0x2d8] sm:$0xff]
            %6478 = vst [vmem:[%s6294 + $0x2d8] sm:$0xff] %v6477
            %v6479 = vld [vmem:[%s6293 + $0x2e0] sm:$0xff]
            %6480 = vst [vmem:[%s6294 + $0x2e0] sm:$0xff] %v6479
            %v6481 = vld [vmem:[%s6293 + $0x2e8] sm:$0xff]
            %6482 = vst [vmem:[%s6294 + $0x2e8] sm:$0xff] %v6481
            %v6483 = vld [vmem:[%s6293 + $0x2f0] sm:$0xff]
            %6484 = vst [vmem:[%s6294 + $0x2f0] sm:$0xff] %v6483
            %v6485 = vld [vmem:[%s6293 + $0x2f8] sm:$0xff]
            %6486 = vst [vmem:[%s6294 + $0x2f8] sm:$0xff] %v6485
            %v6487 = vld [vmem:[%s6293 + $0x300] sm:$0xff]
            %6488 = vst [vmem:[%s6294 + $0x300] sm:$0xff] %v6487
            %v6489 = vld [vmem:[%s6293 + $0x308] sm:$0xff]
            %6490 = vst [vmem:[%s6294 + $0x308] sm:$0xff] %v6489
            %v6491 = vld [vmem:[%s6293 + $0x310] sm:$0xff]
            %6492 = vst [vmem:[%s6294 + $0x310] sm:$0xff] %v6491
            %v6493 = vld [vmem:[%s6293 + $0x318] sm:$0xff]
            %6494 = vst [vmem:[%s6294 + $0x318] sm:$0xff] %v6493
            %v6495 = vld [vmem:[%s6293 + $0x320] sm:$0xff]
            %6496 = vst [vmem:[%s6294 + $0x320] sm:$0xff] %v6495
            %v6497 = vld [vmem:[%s6293 + $0x328] sm:$0xff]
            %6498 = vst [vmem:[%s6294 + $0x328] sm:$0xff] %v6497
            %v6499 = vld [vmem:[%s6293 + $0x330] sm:$0xff]
            %6500 = vst [vmem:[%s6294 + $0x330] sm:$0xff] %v6499
            %v6501 = vld [vmem:[%s6293 + $0x338] sm:$0xff]
            %6502 = vst [vmem:[%s6294 + $0x338] sm:$0xff] %v6501
            %v6503 = vld [vmem:[%s6293 + $0x340] sm:$0xff]
            %6504 = vst [vmem:[%s6294 + $0x340] sm:$0xff] %v6503
            %v6505 = vld [vmem:[%s6293 + $0x348] sm:$0xff]
            %6506 = vst [vmem:[%s6294 + $0x348] sm:$0xff] %v6505
            %v6507 = vld [vmem:[%s6293 + $0x350] sm:$0xff]
            %6508 = vst [vmem:[%s6294 + $0x350] sm:$0xff] %v6507
            %v6509 = vld [vmem:[%s6293 + $0x358] sm:$0xff]
            %6510 = vst [vmem:[%s6294 + $0x358] sm:$0xff] %v6509
            %v6511 = vld [vmem:[%s6293 + $0x360] sm:$0xff]
            %6512 = vst [vmem:[%s6294 + $0x360] sm:$0xff] %v6511
            %v6513 = vld [vmem:[%s6293 + $0x368] sm:$0xff]
            %6514 = vst [vmem:[%s6294 + $0x368] sm:$0xff] %v6513
            %v6515 = vld [vmem:[%s6293 + $0x370] sm:$0xff]
            %6516 = vst [vmem:[%s6294 + $0x370] sm:$0xff] %v6515
            %v6517 = vld [vmem:[%s6293 + $0x378] sm:$0xff]
            %6518 = vst [vmem:[%s6294 + $0x378] sm:$0xff] %v6517
            %v6519 = vld [vmem:[%s6293 + $0x380] sm:$0xff]
            %6520 = vst [vmem:[%s6294 + $0x380] sm:$0xff] %v6519
            %v6521 = vld [vmem:[%s6293 + $0x388] sm:$0xff]
            %6522 = vst [vmem:[%s6294 + $0x388] sm:$0xff] %v6521
            %v6523 = vld [vmem:[%s6293 + $0x390] sm:$0xff]
            %6524 = vst [vmem:[%s6294 + $0x390] sm:$0xff] %v6523
            %v6525 = vld [vmem:[%s6293 + $0x398] sm:$0xff]
            %6526 = vst [vmem:[%s6294 + $0x398] sm:$0xff] %v6525
            %v6527 = vld [vmem:[%s6293 + $0x3a0] sm:$0xff]
            %6528 = vst [vmem:[%s6294 + $0x3a0] sm:$0xff] %v6527
            %v6529 = vld [vmem:[%s6293 + $0x3a8] sm:$0xff]
            %6530 = vst [vmem:[%s6294 + $0x3a8] sm:$0xff] %v6529
            %v6531 = vld [vmem:[%s6293 + $0x3b0] sm:$0xff]
            %6532 = vst [vmem:[%s6294 + $0x3b0] sm:$0xff] %v6531
            %v6533 = vld [vmem:[%s6293 + $0x3b8] sm:$0xff]
            %6534 = vst [vmem:[%s6294 + $0x3b8] sm:$0xff] %v6533
            %v6535 = vld [vmem:[%s6293 + $0x3c0] sm:$0xff]
            %6536 = vst [vmem:[%s6294 + $0x3c0] sm:$0xff] %v6535
            %v6537 = vld [vmem:[%s6293 + $0x3c8] sm:$0xff]
            %6538 = vst [vmem:[%s6294 + $0x3c8] sm:$0xff] %v6537
            %v6539 = vld [vmem:[%s6293 + $0x3d0] sm:$0xff]
            %6540 = vst [vmem:[%s6294 + $0x3d0] sm:$0xff] %v6539
            %v6541 = vld [vmem:[%s6293 + $0x3d8] sm:$0xff]
            %6542 = vst [vmem:[%s6294 + $0x3d8] sm:$0xff] %v6541
            %v6543 = vld [vmem:[%s6293 + $0x3e0] sm:$0xff]
            %6544 = vst [vmem:[%s6294 + $0x3e0] sm:$0xff] %v6543
          $region90: #{tpu_custom_call.1} parent=84 // loop_footer
            %s6292 = sadd.s32 1, %s6288
          $region91: #{tpu_custom_call.1} parent=84 // loop_footer_branch
            %6287 = sbr.rel target = $region87
          $region92: #{tpu_custom_call.1} parent=84 // loop_exit
            _
        $region85: #{tpu_custom_call.1} parent=76 // pred_fallthru
          _
      $region77: #{tpu_custom_call.1} parent=72 // pred_fallthru
        _
      %6807 = vnop
    $region73: #{tpu_custom_call.1} parent=1 // pred_fallthru
      _
    // Predicated region
    $region108: #{tpu_custom_call.1} parent=1 // pred_check
      _
    $region109: #{tpu_custom_call.1} parent=1 // pred_check_branch
      %6809 = sbr.rel (0) target = $region111
    $region110: #{tpu_custom_call.1} parent=1 // pred_region
      _
    $region111: #{tpu_custom_call.1} parent=1 // pred_fallthru
      _
    %6810 = vsyncpa [#allocation3], 1
    %6811 = vsyncpa [#allocation5], 1
    %6812 = vsyncpa [#allocation8], 1
    %6813 = vsyncpa [#allocation11], 1

</llo_original>
